<compile_context>
chip_gen: v7x
topology: tpu7x:2x2x1
jax: 0.10.0
libtpu: 0.0.40
codegen_flags: <defaults>
</compile_context>

<pallas_src>
import functools
import math

import jax
import jax.numpy as jnp
from jax import lax
from jax.experimental import pallas as pl
from jax.experimental.pallas import tpu as pltpu

NEG_INF = -1e9
COMPUTE_DTYPE = jnp.bfloat16   # storage + MXU operand dtype; stats in f32


def _round_up(x, m):
    return ((x + m - 1) // m) * m


def _layernorm_f32(x, g, b, eps):
    mu = jnp.mean(x, axis=-1, keepdims=True)
    var = jnp.mean(jnp.square(x - mu), axis=-1, keepdims=True)
    return (x - mu) * lax.rsqrt(var + eps) * g + b


def _activate(y, activation):
    if activation == "gelu":
        # TODO(synk): HF ViT uses exact erf-GELU; tanh approximation used here.
        return jax.nn.gelu(y, approximate=True)
    if activation == "relu":
        return jnp.maximum(y, 0.0)
    return y


# ----------------------------- Pallas kernels -----------------------------

def _linear_kernel(x_ref, w_ref, b_ref, o_ref, *, activation):
    x = x_ref[...].astype(COMPUTE_DTYPE)
    y = jnp.dot(x, w_ref[...], preferred_element_type=jnp.float32) + b_ref[...]
    o_ref[...] = _activate(y, activation).astype(o_ref.dtype)


def _layernorm_kernel(x_ref, g_ref, b_ref, o_ref, *, eps):
    x = x_ref[...].astype(jnp.float32)
    o_ref[...] = _layernorm_f32(x, g_ref[...], b_ref[...], eps).astype(o_ref.dtype)


def _ffn_kernel(*refs, activation, has_pre_ln, has_post_ln, eps):
    """x -> [preLN] -> fc1 -> act -> fc2 -> +residual(x) -> [postLN]."""
    it = iter(refs)
    x_ref = next(it)
    if has_pre_ln:
        pg, pb = next(it), next(it)
    w1, b1 = next(it), next(it)
    w2, b2 = next(it), next(it)
    if has_post_ln:
        qg, qb = next(it), next(it)
    o_ref = next(it)

    x = x_ref[...].astype(jnp.float32)
    h = x
    if has_pre_ln:
        h = _layernorm_f32(h, pg[...], pb[...], eps)
    h1 = jnp.dot(h.astype(COMPUTE_DTYPE), w1[...],
                 preferred_element_type=jnp.float32) + b1[...]
    h1 = _activate(h1, activation)
    h2 = jnp.dot(h1.astype(COMPUTE_DTYPE), w2[...],
                 preferred_element_type=jnp.float32) + b2[...]
    y = x + h2
    if has_post_ln:
        y = _layernorm_f32(y, qg[...], qb[...], eps)
    o_ref[...] = y.astype(o_ref.dtype)


def _attn_block_kernel(*refs, num_heads, scale, causal, self_attn,
                       has_pre_ln, has_post_ln, eps):
    """Fused attention block (per batch element):

       xq -> [preLN] -> QKV (one fused matmul) -> per-head softmax attention
          -> output projection wo -> + residual(xq) -> [postLN]
    """
    it = iter(refs)
    xq_ref = next(it)
    xkv_ref = xq_ref if self_attn else next(it)
    if has_pre_ln:
        pg, pb = next(it), next(it)
    wqkv_ref, bqkv_ref = next(it), next(it)
    wo_ref, bo_ref = next(it), next(it)
    if has_post_ln:
        qg, qb = next(it), next(it)
    o_ref = next(it)

    d = xq_ref.shape[-1]
    dh = d // num_heads

    xq = xq_ref[0].astype(jnp.float32)                    # (Tq, D)
    hq = xq
    if has_pre_ln:
        hq = _layernorm_f32(hq, pg[...], pb[...], eps)

    w = wqkv_ref[...]                                     # (D, 3D) bf16
    bvec = bqkv_ref[...]                                  # (1, 3D) f32

    if self_attn:
        qkv = jnp.dot(hq.astype(COMPUTE_DTYPE), w,
                      preferred_element_type=jnp.float32) + bvec
        q, k, v = qkv[:, :d], qkv[:, d:2 * d], qkv[:, 2 * d:]
    else:
        hkv = xkv_ref[0].astype(jnp.float32)
        if has_pre_ln:
            hkv = _layernorm_f32(hkv, pg[...], pb[...], eps)
        q = jnp.dot(hq.astype(COMPUTE_DTYPE), w[:, :d],
                    preferred_element_type=jnp.float32) + bvec[:, :d]
        kv = jnp.dot(hkv.astype(COMPUTE_DTYPE), w[:, d:],
                     preferred_element_type=jnp.float32) + bvec[:, d:]
        k, v = kv[:, :d], kv[:, d:]

    tq, tk = q.shape[0], k.shape[0]
    if causal:
        row = lax.broadcasted_iota(jnp.int32, (tq, tk), 0)
        col = lax.broadcasted_iota(jnp.int32, (tq, tk), 1)
        mask_bias = jnp.where(row >= col, 0.0, NEG_INF).astype(jnp.float32)

    wo = wo_ref[...]                                      # (D, D) bf16
    acc = jnp.zeros((tq, d), jnp.float32)
    for h in range(num_heads):
        sl = slice(h * dh, (h + 1) * dh)
        qh = q[:, sl].astype(COMPUTE_DTYPE)
        kh = k[:, sl].astype(COMPUTE_DTYPE)
        vh = v[:, sl].astype(COMPUTE_DTYPE)
        s = lax.dot_general(qh, kh, (((1,), (1,)), ((), ())),
                            preferred_element_type=jnp.float32) * scale
        if causal:
            s = s + mask_bias
        s = s - jnp.max(s, axis=-1, keepdims=True)
        p = jnp.exp(s)
        p = p * pl.reciprocal(jnp.sum(p, axis=-1, keepdims=True), approx=True)
        ctx = jnp.dot(p.astype(COMPUTE_DTYPE), vh,
                      preferred_element_type=jnp.float32)
        # (ctx_heads concat) @ wo == sum_h ctx_h @ wo[h*dh:(h+1)*dh, :]
        acc = acc + jnp.dot(ctx.astype(COMPUTE_DTYPE), wo[sl, :],
                            preferred_element_type=jnp.float32)

    y = xq + acc + bo_ref[...]
    if has_post_ln:
        y = _layernorm_f32(y, qg[...], qb[...], eps)
    o_ref[0] = y.astype(o_ref.dtype)


# ------------------------------ host wrappers ------------------------------

def _row_tile(rows, tm_max=256):
    tm = min(tm_max, _round_up(rows, 16))
    rows_p = _round_up(rows, tm)
    return tm, rows_p


def pallas_linear(x, w, b, activation="none"):
    lead = x.shape[:-1]
    k = x.shape[-1]
    n = w.shape[-1]
    x2 = x.reshape(-1, k)
    rows = x2.shape[0]
    tm, rows_p = _row_tile(rows)
    if rows_p != rows:
        x2 = jnp.pad(x2, ((0, rows_p - rows), (0, 0)))
    out = pl.pallas_call(
        functools.partial(_linear_kernel, activation=activation),
        out_shape=jax.ShapeDtypeStruct((rows_p, n), COMPUTE_DTYPE),
        grid=(rows_p // tm,),
        in_specs=[
            pl.BlockSpec((tm, k), lambda i: (i, 0)),
            pl.BlockSpec((k, n), lambda i: (0, 0)),
            pl.BlockSpec((1, n), lambda i: (0, 0)),
        ],
        out_specs=pl.BlockSpec((tm, n), lambda i: (i, 0)),
        compiler_params=pltpu.CompilerParams(dimension_semantics=("parallel",)),
    )(x2.astype(COMPUTE_DTYPE), w.astype(COMPUTE_DTYPE),
      b.reshape(1, n).astype(jnp.float32))
    return out[:rows].reshape(lead + (n,))


def pallas_layernorm(x, g, b, eps=1e-6):
    lead = x.shape[:-1]
    d = x.shape[-1]
    x2 = x.reshape(-1, d)
    rows = x2.shape[0]
    tm, rows_p = _row_tile(rows)
    if rows_p != rows:
        x2 = jnp.pad(x2, ((0, rows_p - rows), (0, 0)))
    out = pl.pallas_call(
        functools.partial(_layernorm_kernel, eps=eps),
        out_shape=jax.ShapeDtypeStruct((rows_p, d), COMPUTE_DTYPE),
        grid=(rows_p // tm,),
        in_specs=[
            pl.BlockSpec((tm, d), lambda i: (i, 0)),
            pl.BlockSpec((1, d), lambda i: (0, 0)),
            pl.BlockSpec((1, d), lambda i: (0, 0)),
        ],
        out_specs=pl.BlockSpec((tm, d), lambda i: (i, 0)),
        compiler_params=pltpu.CompilerParams(dimension_semantics=("parallel",)),
    )(x2.astype(COMPUTE_DTYPE), g.reshape(1, d).astype(jnp.float32),
      b.reshape(1, d).astype(jnp.float32))
    return out[:rows].reshape(lead + (d,))


def pallas_ffn(x, w1, b1, w2, b2, *, activation,
               pre_ln=None, post_ln=None, eps=1e-6):
    lead = x.shape[:-1]
    d = x.shape[-1]
    mlp = w1.shape[-1]
    x2 = x.reshape(-1, d)
    rows = x2.shape[0]
    tm, rows_p = _row_tile(rows)
    if rows_p != rows:
        x2 = jnp.pad(x2, ((0, rows_p - rows), (0, 0)))

    inputs = [x2.astype(COMPUTE_DTYPE)]
    in_specs = [pl.BlockSpec((tm, d), lambda i: (i, 0))]

    def add_vec(v, n):
        inputs.append(v.reshape(1, n).astype(jnp.float32))
        in_specs.append(pl.BlockSpec((1, n), lambda i: (0, 0)))

    def add_mat(m):
        inputs.append(m.astype(COMPUTE_DTYPE))
        in_specs.append(pl.BlockSpec(m.shape, lambda i: (0, 0)))

    has_pre = pre_ln is not None
    has_post = post_ln is not None
    if has_pre:
        add_vec(pre_ln[0], d)
        add_vec(pre_ln[1], d)
    add_mat(w1)
    add_vec(b1, mlp)
    add_mat(w2)
    add_vec(b2, d)
    if has_post:
        add_vec(post_ln[0], d)
        add_vec(post_ln[1], d)

    out = pl.pallas_call(
        functools.partial(_ffn_kernel, activation=activation,
                          has_pre_ln=has_pre, has_post_ln=has_post, eps=eps),
        out_shape=jax.ShapeDtypeStruct((rows_p, d), COMPUTE_DTYPE),
        grid=(rows_p // tm,),
        in_specs=in_specs,
        out_specs=pl.BlockSpec((tm, d), lambda i: (i, 0)),
        compiler_params=pltpu.CompilerParams(dimension_semantics=("parallel",)),
    )(*inputs)
    return out[:rows].reshape(lead + (d,))


def pallas_attention_block(x_q, p, *, num_heads, x_kv=None, causal=False,
                           pre_ln=None, post_ln=None, eps=1e-6):
    """Fused (pre-LN) + MHA + output proj + residual + (post-LN), grid over batch."""
    b, tq, d = x_q.shape
    self_attn = x_kv is None
    scale = 1.0 / math.sqrt(d // num_heads)

    inputs = [x_q.astype(COMPUTE_DTYPE)]
    in_specs = [pl.BlockSpec((1, tq, d), lambda i: (i, 0, 0))]
    if not self_attn:
        tk = x_kv.shape[1]
        inputs.append(x_kv.astype(COMPUTE_DTYPE))
        in_specs.append(pl.BlockSpec((1, tk, d), lambda i: (i, 0, 0)))

    def add_vec(v, n):
        inputs.append(v.reshape(1, n).astype(jnp.float32))
        in_specs.append(pl.BlockSpec((1, n), lambda i: (0, 0)))

    def add_mat(m):
        inputs.append(m.astype(COMPUTE_DTYPE))
        in_specs.append(pl.BlockSpec(m.shape, lambda i: (0, 0)))

    has_pre = pre_ln is not None
    has_post = post_ln is not None
    if has_pre:
        add_vec(pre_ln[0], d)
        add_vec(pre_ln[1], d)
    add_mat(p["wqkv"])          # (D, 3D) fused q|k|v
    add_vec(p["bqkv"], 3 * d)
    add_mat(p["wo"])
    add_vec(p["bo"], d)
    if has_post:
        add_vec(post_ln[0], d)
        add_vec(post_ln[1], d)

    return pl.pallas_call(
        functools.partial(_attn_block_kernel, num_heads=num_heads, scale=scale,
                          causal=causal, self_attn=self_attn,
                          has_pre_ln=has_pre, has_post_ln=has_post, eps=eps),
        out_shape=jax.ShapeDtypeStruct((b, tq, d), COMPUTE_DTYPE),
        grid=(b,),
        in_specs=in_specs,
        out_specs=pl.BlockSpec((1, tq, d), lambda i: (i, 0, 0)),
        compiler_params=pltpu.CompilerParams(dimension_semantics=("parallel",)),
    )(*inputs)


# ------------------------------ model blocks ------------------------------

def vit_encoder_layer(x, p, num_heads, eps, final_ln=None):
    # pre-norm ViT layer: x = x + MHA(LN1(x)); x = x + MLP(LN2(x))
    x = pallas_attention_block(x, p["attn"], num_heads=num_heads, causal=False,
                               pre_ln=(p["ln1_g"], p["ln1_b"]), eps=eps)
    x = pallas_ffn(x, p["fc1_w"], p["fc1_b"], p["fc2_w"], p["fc2_b"],
                   activation="gelu",
                   pre_ln=(p["ln2_g"], p["ln2_b"]),
                   post_ln=final_ln,            # fold the final ViT LN into last layer
                   eps=eps)
    return x


def vit_forward(pixel_values, params, cfg):
    b, c, hh, ww = pixel_values.shape
    p = cfg["patch_size"]
    gh, gw = hh // p, ww // p
    d = cfg["hidden"]
    # patchify: conv(kernel=P, stride=P) over NCHW  ==  unfold + matmul
    patches = pixel_values.reshape(b, c, gh, p, gw, p)
    patches = patches.transpose(0, 2, 4, 1, 3, 5).reshape(b, gh * gw, c * p * p)
    x = pallas_linear(patches, params["patch_w"], params["patch_b"])   # (B, N, D)
    cls = jnp.broadcast_to(params["cls_token"].astype(x.dtype), (b, 1, d))
    x = jnp.concatenate([cls, x], axis=1)
    x = x + params["pos_embed"].astype(x.dtype)
    n_layers = len(params["layers"])
    eps = cfg["vit_ln_eps"]
    for li, layer_p in enumerate(params["layers"]):
        final_ln = (params["ln_g"], params["ln_b"]) if li == n_layers - 1 else None
        x = vit_encoder_layer(x, layer_p, cfg["num_heads"], eps, final_ln=final_ln)
    return x                                   # last_hidden_state (final LN fused above)


def decoder_layer(x, enc, p, num_heads, eps):
    # classic post-norm decoder layer, all three sublayers fully fused
    x = pallas_attention_block(x, p["self_attn"], num_heads=num_heads, causal=True,
                               post_ln=(p["ln1_g"], p["ln1_b"]), eps=eps)
    x = pallas_attention_block(x, p["cross_attn"], num_heads=num_heads, x_kv=enc,
                               causal=False,
                               post_ln=(p["ln2_g"], p["ln2_b"]), eps=eps)
    x = pallas_ffn(x, p["fc1_w"], p["fc1_b"], p["fc2_w"], p["fc2_b"],
                   activation="relu",
                   post_ln=(p["ln3_g"], p["ln3_b"]), eps=eps)
    return x


def decoder_forward(ids, enc, params, cfg):
    t = ids.shape[1]
    emb = jnp.take(params["tok_emb"], ids, axis=0)        # embedding lookup (glue)
    emb = emb + params["pos_table"][:t][None]
    # TODO(synk): embedding LayerNorm follows the classic post-norm reference
    # decoder (emb -> pos-enc -> LN); verify against the actual injected decoder.
    x = pallas_layernorm(emb, params["ln_g"], params["ln_b"], eps=cfg["dec_ln_eps"])
    for layer_p in params["layers"]:
        x = decoder_layer(x, enc, layer_p, cfg["num_heads"], cfg["dec_ln_eps"])
    return x


def vit_with_decoder_forward(pixel_values, decoder_input_ids, params, cfg):
    enc_out = vit_forward(pixel_values, params["vit"], cfg)
    dec_out = decoder_forward(decoder_input_ids, enc_out, params["dec"], cfg)
    return dec_out.astype(jnp.float32)


# ------------------------- parameter initialization ------------------------

def _resize_pos_embed(posemb, gh, gw, start_index=1):
    """Bilinear resize of the grid part (torch interpolate, align_corners=False)."""
    tok = posemb[:, :start_index]
    grid = posemb[0, start_index:]
    old = int(math.sqrt(grid.shape[0]))
    d = grid.shape[-1]
    grid = grid.reshape(old, old, d)

    def src(out_size, in_size):
        c = (jnp.arange(out_size, dtype=jnp.float32) + 0.5) * (in_size / out_size) - 0.5
        c = jnp.maximum(c, 0.0)
        i0 = jnp.minimum(jnp.floor(c).astype(jnp.int32), in_size - 1)
        i1 = jnp.minimum(i0 + 1, in_size - 1)
        return i0, i1, c - i0.astype(jnp.float32)

    y0, y1, fy = src(gh, old)
    x0, x1, fx = src(gw, old)
    top = grid[y0][:, x0] * (1 - fx)[None, :, None] + grid[y0][:, x1] * fx[None, :, None]
    bot = grid[y1][:, x0] * (1 - fx)[None, :, None] + grid[y1][:, x1] * fx[None, :, None]
    new_grid = top * (1 - fy)[:, None, None] + bot * fy[:, None, None]
    return jnp.concatenate([tok, new_grid.reshape(1, gh * gw, d)], axis=1)


def sinusoid_pos_table(n_pos, d):
    pos = jnp.arange(n_pos, dtype=jnp.float32)[:, None]
    i = jnp.arange(d, dtype=jnp.float32)[None, :]
    angle = pos / jnp.power(10000.0, 2.0 * jnp.floor(i / 2.0) / d)
    return jnp.where((jnp.arange(d) % 2) == 0, jnp.sin(angle), jnp.cos(angle))


def init_params(key, cfg):
    d, mlp = cfg["hidden"], cfg["mlp"]
    c, p = cfg["channels"], cfg["patch_size"]
    keys = iter(jax.random.split(key, 512))

    def nrm(shape, scale=0.02):
        return (scale * jax.random.normal(next(keys), shape)).astype(jnp.float32)

    def zeros(shape):
        return jnp.zeros(shape, jnp.float32)

    def ones(shape):
        return jnp.ones(shape, jnp.float32)

    def attn():
        # fused q|k|v projection weights, (D, 3D) / (3D,)
        return dict(wqkv=nrm((d, 3 * d)), bqkv=zeros((3 * d,)),
                    wo=nrm((d, d)), bo=zeros((d,)))

    def enc_layer():
        return dict(ln1_g=ones((d,)), ln1_b=zeros((d,)),
                    ln2_g=ones((d,)), ln2_b=zeros((d,)),
                    attn=attn(),
                    fc1_w=nrm((d, mlp)), fc1_b=zeros((mlp,)),
                    fc2_w=nrm((mlp, d)), fc2_b=zeros((d,)))

    def dec_layer():
        return dict(self_attn=attn(), cross_attn=attn(),
                    ln1_g=ones((d,)), ln1_b=zeros((d,)),
                    ln2_g=ones((d,)), ln2_b=zeros((d,)),
                    ln3_g=ones((d,)), ln3_b=zeros((d,)),
                    fc1_w=nrm((d, mlp)), fc1_b=zeros((mlp,)),
                    fc2_w=nrm((mlp, d)), fc2_b=zeros((d,)))

    gh = cfg["target_height"] // p
    gw = cfg["target_width"] // p
    old_grid = cfg["old_grid"]
    pos_old = nrm((1, 1 + old_grid * old_grid, d))
    vit = dict(
        patch_w=nrm((c * p * p, d)), patch_b=zeros((d,)),
        cls_token=nrm((1, 1, d)),
        pos_embed=_resize_pos_embed(pos_old, gh, gw),   # ViTWithDecoder.__init__ resize
        layers=[enc_layer() for _ in range(cfg["enc_layers"])],
        ln_g=ones((d,)), ln_b=zeros((d,)),
    )
    dec = dict(
        tok_emb=nrm((cfg["vocab"], d)),
        pos_table=sinusoid_pos_table(cfg["max_dec_len"], d),
        ln_g=ones((d,)), ln_b=zeros((d,)),
        layers=[dec_layer() for _ in range(cfg["dec_layers"])],
    )
    return dict(vit=vit, dec=dec)


# ---------------------------------- main -----------------------------------

if __name__ == "__main__":
    cfg = dict(
        patch_size=16, target_height=32, target_width=32,   # -> 2x2 patch grid
        channels=3, hidden=64, num_heads=4, mlp=128,
        enc_layers=2, dec_layers=2, vocab=50, max_dec_len=32,
        old_grid=3,          # pos-embeds initialized for a 3x3 grid, resized to 2x2
        vit_ln_eps=1e-12,    # HF ViT LayerNorm eps
        dec_ln_eps=1e-6,     # classic transformer decoder LayerNorm eps
    )

    key = jax.random.PRNGKey(0)
    k_px, k_ids, k_param = jax.random.split(key, 3)

    pixel_values = jax.random.normal(
        k_px, (2, cfg["channels"], cfg["target_height"], cfg["target_width"]),
        dtype=jnp.float32)                                   # NCHW, like PyTorch
    decoder_input_ids = jax.random.randint(k_ids, (2, 8), 0, cfg["vocab"],
                                           dtype=jnp.int32)

    params = init_params(k_param, cfg)

    fwd = jax.jit(lambda px, ids, prm: vit_with_decoder_forward(px, ids, prm, cfg))
    dec_output = jax.block_until_ready(fwd(pixel_values, decoder_input_ids, params))

    assert dec_output.shape == (2, 8, cfg["hidden"])
    assert bool(jnp.all(jnp.isfinite(dec_output)))
    print("KERNEL_OK")
</pallas_src>

<mosaic_0001>
module attributes {stable_mosaic.version = 11 : i64} {
  func.func @_layernorm_kernel(%arg0: i32, %arg1: memref<16x64xbf16, #tpu.memory_space<vmem>>, %arg2: memref<1x64xf32, #tpu.memory_space<vmem>>, %arg3: memref<1x64xf32, #tpu.memory_space<vmem>>, %arg4: memref<16x64xbf16, #tpu.memory_space<vmem>>) attributes {dimension_semantics = [#tpu.dimension_semantics<parallel>], iteration_bounds = array<i64: 1>, scalar_prefetch = 0 : i64, scratch_operands = 0 : i64, tpu.core_type = #tpu.core_type<tc>, window_params = [{transform_indices = @transform_0, window_bounds = array<i64: 16, 64>}, {pipeline_mode = #tpu.pipeline_mode<synchronous>, transform_indices = @transform_1, window_bounds = array<i64: 1, 64>}, {pipeline_mode = #tpu.pipeline_mode<synchronous>, transform_indices = @transform_2, window_bounds = array<i64: 1, 64>}, {transform_indices = @transform_3, window_bounds = array<i64: 16, 64>}]} {
    %c0 = arith.constant 0 : index
    %c0_0 = arith.constant 0 : index
    %0 = vector.load %arg1[%c0, %c0_0] : memref<16x64xbf16, #tpu.memory_space<vmem>>, vector<16x64xbf16>
    %1 = arith.extf %0 : vector<16x64xbf16> to vector<16x64xf32>
    %c0_1 = arith.constant 0 : index
    %c0_2 = arith.constant 0 : index
    %2 = vector.load %arg2[%c0_1, %c0_2] : memref<1x64xf32, #tpu.memory_space<vmem>>, vector<1x64xf32>
    %c0_3 = arith.constant 0 : index
    %c0_4 = arith.constant 0 : index
    %3 = vector.load %arg3[%c0_3, %c0_4] : memref<1x64xf32, #tpu.memory_space<vmem>>, vector<1x64xf32>
    %cst = arith.constant dense<0.000000e+00> : vector<16xf32>
    %4 = vector.multi_reduction <add>, %1, %cst [1] : vector<16x64xf32> to vector<16xf32>
    %5 = vector.shape_cast %4 : vector<16xf32> to vector<16x1xf32>
    %cst_5 = arith.constant 6.400000e+01 : f32
    %6 = vector.broadcast %cst_5 : f32 to vector<16x1xf32>
    %7 = arith.divf %5, %6 : vector<16x1xf32>
    %8 = vector.broadcast %7 : vector<16x1xf32> to vector<16x64xf32>
    %9 = arith.subf %1, %8 : vector<16x64xf32>
    %10 = arith.mulf %9, %9 : vector<16x64xf32>
    %cst_6 = arith.constant dense<0.000000e+00> : vector<16xf32>
    %11 = vector.multi_reduction <add>, %10, %cst_6 [1] : vector<16x64xf32> to vector<16xf32>
    %12 = vector.shape_cast %11 : vector<16xf32> to vector<16x1xf32>
    %cst_7 = arith.constant 6.400000e+01 : f32
    %13 = vector.broadcast %cst_7 : f32 to vector<16x1xf32>
    %14 = arith.divf %12, %13 : vector<16x1xf32>
    %15 = vector.broadcast %7 : vector<16x1xf32> to vector<16x64xf32>
    %16 = arith.subf %1, %15 : vector<16x64xf32>
    %cst_8 = arith.constant 9.99999997E-7 : f32
    %17 = vector.broadcast %cst_8 : f32 to vector<16x1xf32>
    %18 = arith.addf %14, %17 : vector<16x1xf32>
    %19 = math.rsqrt %18 : vector<16x1xf32>
    %20 = vector.broadcast %19 : vector<16x1xf32> to vector<16x64xf32>
    %21 = arith.mulf %16, %20 : vector<16x64xf32>
    %22 = vector.broadcast %2 : vector<1x64xf32> to vector<16x64xf32>
    %23 = arith.mulf %21, %22 : vector<16x64xf32>
    %24 = vector.broadcast %3 : vector<1x64xf32> to vector<16x64xf32>
    %25 = arith.addf %23, %24 : vector<16x64xf32>
    %26 = arith.truncf %25 : vector<16x64xf32> to vector<16x64xbf16>
    %c0_9 = arith.constant 0 : index
    %c0_10 = arith.constant 0 : index
    %27 = vector.load %arg4[%c0_9, %c0_10] : memref<16x64xbf16, #tpu.memory_space<vmem>>, vector<16x64xbf16>
    tpu.vector_store %arg4[%c0_9, %c0_10], %26 {strides = array<i32>} : memref<16x64xbf16, #tpu.memory_space<vmem>>, vector<16x64xbf16>,
    return
  }
  func.func @transform_0(%arg0: i32) -> (i32, i32) {
    %c0_i32 = arith.constant 0 : i32
    %c0_i32_0 = arith.constant 0 : i32
    return %arg0, %c0_i32 : i32, i32
  }
  func.func @transform_1(%arg0: i32) -> (i32, i32) {
    %c0_i32 = arith.constant 0 : i32
    %c0_i32_0 = arith.constant 0 : i32
    %c0_i32_1 = arith.constant 0 : i32
    return %c0_i32, %c0_i32_0 : i32, i32
  }
  func.func @transform_2(%arg0: i32) -> (i32, i32) {
    %c0_i32 = arith.constant 0 : i32
    %c0_i32_0 = arith.constant 0 : i32
    %c0_i32_1 = arith.constant 0 : i32
    return %c0_i32, %c0_i32_0 : i32, i32
  }
  func.func @transform_3(%arg0: i32) -> (i32, i32) {
    %c0_i32 = arith.constant 0 : i32
    %c0_i32_0 = arith.constant 0 : i32
    return %arg0, %c0_i32 : i32, i32
  }
}

module attributes {stable_mosaic.version = 11 : i64} {
  func.func @_attn_block_kernel(%arg0: i32, %arg1: memref<1x8x64xbf16, #tpu.memory_space<vmem>>, %arg2: memref<64x192xbf16, #tpu.memory_space<vmem>>, %arg3: memref<1x192xf32, #tpu.memory_space<vmem>>, %arg4: memref<64x64xbf16, #tpu.memory_space<vmem>>, %arg5: memref<1x64xf32, #tpu.memory_space<vmem>>, %arg6: memref<1x64xf32, #tpu.memory_space<vmem>>, %arg7: memref<1x64xf32, #tpu.memory_space<vmem>>, %arg8: memref<1x8x64xbf16, #tpu.memory_space<vmem>>) attributes {dimension_semantics = [#tpu.dimension_semantics<parallel>], iteration_bounds = array<i64: 2>, scalar_prefetch = 0 : i64, scratch_operands = 0 : i64, tpu.core_type = #tpu.core_type<tc>, window_params = [{transform_indices = @transform_0, window_bounds = array<i64: 1, 8, 64>}, {pipeline_mode = #tpu.pipeline_mode<synchronous>, transform_indices = @transform_1, window_bounds = array<i64: 64, 192>}, {pipeline_mode = #tpu.pipeline_mode<synchronous>, transform_indices = @transform_2, window_bounds = array<i64: 1, 192>}, {pipeline_mode = #tpu.pipeline_mode<synchronous>, transform_indices = @transform_3, window_bounds = array<i64: 64, 64>}, {pipeline_mode = #tpu.pipeline_mode<synchronous>, transform_indices = @transform_4, window_bounds = array<i64: 1, 64>}, {pipeline_mode = #tpu.pipeline_mode<synchronous>, transform_indices = @transform_5, window_bounds = array<i64: 1, 64>}, {pipeline_mode = #tpu.pipeline_mode<synchronous>, transform_indices = @transform_6, window_bounds = array<i64: 1, 64>}, {transform_indices = @transform_7, window_bounds = array<i64: 1, 8, 64>}]} {
    %c0 = arith.constant 0 : index
    %c0_0 = arith.constant 0 : index
    %c0_1 = arith.constant 0 : index
    %0 = vector.load %arg1[%c0, %c0_0, %c0_1] : memref<1x8x64xbf16, #tpu.memory_space<vmem>>, vector<1x8x64xbf16>
    %1 = vector.shape_cast %0 : vector<1x8x64xbf16> to vector<8x64xbf16>
    %2 = arith.extf %1 : vector<8x64xbf16> to vector<8x64xf32>
    %c0_2 = arith.constant 0 : index
    %c0_3 = arith.constant 0 : index
    %3 = vector.load %arg2[%c0_2, %c0_3] : memref<64x192xbf16, #tpu.memory_space<vmem>>, vector<64x192xbf16>
    %c0_4 = arith.constant 0 : index
    %c0_5 = arith.constant 0 : index
    %4 = vector.load %arg3[%c0_4, %c0_5] : memref<1x192xf32, #tpu.memory_space<vmem>>, vector<1x192xf32>
    %5 = arith.truncf %2 : vector<8x64xf32> to vector<8x64xbf16>
    %cst = arith.constant dense<0.000000e+00> : vector<8x192xf32>
    %6 = tpu.matmul %5, %3, %cst {dimension_numbers = #tpu.dot_dimension_numbers<[1], [0], [0], [1], [0, 0, 1, 1], [], []>} : vector<8x64xbf16>, vector<64x192xbf16>, vector<8x192xf32> -> vector<8x192xf32>
    %7 = vector.broadcast %4 : vector<1x192xf32> to vector<8x192xf32>
    %8 = arith.addf %6, %7 : vector<8x192xf32>
    %9 = vector.extract_strided_slice %8 {offsets = [0, 0], sizes = [8, 64], strides = [1, 1]} : vector<8x192xf32> to vector<8x64xf32>
    %10 = vector.extract_strided_slice %8 {offsets = [0, 64], sizes = [8, 64], strides = [1, 1]} : vector<8x192xf32> to vector<8x64xf32>
    %11 = vector.extract_strided_slice %8 {offsets = [0, 128], sizes = [8, 64], strides = [1, 1]} : vector<8x192xf32> to vector<8x64xf32>
    %12 = tpu.iota {dimensions = array<i32: 0>} : vector<8x8xi32>
    %13 = tpu.iota {dimensions = array<i32: 1>} : vector<8x8xi32>
    %14 = arith.cmpi sge, %12, %13 : vector<8x8xi32>
    %cst_6 = arith.constant 0.000000e+00 : f32
    %cst_7 = arith.constant -1.000000e+09 : f32
    %15 = vector.broadcast %cst_6 : f32 to vector<8x8xf32>
    %16 = vector.broadcast %cst_7 : f32 to vector<8x8xf32>
    %17 = arith.select %14, %15, %16 : vector<8x8xi1>, vector<8x8xf32>
    %c0_8 = arith.constant 0 : index
    %c0_9 = arith.constant 0 : index
    %18 = vector.load %arg4[%c0_8, %c0_9] : memref<64x64xbf16, #tpu.memory_space<vmem>>, vector<64x64xbf16>
    %cst_10 = arith.constant 0.000000e+00 : f32
    %19 = vector.broadcast %cst_10 : f32 to vector<8x64xf32>
    %20 = vector.extract_strided_slice %9 {offsets = [0, 0], sizes = [8, 16], strides = [1, 1]} : vector<8x64xf32> to vector<8x16xf32>
    %21 = arith.truncf %20 : vector<8x16xf32> to vector<8x16xbf16>
    %22 = vector.extract_strided_slice %10 {offsets = [0, 0], sizes = [8, 16], strides = [1, 1]} : vector<8x64xf32> to vector<8x16xf32>
    %23 = arith.truncf %22 : vector<8x16xf32> to vector<8x16xbf16>
    %24 = vector.extract_strided_slice %11 {offsets = [0, 0], sizes = [8, 16], strides = [1, 1]} : vector<8x64xf32> to vector<8x16xf32>
    %25 = arith.truncf %24 : vector<8x16xf32> to vector<8x16xbf16>
    %cst_11 = arith.constant dense<0.000000e+00> : vector<8x8xf32>
    %26 = tpu.matmul %21, %23, %cst_11 {dimension_numbers = #tpu.dot_dimension_numbers<[1], [1], [0], [0], [0, 0, 1, 0], [], []>} : vector<8x16xbf16>, vector<8x16xbf16>, vector<8x8xf32> -> vector<8x8xf32>
    %cst_12 = arith.constant 2.500000e-01 : f32
    %27 = vector.broadcast %cst_12 : f32 to vector<8x8xf32>
    %28 = arith.mulf %26, %27 : vector<8x8xf32>
    %29 = arith.addf %28, %17 : vector<8x8xf32>
    %cst_13 = arith.constant dense<0xFF800000> : vector<8xf32>
    %30 = vector.multi_reduction <maximumf>, %29, %cst_13 [1] : vector<8x8xf32> to vector<8xf32>
    %31 = vector.shape_cast %30 : vector<8xf32> to vector<8x1xf32>
    %32 = vector.broadcast %31 : vector<8x1xf32> to vector<8x8xf32>
    %33 = arith.subf %29, %32 : vector<8x8xf32>
    %34 = math.exp %33 : vector<8x8xf32>
    %cst_14 = arith.constant dense<0.000000e+00> : vector<8xf32>
    %35 = vector.multi_reduction <add>, %34, %cst_14 [1] : vector<8x8xf32> to vector<8xf32>
    %36 = vector.shape_cast %35 : vector<8xf32> to vector<8x1xf32>
    %37 = tpu.reciprocal %36 {approx = true} : vector<8x1xf32> -> vector<8x1xf32>
    %38 = vector.broadcast %37 : vector<8x1xf32> to vector<8x8xf32>
    %39 = arith.mulf %34, %38 : vector<8x8xf32>
    %40 = arith.truncf %39 : vector<8x8xf32> to vector<8x8xbf16>
    %cst_15 = arith.constant dense<0.000000e+00> : vector<8x16xf32>
    %41 = tpu.matmul %40, %25, %cst_15 {dimension_numbers = #tpu.dot_dimension_numbers<[1], [0], [0], [1], [0, 0, 1, 1], [], []>} : vector<8x8xbf16>, vector<8x16xbf16>, vector<8x16xf32> -> vector<8x16xf32>
    %42 = arith.truncf %41 : vector<8x16xf32> to vector<8x16xbf16>
    %43 = vector.extract_strided_slice %18 {offsets = [0, 0], sizes = [16, 64], strides = [1, 1]} : vector<64x64xbf16> to vector<16x64xbf16>
    %cst_16 = arith.constant dense<0.000000e+00> : vector<8x64xf32>
    %44 = tpu.matmul %42, %43, %cst_16 {dimension_numbers = #tpu.dot_dimension_numbers<[1], [0], [0], [1], [0, 0, 1, 1], [], []>} : vector<8x16xbf16>, vector<16x64xbf16>, vector<8x64xf32> -> vector<8x64xf32>
    %45 = arith.addf %19, %44 : vector<8x64xf32>
    %46 = vector.extract_strided_slice %9 {offsets = [0, 16], sizes = [8, 16], strides = [1, 1]} : vector<8x64xf32> to vector<8x16xf32>
    %47 = arith.truncf %46 : vector<8x16xf32> to vector<8x16xbf16>
    %48 = vector.extract_strided_slice %10 {offsets = [0, 16], sizes = [8, 16], strides = [1, 1]} : vector<8x64xf32> to vector<8x16xf32>
    %49 = arith.truncf %48 : vector<8x16xf32> to vector<8x16xbf16>
    %50 = vector.extract_strided_slice %11 {offsets = [0, 16], sizes = [8, 16], strides = [1, 1]} : vector<8x64xf32> to vector<8x16xf32>
    %51 = arith.truncf %50 : vector<8x16xf32> to vector<8x16xbf16>
    %cst_17 = arith.constant dense<0.000000e+00> : vector<8x8xf32>
    %52 = tpu.matmul %47, %49, %cst_17 {dimension_numbers = #tpu.dot_dimension_numbers<[1], [1], [0], [0], [0, 0, 1, 0], [], []>} : vector<8x16xbf16>, vector<8x16xbf16>, vector<8x8xf32> -> vector<8x8xf32>
    %cst_18 = arith.constant 2.500000e-01 : f32
    %53 = vector.broadcast %cst_18 : f32 to vector<8x8xf32>
    %54 = arith.mulf %52, %53 : vector<8x8xf32>
    %55 = arith.addf %54, %17 : vector<8x8xf32>
    %cst_19 = arith.constant dense<0xFF800000> : vector<8xf32>
    %56 = vector.multi_reduction <maximumf>, %55, %cst_19 [1] : vector<8x8xf32> to vector<8xf32>
    %57 = vector.shape_cast %56 : vector<8xf32> to vector<8x1xf32>
    %58 = vector.broadcast %57 : vector<8x1xf32> to vector<8x8xf32>
    %59 = arith.subf %55, %58 : vector<8x8xf32>
    %60 = math.exp %59 : vector<8x8xf32>
    %cst_20 = arith.constant dense<0.000000e+00> : vector<8xf32>
    %61 = vector.multi_reduction <add>, %60, %cst_20 [1] : vector<8x8xf32> to vector<8xf32>
    %62 = vector.shape_cast %61 : vector<8xf32> to vector<8x1xf32>
    %63 = tpu.reciprocal %62 {approx = true} : vector<8x1xf32> -> vector<8x1xf32>
    %64 = vector.broadcast %63 : vector<8x1xf32> to vector<8x8xf32>
    %65 = arith.mulf %60, %64 : vector<8x8xf32>
    %66 = arith.truncf %65 : vector<8x8xf32> to vector<8x8xbf16>
    %cst_21 = arith.constant dense<0.000000e+00> : vector<8x16xf32>
    %67 = tpu.matmul %66, %51, %cst_21 {dimension_numbers = #tpu.dot_dimension_numbers<[1], [0], [0], [1], [0, 0, 1, 1], [], []>} : vector<8x8xbf16>, vector<8x16xbf16>, vector<8x16xf32> -> vector<8x16xf32>
    %68 = arith.truncf %67 : vector<8x16xf32> to vector<8x16xbf16>
    %69 = vector.extract_strided_slice %18 {offsets = [16, 0], sizes = [16, 64], strides = [1, 1]} : vector<64x64xbf16> to vector<16x64xbf16>
    %cst_22 = arith.constant dense<0.000000e+00> : vector<8x64xf32>
    %70 = tpu.matmul %68, %69, %cst_22 {dimension_numbers = #tpu.dot_dimension_numbers<[1], [0], [0], [1], [0, 0, 1, 1], [], []>} : vector<8x16xbf16>, vector<16x64xbf16>, vector<8x64xf32> -> vector<8x64xf32>
    %71 = arith.addf %45, %70 : vector<8x64xf32>
    %72 = vector.extract_strided_slice %9 {offsets = [0, 32], sizes = [8, 16], strides = [1, 1]} : vector<8x64xf32> to vector<8x16xf32>
    %73 = arith.truncf %72 : vector<8x16xf32> to vector<8x16xbf16>
    %74 = vector.extract_strided_slice %10 {offsets = [0, 32], sizes = [8, 16], strides = [1, 1]} : vector<8x64xf32> to vector<8x16xf32>
    %75 = arith.truncf %74 : vector<8x16xf32> to vector<8x16xbf16>
    %76 = vector.extract_strided_slice %11 {offsets = [0, 32], sizes = [8, 16], strides = [1, 1]} : vector<8x64xf32> to vector<8x16xf32>
    %77 = arith.truncf %76 : vector<8x16xf32> to vector<8x16xbf16>
    %cst_23 = arith.constant dense<0.000000e+00> : vector<8x8xf32>
    %78 = tpu.matmul %73, %75, %cst_23 {dimension_numbers = #tpu.dot_dimension_numbers<[1], [1], [0], [0], [0, 0, 1, 0], [], []>} : vector<8x16xbf16>, vector<8x16xbf16>, vector<8x8xf32> -> vector<8x8xf32>
    %cst_24 = arith.constant 2.500000e-01 : f32
    %79 = vector.broadcast %cst_24 : f32 to vector<8x8xf32>
    %80 = arith.mulf %78, %79 : vector<8x8xf32>
    %81 = arith.addf %80, %17 : vector<8x8xf32>
    %cst_25 = arith.constant dense<0xFF800000> : vector<8xf32>
    %82 = vector.multi_reduction <maximumf>, %81, %cst_25 [1] : vector<8x8xf32> to vector<8xf32>
    %83 = vector.shape_cast %82 : vector<8xf32> to vector<8x1xf32>
    %84 = vector.broadcast %83 : vector<8x1xf32> to vector<8x8xf32>
    %85 = arith.subf %81, %84 : vector<8x8xf32>
    %86 = math.exp %85 : vector<8x8xf32>
    %cst_26 = arith.constant dense<0.000000e+00> : vector<8xf32>
    %87 = vector.multi_reduction <add>, %86, %cst_26 [1] : vector<8x8xf32> to vector<8xf32>
    %88 = vector.shape_cast %87 : vector<8xf32> to vector<8x1xf32>
    %89 = tpu.reciprocal %88 {approx = true} : vector<8x1xf32> -> vector<8x1xf32>
    %90 = vector.broadcast %89 : vector<8x1xf32> to vector<8x8xf32>
    %91 = arith.mulf %86, %90 : vector<8x8xf32>
    %92 = arith.truncf %91 : vector<8x8xf32> to vector<8x8xbf16>
    %cst_27 = arith.constant dense<0.000000e+00> : vector<8x16xf32>
    %93 = tpu.matmul %92, %77, %cst_27 {dimension_numbers = #tpu.dot_dimension_numbers<[1], [0], [0], [1], [0, 0, 1, 1], [], []>} : vector<8x8xbf16>, vector<8x16xbf16>, vector<8x16xf32> -> vector<8x16xf32>
    %94 = arith.truncf %93 : vector<8x16xf32> to vector<8x16xbf16>
    %95 = vector.extract_strided_slice %18 {offsets = [32, 0], sizes = [16, 64], strides = [1, 1]} : vector<64x64xbf16> to vector<16x64xbf16>
    %cst_28 = arith.constant dense<0.000000e+00> : vector<8x64xf32>
    %96 = tpu.matmul %94, %95, %cst_28 {dimension_numbers = #tpu.dot_dimension_numbers<[1], [0], [0], [1], [0, 0, 1, 1], [], []>} : vector<8x16xbf16>, vector<16x64xbf16>, vector<8x64xf32> -> vector<8x64xf32>
    %97 = arith.addf %71, %96 : vector<8x64xf32>
    %98 = vector.extract_strided_slice %9 {offsets = [0, 48], sizes = [8, 16], strides = [1, 1]} : vector<8x64xf32> to vector<8x16xf32>
    %99 = arith.truncf %98 : vector<8x16xf32> to vector<8x16xbf16>
    %100 = vector.extract_strided_slice %10 {offsets = [0, 48], sizes = [8, 16], strides = [1, 1]} : vector<8x64xf32> to vector<8x16xf32>
    %101 = arith.truncf %100 : vector<8x16xf32> to vector<8x16xbf16>
    %102 = vector.extract_strided_slice %11 {offsets = [0, 48], sizes = [8, 16], strides = [1, 1]} : vector<8x64xf32> to vector<8x16xf32>
    %103 = arith.truncf %102 : vector<8x16xf32> to vector<8x16xbf16>
    %cst_29 = arith.constant dense<0.000000e+00> : vector<8x8xf32>
    %104 = tpu.matmul %99, %101, %cst_29 {dimension_numbers = #tpu.dot_dimension_numbers<[1], [1], [0], [0], [0, 0, 1, 0], [], []>} : vector<8x16xbf16>, vector<8x16xbf16>, vector<8x8xf32> -> vector<8x8xf32>
    %cst_30 = arith.constant 2.500000e-01 : f32
    %105 = vector.broadcast %cst_30 : f32 to vector<8x8xf32>
    %106 = arith.mulf %104, %105 : vector<8x8xf32>
    %107 = arith.addf %106, %17 : vector<8x8xf32>
    %cst_31 = arith.constant dense<0xFF800000> : vector<8xf32>
    %108 = vector.multi_reduction <maximumf>, %107, %cst_31 [1] : vector<8x8xf32> to vector<8xf32>
    %109 = vector.shape_cast %108 : vector<8xf32> to vector<8x1xf32>
    %110 = vector.broadcast %109 : vector<8x1xf32> to vector<8x8xf32>
    %111 = arith.subf %107, %110 : vector<8x8xf32>
    %112 = math.exp %111 : vector<8x8xf32>
    %cst_32 = arith.constant dense<0.000000e+00> : vector<8xf32>
    %113 = vector.multi_reduction <add>, %112, %cst_32 [1] : vector<8x8xf32> to vector<8xf32>
    %114 = vector.shape_cast %113 : vector<8xf32> to vector<8x1xf32>
    %115 = tpu.reciprocal %114 {approx = true} : vector<8x1xf32> -> vector<8x1xf32>
    %116 = vector.broadcast %115 : vector<8x1xf32> to vector<8x8xf32>
    %117 = arith.mulf %112, %116 : vector<8x8xf32>
    %118 = arith.truncf %117 : vector<8x8xf32> to vector<8x8xbf16>
    %cst_33 = arith.constant dense<0.000000e+00> : vector<8x16xf32>
    %119 = tpu.matmul %118, %103, %cst_33 {dimension_numbers = #tpu.dot_dimension_numbers<[1], [0], [0], [1], [0, 0, 1, 1], [], []>} : vector<8x8xbf16>, vector<8x16xbf16>, vector<8x16xf32> -> vector<8x16xf32>
    %120 = arith.truncf %119 : vector<8x16xf32> to vector<8x16xbf16>
    %121 = vector.extract_strided_slice %18 {offsets = [48, 0], sizes = [16, 64], strides = [1, 1]} : vector<64x64xbf16> to vector<16x64xbf16>
    %cst_34 = arith.constant dense<0.000000e+00> : vector<8x64xf32>
    %122 = tpu.matmul %120, %121, %cst_34 {dimension_numbers = #tpu.dot_dimension_numbers<[1], [0], [0], [1], [0, 0, 1, 1], [], []>} : vector<8x16xbf16>, vector<16x64xbf16>, vector<8x64xf32> -> vector<8x64xf32>
    %123 = arith.addf %97, %122 : vector<8x64xf32>
    %124 = arith.addf %2, %123 : vector<8x64xf32>
    %c0_35 = arith.constant 0 : index
    %c0_36 = arith.constant 0 : index
    %125 = vector.load %arg5[%c0_35, %c0_36] : memref<1x64xf32, #tpu.memory_space<vmem>>, vector<1x64xf32>
    %126 = vector.broadcast %125 : vector<1x64xf32> to vector<8x64xf32>
    %127 = arith.addf %124, %126 : vector<8x64xf32>
    %c0_37 = arith.constant 0 : index
    %c0_38 = arith.constant 0 : index
    %128 = vector.load %arg6[%c0_37, %c0_38] : memref<1x64xf32, #tpu.memory_space<vmem>>, vector<1x64xf32>
    %c0_39 = arith.constant 0 : index
    %c0_40 = arith.constant 0 : index
    %129 = vector.load %arg7[%c0_39, %c0_40] : memref<1x64xf32, #tpu.memory_space<vmem>>, vector<1x64xf32>
    %cst_41 = arith.constant dense<0.000000e+00> : vector<8xf32>
    %130 = vector.multi_reduction <add>, %127, %cst_41 [1] : vector<8x64xf32> to vector<8xf32>
    %131 = vector.shape_cast %130 : vector<8xf32> to vector<8x1xf32>
    %cst_42 = arith.constant 6.400000e+01 : f32
    %132 = vector.broadcast %cst_42 : f32 to vector<8x1xf32>
    %133 = arith.divf %131, %132 : vector<8x1xf32>
    %134 = vector.broadcast %133 : vector<8x1xf32> to vector<8x64xf32>
    %135 = arith.subf %127, %134 : vector<8x64xf32>
    %136 = arith.mulf %135, %135 : vector<8x64xf32>
    %cst_43 = arith.constant dense<0.000000e+00> : vector<8xf32>
    %137 = vector.multi_reduction <add>, %136, %cst_43 [1] : vector<8x64xf32> to vector<8xf32>
    %138 = vector.shape_cast %137 : vector<8xf32> to vector<8x1xf32>
    %cst_44 = arith.constant 6.400000e+01 : f32
    %139 = vector.broadcast %cst_44 : f32 to vector<8x1xf32>
    %140 = arith.divf %138, %139 : vector<8x1xf32>
    %141 = vector.broadcast %133 : vector<8x1xf32> to vector<8x64xf32>
    %142 = arith.subf %127, %141 : vector<8x64xf32>
    %cst_45 = arith.constant 9.99999997E-7 : f32
    %143 = vector.broadcast %cst_45 : f32 to vector<8x1xf32>
    %144 = arith.addf %140, %143 : vector<8x1xf32>
    %145 = math.rsqrt %144 : vector<8x1xf32>
    %146 = vector.broadcast %145 : vector<8x1xf32> to vector<8x64xf32>
    %147 = arith.mulf %142, %146 : vector<8x64xf32>
    %148 = vector.broadcast %128 : vector<1x64xf32> to vector<8x64xf32>
    %149 = arith.mulf %147, %148 : vector<8x64xf32>
    %150 = vector.broadcast %129 : vector<1x64xf32> to vector<8x64xf32>
    %151 = arith.addf %149, %150 : vector<8x64xf32>
    %152 = arith.truncf %151 : vector<8x64xf32> to vector<8x64xbf16>
    %c0_46 = arith.constant 0 : index
    %c0_47 = arith.constant 0 : index
    %c0_48 = arith.constant 0 : index
    %153 = vector.load %arg8[%c0_46, %c0_47, %c0_48] : memref<1x8x64xbf16, #tpu.memory_space<vmem>>, vector<1x8x64xbf16>
    %154 = vector.shape_cast %153 : vector<1x8x64xbf16> to vector<8x64xbf16>
    %155 = vector.shape_cast %152 : vector<8x64xbf16> to vector<1x8x64xbf16>
    tpu.vector_store %arg8[%c0_46, %c0_47, %c0_48], %155 {strides = array<i32>} : memref<1x8x64xbf16, #tpu.memory_space<vmem>>, vector<1x8x64xbf16>,
    return
  }
  func.func @transform_0(%arg0: i32) -> (i32, i32, i32) {
    %c0_i32 = arith.constant 0 : i32
    %c0_i32_0 = arith.constant 0 : i32
    %c0_i32_1 = arith.constant 0 : i32
    return %arg0, %c0_i32, %c0_i32_0 : i32, i32, i32
  }
  func.func @transform_1(%arg0: i32) -> (i32, i32) {
    %c0_i32 = arith.constant 0 : i32
    %c0_i32_0 = arith.constant 0 : i32
    %c0_i32_1 = arith.constant 0 : i32
    return %c0_i32, %c0_i32_0 : i32, i32
  }
  func.func @transform_2(%arg0: i32) -> (i32, i32) {
    %c0_i32 = arith.constant 0 : i32
    %c0_i32_0 = arith.constant 0 : i32
    %c0_i32_1 = arith.constant 0 : i32
    return %c0_i32, %c0_i32_0 : i32, i32
  }
  func.func @transform_3(%arg0: i32) -> (i32, i32) {
    %c0_i32 = arith.constant 0 : i32
    %c0_i32_0 = arith.constant 0 : i32
    %c0_i32_1 = arith.constant 0 : i32
    return %c0_i32, %c0_i32_0 : i32, i32
  }
  func.func @transform_4(%arg0: i32) -> (i32, i32) {
    %c0_i32 = arith.constant 0 : i32
    %c0_i32_0 = arith.constant 0 : i32
    %c0_i32_1 = arith.constant 0 : i32
    return %c0_i32, %c0_i32_0 : i32, i32
  }
  func.func @transform_5(%arg0: i32) -> (i32, i32) {
    %c0_i32 = arith.constant 0 : i32
    %c0_i32_0 = arith.constant 0 : i32
    %c0_i32_1 = arith.constant 0 : i32
    return %c0_i32, %c0_i32_0 : i32, i32
  }
  func.func @transform_6(%arg0: i32) -> (i32, i32) {
    %c0_i32 = arith.constant 0 : i32
    %c0_i32_0 = arith.constant 0 : i32
    %c0_i32_1 = arith.constant 0 : i32
    return %c0_i32, %c0_i32_0 : i32, i32
  }
  func.func @transform_7(%arg0: i32) -> (i32, i32, i32) {
    %c0_i32 = arith.constant 0 : i32
    %c0_i32_0 = arith.constant 0 : i32
    %c0_i32_1 = arith.constant 0 : i32
    return %arg0, %c0_i32, %c0_i32_0 : i32, i32, i32
  }
}

module attributes {stable_mosaic.version = 11 : i64} {
  func.func @_linear_kernel(%arg0: i32, %arg1: memref<16x768xbf16, #tpu.memory_space<vmem>>, %arg2: memref<768x64xbf16, #tpu.memory_space<vmem>>, %arg3: memref<1x64xf32, #tpu.memory_space<vmem>>, %arg4: memref<16x64xbf16, #tpu.memory_space<vmem>>) attributes {dimension_semantics = [#tpu.dimension_semantics<parallel>], iteration_bounds = array<i64: 1>, scalar_prefetch = 0 : i64, scratch_operands = 0 : i64, tpu.core_type = #tpu.core_type<tc>, window_params = [{transform_indices = @transform_0, window_bounds = array<i64: 16, 768>}, {pipeline_mode = #tpu.pipeline_mode<synchronous>, transform_indices = @transform_1, window_bounds = array<i64: 768, 64>}, {pipeline_mode = #tpu.pipeline_mode<synchronous>, transform_indices = @transform_2, window_bounds = array<i64: 1, 64>}, {transform_indices = @transform_3, window_bounds = array<i64: 16, 64>}]} {
    %c0 = arith.constant 0 : index
    %c0_0 = arith.constant 0 : index
    %0 = vector.load %arg1[%c0, %c0_0] : memref<16x768xbf16, #tpu.memory_space<vmem>>, vector<16x768xbf16>
    %c0_1 = arith.constant 0 : index
    %c0_2 = arith.constant 0 : index
    %1 = vector.load %arg2[%c0_1, %c0_2] : memref<768x64xbf16, #tpu.memory_space<vmem>>, vector<768x64xbf16>
    %cst = arith.constant dense<0.000000e+00> : vector<16x64xf32>
    %2 = tpu.matmul %0, %1, %cst {dimension_numbers = #tpu.dot_dimension_numbers<[1], [0], [0], [1], [0, 0, 1, 1], [], []>} : vector<16x768xbf16>, vector<768x64xbf16>, vector<16x64xf32> -> vector<16x64xf32>
    %c0_3 = arith.constant 0 : index
    %c0_4 = arith.constant 0 : index
    %3 = vector.load %arg3[%c0_3, %c0_4] : memref<1x64xf32, #tpu.memory_space<vmem>>, vector<1x64xf32>
    %4 = vector.broadcast %3 : vector<1x64xf32> to vector<16x64xf32>
    %5 = arith.addf %2, %4 : vector<16x64xf32>
    %6 = arith.truncf %5 : vector<16x64xf32> to vector<16x64xbf16>
    %c0_5 = arith.constant 0 : index
    %c0_6 = arith.constant 0 : index
    %7 = vector.load %arg4[%c0_5, %c0_6] : memref<16x64xbf16, #tpu.memory_space<vmem>>, vector<16x64xbf16>
    tpu.vector_store %arg4[%c0_5, %c0_6], %6 {strides = array<i32>} : memref<16x64xbf16, #tpu.memory_space<vmem>>, vector<16x64xbf16>,
    return
  }
  func.func @transform_0(%arg0: i32) -> (i32, i32) {
    %c0_i32 = arith.constant 0 : i32
    %c0_i32_0 = arith.constant 0 : i32
    return %arg0, %c0_i32 : i32, i32
  }
  func.func @transform_1(%arg0: i32) -> (i32, i32) {
    %c0_i32 = arith.constant 0 : i32
    %c0_i32_0 = arith.constant 0 : i32
    %c0_i32_1 = arith.constant 0 : i32
    return %c0_i32, %c0_i32_0 : i32, i32
  }
  func.func @transform_2(%arg0: i32) -> (i32, i32) {
    %c0_i32 = arith.constant 0 : i32
    %c0_i32_0 = arith.constant 0 : i32
    %c0_i32_1 = arith.constant 0 : i32
    return %c0_i32, %c0_i32_0 : i32, i32
  }
  func.func @transform_3(%arg0: i32) -> (i32, i32) {
    %c0_i32 = arith.constant 0 : i32
    %c0_i32_0 = arith.constant 0 : i32
    return %arg0, %c0_i32 : i32, i32
  }
}

module attributes {stable_mosaic.version = 11 : i64} {
  func.func @_attn_block_kernel(%arg0: i32, %arg1: memref<1x5x64xbf16, #tpu.memory_space<vmem>>, %arg2: memref<1x64xf32, #tpu.memory_space<vmem>>, %arg3: memref<1x64xf32, #tpu.memory_space<vmem>>, %arg4: memref<64x192xbf16, #tpu.memory_space<vmem>>, %arg5: memref<1x192xf32, #tpu.memory_space<vmem>>, %arg6: memref<64x64xbf16, #tpu.memory_space<vmem>>, %arg7: memref<1x64xf32, #tpu.memory_space<vmem>>, %arg8: memref<1x5x64xbf16, #tpu.memory_space<vmem>>) attributes {dimension_semantics = [#tpu.dimension_semantics<parallel>], iteration_bounds = array<i64: 2>, scalar_prefetch = 0 : i64, scratch_operands = 0 : i64, tpu.core_type = #tpu.core_type<tc>, window_params = [{transform_indices = @transform_0, window_bounds = array<i64: 1, 5, 64>}, {pipeline_mode = #tpu.pipeline_mode<synchronous>, transform_indices = @transform_1, window_bounds = array<i64: 1, 64>}, {pipeline_mode = #tpu.pipeline_mode<synchronous>, transform_indices = @transform_2, window_bounds = array<i64: 1, 64>}, {pipeline_mode = #tpu.pipeline_mode<synchronous>, transform_indices = @transform_3, window_bounds = array<i64: 64, 192>}, {pipeline_mode = #tpu.pipeline_mode<synchronous>, transform_indices = @transform_4, window_bounds = array<i64: 1, 192>}, {pipeline_mode = #tpu.pipeline_mode<synchronous>, transform_indices = @transform_5, window_bounds = array<i64: 64, 64>}, {pipeline_mode = #tpu.pipeline_mode<synchronous>, transform_indices = @transform_6, window_bounds = array<i64: 1, 64>}, {transform_indices = @transform_7, window_bounds = array<i64: 1, 5, 64>}]} {
    %c0 = arith.constant 0 : index
    %c0_0 = arith.constant 0 : index
    %c0_1 = arith.constant 0 : index
    %0 = vector.load %arg1[%c0, %c0_0, %c0_1] : memref<1x5x64xbf16, #tpu.memory_space<vmem>>, vector<1x5x64xbf16>
    %1 = vector.shape_cast %0 : vector<1x5x64xbf16> to vector<5x64xbf16>
    %2 = arith.extf %1 : vector<5x64xbf16> to vector<5x64xf32>
    %c0_2 = arith.constant 0 : index
    %c0_3 = arith.constant 0 : index
    %3 = vector.load %arg2[%c0_2, %c0_3] : memref<1x64xf32, #tpu.memory_space<vmem>>, vector<1x64xf32>
    %c0_4 = arith.constant 0 : index
    %c0_5 = arith.constant 0 : index
    %4 = vector.load %arg3[%c0_4, %c0_5] : memref<1x64xf32, #tpu.memory_space<vmem>>, vector<1x64xf32>
    %cst = arith.constant dense<0.000000e+00> : vector<5xf32>
    %5 = vector.multi_reduction <add>, %2, %cst [1] : vector<5x64xf32> to vector<5xf32>
    %6 = vector.shape_cast %5 : vector<5xf32> to vector<5x1xf32>
    %cst_6 = arith.constant 6.400000e+01 : f32
    %7 = vector.broadcast %cst_6 : f32 to vector<5x1xf32>
    %8 = arith.divf %6, %7 : vector<5x1xf32>
    %9 = vector.broadcast %8 : vector<5x1xf32> to vector<5x64xf32>
    %10 = arith.subf %2, %9 : vector<5x64xf32>
    %11 = arith.mulf %10, %10 : vector<5x64xf32>
    %cst_7 = arith.constant dense<0.000000e+00> : vector<5xf32>
    %12 = vector.multi_reduction <add>, %11, %cst_7 [1] : vector<5x64xf32> to vector<5xf32>
    %13 = vector.shape_cast %12 : vector<5xf32> to vector<5x1xf32>
    %cst_8 = arith.constant 6.400000e+01 : f32
    %14 = vector.broadcast %cst_8 : f32 to vector<5x1xf32>
    %15 = arith.divf %13, %14 : vector<5x1xf32>
    %16 = vector.broadcast %8 : vector<5x1xf32> to vector<5x64xf32>
    %17 = arith.subf %2, %16 : vector<5x64xf32>
    %cst_9 = arith.constant 9.99999996E-13 : f32
    %18 = vector.broadcast %cst_9 : f32 to vector<5x1xf32>
    %19 = arith.addf %15, %18 : vector<5x1xf32>
    %20 = math.rsqrt %19 : vector<5x1xf32>
    %21 = vector.broadcast %20 : vector<5x1xf32> to vector<5x64xf32>
    %22 = arith.mulf %17, %21 : vector<5x64xf32>
    %23 = vector.broadcast %3 : vector<1x64xf32> to vector<5x64xf32>
    %24 = arith.mulf %22, %23 : vector<5x64xf32>
    %25 = vector.broadcast %4 : vector<1x64xf32> to vector<5x64xf32>
    %26 = arith.addf %24, %25 : vector<5x64xf32>
    %c0_10 = arith.constant 0 : index
    %c0_11 = arith.constant 0 : index
    %27 = vector.load %arg4[%c0_10, %c0_11] : memref<64x192xbf16, #tpu.memory_space<vmem>>, vector<64x192xbf16>
    %c0_12 = arith.constant 0 : index
    %c0_13 = arith.constant 0 : index
    %28 = vector.load %arg5[%c0_12, %c0_13] : memref<1x192xf32, #tpu.memory_space<vmem>>, vector<1x192xf32>
    %29 = arith.truncf %26 : vector<5x64xf32> to vector<5x64xbf16>
    %cst_14 = arith.constant dense<0.000000e+00> : vector<5x192xf32>
    %30 = tpu.matmul %29, %27, %cst_14 {dimension_numbers = #tpu.dot_dimension_numbers<[1], [0], [0], [1], [0, 0, 1, 1], [], []>} : vector<5x64xbf16>, vector<64x192xbf16>, vector<5x192xf32> -> vector<5x192xf32>
    %31 = vector.broadcast %28 : vector<1x192xf32> to vector<5x192xf32>
    %32 = arith.addf %30, %31 : vector<5x192xf32>
    %33 = vector.extract_strided_slice %32 {offsets = [0, 0], sizes = [5, 64], strides = [1, 1]} : vector<5x192xf32> to vector<5x64xf32>
    %34 = vector.extract_strided_slice %32 {offsets = [0, 64], sizes = [5, 64], strides = [1, 1]} : vector<5x192xf32> to vector<5x64xf32>
    %35 = vector.extract_strided_slice %32 {offsets = [0, 128], sizes = [5, 64], strides = [1, 1]} : vector<5x192xf32> to vector<5x64xf32>
    %c0_15 = arith.constant 0 : index
    %c0_16 = arith.constant 0 : index
    %36 = vector.load %arg6[%c0_15, %c0_16] : memref<64x64xbf16, #tpu.memory_space<vmem>>, vector<64x64xbf16>
    %cst_17 = arith.constant 0.000000e+00 : f32
    %37 = vector.broadcast %cst_17 : f32 to vector<5x64xf32>
    %38 = vector.extract_strided_slice %33 {offsets = [0, 0], sizes = [5, 16], strides = [1, 1]} : vector<5x64xf32> to vector<5x16xf32>
    %39 = arith.truncf %38 : vector<5x16xf32> to vector<5x16xbf16>
    %40 = vector.extract_strided_slice %34 {offsets = [0, 0], sizes = [5, 16], strides = [1, 1]} : vector<5x64xf32> to vector<5x16xf32>
    %41 = arith.truncf %40 : vector<5x16xf32> to vector<5x16xbf16>
    %42 = vector.extract_strided_slice %35 {offsets = [0, 0], sizes = [5, 16], strides = [1, 1]} : vector<5x64xf32> to vector<5x16xf32>
    %43 = arith.truncf %42 : vector<5x16xf32> to vector<5x16xbf16>
    %cst_18 = arith.constant dense<0.000000e+00> : vector<5x5xf32>
    %44 = tpu.matmul %39, %41, %cst_18 {dimension_numbers = #tpu.dot_dimension_numbers<[1], [1], [0], [0], [0, 0, 1, 0], [], []>} : vector<5x16xbf16>, vector<5x16xbf16>, vector<5x5xf32> -> vector<5x5xf32>
    %cst_19 = arith.constant 2.500000e-01 : f32
    %45 = vector.broadcast %cst_19 : f32 to vector<5x5xf32>
    %46 = arith.mulf %44, %45 : vector<5x5xf32>
    %cst_20 = arith.constant dense<0xFF800000> : vector<5xf32>
    %47 = vector.multi_reduction <maximumf>, %46, %cst_20 [1] : vector<5x5xf32> to vector<5xf32>
    %48 = vector.shape_cast %47 : vector<5xf32> to vector<5x1xf32>
    %49 = vector.broadcast %48 : vector<5x1xf32> to vector<5x5xf32>
    %50 = arith.subf %46, %49 : vector<5x5xf32>
    %51 = math.exp %50 : vector<5x5xf32>
    %cst_21 = arith.constant dense<0.000000e+00> : vector<5xf32>
    %52 = vector.multi_reduction <add>, %51, %cst_21 [1] : vector<5x5xf32> to vector<5xf32>
    %53 = vector.shape_cast %52 : vector<5xf32> to vector<5x1xf32>
    %54 = tpu.reciprocal %53 {approx = true} : vector<5x1xf32> -> vector<5x1xf32>
    %55 = vector.broadcast %54 : vector<5x1xf32> to vector<5x5xf32>
    %56 = arith.mulf %51, %55 : vector<5x5xf32>
    %57 = arith.truncf %56 : vector<5x5xf32> to vector<5x5xbf16>
    %cst_22 = arith.constant dense<0.000000e+00> : vector<5x16xf32>
    %58 = tpu.matmul %57, %43, %cst_22 {dimension_numbers = #tpu.dot_dimension_numbers<[1], [0], [0], [1], [0, 0, 1, 1], [], []>} : vector<5x5xbf16>, vector<5x16xbf16>, vector<5x16xf32> -> vector<5x16xf32>
    %59 = arith.truncf %58 : vector<5x16xf32> to vector<5x16xbf16>
    %60 = vector.extract_strided_slice %36 {offsets = [0, 0], sizes = [16, 64], strides = [1, 1]} : vector<64x64xbf16> to vector<16x64xbf16>
    %cst_23 = arith.constant dense<0.000000e+00> : vector<5x64xf32>
    %61 = tpu.matmul %59, %60, %cst_23 {dimension_numbers = #tpu.dot_dimension_numbers<[1], [0], [0], [1], [0, 0, 1, 1], [], []>} : vector<5x16xbf16>, vector<16x64xbf16>, vector<5x64xf32> -> vector<5x64xf32>
    %62 = arith.addf %37, %61 : vector<5x64xf32>
    %63 = vector.extract_strided_slice %33 {offsets = [0, 16], sizes = [5, 16], strides = [1, 1]} : vector<5x64xf32> to vector<5x16xf32>
    %64 = arith.truncf %63 : vector<5x16xf32> to vector<5x16xbf16>
    %65 = vector.extract_strided_slice %34 {offsets = [0, 16], sizes = [5, 16], strides = [1, 1]} : vector<5x64xf32> to vector<5x16xf32>
    %66 = arith.truncf %65 : vector<5x16xf32> to vector<5x16xbf16>
    %67 = vector.extract_strided_slice %35 {offsets = [0, 16], sizes = [5, 16], strides = [1, 1]} : vector<5x64xf32> to vector<5x16xf32>
    %68 = arith.truncf %67 : vector<5x16xf32> to vector<5x16xbf16>
    %cst_24 = arith.constant dense<0.000000e+00> : vector<5x5xf32>
    %69 = tpu.matmul %64, %66, %cst_24 {dimension_numbers = #tpu.dot_dimension_numbers<[1], [1], [0], [0], [0, 0, 1, 0], [], []>} : vector<5x16xbf16>, vector<5x16xbf16>, vector<5x5xf32> -> vector<5x5xf32>
    %cst_25 = arith.constant 2.500000e-01 : f32
    %70 = vector.broadcast %cst_25 : f32 to vector<5x5xf32>
    %71 = arith.mulf %69, %70 : vector<5x5xf32>
    %cst_26 = arith.constant dense<0xFF800000> : vector<5xf32>
    %72 = vector.multi_reduction <maximumf>, %71, %cst_26 [1] : vector<5x5xf32> to vector<5xf32>
    %73 = vector.shape_cast %72 : vector<5xf32> to vector<5x1xf32>
    %74 = vector.broadcast %73 : vector<5x1xf32> to vector<5x5xf32>
    %75 = arith.subf %71, %74 : vector<5x5xf32>
    %76 = math.exp %75 : vector<5x5xf32>
    %cst_27 = arith.constant dense<0.000000e+00> : vector<5xf32>
    %77 = vector.multi_reduction <add>, %76, %cst_27 [1] : vector<5x5xf32> to vector<5xf32>
    %78 = vector.shape_cast %77 : vector<5xf32> to vector<5x1xf32>
    %79 = tpu.reciprocal %78 {approx = true} : vector<5x1xf32> -> vector<5x1xf32>
    %80 = vector.broadcast %79 : vector<5x1xf32> to vector<5x5xf32>
    %81 = arith.mulf %76, %80 : vector<5x5xf32>
    %82 = arith.truncf %81 : vector<5x5xf32> to vector<5x5xbf16>
    %cst_28 = arith.constant dense<0.000000e+00> : vector<5x16xf32>
    %83 = tpu.matmul %82, %68, %cst_28 {dimension_numbers = #tpu.dot_dimension_numbers<[1], [0], [0], [1], [0, 0, 1, 1], [], []>} : vector<5x5xbf16>, vector<5x16xbf16>, vector<5x16xf32> -> vector<5x16xf32>
    %84 = arith.truncf %83 : vector<5x16xf32> to vector<5x16xbf16>
    %85 = vector.extract_strided_slice %36 {offsets = [16, 0], sizes = [16, 64], strides = [1, 1]} : vector<64x64xbf16> to vector<16x64xbf16>
    %cst_29 = arith.constant dense<0.000000e+00> : vector<5x64xf32>
    %86 = tpu.matmul %84, %85, %cst_29 {dimension_numbers = #tpu.dot_dimension_numbers<[1], [0], [0], [1], [0, 0, 1, 1], [], []>} : vector<5x16xbf16>, vector<16x64xbf16>, vector<5x64xf32> -> vector<5x64xf32>
    %87 = arith.addf %62, %86 : vector<5x64xf32>
    %88 = vector.extract_strided_slice %33 {offsets = [0, 32], sizes = [5, 16], strides = [1, 1]} : vector<5x64xf32> to vector<5x16xf32>
    %89 = arith.truncf %88 : vector<5x16xf32> to vector<5x16xbf16>
    %90 = vector.extract_strided_slice %34 {offsets = [0, 32], sizes = [5, 16], strides = [1, 1]} : vector<5x64xf32> to vector<5x16xf32>
    %91 = arith.truncf %90 : vector<5x16xf32> to vector<5x16xbf16>
    %92 = vector.extract_strided_slice %35 {offsets = [0, 32], sizes = [5, 16], strides = [1, 1]} : vector<5x64xf32> to vector<5x16xf32>
    %93 = arith.truncf %92 : vector<5x16xf32> to vector<5x16xbf16>
    %cst_30 = arith.constant dense<0.000000e+00> : vector<5x5xf32>
    %94 = tpu.matmul %89, %91, %cst_30 {dimension_numbers = #tpu.dot_dimension_numbers<[1], [1], [0], [0], [0, 0, 1, 0], [], []>} : vector<5x16xbf16>, vector<5x16xbf16>, vector<5x5xf32> -> vector<5x5xf32>
    %cst_31 = arith.constant 2.500000e-01 : f32
    %95 = vector.broadcast %cst_31 : f32 to vector<5x5xf32>
    %96 = arith.mulf %94, %95 : vector<5x5xf32>
    %cst_32 = arith.constant dense<0xFF800000> : vector<5xf32>
    %97 = vector.multi_reduction <maximumf>, %96, %cst_32 [1] : vector<5x5xf32> to vector<5xf32>
    %98 = vector.shape_cast %97 : vector<5xf32> to vector<5x1xf32>
    %99 = vector.broadcast %98 : vector<5x1xf32> to vector<5x5xf32>
    %100 = arith.subf %96, %99 : vector<5x5xf32>
    %101 = math.exp %100 : vector<5x5xf32>
    %cst_33 = arith.constant dense<0.000000e+00> : vector<5xf32>
    %102 = vector.multi_reduction <add>, %101, %cst_33 [1] : vector<5x5xf32> to vector<5xf32>
    %103 = vector.shape_cast %102 : vector<5xf32> to vector<5x1xf32>
    %104 = tpu.reciprocal %103 {approx = true} : vector<5x1xf32> -> vector<5x1xf32>
    %105 = vector.broadcast %104 : vector<5x1xf32> to vector<5x5xf32>
    %106 = arith.mulf %101, %105 : vector<5x5xf32>
    %107 = arith.truncf %106 : vector<5x5xf32> to vector<5x5xbf16>
    %cst_34 = arith.constant dense<0.000000e+00> : vector<5x16xf32>
    %108 = tpu.matmul %107, %93, %cst_34 {dimension_numbers = #tpu.dot_dimension_numbers<[1], [0], [0], [1], [0, 0, 1, 1], [], []>} : vector<5x5xbf16>, vector<5x16xbf16>, vector<5x16xf32> -> vector<5x16xf32>
    %109 = arith.truncf %108 : vector<5x16xf32> to vector<5x16xbf16>
    %110 = vector.extract_strided_slice %36 {offsets = [32, 0], sizes = [16, 64], strides = [1, 1]} : vector<64x64xbf16> to vector<16x64xbf16>
    %cst_35 = arith.constant dense<0.000000e+00> : vector<5x64xf32>
    %111 = tpu.matmul %109, %110, %cst_35 {dimension_numbers = #tpu.dot_dimension_numbers<[1], [0], [0], [1], [0, 0, 1, 1], [], []>} : vector<5x16xbf16>, vector<16x64xbf16>, vector<5x64xf32> -> vector<5x64xf32>
    %112 = arith.addf %87, %111 : vector<5x64xf32>
    %113 = vector.extract_strided_slice %33 {offsets = [0, 48], sizes = [5, 16], strides = [1, 1]} : vector<5x64xf32> to vector<5x16xf32>
    %114 = arith.truncf %113 : vector<5x16xf32> to vector<5x16xbf16>
    %115 = vector.extract_strided_slice %34 {offsets = [0, 48], sizes = [5, 16], strides = [1, 1]} : vector<5x64xf32> to vector<5x16xf32>
    %116 = arith.truncf %115 : vector<5x16xf32> to vector<5x16xbf16>
    %117 = vector.extract_strided_slice %35 {offsets = [0, 48], sizes = [5, 16], strides = [1, 1]} : vector<5x64xf32> to vector<5x16xf32>
    %118 = arith.truncf %117 : vector<5x16xf32> to vector<5x16xbf16>
    %cst_36 = arith.constant dense<0.000000e+00> : vector<5x5xf32>
    %119 = tpu.matmul %114, %116, %cst_36 {dimension_numbers = #tpu.dot_dimension_numbers<[1], [1], [0], [0], [0, 0, 1, 0], [], []>} : vector<5x16xbf16>, vector<5x16xbf16>, vector<5x5xf32> -> vector<5x5xf32>
    %cst_37 = arith.constant 2.500000e-01 : f32
    %120 = vector.broadcast %cst_37 : f32 to vector<5x5xf32>
    %121 = arith.mulf %119, %120 : vector<5x5xf32>
    %cst_38 = arith.constant dense<0xFF800000> : vector<5xf32>
    %122 = vector.multi_reduction <maximumf>, %121, %cst_38 [1] : vector<5x5xf32> to vector<5xf32>
    %123 = vector.shape_cast %122 : vector<5xf32> to vector<5x1xf32>
    %124 = vector.broadcast %123 : vector<5x1xf32> to vector<5x5xf32>
    %125 = arith.subf %121, %124 : vector<5x5xf32>
    %126 = math.exp %125 : vector<5x5xf32>
    %cst_39 = arith.constant dense<0.000000e+00> : vector<5xf32>
    %127 = vector.multi_reduction <add>, %126, %cst_39 [1] : vector<5x5xf32> to vector<5xf32>
    %128 = vector.shape_cast %127 : vector<5xf32> to vector<5x1xf32>
    %129 = tpu.reciprocal %128 {approx = true} : vector<5x1xf32> -> vector<5x1xf32>
    %130 = vector.broadcast %129 : vector<5x1xf32> to vector<5x5xf32>
    %131 = arith.mulf %126, %130 : vector<5x5xf32>
    %132 = arith.truncf %131 : vector<5x5xf32> to vector<5x5xbf16>
    %cst_40 = arith.constant dense<0.000000e+00> : vector<5x16xf32>
    %133 = tpu.matmul %132, %118, %cst_40 {dimension_numbers = #tpu.dot_dimension_numbers<[1], [0], [0], [1], [0, 0, 1, 1], [], []>} : vector<5x5xbf16>, vector<5x16xbf16>, vector<5x16xf32> -> vector<5x16xf32>
    %134 = arith.truncf %133 : vector<5x16xf32> to vector<5x16xbf16>
    %135 = vector.extract_strided_slice %36 {offsets = [48, 0], sizes = [16, 64], strides = [1, 1]} : vector<64x64xbf16> to vector<16x64xbf16>
    %cst_41 = arith.constant dense<0.000000e+00> : vector<5x64xf32>
    %136 = tpu.matmul %134, %135, %cst_41 {dimension_numbers = #tpu.dot_dimension_numbers<[1], [0], [0], [1], [0, 0, 1, 1], [], []>} : vector<5x16xbf16>, vector<16x64xbf16>, vector<5x64xf32> -> vector<5x64xf32>
    %137 = arith.addf %112, %136 : vector<5x64xf32>
    %138 = arith.addf %2, %137 : vector<5x64xf32>
    %c0_42 = arith.constant 0 : index
    %c0_43 = arith.constant 0 : index
    %139 = vector.load %arg7[%c0_42, %c0_43] : memref<1x64xf32, #tpu.memory_space<vmem>>, vector<1x64xf32>
    %140 = vector.broadcast %139 : vector<1x64xf32> to vector<5x64xf32>
    %141 = arith.addf %138, %140 : vector<5x64xf32>
    %142 = arith.truncf %141 : vector<5x64xf32> to vector<5x64xbf16>
    %c0_44 = arith.constant 0 : index
    %c0_45 = arith.constant 0 : index
    %c0_46 = arith.constant 0 : index
    %143 = vector.load %arg8[%c0_44, %c0_45, %c0_46] : memref<1x5x64xbf16, #tpu.memory_space<vmem>>, vector<1x5x64xbf16>
    %144 = vector.shape_cast %143 : vector<1x5x64xbf16> to vector<5x64xbf16>
    %145 = vector.shape_cast %142 : vector<5x64xbf16> to vector<1x5x64xbf16>
    tpu.vector_store %arg8[%c0_44, %c0_45, %c0_46], %145 {strides = array<i32>} : memref<1x5x64xbf16, #tpu.memory_space<vmem>>, vector<1x5x64xbf16>,
    return
  }
  func.func @transform_0(%arg0: i32) -> (i32, i32, i32) {
    %c0_i32 = arith.constant 0 : i32
    %c0_i32_0 = arith.constant 0 : i32
    %c0_i32_1 = arith.constant 0 : i32
    return %arg0, %c0_i32, %c0_i32_0 : i32, i32, i32
  }
  func.func @transform_1(%arg0: i32) -> (i32, i32) {
    %c0_i32 = arith.constant 0 : i32
    %c0_i32_0 = arith.constant 0 : i32
    %c0_i32_1 = arith.constant 0 : i32
    return %c0_i32, %c0_i32_0 : i32, i32
  }
  func.func @transform_2(%arg0: i32) -> (i32, i32) {
    %c0_i32 = arith.constant 0 : i32
    %c0_i32_0 = arith.constant 0 : i32
    %c0_i32_1 = arith.constant 0 : i32
    return %c0_i32, %c0_i32_0 : i32, i32
  }
  func.func @transform_3(%arg0: i32) -> (i32, i32) {
    %c0_i32 = arith.constant 0 : i32
    %c0_i32_0 = arith.constant 0 : i32
    %c0_i32_1 = arith.constant 0 : i32
    return %c0_i32, %c0_i32_0 : i32, i32
  }
  func.func @transform_4(%arg0: i32) -> (i32, i32) {
    %c0_i32 = arith.constant 0 : i32
    %c0_i32_0 = arith.constant 0 : i32
    %c0_i32_1 = arith.constant 0 : i32
    return %c0_i32, %c0_i32_0 : i32, i32
  }
  func.func @transform_5(%arg0: i32) -> (i32, i32) {
    %c0_i32 = arith.constant 0 : i32
    %c0_i32_0 = arith.constant 0 : i32
    %c0_i32_1 = arith.constant 0 : i32
    return %c0_i32, %c0_i32_0 : i32, i32
  }
  func.func @transform_6(%arg0: i32) -> (i32, i32) {
    %c0_i32 = arith.constant 0 : i32
    %c0_i32_0 = arith.constant 0 : i32
    %c0_i32_1 = arith.constant 0 : i32
    return %c0_i32, %c0_i32_0 : i32, i32
  }
  func.func @transform_7(%arg0: i32) -> (i32, i32, i32) {
    %c0_i32 = arith.constant 0 : i32
    %c0_i32_0 = arith.constant 0 : i32
    %c0_i32_1 = arith.constant 0 : i32
    return %arg0, %c0_i32, %c0_i32_0 : i32, i32, i32
  }
}

module attributes {stable_mosaic.version = 11 : i64} {
  func.func @_ffn_kernel(%arg0: i32, %arg1: memref<16x64xbf16, #tpu.memory_space<vmem>>, %arg2: memref<1x64xf32, #tpu.memory_space<vmem>>, %arg3: memref<1x64xf32, #tpu.memory_space<vmem>>, %arg4: memref<64x128xbf16, #tpu.memory_space<vmem>>, %arg5: memref<1x128xf32, #tpu.memory_space<vmem>>, %arg6: memref<128x64xbf16, #tpu.memory_space<vmem>>, %arg7: memref<1x64xf32, #tpu.memory_space<vmem>>, %arg8: memref<16x64xbf16, #tpu.memory_space<vmem>>) attributes {dimension_semantics = [#tpu.dimension_semantics<parallel>], iteration_bounds = array<i64: 1>, scalar_prefetch = 0 : i64, scratch_operands = 0 : i64, tpu.core_type = #tpu.core_type<tc>, window_params = [{transform_indices = @transform_0, window_bounds = array<i64: 16, 64>}, {pipeline_mode = #tpu.pipeline_mode<synchronous>, transform_indices = @transform_1, window_bounds = array<i64: 1, 64>}, {pipeline_mode = #tpu.pipeline_mode<synchronous>, transform_indices = @transform_2, window_bounds = array<i64: 1, 64>}, {pipeline_mode = #tpu.pipeline_mode<synchronous>, transform_indices = @transform_3, window_bounds = array<i64: 64, 128>}, {pipeline_mode = #tpu.pipeline_mode<synchronous>, transform_indices = @transform_4, window_bounds = array<i64: 1, 128>}, {pipeline_mode = #tpu.pipeline_mode<synchronous>, transform_indices = @transform_5, window_bounds = array<i64: 128, 64>}, {pipeline_mode = #tpu.pipeline_mode<synchronous>, transform_indices = @transform_6, window_bounds = array<i64: 1, 64>}, {transform_indices = @transform_7, window_bounds = array<i64: 16, 64>}]} {
    %c0 = arith.constant 0 : index
    %c0_0 = arith.constant 0 : index
    %0 = vector.load %arg1[%c0, %c0_0] : memref<16x64xbf16, #tpu.memory_space<vmem>>, vector<16x64xbf16>
    %1 = arith.extf %0 : vector<16x64xbf16> to vector<16x64xf32>
    %c0_1 = arith.constant 0 : index
    %c0_2 = arith.constant 0 : index
    %2 = vector.load %arg2[%c0_1, %c0_2] : memref<1x64xf32, #tpu.memory_space<vmem>>, vector<1x64xf32>
    %c0_3 = arith.constant 0 : index
    %c0_4 = arith.constant 0 : index
    %3 = vector.load %arg3[%c0_3, %c0_4] : memref<1x64xf32, #tpu.memory_space<vmem>>, vector<1x64xf32>
    %cst = arith.constant dense<0.000000e+00> : vector<16xf32>
    %4 = vector.multi_reduction <add>, %1, %cst [1] : vector<16x64xf32> to vector<16xf32>
    %5 = vector.shape_cast %4 : vector<16xf32> to vector<16x1xf32>
    %cst_5 = arith.constant 6.400000e+01 : f32
    %6 = vector.broadcast %cst_5 : f32 to vector<16x1xf32>
    %7 = arith.divf %5, %6 : vector<16x1xf32>
    %8 = vector.broadcast %7 : vector<16x1xf32> to vector<16x64xf32>
    %9 = arith.subf %1, %8 : vector<16x64xf32>
    %10 = arith.mulf %9, %9 : vector<16x64xf32>
    %cst_6 = arith.constant dense<0.000000e+00> : vector<16xf32>
    %11 = vector.multi_reduction <add>, %10, %cst_6 [1] : vector<16x64xf32> to vector<16xf32>
    %12 = vector.shape_cast %11 : vector<16xf32> to vector<16x1xf32>
    %cst_7 = arith.constant 6.400000e+01 : f32
    %13 = vector.broadcast %cst_7 : f32 to vector<16x1xf32>
    %14 = arith.divf %12, %13 : vector<16x1xf32>
    %15 = vector.broadcast %7 : vector<16x1xf32> to vector<16x64xf32>
    %16 = arith.subf %1, %15 : vector<16x64xf32>
    %cst_8 = arith.constant 9.99999996E-13 : f32
    %17 = vector.broadcast %cst_8 : f32 to vector<16x1xf32>
    %18 = arith.addf %14, %17 : vector<16x1xf32>
    %19 = math.rsqrt %18 : vector<16x1xf32>
    %20 = vector.broadcast %19 : vector<16x1xf32> to vector<16x64xf32>
    %21 = arith.mulf %16, %20 : vector<16x64xf32>
    %22 = vector.broadcast %2 : vector<1x64xf32> to vector<16x64xf32>
    %23 = arith.mulf %21, %22 : vector<16x64xf32>
    %24 = vector.broadcast %3 : vector<1x64xf32> to vector<16x64xf32>
    %25 = arith.addf %23, %24 : vector<16x64xf32>
    %26 = arith.truncf %25 : vector<16x64xf32> to vector<16x64xbf16>
    %c0_9 = arith.constant 0 : index
    %c0_10 = arith.constant 0 : index
    %27 = vector.load %arg4[%c0_9, %c0_10] : memref<64x128xbf16, #tpu.memory_space<vmem>>, vector<64x128xbf16>
    %cst_11 = arith.constant dense<0.000000e+00> : vector<16x128xf32>
    %28 = tpu.matmul %26, %27, %cst_11 {dimension_numbers = #tpu.dot_dimension_numbers<[1], [0], [0], [1], [0, 0, 1, 1], [], []>} : vector<16x64xbf16>, vector<64x128xbf16>, vector<16x128xf32> -> vector<16x128xf32>
    %c0_12 = arith.constant 0 : index
    %c0_13 = arith.constant 0 : index
    %29 = vector.load %arg5[%c0_12, %c0_13] : memref<1x128xf32, #tpu.memory_space<vmem>>, vector<1x128xf32>
    %30 = vector.broadcast %29 : vector<1x128xf32> to vector<16x128xf32>
    %31 = arith.addf %28, %30 : vector<16x128xf32>
    %32 = arith.mulf %31, %31 : vector<16x128xf32>
    %33 = arith.mulf %31, %32 : vector<16x128xf32>
    %cst_14 = arith.constant 4.471500e-02 : f32
    %34 = vector.broadcast %cst_14 : f32 to vector<16x128xf32>
    %35 = arith.mulf %34, %33 : vector<16x128xf32>
    %36 = arith.addf %31, %35 : vector<16x128xf32>
    %cst_15 = arith.constant 0.797884583 : f32
    %37 = vector.broadcast %cst_15 : f32 to vector<16x128xf32>
    %38 = arith.mulf %37, %36 : vector<16x128xf32>
    %39 = math.tanh %38 : vector<16x128xf32>
    %cst_16 = arith.constant 1.000000e+00 : f32
    %40 = vector.broadcast %cst_16 : f32 to vector<16x128xf32>
    %41 = arith.addf %40, %39 : vector<16x128xf32>
    %cst_17 = arith.constant 5.000000e-01 : f32
    %42 = vector.broadcast %cst_17 : f32 to vector<16x128xf32>
    %43 = arith.mulf %42, %41 : vector<16x128xf32>
    %44 = arith.mulf %31, %43 : vector<16x128xf32>
    %45 = arith.truncf %44 : vector<16x128xf32> to vector<16x128xbf16>
    %c0_18 = arith.constant 0 : index
    %c0_19 = arith.constant 0 : index
    %46 = vector.load %arg6[%c0_18, %c0_19] : memref<128x64xbf16, #tpu.memory_space<vmem>>, vector<128x64xbf16>
    %cst_20 = arith.constant dense<0.000000e+00> : vector<16x64xf32>
    %47 = tpu.matmul %45, %46, %cst_20 {dimension_numbers = #tpu.dot_dimension_numbers<[1], [0], [0], [1], [0, 0, 1, 1], [], []>} : vector<16x128xbf16>, vector<128x64xbf16>, vector<16x64xf32> -> vector<16x64xf32>
    %c0_21 = arith.constant 0 : index
    %c0_22 = arith.constant 0 : index
    %48 = vector.load %arg7[%c0_21, %c0_22] : memref<1x64xf32, #tpu.memory_space<vmem>>, vector<1x64xf32>
    %49 = vector.broadcast %48 : vector<1x64xf32> to vector<16x64xf32>
    %50 = arith.addf %47, %49 : vector<16x64xf32>
    %51 = arith.addf %1, %50 : vector<16x64xf32>
    %52 = arith.truncf %51 : vector<16x64xf32> to vector<16x64xbf16>
    %c0_23 = arith.constant 0 : index
    %c0_24 = arith.constant 0 : index
    %53 = vector.load %arg8[%c0_23, %c0_24] : memref<16x64xbf16, #tpu.memory_space<vmem>>, vector<16x64xbf16>
    tpu.vector_store %arg8[%c0_23, %c0_24], %52 {strides = array<i32>} : memref<16x64xbf16, #tpu.memory_space<vmem>>, vector<16x64xbf16>,
    return
  }
  func.func @transform_0(%arg0: i32) -> (i32, i32) {
    %c0_i32 = arith.constant 0 : i32
    %c0_i32_0 = arith.constant 0 : i32
    return %arg0, %c0_i32 : i32, i32
  }
  func.func @transform_1(%arg0: i32) -> (i32, i32) {
    %c0_i32 = arith.constant 0 : i32
    %c0_i32_0 = arith.constant 0 : i32
    %c0_i32_1 = arith.constant 0 : i32
    return %c0_i32, %c0_i32_0 : i32, i32
  }
  func.func @transform_2(%arg0: i32) -> (i32, i32) {
    %c0_i32 = arith.constant 0 : i32
    %c0_i32_0 = arith.constant 0 : i32
    %c0_i32_1 = arith.constant 0 : i32
    return %c0_i32, %c0_i32_0 : i32, i32
  }
  func.func @transform_3(%arg0: i32) -> (i32, i32) {
    %c0_i32 = arith.constant 0 : i32
    %c0_i32_0 = arith.constant 0 : i32
    %c0_i32_1 = arith.constant 0 : i32
    return %c0_i32, %c0_i32_0 : i32, i32
  }
  func.func @transform_4(%arg0: i32) -> (i32, i32) {
    %c0_i32 = arith.constant 0 : i32
    %c0_i32_0 = arith.constant 0 : i32
    %c0_i32_1 = arith.constant 0 : i32
    return %c0_i32, %c0_i32_0 : i32, i32
  }
  func.func @transform_5(%arg0: i32) -> (i32, i32) {
    %c0_i32 = arith.constant 0 : i32
    %c0_i32_0 = arith.constant 0 : i32
    %c0_i32_1 = arith.constant 0 : i32
    return %c0_i32, %c0_i32_0 : i32, i32
  }
  func.func @transform_6(%arg0: i32) -> (i32, i32) {
    %c0_i32 = arith.constant 0 : i32
    %c0_i32_0 = arith.constant 0 : i32
    %c0_i32_1 = arith.constant 0 : i32
    return %c0_i32, %c0_i32_0 : i32, i32
  }
  func.func @transform_7(%arg0: i32) -> (i32, i32) {
    %c0_i32 = arith.constant 0 : i32
    %c0_i32_0 = arith.constant 0 : i32
    return %arg0, %c0_i32 : i32, i32
  }
}

module attributes {stable_mosaic.version = 11 : i64} {
  func.func @_ffn_kernel(%arg0: i32, %arg1: memref<16x64xbf16, #tpu.memory_space<vmem>>, %arg2: memref<1x64xf32, #tpu.memory_space<vmem>>, %arg3: memref<1x64xf32, #tpu.memory_space<vmem>>, %arg4: memref<64x128xbf16, #tpu.memory_space<vmem>>, %arg5: memref<1x128xf32, #tpu.memory_space<vmem>>, %arg6: memref<128x64xbf16, #tpu.memory_space<vmem>>, %arg7: memref<1x64xf32, #tpu.memory_space<vmem>>, %arg8: memref<1x64xf32, #tpu.memory_space<vmem>>, %arg9: memref<1x64xf32, #tpu.memory_space<vmem>>, %arg10: memref<16x64xbf16, #tpu.memory_space<vmem>>) attributes {dimension_semantics = [#tpu.dimension_semantics<parallel>], iteration_bounds = array<i64: 1>, scalar_prefetch = 0 : i64, scratch_operands = 0 : i64, tpu.core_type = #tpu.core_type<tc>, window_params = [{transform_indices = @transform_0, window_bounds = array<i64: 16, 64>}, {pipeline_mode = #tpu.pipeline_mode<synchronous>, transform_indices = @transform_1, window_bounds = array<i64: 1, 64>}, {pipeline_mode = #tpu.pipeline_mode<synchronous>, transform_indices = @transform_2, window_bounds = array<i64: 1, 64>}, {pipeline_mode = #tpu.pipeline_mode<synchronous>, transform_indices = @transform_3, window_bounds = array<i64: 64, 128>}, {pipeline_mode = #tpu.pipeline_mode<synchronous>, transform_indices = @transform_4, window_bounds = array<i64: 1, 128>}, {pipeline_mode = #tpu.pipeline_mode<synchronous>, transform_indices = @transform_5, window_bounds = array<i64: 128, 64>}, {pipeline_mode = #tpu.pipeline_mode<synchronous>, transform_indices = @transform_6, window_bounds = array<i64: 1, 64>}, {pipeline_mode = #tpu.pipeline_mode<synchronous>, transform_indices = @transform_7, window_bounds = array<i64: 1, 64>}, {pipeline_mode = #tpu.pipeline_mode<synchronous>, transform_indices = @transform_8, window_bounds = array<i64: 1, 64>}, {transform_indices = @transform_9, window_bounds = array<i64: 16, 64>}]} {
    %c0 = arith.constant 0 : index
    %c0_0 = arith.constant 0 : index
    %0 = vector.load %arg1[%c0, %c0_0] : memref<16x64xbf16, #tpu.memory_space<vmem>>, vector<16x64xbf16>
    %1 = arith.extf %0 : vector<16x64xbf16> to vector<16x64xf32>
    %c0_1 = arith.constant 0 : index
    %c0_2 = arith.constant 0 : index
    %2 = vector.load %arg2[%c0_1, %c0_2] : memref<1x64xf32, #tpu.memory_space<vmem>>, vector<1x64xf32>
    %c0_3 = arith.constant 0 : index
    %c0_4 = arith.constant 0 : index
    %3 = vector.load %arg3[%c0_3, %c0_4] : memref<1x64xf32, #tpu.memory_space<vmem>>, vector<1x64xf32>
    %cst = arith.constant dense<0.000000e+00> : vector<16xf32>
    %4 = vector.multi_reduction <add>, %1, %cst [1] : vector<16x64xf32> to vector<16xf32>
    %5 = vector.shape_cast %4 : vector<16xf32> to vector<16x1xf32>
    %cst_5 = arith.constant 6.400000e+01 : f32
    %6 = vector.broadcast %cst_5 : f32 to vector<16x1xf32>
    %7 = arith.divf %5, %6 : vector<16x1xf32>
    %8 = vector.broadcast %7 : vector<16x1xf32> to vector<16x64xf32>
    %9 = arith.subf %1, %8 : vector<16x64xf32>
    %10 = arith.mulf %9, %9 : vector<16x64xf32>
    %cst_6 = arith.constant dense<0.000000e+00> : vector<16xf32>
    %11 = vector.multi_reduction <add>, %10, %cst_6 [1] : vector<16x64xf32> to vector<16xf32>
    %12 = vector.shape_cast %11 : vector<16xf32> to vector<16x1xf32>
    %cst_7 = arith.constant 6.400000e+01 : f32
    %13 = vector.broadcast %cst_7 : f32 to vector<16x1xf32>
    %14 = arith.divf %12, %13 : vector<16x1xf32>
    %15 = vector.broadcast %7 : vector<16x1xf32> to vector<16x64xf32>
    %16 = arith.subf %1, %15 : vector<16x64xf32>
    %cst_8 = arith.constant 9.99999996E-13 : f32
    %17 = vector.broadcast %cst_8 : f32 to vector<16x1xf32>
    %18 = arith.addf %14, %17 : vector<16x1xf32>
    %19 = math.rsqrt %18 : vector<16x1xf32>
    %20 = vector.broadcast %19 : vector<16x1xf32> to vector<16x64xf32>
    %21 = arith.mulf %16, %20 : vector<16x64xf32>
    %22 = vector.broadcast %2 : vector<1x64xf32> to vector<16x64xf32>
    %23 = arith.mulf %21, %22 : vector<16x64xf32>
    %24 = vector.broadcast %3 : vector<1x64xf32> to vector<16x64xf32>
    %25 = arith.addf %23, %24 : vector<16x64xf32>
    %26 = arith.truncf %25 : vector<16x64xf32> to vector<16x64xbf16>
    %c0_9 = arith.constant 0 : index
    %c0_10 = arith.constant 0 : index
    %27 = vector.load %arg4[%c0_9, %c0_10] : memref<64x128xbf16, #tpu.memory_space<vmem>>, vector<64x128xbf16>
    %cst_11 = arith.constant dense<0.000000e+00> : vector<16x128xf32>
    %28 = tpu.matmul %26, %27, %cst_11 {dimension_numbers = #tpu.dot_dimension_numbers<[1], [0], [0], [1], [0, 0, 1, 1], [], []>} : vector<16x64xbf16>, vector<64x128xbf16>, vector<16x128xf32> -> vector<16x128xf32>
    %c0_12 = arith.constant 0 : index
    %c0_13 = arith.constant 0 : index
    %29 = vector.load %arg5[%c0_12, %c0_13] : memref<1x128xf32, #tpu.memory_space<vmem>>, vector<1x128xf32>
    %30 = vector.broadcast %29 : vector<1x128xf32> to vector<16x128xf32>
    %31 = arith.addf %28, %30 : vector<16x128xf32>
    %32 = arith.mulf %31, %31 : vector<16x128xf32>
    %33 = arith.mulf %31, %32 : vector<16x128xf32>
    %cst_14 = arith.constant 4.471500e-02 : f32
    %34 = vector.broadcast %cst_14 : f32 to vector<16x128xf32>
    %35 = arith.mulf %34, %33 : vector<16x128xf32>
    %36 = arith.addf %31, %35 : vector<16x128xf32>
    %cst_15 = arith.constant 0.797884583 : f32
    %37 = vector.broadcast %cst_15 : f32 to vector<16x128xf32>
    %38 = arith.mulf %37, %36 : vector<16x128xf32>
    %39 = math.tanh %38 : vector<16x128xf32>
    %cst_16 = arith.constant 1.000000e+00 : f32
    %40 = vector.broadcast %cst_16 : f32 to vector<16x128xf32>
    %41 = arith.addf %40, %39 : vector<16x128xf32>
    %cst_17 = arith.constant 5.000000e-01 : f32
    %42 = vector.broadcast %cst_17 : f32 to vector<16x128xf32>
    %43 = arith.mulf %42, %41 : vector<16x128xf32>
    %44 = arith.mulf %31, %43 : vector<16x128xf32>
    %45 = arith.truncf %44 : vector<16x128xf32> to vector<16x128xbf16>
    %c0_18 = arith.constant 0 : index
    %c0_19 = arith.constant 0 : index
    %46 = vector.load %arg6[%c0_18, %c0_19] : memref<128x64xbf16, #tpu.memory_space<vmem>>, vector<128x64xbf16>
    %cst_20 = arith.constant dense<0.000000e+00> : vector<16x64xf32>
    %47 = tpu.matmul %45, %46, %cst_20 {dimension_numbers = #tpu.dot_dimension_numbers<[1], [0], [0], [1], [0, 0, 1, 1], [], []>} : vector<16x128xbf16>, vector<128x64xbf16>, vector<16x64xf32> -> vector<16x64xf32>
    %c0_21 = arith.constant 0 : index
    %c0_22 = arith.constant 0 : index
    %48 = vector.load %arg7[%c0_21, %c0_22] : memref<1x64xf32, #tpu.memory_space<vmem>>, vector<1x64xf32>
    %49 = vector.broadcast %48 : vector<1x64xf32> to vector<16x64xf32>
    %50 = arith.addf %47, %49 : vector<16x64xf32>
    %51 = arith.addf %1, %50 : vector<16x64xf32>
    %c0_23 = arith.constant 0 : index
    %c0_24 = arith.constant 0 : index
    %52 = vector.load %arg8[%c0_23, %c0_24] : memref<1x64xf32, #tpu.memory_space<vmem>>, vector<1x64xf32>
    %c0_25 = arith.constant 0 : index
    %c0_26 = arith.constant 0 : index
    %53 = vector.load %arg9[%c0_25, %c0_26] : memref<1x64xf32, #tpu.memory_space<vmem>>, vector<1x64xf32>
    %cst_27 = arith.constant dense<0.000000e+00> : vector<16xf32>
    %54 = vector.multi_reduction <add>, %51, %cst_27 [1] : vector<16x64xf32> to vector<16xf32>
    %55 = vector.shape_cast %54 : vector<16xf32> to vector<16x1xf32>
    %cst_28 = arith.constant 6.400000e+01 : f32
    %56 = vector.broadcast %cst_28 : f32 to vector<16x1xf32>
    %57 = arith.divf %55, %56 : vector<16x1xf32>
    %58 = vector.broadcast %57 : vector<16x1xf32> to vector<16x64xf32>
    %59 = arith.subf %51, %58 : vector<16x64xf32>
    %60 = arith.mulf %59, %59 : vector<16x64xf32>
    %cst_29 = arith.constant dense<0.000000e+00> : vector<16xf32>
    %61 = vector.multi_reduction <add>, %60, %cst_29 [1] : vector<16x64xf32> to vector<16xf32>
    %62 = vector.shape_cast %61 : vector<16xf32> to vector<16x1xf32>
    %cst_30 = arith.constant 6.400000e+01 : f32
    %63 = vector.broadcast %cst_30 : f32 to vector<16x1xf32>
    %64 = arith.divf %62, %63 : vector<16x1xf32>
    %65 = vector.broadcast %57 : vector<16x1xf32> to vector<16x64xf32>
    %66 = arith.subf %51, %65 : vector<16x64xf32>
    %cst_31 = arith.constant 9.99999996E-13 : f32
    %67 = vector.broadcast %cst_31 : f32 to vector<16x1xf32>
    %68 = arith.addf %64, %67 : vector<16x1xf32>
    %69 = math.rsqrt %68 : vector<16x1xf32>
    %70 = vector.broadcast %69 : vector<16x1xf32> to vector<16x64xf32>
    %71 = arith.mulf %66, %70 : vector<16x64xf32>
    %72 = vector.broadcast %52 : vector<1x64xf32> to vector<16x64xf32>
    %73 = arith.mulf %71, %72 : vector<16x64xf32>
    %74 = vector.broadcast %53 : vector<1x64xf32> to vector<16x64xf32>
    %75 = arith.addf %73, %74 : vector<16x64xf32>
    %76 = arith.truncf %75 : vector<16x64xf32> to vector<16x64xbf16>
    %c0_32 = arith.constant 0 : index
    %c0_33 = arith.constant 0 : index
    %77 = vector.load %arg10[%c0_32, %c0_33] : memref<16x64xbf16, #tpu.memory_space<vmem>>, vector<16x64xbf16>
    tpu.vector_store %arg10[%c0_32, %c0_33], %76 {strides = array<i32>} : memref<16x64xbf16, #tpu.memory_space<vmem>>, vector<16x64xbf16>,
    return
  }
  func.func @transform_0(%arg0: i32) -> (i32, i32) {
    %c0_i32 = arith.constant 0 : i32
    %c0_i32_0 = arith.constant 0 : i32
    return %arg0, %c0_i32 : i32, i32
  }
  func.func @transform_1(%arg0: i32) -> (i32, i32) {
    %c0_i32 = arith.constant 0 : i32
    %c0_i32_0 = arith.constant 0 : i32
    %c0_i32_1 = arith.constant 0 : i32
    return %c0_i32, %c0_i32_0 : i32, i32
  }
  func.func @transform_2(%arg0: i32) -> (i32, i32) {
    %c0_i32 = arith.constant 0 : i32
    %c0_i32_0 = arith.constant 0 : i32
    %c0_i32_1 = arith.constant 0 : i32
    return %c0_i32, %c0_i32_0 : i32, i32
  }
  func.func @transform_3(%arg0: i32) -> (i32, i32) {
    %c0_i32 = arith.constant 0 : i32
    %c0_i32_0 = arith.constant 0 : i32
    %c0_i32_1 = arith.constant 0 : i32
    return %c0_i32, %c0_i32_0 : i32, i32
  }
  func.func @transform_4(%arg0: i32) -> (i32, i32) {
    %c0_i32 = arith.constant 0 : i32
    %c0_i32_0 = arith.constant 0 : i32
    %c0_i32_1 = arith.constant 0 : i32
    return %c0_i32, %c0_i32_0 : i32, i32
  }
  func.func @transform_5(%arg0: i32) -> (i32, i32) {
    %c0_i32 = arith.constant 0 : i32
    %c0_i32_0 = arith.constant 0 : i32
    %c0_i32_1 = arith.constant 0 : i32
    return %c0_i32, %c0_i32_0 : i32, i32
  }
  func.func @transform_6(%arg0: i32) -> (i32, i32) {
    %c0_i32 = arith.constant 0 : i32
    %c0_i32_0 = arith.constant 0 : i32
    %c0_i32_1 = arith.constant 0 : i32
    return %c0_i32, %c0_i32_0 : i32, i32
  }
  func.func @transform_7(%arg0: i32) -> (i32, i32) {
    %c0_i32 = arith.constant 0 : i32
    %c0_i32_0 = arith.constant 0 : i32
    %c0_i32_1 = arith.constant 0 : i32
    return %c0_i32, %c0_i32_0 : i32, i32
  }
  func.func @transform_8(%arg0: i32) -> (i32, i32) {
    %c0_i32 = arith.constant 0 : i32
    %c0_i32_0 = arith.constant 0 : i32
    %c0_i32_1 = arith.constant 0 : i32
    return %c0_i32, %c0_i32_0 : i32, i32
  }
  func.func @transform_9(%arg0: i32) -> (i32, i32) {
    %c0_i32 = arith.constant 0 : i32
    %c0_i32_0 = arith.constant 0 : i32
    return %arg0, %c0_i32 : i32, i32
  }
}

module attributes {stable_mosaic.version = 11 : i64} {
  func.func @_attn_block_kernel(%arg0: i32, %arg1: memref<1x8x64xbf16, #tpu.memory_space<vmem>>, %arg2: memref<1x5x64xbf16, #tpu.memory_space<vmem>>, %arg3: memref<64x192xbf16, #tpu.memory_space<vmem>>, %arg4: memref<1x192xf32, #tpu.memory_space<vmem>>, %arg5: memref<64x64xbf16, #tpu.memory_space<vmem>>, %arg6: memref<1x64xf32, #tpu.memory_space<vmem>>, %arg7: memref<1x64xf32, #tpu.memory_space<vmem>>, %arg8: memref<1x64xf32, #tpu.memory_space<vmem>>, %arg9: memref<1x8x64xbf16, #tpu.memory_space<vmem>>) attributes {dimension_semantics = [#tpu.dimension_semantics<parallel>], iteration_bounds = array<i64: 2>, scalar_prefetch = 0 : i64, scratch_operands = 0 : i64, tpu.core_type = #tpu.core_type<tc>, window_params = [{transform_indices = @transform_0, window_bounds = array<i64: 1, 8, 64>}, {transform_indices = @transform_1, window_bounds = array<i64: 1, 5, 64>}, {pipeline_mode = #tpu.pipeline_mode<synchronous>, transform_indices = @transform_2, window_bounds = array<i64: 64, 192>}, {pipeline_mode = #tpu.pipeline_mode<synchronous>, transform_indices = @transform_3, window_bounds = array<i64: 1, 192>}, {pipeline_mode = #tpu.pipeline_mode<synchronous>, transform_indices = @transform_4, window_bounds = array<i64: 64, 64>}, {pipeline_mode = #tpu.pipeline_mode<synchronous>, transform_indices = @transform_5, window_bounds = array<i64: 1, 64>}, {pipeline_mode = #tpu.pipeline_mode<synchronous>, transform_indices = @transform_6, window_bounds = array<i64: 1, 64>}, {pipeline_mode = #tpu.pipeline_mode<synchronous>, transform_indices = @transform_7, window_bounds = array<i64: 1, 64>}, {transform_indices = @transform_8, window_bounds = array<i64: 1, 8, 64>}]} {
    %c0 = arith.constant 0 : index
    %c0_0 = arith.constant 0 : index
    %c0_1 = arith.constant 0 : index
    %0 = vector.load %arg1[%c0, %c0_0, %c0_1] : memref<1x8x64xbf16, #tpu.memory_space<vmem>>, vector<1x8x64xbf16>
    %1 = vector.shape_cast %0 : vector<1x8x64xbf16> to vector<8x64xbf16>
    %2 = arith.extf %1 : vector<8x64xbf16> to vector<8x64xf32>
    %c0_2 = arith.constant 0 : index
    %c0_3 = arith.constant 0 : index
    %3 = vector.load %arg3[%c0_2, %c0_3] : memref<64x192xbf16, #tpu.memory_space<vmem>>, vector<64x192xbf16>
    %c0_4 = arith.constant 0 : index
    %c0_5 = arith.constant 0 : index
    %4 = vector.load %arg4[%c0_4, %c0_5] : memref<1x192xf32, #tpu.memory_space<vmem>>, vector<1x192xf32>
    %c0_6 = arith.constant 0 : index
    %c0_7 = arith.constant 0 : index
    %c0_8 = arith.constant 0 : index
    %5 = vector.load %arg2[%c0_6, %c0_7, %c0_8] : memref<1x5x64xbf16, #tpu.memory_space<vmem>>, vector<1x5x64xbf16>
    %6 = vector.shape_cast %5 : vector<1x5x64xbf16> to vector<5x64xbf16>
    %7 = arith.extf %6 : vector<5x64xbf16> to vector<5x64xf32>
    %8 = arith.truncf %2 : vector<8x64xf32> to vector<8x64xbf16>
    %9 = vector.extract_strided_slice %3 {offsets = [0, 0], sizes = [64, 64], strides = [1, 1]} : vector<64x192xbf16> to vector<64x64xbf16>
    %cst = arith.constant dense<0.000000e+00> : vector<8x64xf32>
    %10 = tpu.matmul %8, %9, %cst {dimension_numbers = #tpu.dot_dimension_numbers<[1], [0], [0], [1], [0, 0, 1, 1], [], []>} : vector<8x64xbf16>, vector<64x64xbf16>, vector<8x64xf32> -> vector<8x64xf32>
    %11 = vector.extract_strided_slice %4 {offsets = [0, 0], sizes = [1, 64], strides = [1, 1]} : vector<1x192xf32> to vector<1x64xf32>
    %12 = vector.broadcast %11 : vector<1x64xf32> to vector<8x64xf32>
    %13 = arith.addf %10, %12 : vector<8x64xf32>
    %14 = arith.truncf %7 : vector<5x64xf32> to vector<5x64xbf16>
    %15 = vector.extract_strided_slice %3 {offsets = [0, 64], sizes = [64, 128], strides = [1, 1]} : vector<64x192xbf16> to vector<64x128xbf16>
    %cst_9 = arith.constant dense<0.000000e+00> : vector<5x128xf32>
    %16 = tpu.matmul %14, %15, %cst_9 {dimension_numbers = #tpu.dot_dimension_numbers<[1], [0], [0], [1], [0, 0, 1, 1], [], []>} : vector<5x64xbf16>, vector<64x128xbf16>, vector<5x128xf32> -> vector<5x128xf32>
    %17 = vector.extract_strided_slice %4 {offsets = [0, 64], sizes = [1, 128], strides = [1, 1]} : vector<1x192xf32> to vector<1x128xf32>
    %18 = vector.broadcast %17 : vector<1x128xf32> to vector<5x128xf32>
    %19 = arith.addf %16, %18 : vector<5x128xf32>
    %20 = vector.extract_strided_slice %19 {offsets = [0, 0], sizes = [5, 64], strides = [1, 1]} : vector<5x128xf32> to vector<5x64xf32>
    %21 = vector.extract_strided_slice %19 {offsets = [0, 64], sizes = [5, 64], strides = [1, 1]} : vector<5x128xf32> to vector<5x64xf32>
    %c0_10 = arith.constant 0 : index
    %c0_11 = arith.constant 0 : index
    %22 = vector.load %arg5[%c0_10, %c0_11] : memref<64x64xbf16, #tpu.memory_space<vmem>>, vector<64x64xbf16>
    %cst_12 = arith.constant 0.000000e+00 : f32
    %23 = vector.broadcast %cst_12 : f32 to vector<8x64xf32>
    %24 = vector.extract_strided_slice %13 {offsets = [0, 0], sizes = [8, 16], strides = [1, 1]} : vector<8x64xf32> to vector<8x16xf32>
    %25 = arith.truncf %24 : vector<8x16xf32> to vector<8x16xbf16>
    %26 = vector.extract_strided_slice %20 {offsets = [0, 0], sizes = [5, 16], strides = [1, 1]} : vector<5x64xf32> to vector<5x16xf32>
    %27 = arith.truncf %26 : vector<5x16xf32> to vector<5x16xbf16>
    %28 = vector.extract_strided_slice %21 {offsets = [0, 0], sizes = [5, 16], strides = [1, 1]} : vector<5x64xf32> to vector<5x16xf32>
    %29 = arith.truncf %28 : vector<5x16xf32> to vector<5x16xbf16>
    %cst_13 = arith.constant dense<0.000000e+00> : vector<8x5xf32>
    %30 = tpu.matmul %25, %27, %cst_13 {dimension_numbers = #tpu.dot_dimension_numbers<[1], [1], [0], [0], [0, 0, 1, 0], [], []>} : vector<8x16xbf16>, vector<5x16xbf16>, vector<8x5xf32> -> vector<8x5xf32>
    %cst_14 = arith.constant 2.500000e-01 : f32
    %31 = vector.broadcast %cst_14 : f32 to vector<8x5xf32>
    %32 = arith.mulf %30, %31 : vector<8x5xf32>
    %cst_15 = arith.constant dense<0xFF800000> : vector<8xf32>
    %33 = vector.multi_reduction <maximumf>, %32, %cst_15 [1] : vector<8x5xf32> to vector<8xf32>
    %34 = vector.shape_cast %33 : vector<8xf32> to vector<8x1xf32>
    %35 = vector.broadcast %34 : vector<8x1xf32> to vector<8x5xf32>
    %36 = arith.subf %32, %35 : vector<8x5xf32>
    %37 = math.exp %36 : vector<8x5xf32>
    %cst_16 = arith.constant dense<0.000000e+00> : vector<8xf32>
    %38 = vector.multi_reduction <add>, %37, %cst_16 [1] : vector<8x5xf32> to vector<8xf32>
    %39 = vector.shape_cast %38 : vector<8xf32> to vector<8x1xf32>
    %40 = tpu.reciprocal %39 {approx = true} : vector<8x1xf32> -> vector<8x1xf32>
    %41 = vector.broadcast %40 : vector<8x1xf32> to vector<8x5xf32>
    %42 = arith.mulf %37, %41 : vector<8x5xf32>
    %43 = arith.truncf %42 : vector<8x5xf32> to vector<8x5xbf16>
    %cst_17 = arith.constant dense<0.000000e+00> : vector<8x16xf32>
    %44 = tpu.matmul %43, %29, %cst_17 {dimension_numbers = #tpu.dot_dimension_numbers<[1], [0], [0], [1], [0, 0, 1, 1], [], []>} : vector<8x5xbf16>, vector<5x16xbf16>, vector<8x16xf32> -> vector<8x16xf32>
    %45 = arith.truncf %44 : vector<8x16xf32> to vector<8x16xbf16>
    %46 = vector.extract_strided_slice %22 {offsets = [0, 0], sizes = [16, 64], strides = [1, 1]} : vector<64x64xbf16> to vector<16x64xbf16>
    %cst_18 = arith.constant dense<0.000000e+00> : vector<8x64xf32>
    %47 = tpu.matmul %45, %46, %cst_18 {dimension_numbers = #tpu.dot_dimension_numbers<[1], [0], [0], [1], [0, 0, 1, 1], [], []>} : vector<8x16xbf16>, vector<16x64xbf16>, vector<8x64xf32> -> vector<8x64xf32>
    %48 = arith.addf %23, %47 : vector<8x64xf32>
    %49 = vector.extract_strided_slice %13 {offsets = [0, 16], sizes = [8, 16], strides = [1, 1]} : vector<8x64xf32> to vector<8x16xf32>
    %50 = arith.truncf %49 : vector<8x16xf32> to vector<8x16xbf16>
    %51 = vector.extract_strided_slice %20 {offsets = [0, 16], sizes = [5, 16], strides = [1, 1]} : vector<5x64xf32> to vector<5x16xf32>
    %52 = arith.truncf %51 : vector<5x16xf32> to vector<5x16xbf16>
    %53 = vector.extract_strided_slice %21 {offsets = [0, 16], sizes = [5, 16], strides = [1, 1]} : vector<5x64xf32> to vector<5x16xf32>
    %54 = arith.truncf %53 : vector<5x16xf32> to vector<5x16xbf16>
    %cst_19 = arith.constant dense<0.000000e+00> : vector<8x5xf32>
    %55 = tpu.matmul %50, %52, %cst_19 {dimension_numbers = #tpu.dot_dimension_numbers<[1], [1], [0], [0], [0, 0, 1, 0], [], []>} : vector<8x16xbf16>, vector<5x16xbf16>, vector<8x5xf32> -> vector<8x5xf32>
    %cst_20 = arith.constant 2.500000e-01 : f32
    %56 = vector.broadcast %cst_20 : f32 to vector<8x5xf32>
    %57 = arith.mulf %55, %56 : vector<8x5xf32>
    %cst_21 = arith.constant dense<0xFF800000> : vector<8xf32>
    %58 = vector.multi_reduction <maximumf>, %57, %cst_21 [1] : vector<8x5xf32> to vector<8xf32>
    %59 = vector.shape_cast %58 : vector<8xf32> to vector<8x1xf32>
    %60 = vector.broadcast %59 : vector<8x1xf32> to vector<8x5xf32>
    %61 = arith.subf %57, %60 : vector<8x5xf32>
    %62 = math.exp %61 : vector<8x5xf32>
    %cst_22 = arith.constant dense<0.000000e+00> : vector<8xf32>
    %63 = vector.multi_reduction <add>, %62, %cst_22 [1] : vector<8x5xf32> to vector<8xf32>
    %64 = vector.shape_cast %63 : vector<8xf32> to vector<8x1xf32>
    %65 = tpu.reciprocal %64 {approx = true} : vector<8x1xf32> -> vector<8x1xf32>
    %66 = vector.broadcast %65 : vector<8x1xf32> to vector<8x5xf32>
    %67 = arith.mulf %62, %66 : vector<8x5xf32>
    %68 = arith.truncf %67 : vector<8x5xf32> to vector<8x5xbf16>
    %cst_23 = arith.constant dense<0.000000e+00> : vector<8x16xf32>
    %69 = tpu.matmul %68, %54, %cst_23 {dimension_numbers = #tpu.dot_dimension_numbers<[1], [0], [0], [1], [0, 0, 1, 1], [], []>} : vector<8x5xbf16>, vector<5x16xbf16>, vector<8x16xf32> -> vector<8x16xf32>
    %70 = arith.truncf %69 : vector<8x16xf32> to vector<8x16xbf16>
    %71 = vector.extract_strided_slice %22 {offsets = [16, 0], sizes = [16, 64], strides = [1, 1]} : vector<64x64xbf16> to vector<16x64xbf16>
    %cst_24 = arith.constant dense<0.000000e+00> : vector<8x64xf32>
    %72 = tpu.matmul %70, %71, %cst_24 {dimension_numbers = #tpu.dot_dimension_numbers<[1], [0], [0], [1], [0, 0, 1, 1], [], []>} : vector<8x16xbf16>, vector<16x64xbf16>, vector<8x64xf32> -> vector<8x64xf32>
    %73 = arith.addf %48, %72 : vector<8x64xf32>
    %74 = vector.extract_strided_slice %13 {offsets = [0, 32], sizes = [8, 16], strides = [1, 1]} : vector<8x64xf32> to vector<8x16xf32>
    %75 = arith.truncf %74 : vector<8x16xf32> to vector<8x16xbf16>
    %76 = vector.extract_strided_slice %20 {offsets = [0, 32], sizes = [5, 16], strides = [1, 1]} : vector<5x64xf32> to vector<5x16xf32>
    %77 = arith.truncf %76 : vector<5x16xf32> to vector<5x16xbf16>
    %78 = vector.extract_strided_slice %21 {offsets = [0, 32], sizes = [5, 16], strides = [1, 1]} : vector<5x64xf32> to vector<5x16xf32>
    %79 = arith.truncf %78 : vector<5x16xf32> to vector<5x16xbf16>
    %cst_25 = arith.constant dense<0.000000e+00> : vector<8x5xf32>
    %80 = tpu.matmul %75, %77, %cst_25 {dimension_numbers = #tpu.dot_dimension_numbers<[1], [1], [0], [0], [0, 0, 1, 0], [], []>} : vector<8x16xbf16>, vector<5x16xbf16>, vector<8x5xf32> -> vector<8x5xf32>
    %cst_26 = arith.constant 2.500000e-01 : f32
    %81 = vector.broadcast %cst_26 : f32 to vector<8x5xf32>
    %82 = arith.mulf %80, %81 : vector<8x5xf32>
    %cst_27 = arith.constant dense<0xFF800000> : vector<8xf32>
    %83 = vector.multi_reduction <maximumf>, %82, %cst_27 [1] : vector<8x5xf32> to vector<8xf32>
    %84 = vector.shape_cast %83 : vector<8xf32> to vector<8x1xf32>
    %85 = vector.broadcast %84 : vector<8x1xf32> to vector<8x5xf32>
    %86 = arith.subf %82, %85 : vector<8x5xf32>
    %87 = math.exp %86 : vector<8x5xf32>
    %cst_28 = arith.constant dense<0.000000e+00> : vector<8xf32>
    %88 = vector.multi_reduction <add>, %87, %cst_28 [1] : vector<8x5xf32> to vector<8xf32>
    %89 = vector.shape_cast %88 : vector<8xf32> to vector<8x1xf32>
    %90 = tpu.reciprocal %89 {approx = true} : vector<8x1xf32> -> vector<8x1xf32>
    %91 = vector.broadcast %90 : vector<8x1xf32> to vector<8x5xf32>
    %92 = arith.mulf %87, %91 : vector<8x5xf32>
    %93 = arith.truncf %92 : vector<8x5xf32> to vector<8x5xbf16>
    %cst_29 = arith.constant dense<0.000000e+00> : vector<8x16xf32>
    %94 = tpu.matmul %93, %79, %cst_29 {dimension_numbers = #tpu.dot_dimension_numbers<[1], [0], [0], [1], [0, 0, 1, 1], [], []>} : vector<8x5xbf16>, vector<5x16xbf16>, vector<8x16xf32> -> vector<8x16xf32>
    %95 = arith.truncf %94 : vector<8x16xf32> to vector<8x16xbf16>
    %96 = vector.extract_strided_slice %22 {offsets = [32, 0], sizes = [16, 64], strides = [1, 1]} : vector<64x64xbf16> to vector<16x64xbf16>
    %cst_30 = arith.constant dense<0.000000e+00> : vector<8x64xf32>
    %97 = tpu.matmul %95, %96, %cst_30 {dimension_numbers = #tpu.dot_dimension_numbers<[1], [0], [0], [1], [0, 0, 1, 1], [], []>} : vector<8x16xbf16>, vector<16x64xbf16>, vector<8x64xf32> -> vector<8x64xf32>
    %98 = arith.addf %73, %97 : vector<8x64xf32>
    %99 = vector.extract_strided_slice %13 {offsets = [0, 48], sizes = [8, 16], strides = [1, 1]} : vector<8x64xf32> to vector<8x16xf32>
    %100 = arith.truncf %99 : vector<8x16xf32> to vector<8x16xbf16>
    %101 = vector.extract_strided_slice %20 {offsets = [0, 48], sizes = [5, 16], strides = [1, 1]} : vector<5x64xf32> to vector<5x16xf32>
    %102 = arith.truncf %101 : vector<5x16xf32> to vector<5x16xbf16>
    %103 = vector.extract_strided_slice %21 {offsets = [0, 48], sizes = [5, 16], strides = [1, 1]} : vector<5x64xf32> to vector<5x16xf32>
    %104 = arith.truncf %103 : vector<5x16xf32> to vector<5x16xbf16>
    %cst_31 = arith.constant dense<0.000000e+00> : vector<8x5xf32>
    %105 = tpu.matmul %100, %102, %cst_31 {dimension_numbers = #tpu.dot_dimension_numbers<[1], [1], [0], [0], [0, 0, 1, 0], [], []>} : vector<8x16xbf16>, vector<5x16xbf16>, vector<8x5xf32> -> vector<8x5xf32>
    %cst_32 = arith.constant 2.500000e-01 : f32
    %106 = vector.broadcast %cst_32 : f32 to vector<8x5xf32>
    %107 = arith.mulf %105, %106 : vector<8x5xf32>
    %cst_33 = arith.constant dense<0xFF800000> : vector<8xf32>
    %108 = vector.multi_reduction <maximumf>, %107, %cst_33 [1] : vector<8x5xf32> to vector<8xf32>
    %109 = vector.shape_cast %108 : vector<8xf32> to vector<8x1xf32>
    %110 = vector.broadcast %109 : vector<8x1xf32> to vector<8x5xf32>
    %111 = arith.subf %107, %110 : vector<8x5xf32>
    %112 = math.exp %111 : vector<8x5xf32>
    %cst_34 = arith.constant dense<0.000000e+00> : vector<8xf32>
    %113 = vector.multi_reduction <add>, %112, %cst_34 [1] : vector<8x5xf32> to vector<8xf32>
    %114 = vector.shape_cast %113 : vector<8xf32> to vector<8x1xf32>
    %115 = tpu.reciprocal %114 {approx = true} : vector<8x1xf32> -> vector<8x1xf32>
    %116 = vector.broadcast %115 : vector<8x1xf32> to vector<8x5xf32>
    %117 = arith.mulf %112, %116 : vector<8x5xf32>
    %118 = arith.truncf %117 : vector<8x5xf32> to vector<8x5xbf16>
    %cst_35 = arith.constant dense<0.000000e+00> : vector<8x16xf32>
    %119 = tpu.matmul %118, %104, %cst_35 {dimension_numbers = #tpu.dot_dimension_numbers<[1], [0], [0], [1], [0, 0, 1, 1], [], []>} : vector<8x5xbf16>, vector<5x16xbf16>, vector<8x16xf32> -> vector<8x16xf32>
    %120 = arith.truncf %119 : vector<8x16xf32> to vector<8x16xbf16>
    %121 = vector.extract_strided_slice %22 {offsets = [48, 0], sizes = [16, 64], strides = [1, 1]} : vector<64x64xbf16> to vector<16x64xbf16>
    %cst_36 = arith.constant dense<0.000000e+00> : vector<8x64xf32>
    %122 = tpu.matmul %120, %121, %cst_36 {dimension_numbers = #tpu.dot_dimension_numbers<[1], [0], [0], [1], [0, 0, 1, 1], [], []>} : vector<8x16xbf16>, vector<16x64xbf16>, vector<8x64xf32> -> vector<8x64xf32>
    %123 = arith.addf %98, %122 : vector<8x64xf32>
    %124 = arith.addf %2, %123 : vector<8x64xf32>
    %c0_37 = arith.constant 0 : index
    %c0_38 = arith.constant 0 : index
    %125 = vector.load %arg6[%c0_37, %c0_38] : memref<1x64xf32, #tpu.memory_space<vmem>>, vector<1x64xf32>
    %126 = vector.broadcast %125 : vector<1x64xf32> to vector<8x64xf32>
    %127 = arith.addf %124, %126 : vector<8x64xf32>
    %c0_39 = arith.constant 0 : index
    %c0_40 = arith.constant 0 : index
    %128 = vector.load %arg7[%c0_39, %c0_40] : memref<1x64xf32, #tpu.memory_space<vmem>>, vector<1x64xf32>
    %c0_41 = arith.constant 0 : index
    %c0_42 = arith.constant 0 : index
    %129 = vector.load %arg8[%c0_41, %c0_42] : memref<1x64xf32, #tpu.memory_space<vmem>>, vector<1x64xf32>
    %cst_43 = arith.constant dense<0.000000e+00> : vector<8xf32>
    %130 = vector.multi_reduction <add>, %127, %cst_43 [1] : vector<8x64xf32> to vector<8xf32>
    %131 = vector.shape_cast %130 : vector<8xf32> to vector<8x1xf32>
    %cst_44 = arith.constant 6.400000e+01 : f32
    %132 = vector.broadcast %cst_44 : f32 to vector<8x1xf32>
    %133 = arith.divf %131, %132 : vector<8x1xf32>
    %134 = vector.broadcast %133 : vector<8x1xf32> to vector<8x64xf32>
    %135 = arith.subf %127, %134 : vector<8x64xf32>
    %136 = arith.mulf %135, %135 : vector<8x64xf32>
    %cst_45 = arith.constant dense<0.000000e+00> : vector<8xf32>
    %137 = vector.multi_reduction <add>, %136, %cst_45 [1] : vector<8x64xf32> to vector<8xf32>
    %138 = vector.shape_cast %137 : vector<8xf32> to vector<8x1xf32>
    %cst_46 = arith.constant 6.400000e+01 : f32
    %139 = vector.broadcast %cst_46 : f32 to vector<8x1xf32>
    %140 = arith.divf %138, %139 : vector<8x1xf32>
    %141 = vector.broadcast %133 : vector<8x1xf32> to vector<8x64xf32>
    %142 = arith.subf %127, %141 : vector<8x64xf32>
    %cst_47 = arith.constant 9.99999997E-7 : f32
    %143 = vector.broadcast %cst_47 : f32 to vector<8x1xf32>
    %144 = arith.addf %140, %143 : vector<8x1xf32>
    %145 = math.rsqrt %144 : vector<8x1xf32>
    %146 = vector.broadcast %145 : vector<8x1xf32> to vector<8x64xf32>
    %147 = arith.mulf %142, %146 : vector<8x64xf32>
    %148 = vector.broadcast %128 : vector<1x64xf32> to vector<8x64xf32>
    %149 = arith.mulf %147, %148 : vector<8x64xf32>
    %150 = vector.broadcast %129 : vector<1x64xf32> to vector<8x64xf32>
    %151 = arith.addf %149, %150 : vector<8x64xf32>
    %152 = arith.truncf %151 : vector<8x64xf32> to vector<8x64xbf16>
    %c0_48 = arith.constant 0 : index
    %c0_49 = arith.constant 0 : index
    %c0_50 = arith.constant 0 : index
    %153 = vector.load %arg9[%c0_48, %c0_49, %c0_50] : memref<1x8x64xbf16, #tpu.memory_space<vmem>>, vector<1x8x64xbf16>
    %154 = vector.shape_cast %153 : vector<1x8x64xbf16> to vector<8x64xbf16>
    %155 = vector.shape_cast %152 : vector<8x64xbf16> to vector<1x8x64xbf16>
    tpu.vector_store %arg9[%c0_48, %c0_49, %c0_50], %155 {strides = array<i32>} : memref<1x8x64xbf16, #tpu.memory_space<vmem>>, vector<1x8x64xbf16>,
    return
  }
  func.func @transform_0(%arg0: i32) -> (i32, i32, i32) {
    %c0_i32 = arith.constant 0 : i32
    %c0_i32_0 = arith.constant 0 : i32
    %c0_i32_1 = arith.constant 0 : i32
    return %arg0, %c0_i32, %c0_i32_0 : i32, i32, i32
  }
  func.func @transform_1(%arg0: i32) -> (i32, i32, i32) {
    %c0_i32 = arith.constant 0 : i32
    %c0_i32_0 = arith.constant 0 : i32
    %c0_i32_1 = arith.constant 0 : i32
    return %arg0, %c0_i32, %c0_i32_0 : i32, i32, i32
  }
  func.func @transform_2(%arg0: i32) -> (i32, i32) {
    %c0_i32 = arith.constant 0 : i32
    %c0_i32_0 = arith.constant 0 : i32
    %c0_i32_1 = arith.constant 0 : i32
    return %c0_i32, %c0_i32_0 : i32, i32
  }
  func.func @transform_3(%arg0: i32) -> (i32, i32) {
    %c0_i32 = arith.constant 0 : i32
    %c0_i32_0 = arith.constant 0 : i32
    %c0_i32_1 = arith.constant 0 : i32
    return %c0_i32, %c0_i32_0 : i32, i32
  }
  func.func @transform_4(%arg0: i32) -> (i32, i32) {
    %c0_i32 = arith.constant 0 : i32
    %c0_i32_0 = arith.constant 0 : i32
    %c0_i32_1 = arith.constant 0 : i32
    return %c0_i32, %c0_i32_0 : i32, i32
  }
  func.func @transform_5(%arg0: i32) -> (i32, i32) {
    %c0_i32 = arith.constant 0 : i32
    %c0_i32_0 = arith.constant 0 : i32
    %c0_i32_1 = arith.constant 0 : i32
    return %c0_i32, %c0_i32_0 : i32, i32
  }
  func.func @transform_6(%arg0: i32) -> (i32, i32) {
    %c0_i32 = arith.constant 0 : i32
    %c0_i32_0 = arith.constant 0 : i32
    %c0_i32_1 = arith.constant 0 : i32
    return %c0_i32, %c0_i32_0 : i32, i32
  }
  func.func @transform_7(%arg0: i32) -> (i32, i32) {
    %c0_i32 = arith.constant 0 : i32
    %c0_i32_0 = arith.constant 0 : i32
    %c0_i32_1 = arith.constant 0 : i32
    return %c0_i32, %c0_i32_0 : i32, i32
  }
  func.func @transform_8(%arg0: i32) -> (i32, i32, i32) {
    %c0_i32 = arith.constant 0 : i32
    %c0_i32_0 = arith.constant 0 : i32
    %c0_i32_1 = arith.constant 0 : i32
    return %arg0, %c0_i32, %c0_i32_0 : i32, i32, i32
  }
}

module attributes {stable_mosaic.version = 11 : i64} {
  func.func @_ffn_kernel(%arg0: i32, %arg1: memref<16x64xbf16, #tpu.memory_space<vmem>>, %arg2: memref<64x128xbf16, #tpu.memory_space<vmem>>, %arg3: memref<1x128xf32, #tpu.memory_space<vmem>>, %arg4: memref<128x64xbf16, #tpu.memory_space<vmem>>, %arg5: memref<1x64xf32, #tpu.memory_space<vmem>>, %arg6: memref<1x64xf32, #tpu.memory_space<vmem>>, %arg7: memref<1x64xf32, #tpu.memory_space<vmem>>, %arg8: memref<16x64xbf16, #tpu.memory_space<vmem>>) attributes {dimension_semantics = [#tpu.dimension_semantics<parallel>], iteration_bounds = array<i64: 1>, scalar_prefetch = 0 : i64, scratch_operands = 0 : i64, tpu.core_type = #tpu.core_type<tc>, window_params = [{transform_indices = @transform_0, window_bounds = array<i64: 16, 64>}, {pipeline_mode = #tpu.pipeline_mode<synchronous>, transform_indices = @transform_1, window_bounds = array<i64: 64, 128>}, {pipeline_mode = #tpu.pipeline_mode<synchronous>, transform_indices = @transform_2, window_bounds = array<i64: 1, 128>}, {pipeline_mode = #tpu.pipeline_mode<synchronous>, transform_indices = @transform_3, window_bounds = array<i64: 128, 64>}, {pipeline_mode = #tpu.pipeline_mode<synchronous>, transform_indices = @transform_4, window_bounds = array<i64: 1, 64>}, {pipeline_mode = #tpu.pipeline_mode<synchronous>, transform_indices = @transform_5, window_bounds = array<i64: 1, 64>}, {pipeline_mode = #tpu.pipeline_mode<synchronous>, transform_indices = @transform_6, window_bounds = array<i64: 1, 64>}, {transform_indices = @transform_7, window_bounds = array<i64: 16, 64>}]} {
    %c0 = arith.constant 0 : index
    %c0_0 = arith.constant 0 : index
    %0 = vector.load %arg1[%c0, %c0_0] : memref<16x64xbf16, #tpu.memory_space<vmem>>, vector<16x64xbf16>
    %1 = arith.extf %0 : vector<16x64xbf16> to vector<16x64xf32>
    %2 = arith.truncf %1 : vector<16x64xf32> to vector<16x64xbf16>
    %c0_1 = arith.constant 0 : index
    %c0_2 = arith.constant 0 : index
    %3 = vector.load %arg2[%c0_1, %c0_2] : memref<64x128xbf16, #tpu.memory_space<vmem>>, vector<64x128xbf16>
    %cst = arith.constant dense<0.000000e+00> : vector<16x128xf32>
    %4 = tpu.matmul %2, %3, %cst {dimension_numbers = #tpu.dot_dimension_numbers<[1], [0], [0], [1], [0, 0, 1, 1], [], []>} : vector<16x64xbf16>, vector<64x128xbf16>, vector<16x128xf32> -> vector<16x128xf32>
    %c0_3 = arith.constant 0 : index
    %c0_4 = arith.constant 0 : index
    %5 = vector.load %arg3[%c0_3, %c0_4] : memref<1x128xf32, #tpu.memory_space<vmem>>, vector<1x128xf32>
    %6 = vector.broadcast %5 : vector<1x128xf32> to vector<16x128xf32>
    %7 = arith.addf %4, %6 : vector<16x128xf32>
    %cst_5 = arith.constant 0.000000e+00 : f32
    %8 = vector.broadcast %cst_5 : f32 to vector<16x128xf32>
    %9 = arith.maximumf %7, %8 : vector<16x128xf32>
    %10 = arith.truncf %9 : vector<16x128xf32> to vector<16x128xbf16>
    %c0_6 = arith.constant 0 : index
    %c0_7 = arith.constant 0 : index
    %11 = vector.load %arg4[%c0_6, %c0_7] : memref<128x64xbf16, #tpu.memory_space<vmem>>, vector<128x64xbf16>
    %cst_8 = arith.constant dense<0.000000e+00> : vector<16x64xf32>
    %12 = tpu.matmul %10, %11, %cst_8 {dimension_numbers = #tpu.dot_dimension_numbers<[1], [0], [0], [1], [0, 0, 1, 1], [], []>} : vector<16x128xbf16>, vector<128x64xbf16>, vector<16x64xf32> -> vector<16x64xf32>
    %c0_9 = arith.constant 0 : index
    %c0_10 = arith.constant 0 : index
    %13 = vector.load %arg5[%c0_9, %c0_10] : memref<1x64xf32, #tpu.memory_space<vmem>>, vector<1x64xf32>
    %14 = vector.broadcast %13 : vector<1x64xf32> to vector<16x64xf32>
    %15 = arith.addf %12, %14 : vector<16x64xf32>
    %16 = arith.addf %1, %15 : vector<16x64xf32>
    %c0_11 = arith.constant 0 : index
    %c0_12 = arith.constant 0 : index
    %17 = vector.load %arg6[%c0_11, %c0_12] : memref<1x64xf32, #tpu.memory_space<vmem>>, vector<1x64xf32>
    %c0_13 = arith.constant 0 : index
    %c0_14 = arith.constant 0 : index
    %18 = vector.load %arg7[%c0_13, %c0_14] : memref<1x64xf32, #tpu.memory_space<vmem>>, vector<1x64xf32>
    %cst_15 = arith.constant dense<0.000000e+00> : vector<16xf32>
    %19 = vector.multi_reduction <add>, %16, %cst_15 [1] : vector<16x64xf32> to vector<16xf32>
    %20 = vector.shape_cast %19 : vector<16xf32> to vector<16x1xf32>
    %cst_16 = arith.constant 6.400000e+01 : f32
    %21 = vector.broadcast %cst_16 : f32 to vector<16x1xf32>
    %22 = arith.divf %20, %21 : vector<16x1xf32>
    %23 = vector.broadcast %22 : vector<16x1xf32> to vector<16x64xf32>
    %24 = arith.subf %16, %23 : vector<16x64xf32>
    %25 = arith.mulf %24, %24 : vector<16x64xf32>
    %cst_17 = arith.constant dense<0.000000e+00> : vector<16xf32>
    %26 = vector.multi_reduction <add>, %25, %cst_17 [1] : vector<16x64xf32> to vector<16xf32>
    %27 = vector.shape_cast %26 : vector<16xf32> to vector<16x1xf32>
    %cst_18 = arith.constant 6.400000e+01 : f32
    %28 = vector.broadcast %cst_18 : f32 to vector<16x1xf32>
    %29 = arith.divf %27, %28 : vector<16x1xf32>
    %30 = vector.broadcast %22 : vector<16x1xf32> to vector<16x64xf32>
    %31 = arith.subf %16, %30 : vector<16x64xf32>
    %cst_19 = arith.constant 9.99999997E-7 : f32
    %32 = vector.broadcast %cst_19 : f32 to vector<16x1xf32>
    %33 = arith.addf %29, %32 : vector<16x1xf32>
    %34 = math.rsqrt %33 : vector<16x1xf32>
    %35 = vector.broadcast %34 : vector<16x1xf32> to vector<16x64xf32>
    %36 = arith.mulf %31, %35 : vector<16x64xf32>
    %37 = vector.broadcast %17 : vector<1x64xf32> to vector<16x64xf32>
    %38 = arith.mulf %36, %37 : vector<16x64xf32>
    %39 = vector.broadcast %18 : vector<1x64xf32> to vector<16x64xf32>
    %40 = arith.addf %38, %39 : vector<16x64xf32>
    %41 = arith.truncf %40 : vector<16x64xf32> to vector<16x64xbf16>
    %c0_20 = arith.constant 0 : index
    %c0_21 = arith.constant 0 : index
    %42 = vector.load %arg8[%c0_20, %c0_21] : memref<16x64xbf16, #tpu.memory_space<vmem>>, vector<16x64xbf16>
    tpu.vector_store %arg8[%c0_20, %c0_21], %41 {strides = array<i32>} : memref<16x64xbf16, #tpu.memory_space<vmem>>, vector<16x64xbf16>,
    return
  }
  func.func @transform_0(%arg0: i32) -> (i32, i32) {
    %c0_i32 = arith.constant 0 : i32
    %c0_i32_0 = arith.constant 0 : i32
    return %arg0, %c0_i32 : i32, i32
  }
  func.func @transform_1(%arg0: i32) -> (i32, i32) {
    %c0_i32 = arith.constant 0 : i32
    %c0_i32_0 = arith.constant 0 : i32
    %c0_i32_1 = arith.constant 0 : i32
    return %c0_i32, %c0_i32_0 : i32, i32
  }
  func.func @transform_2(%arg0: i32) -> (i32, i32) {
    %c0_i32 = arith.constant 0 : i32
    %c0_i32_0 = arith.constant 0 : i32
    %c0_i32_1 = arith.constant 0 : i32
    return %c0_i32, %c0_i32_0 : i32, i32
  }
  func.func @transform_3(%arg0: i32) -> (i32, i32) {
    %c0_i32 = arith.constant 0 : i32
    %c0_i32_0 = arith.constant 0 : i32
    %c0_i32_1 = arith.constant 0 : i32
    return %c0_i32, %c0_i32_0 : i32, i32
  }
  func.func @transform_4(%arg0: i32) -> (i32, i32) {
    %c0_i32 = arith.constant 0 : i32
    %c0_i32_0 = arith.constant 0 : i32
    %c0_i32_1 = arith.constant 0 : i32
    return %c0_i32, %c0_i32_0 : i32, i32
  }
  func.func @transform_5(%arg0: i32) -> (i32, i32) {
    %c0_i32 = arith.constant 0 : i32
    %c0_i32_0 = arith.constant 0 : i32
    %c0_i32_1 = arith.constant 0 : i32
    return %c0_i32, %c0_i32_0 : i32, i32
  }
  func.func @transform_6(%arg0: i32) -> (i32, i32) {
    %c0_i32 = arith.constant 0 : i32
    %c0_i32_0 = arith.constant 0 : i32
    %c0_i32_1 = arith.constant 0 : i32
    return %c0_i32, %c0_i32_0 : i32, i32
  }
  func.func @transform_7(%arg0: i32) -> (i32, i32) {
    %c0_i32 = arith.constant 0 : i32
    %c0_i32_0 = arith.constant 0 : i32
    return %arg0, %c0_i32 : i32, i32
  }
}

</mosaic_0001>

<llo_original>
// kernel: _lambda_.17
$region0: #{_lambda_.17}
  #allocation0 [shape = 'u32[]', space=smem, size = 0x4, offset = 0x4, fixed_abs, tag = 'smem constant byte address 0x4 - core index']
  #allocation1 [shape = 'u32[144,128]{1,0:T(1,128)}', space=vmem, size = 0x12000, scoped, tag = 'internal scratch']
  %s0 = inlined_call_operand.vmem [shape: bf16[16,64], index: 0, kind: input, shape index: {}]
  %s1 = inlined_call_operand.vmem [shape: f32[1,64], index: 1, kind: input, shape index: {}]
  %s2 = inlined_call_operand.vmem [shape: f32[1,64], index: 2, kind: input, shape index: {}]
  %s3 = inlined_call_operand.vmem [shape: bf16[16,64], index: 3, kind: output, shape index: {}]
  %s4 = sld [smem:[#allocation0]]
  $region22: #{_lambda_.17} parent=0
    _
  %s6 = ssub.s32 1, %s4
  %s7 = scalar_select 0, %s6, %s4
  // Predicated region
  $region2: #{_lambda_.17} parent=0 // pred_check
    _
  $region3: #{_lambda_.17} parent=0 // pred_check_branch
    %9 = sbr.rel (0) target = $region5
  $region4: #{_lambda_.17} parent=0 // pred_region
    _
  $region5: #{_lambda_.17} parent=0 // pred_fallthru
    _
  // Predicated region
  $region6: #{_lambda_.17} parent=0 // pred_check
    _
  $region7: #{_lambda_.17} parent=0 // pred_check_branch
    %11 = sbr.rel (0) target = $region9
  $region8: #{_lambda_.17} parent=0 // pred_region
    _
  $region9: #{_lambda_.17} parent=0 // pred_fallthru
    _
  // Predicated region
  $region10: #{_lambda_.17} parent=0 // pred_check
    _
  $region11: #{_lambda_.17} parent=0 // pred_check_branch
    %13 = sbr.rel (0) target = $region13
  $region12: #{_lambda_.17} parent=0 // pred_region
    _
  $region13: #{_lambda_.17} parent=0 // pred_fallthru
    _
  %v14 = vld [vmem:[%s0] sm:$0xf]
  %v15 = vld [vmem:[%s0 + $0x4] sm:$0xf]
  %v16 = vunpack.c.l.bf16 %v14
  %v17 = vunpack.c.l.bf16 %v15
  %v18 = vld [vmem:[%s1] sm:$0x1]
  %v19 = vld [vmem:[%s2] sm:$0x1]
  %vm20 = vcmask 523264
  %v21 = vsel %vm20, %v16, 0.0
  %22 = vadd.xlane.f32.xlu0 %v21
  %v23 = vpop.xlane.xlu0 %22
  %v24 = vsel %vm20, %v17, 0.0
  %25 = vadd.xlane.f32.xlu0 %v24
  %v26 = vpop.xlane.xlu0 %25
  %v27 = vrcp.pop 64.0
  %v28 = vmul.f32 %v23, %v27
  %v29 = vmul.f32 %v26, %v27
  %v30 = vsub.f32 %v16, %v28
  %v31 = vsub.f32 %v17, %v29
  %v32 = vmul.f32 %v30, %v30
  %v33 = vmul.f32 %v31, %v31
  %v34 = vsel %vm20, %v32, 0.0
  %35 = vadd.xlane.f32.xlu0 %v34
  %v36 = vpop.xlane.xlu0 %35
  %v37 = vsel %vm20, %v33, 0.0
  %38 = vadd.xlane.f32.xlu0 %v37
  %v39 = vpop.xlane.xlu0 %38
  %v40 = vmul.f32 %v36, %v27
  %v41 = vmul.f32 %v39, %v27
  %v42 = vadd.f32 %v40, 1e-06
  %v43 = vadd.f32 %v41, 1e-06
  %v44 = vrsqrt.pop %v42
  %v45 = vrsqrt.pop %v43
  %v46 = vmul.f32 %v30, %v44
  %v47 = vmul.f32 %v31, %v45
  %v49 = vlaneseq
  %v50 = vshrl.u32 %v49, 7
  %v51 = vsub.s32 0, %v50
  %v52 = vrot.slane %v18, %v51
  %v54 = vmul.f32 %v46, %v52
  %v55 = vmul.f32 %v47, %v52
  %v57 = vlaneseq
  %v58 = vshrl.u32 %v57, 7
  %v59 = vsub.s32 0, %v58
  %v60 = vrot.slane %v19, %v59
  %v62 = vadd.f32 %v54, %v60
  %v63 = vadd.f32 %v55, %v60
  %v64 = vpack.c.bf16 %v63, %v62
  %v66 = vunpack.c.l.b16 %v64
  %v67 = vunpack.c.h.b16 %v64
  %v68 = vpack.c.b16 %v66, %v66
  %v69 = vpack.c.b16 %v67, %v67
  %vm72 = vcmask 519168
  %73 = vst.msk [vmem:[%s3] sm:$0xf] %vm72, %v68
  %74 = vst.msk [vmem:[%s3 + $0x4] sm:$0xf] %vm72, %v69
  // Predicated region
  $region14: #{_lambda_.17} parent=0 // pred_check
    _
  $region15: #{_lambda_.17} parent=0 // pred_check_branch
    %76 = sbr.rel (0) target = $region17
  $region16: #{_lambda_.17} parent=0 // pred_region
    _
  $region17: #{_lambda_.17} parent=0 // pred_fallthru
    _
  // Predicated region
  $region18: #{_lambda_.17} parent=0 // pred_check
    _
  $region19: #{_lambda_.17} parent=0 // pred_check_branch
    %78 = sbr.rel (0) target = $region21
  $region20: #{_lambda_.17} parent=0 // pred_region
    _
  $region21: #{_lambda_.17} parent=0 // pred_fallthru
    _

// kernel: _lambda_.18
$region0: #{_lambda_.18}
  #allocation0 [shape = 'u32[]', space=smem, size = 0x4, offset = 0x4, fixed_abs, tag = 'smem constant byte address 0x4 - core index']
  #allocation1 [shape = 'u32[144,128]{1,0:T(1,128)}', space=vmem, size = 0x12000, scoped, tag = 'internal scratch']
  %s0 = inlined_call_operand.vmem [shape: bf16[2,8,64], index: 0, kind: input, shape index: {}]
  %s1 = inlined_call_operand.vmem [shape: bf16[64,192], index: 1, kind: input, shape index: {}]
  %s2 = inlined_call_operand.vmem [shape: f32[1,192], index: 2, kind: input, shape index: {}]
  %s3 = inlined_call_operand.vmem [shape: bf16[64,64], index: 3, kind: input, shape index: {}]
  %s4 = inlined_call_operand.vmem [shape: f32[1,64], index: 4, kind: input, shape index: {}]
  %s5 = inlined_call_operand.vmem [shape: f32[1,64], index: 5, kind: input, shape index: {}]
  %s6 = inlined_call_operand.vmem [shape: f32[1,64], index: 6, kind: input, shape index: {}]
  %s7 = inlined_call_operand.vmem [shape: bf16[2,8,64], index: 7, kind: output, shape index: {}]
  %s8 = sld [smem:[#allocation0]]
  $region61: #{_lambda_.18} parent=0
    _
  %s10 = ssub.s32 1, %s8
  %s11 = scalar_select 0, %s10, %s8
  loop: start=0, step=1, limit=4
  $region2: #{_lambda_.18} parent=0 // loop_pre_header
    _
  $region3: #{_lambda_.18} parent=0 // loop_header
    %s13 = sphi 0, %s17
    %p14 = scmp.ge.s32.totalorder %s13, 4
    %s23 = sphi 0, %s25
    %s26 = sphi 0, %s23
    %s27 = sphi 0, %s26
    %s43 = sphi 0, %s27
    %s47 = sphi 0, %s47
    %s49 = sphi 0, %s47
    %s50 = sphi 0, %s49
    %s64 = sphi 0, %s50
    %s68 = sphi 0, %s68
    %s70 = sphi 0, %s68
    %s71 = sphi 0, %s70
    %s85 = sphi 0, %s71
    %s89 = sphi 0, %s89
    %s91 = sphi 0, %s89
    %s92 = sphi 0, %s91
    %s106 = sphi 0, %s92
    %s110 = sphi 0, %s110
    %s112 = sphi 0, %s110
    %s113 = sphi 0, %s112
    %s127 = sphi 0, %s113
    %s131 = sphi 0, %s131
    %s133 = sphi 0, %s131
    %s134 = sphi 0, %s133
    %s148 = sphi 0, %s134
    %s152 = sphi 0, %s152
    %s154 = sphi 0, %s152
    %s155 = sphi 0, %s154
    %s169 = sphi 0, %s155
    %s175 = sphi 0, %s177
    %s178 = sphi 0, %s175
    %s179 = sphi 0, %s178
    %s195 = sphi 0, %s179
  $region4: #{_lambda_.18} parent=0 // loop_header_branch
    %16 = sbr.rel (%p14) target = $region8
  $region5: #{_lambda_.18} parent=0 // loop_body
    %s18 = ssub.s32 %s13, 1
    %s19 = ssub.s32 %s13, 2
    %s20 = sadd.s32 %s13, 1
    %s21 = ssub.s32 %s13, %s20
    %p22 = scmp.eq.s32.totalorder %s21, 0
    %s24 = sadd.s32 %s23, 1
    %s25 = scalar_select %p22, %s23, %s24
    %p28 = pneg %p22
    %p29 = scmp.eq.s32.totalorder %s13, 1
    %p30 = por %p28, %p29
    %p31 = scmp.ne.s32.totalorder %s23, %s26
    %p32 = scmp.eq.s32.totalorder %s13, 0
    %p33 = por %p31, %p32
    %p34 = scmp.ne.s32.totalorder %s23, %s26
    %p35 = scmp.eq.s32.totalorder %s18, 1
    %p36 = por %p34, %p35
    %p37 = scmp.ne.s32.totalorder %s26, %s27
    %p38 = scmp.eq.s32.totalorder %s18, 0
    %p39 = por %p37, %p38
    %p40 = scmp.ne.s32.totalorder %s26, %s27
    %p41 = scmp.eq.s32.totalorder %s19, 1
    %p42 = por %p40, %p41
    %p44 = scmp.ne.s32.totalorder %s27, %s43
    %p45 = scmp.eq.s32.totalorder %s19, 0
    %p46 = por %p44, %p45
    %s48 = sadd.s32 %s47, 1
    %p51 = scmp.eq.s32.totalorder %s13, 1
    %p52 = scmp.ne.s32.totalorder %s47, %s49
    %p53 = scmp.eq.s32.totalorder %s13, 0
    %p54 = por %p52, %p53
    %p55 = scmp.ne.s32.totalorder %s47, %s49
    %p56 = scmp.eq.s32.totalorder %s18, 1
    %p57 = por %p55, %p56
    %p58 = scmp.ne.s32.totalorder %s49, %s50
    %p59 = scmp.eq.s32.totalorder %s18, 0
    %p60 = por %p58, %p59
    %p61 = scmp.ne.s32.totalorder %s49, %s50
    %p62 = scmp.eq.s32.totalorder %s19, 1
    %p63 = por %p61, %p62
    %p65 = scmp.ne.s32.totalorder %s50, %s64
    %p66 = scmp.eq.s32.totalorder %s19, 0
    %p67 = por %p65, %p66
    %s69 = sadd.s32 %s68, 1
    %p72 = scmp.eq.s32.totalorder %s13, 1
    %p73 = scmp.ne.s32.totalorder %s68, %s70
    %p74 = scmp.eq.s32.totalorder %s13, 0
    %p75 = por %p73, %p74
    %p76 = scmp.ne.s32.totalorder %s68, %s70
    %p77 = scmp.eq.s32.totalorder %s18, 1
    %p78 = por %p76, %p77
    %p79 = scmp.ne.s32.totalorder %s70, %s71
    %p80 = scmp.eq.s32.totalorder %s18, 0
    %p81 = por %p79, %p80
    %p82 = scmp.ne.s32.totalorder %s70, %s71
    %p83 = scmp.eq.s32.totalorder %s19, 1
    %p84 = por %p82, %p83
    %p86 = scmp.ne.s32.totalorder %s71, %s85
    %p87 = scmp.eq.s32.totalorder %s19, 0
    %p88 = por %p86, %p87
    %s90 = sadd.s32 %s89, 1
    %p93 = scmp.eq.s32.totalorder %s13, 1
    %p94 = scmp.ne.s32.totalorder %s89, %s91
    %p95 = scmp.eq.s32.totalorder %s13, 0
    %p96 = por %p94, %p95
    %p97 = scmp.ne.s32.totalorder %s89, %s91
    %p98 = scmp.eq.s32.totalorder %s18, 1
    %p99 = por %p97, %p98
    %p100 = scmp.ne.s32.totalorder %s91, %s92
    %p101 = scmp.eq.s32.totalorder %s18, 0
    %p102 = por %p100, %p101
    %p103 = scmp.ne.s32.totalorder %s91, %s92
    %p104 = scmp.eq.s32.totalorder %s19, 1
    %p105 = por %p103, %p104
    %p107 = scmp.ne.s32.totalorder %s92, %s106
    %p108 = scmp.eq.s32.totalorder %s19, 0
    %p109 = por %p107, %p108
    %s111 = sadd.s32 %s110, 1
    %p114 = scmp.eq.s32.totalorder %s13, 1
    %p115 = scmp.ne.s32.totalorder %s110, %s112
    %p116 = scmp.eq.s32.totalorder %s13, 0
    %p117 = por %p115, %p116
    %p118 = scmp.ne.s32.totalorder %s110, %s112
    %p119 = scmp.eq.s32.totalorder %s18, 1
    %p120 = por %p118, %p119
    %p121 = scmp.ne.s32.totalorder %s112, %s113
    %p122 = scmp.eq.s32.totalorder %s18, 0
    %p123 = por %p121, %p122
    %p124 = scmp.ne.s32.totalorder %s112, %s113
    %p125 = scmp.eq.s32.totalorder %s19, 1
    %p126 = por %p124, %p125
    %p128 = scmp.ne.s32.totalorder %s113, %s127
    %p129 = scmp.eq.s32.totalorder %s19, 0
    %p130 = por %p128, %p129
    %s132 = sadd.s32 %s131, 1
    %p135 = scmp.eq.s32.totalorder %s13, 1
    %p136 = scmp.ne.s32.totalorder %s131, %s133
    %p137 = scmp.eq.s32.totalorder %s13, 0
    %p138 = por %p136, %p137
    %p139 = scmp.ne.s32.totalorder %s131, %s133
    %p140 = scmp.eq.s32.totalorder %s18, 1
    %p141 = por %p139, %p140
    %p142 = scmp.ne.s32.totalorder %s133, %s134
    %p143 = scmp.eq.s32.totalorder %s18, 0
    %p144 = por %p142, %p143
    %p145 = scmp.ne.s32.totalorder %s133, %s134
    %p146 = scmp.eq.s32.totalorder %s19, 1
    %p147 = por %p145, %p146
    %p149 = scmp.ne.s32.totalorder %s134, %s148
    %p150 = scmp.eq.s32.totalorder %s19, 0
    %p151 = por %p149, %p150
    %s153 = sadd.s32 %s152, 1
    %p156 = scmp.eq.s32.totalorder %s13, 1
    %p157 = scmp.ne.s32.totalorder %s152, %s154
    %p158 = scmp.eq.s32.totalorder %s13, 0
    %p159 = por %p157, %p158
    %p160 = scmp.ne.s32.totalorder %s152, %s154
    %p161 = scmp.eq.s32.totalorder %s18, 1
    %p162 = por %p160, %p161
    %p163 = scmp.ne.s32.totalorder %s154, %s155
    %p164 = scmp.eq.s32.totalorder %s18, 0
    %p165 = por %p163, %p164
    %p166 = scmp.ne.s32.totalorder %s154, %s155
    %p167 = scmp.eq.s32.totalorder %s19, 1
    %p168 = por %p166, %p167
    %p170 = scmp.ne.s32.totalorder %s155, %s169
    %p171 = scmp.eq.s32.totalorder %s19, 0
    %p172 = por %p170, %p171
    %s173 = ssub.s32 %s13, %s20
    %p174 = scmp.eq.s32.totalorder %s173, 0
    %s176 = sadd.s32 %s175, 1
    %s177 = scalar_select %p174, %s175, %s176
    %p180 = pneg %p174
    %p181 = scmp.eq.s32.totalorder %s13, 1
    %p182 = por %p180, %p181
    %p183 = scmp.ne.s32.totalorder %s175, %s178
    %p184 = scmp.eq.s32.totalorder %s13, 0
    %p185 = por %p183, %p184
    %p186 = scmp.ne.s32.totalorder %s175, %s178
    %p187 = scmp.eq.s32.totalorder %s18, 1
    %p188 = por %p186, %p187
    %p189 = scmp.ne.s32.totalorder %s178, %s179
    %p190 = scmp.eq.s32.totalorder %s18, 0
    %p191 = por %p189, %p190
    %p192 = scmp.ne.s32.totalorder %s178, %s179
    %p193 = scmp.eq.s32.totalorder %s19, 1
    %p194 = por %p192, %p193
    %p196 = scmp.ne.s32.totalorder %s179, %s195
    %p197 = scmp.eq.s32.totalorder %s19, 0
    %p198 = por %p196, %p197
    %p199 = scmp.le.s32.totalorder 1, %s13
    %p200 = scmp.lt.s32.totalorder %s13, 3
    %p201 = pnand %p199, %p200
    %p202 = pneg %p201
    // Predicated region
    $region9: #{_lambda_.18} parent=5 // pred_check
      _
    $region10: #{_lambda_.18} parent=5 // pred_check_branch
      %204 = sbr.rel (%p201) target = $region12
    $region11: #{_lambda_.18} parent=5 // pred_region
      %s205 = ssub.s32 %s13, 1
      // Predicated region
      $region13: #{_lambda_.18} parent=11 // pred_check
        %p206 = pneg %p60
      $region14: #{_lambda_.18} parent=11 // pred_check_branch
        %208 = sbr.rel (%p206) target = $region16
      $region15: #{_lambda_.18} parent=11 // pred_region
        _
      $region16: #{_lambda_.18} parent=11 // pred_fallthru
        _
      // Predicated region
      $region17: #{_lambda_.18} parent=11 // pred_check
        %p209 = pneg %p81
      $region18: #{_lambda_.18} parent=11 // pred_check_branch
        %211 = sbr.rel (%p209) target = $region20
      $region19: #{_lambda_.18} parent=11 // pred_region
        _
      $region20: #{_lambda_.18} parent=11 // pred_fallthru
        _
      // Predicated region
      $region21: #{_lambda_.18} parent=11 // pred_check
        %p212 = pneg %p102
      $region22: #{_lambda_.18} parent=11 // pred_check_branch
        %214 = sbr.rel (%p212) target = $region24
      $region23: #{_lambda_.18} parent=11 // pred_region
        _
      $region24: #{_lambda_.18} parent=11 // pred_fallthru
        _
      // Predicated region
      $region25: #{_lambda_.18} parent=11 // pred_check
        %p215 = pneg %p123
      $region26: #{_lambda_.18} parent=11 // pred_check_branch
        %217 = sbr.rel (%p215) target = $region28
      $region27: #{_lambda_.18} parent=11 // pred_region
        _
      $region28: #{_lambda_.18} parent=11 // pred_fallthru
        _
      // Predicated region
      $region29: #{_lambda_.18} parent=11 // pred_check
        %p218 = pneg %p144
      $region30: #{_lambda_.18} parent=11 // pred_check_branch
        %220 = sbr.rel (%p218) target = $region32
      $region31: #{_lambda_.18} parent=11 // pred_region
        _
      $region32: #{_lambda_.18} parent=11 // pred_fallthru
        _
      // Predicated region
      $region33: #{_lambda_.18} parent=11 // pred_check
        %p221 = pneg %p165
      $region34: #{_lambda_.18} parent=11 // pred_check_branch
        %223 = sbr.rel (%p221) target = $region36
      $region35: #{_lambda_.18} parent=11 // pred_region
        _
      $region36: #{_lambda_.18} parent=11 // pred_fallthru
        _
    $region12: #{_lambda_.18} parent=5 // pred_fallthru
      _
    %p224 = scmp.lt.s32.totalorder %s13, 2
    // Predicated region
    $region37: #{_lambda_.18} parent=5 // pred_check
      %p225 = pneg %p224
    $region38: #{_lambda_.18} parent=5 // pred_check_branch
      %227 = sbr.rel (%p225) target = $region40
    $region39: #{_lambda_.18} parent=5 // pred_region
      // Predicated region
      $region41: #{_lambda_.18} parent=39 // pred_check
        %p228 = pneg %p33
      $region42: #{_lambda_.18} parent=39 // pred_check_branch
        %230 = sbr.rel (%p228) target = $region44
      $region43: #{_lambda_.18} parent=39 // pred_region
        %p231 = scmp.lt.s32.totalorder %s13, 1
        %s232 = scalar_select %p231, %s13, 1
        %s233 = smul.addr %s232, 4
        %s234 = scalar_lea.vmem %s0, %s233
      $region44: #{_lambda_.18} parent=39 // pred_fallthru
        _
    $region40: #{_lambda_.18} parent=5 // pred_fallthru
      _
    %p235 = scmp.le.s32.totalorder 1, %s13
    %p236 = scmp.lt.s32.totalorder %s13, 3
    %p237 = pnand %p235, %p236
    %p238 = pneg %p237
    // Predicated region
    $region45: #{_lambda_.18} parent=5 // pred_check
      _
    $region46: #{_lambda_.18} parent=5 // pred_check_branch
      %240 = sbr.rel (%p237) target = $region48
    $region47: #{_lambda_.18} parent=5 // pred_region
      %s241 = ssub.s32 %s13, 1
      %p242 = scmp.lt.s32.totalorder %s18, 1
      %s243 = scalar_select %p242, %s18, 1
      %s244 = smul.addr %s243, 4
      %s245 = scalar_lea.vmem %s0, %s244
      %p246 = pneg %p39
      %p247 = pneg %p36
      %p248 = pneg %p60
      %p249 = pneg %p57
      %p250 = pneg %p81
      %p251 = pneg %p78
      %p252 = pneg %p102
      %p253 = pneg %p99
      %p254 = pneg %p123
      %p255 = pneg %p120
      %p256 = pneg %p144
      %p257 = pneg %p141
      %p258 = pneg %p165
      %p259 = pneg %p162
      %p260 = pneg %p191
      %p261 = pneg %p188
      %p262 = scmp.lt.s32.totalorder %s18, 1
      %s263 = scalar_select %p262, %s18, 1
      %s264 = smul.addr %s263, 4
      %s265 = scalar_lea.vmem %s7, %s264
      %p266 = scmp.lt.s32.totalorder %s18, 1
      %s267 = scalar_select %p266, %s18, 1
      %s268 = smul.addr %s267, 4
      %s269 = scalar_lea.vmem %s0, %s268
      %p270 = scmp.lt.s32.totalorder %s18, 1
      %s271 = scalar_select %p270, %s18, 1
      %s272 = smul.addr %s271, 4
      %s273 = scalar_lea.vmem %s7, %s272
      %v275 = vld [vmem:[%s269] sm:$0xf]
      %v276 = vunpack.c.l.bf16 %v275
      %v277 = vld [vmem:[%s1] sm:$0xff]
      %v278 = vld [vmem:[%s1 + $0x8] sm:$0xff]
      %v279 = vld [vmem:[%s1 + $0x10] sm:$0xff]
      %v280 = vld [vmem:[%s1 + $0x18] sm:$0xff]
      %v281 = vld [vmem:[%s1 + $0x20] sm:$0xff]
      %v282 = vld [vmem:[%s1 + $0x28] sm:$0xff]
      %v283 = vld [vmem:[%s1 + $0x30] sm:$0xff]
      %v284 = vld [vmem:[%s1 + $0x38] sm:$0xff]
      %v285 = vld [vmem:[%s2] sm:$0x3]
      %v287 = vlaneseq
      %v288 = vshrl.u32 %v287, 7
      %v289 = vsub.s32 0, %v288
      %v290 = vrot.slane %v285, %v289
      %v291 = vlaneseq
      %v292 = vshrl.u32 %v291, 7
      %v293 = vsub.s32 1, %v292
      %v294 = vrot.slane %v285, %v293
      %v305 = vunpack.c.l.b16 %v277
      %v306 = vunpack.c.h.b16 %v277
      %v307 = vunpack.c.l.b16 %v278
      %v308 = vunpack.c.h.b16 %v278
      %v309 = vunpack.c.l.b16 %v279
      %v310 = vunpack.c.h.b16 %v279
      %v311 = vunpack.c.l.b16 %v280
      %v312 = vunpack.c.h.b16 %v280
      %v313 = vunpack.c.l.b16 %v281
      %v314 = vunpack.c.h.b16 %v281
      %v315 = vunpack.c.l.b16 %v282
      %v316 = vunpack.c.h.b16 %v282
      %v317 = vunpack.c.l.b16 %v283
      %v318 = vunpack.c.h.b16 %v283
      %v319 = vunpack.c.l.b16 %v284
      %v320 = vunpack.c.h.b16 %v284
      %v321 = vpack.c.b16 %v307, %v305
      %v322 = vpack.c.b16 %v308, %v306
      %v323 = vpack.c.b16 %v311, %v309
      %v324 = vpack.c.b16 %v312, %v310
      %v325 = vpack.c.b16 %v315, %v313
      %v326 = vpack.c.b16 %v316, %v314
      %v327 = vpack.c.b16 %v319, %v317
      %v328 = vpack.c.b16 %v320, %v318
      %vm337 = vcmask 523264
      %v339 = vsel %vm337, %v275, 0
      %341 = vmatprep.subr.bf16.mxu0 %v322
      %342 = vmatpush1.bf16.msra.mxu0 %v321
      %343 = vmatprep.subr.bf16.mxu0 %v324
      %344 = vmatpush1.bf16.msra.mxu0 %v323
      %345 = vmatprep.subr.bf16.mxu0 %v326
      %346 = vmatpush1.bf16.msra.mxu0 %v325
      %347 = vmatprep.subr.bf16.mxu0 %v328
      %348 = vmatpush1.bf16.msra.mxu0 %v327
      %349 = vmatprep.subr.bf16.mxu0 0
      %350 = vmatpush1.bf16.msra.mxu0 0
      %351 = vmatprep.subr.bf16.mxu0 0
      %352 = vmatpush1.bf16.msra.mxu0 0
      %353 = vmatprep.subr.bf16.mxu0 0
      %354 = vmatpush1.bf16.msra.mxu0 0
      %355 = vmatprep.subr.bf16.mxu0 0
      %356 = vmatpush1.bf16.msra.mxu0 0
      %357 = vmatprep.subr.bf16.mxu0 0
      %358 = vmatpush1.bf16.msra.mxu0 0
      %359 = vmatprep.subr.bf16.mxu0 0
      %360 = vmatpush1.bf16.msra.mxu0 0
      %361 = vmatprep.subr.bf16.mxu0 0
      %362 = vmatpush1.bf16.msra.mxu0 0
      %363 = vmatprep.subr.bf16.mxu0 0
      %364 = vmatpush1.bf16.msra.mxu0 0
      %365 = vmatprep.subr.bf16.mxu0 0
      %366 = vmatpush1.bf16.msra.mxu0 0
      %367 = vmatprep.subr.bf16.mxu0 0
      %368 = vmatpush1.bf16.msra.mxu0 0
      %369 = vmatprep.subr.bf16.mxu0 0
      %370 = vmatpush1.bf16.msra.mxu0 0
      %371 = vmatprep.subr.bf16.mxu0 0
      %372 = vmatpush1.bf16.msra.mxu0 0
      %373 = vmatprep.mubr.bf16.mxu0 0
      %374 = vmatmul.mubr.bf16.gmra.mrb[0].mxu0 %v339
      %v375 = vpop.f32.mrb[0].mxu0
      %v376 = vadd.f32 %v290, %v375
      %v377 = vpop.f32.mrb[0].mxu0
      %v378 = vadd.f32 %v294, %v377
      %v379 = vpop.f32.mrb[0].mxu0
      %v380 = vpop.f32.mrb[0].mxu0
      %381 = vdwg.mxu0
      %v382 = vlaneseq
      %v383 = vshrl.u32 %v382, 7
      %v384 = vlaneseq
      %v385 = vand.u32 %v384, 127
      %vm386 = vcmp.ge.s32.totalorder %v383, %v385
      %v387 = vsel %vm386, 0.0, -1e+09
      %v388 = vld [vmem:[%s3] sm:$0xf]
      %v389 = vld [vmem:[%s3 + $0x4] sm:$0xf]
      %v390 = vld [vmem:[%s3 + $0x8] sm:$0xf]
      %v391 = vld [vmem:[%s3 + $0xc] sm:$0xf]
      %v392 = vld [vmem:[%s3 + $0x10] sm:$0xf]
      %v393 = vld [vmem:[%s3 + $0x14] sm:$0xf]
      %v394 = vld [vmem:[%s3 + $0x18] sm:$0xf]
      %v395 = vld [vmem:[%s3 + $0x1c] sm:$0xf]
      %v396 = vpack.c.bf16 %v376, %v376
      %v397 = vpack.c.bf16 %v378, %v378
      %399 = vrot.lane.b32.xlu0 %v396, 64
      %v400 = vpop.permute.xlu0 %399
      %vm401 = vcmask 130048
      %v403 = vsel %vm401, %v396, 0
      %v406 = vsel %vm401, %v400, 0
      %408 = vmatprep.subr.bf16.mxu0 0
      %409 = vmatpush1.bf16.xpose.msra.mxu0 %v406
      %410 = vmatprep.subr.bf16.mxu0 0
      %411 = vmatpush1.bf16.xpose.msra.mxu0 0
      %412 = vmatprep.subr.bf16.mxu0 0
      %413 = vmatpush1.bf16.xpose.msra.mxu0 0
      %414 = vmatprep.subr.bf16.mxu0 0
      %415 = vmatpush1.bf16.xpose.msra.mxu0 0
      %416 = vmatprep.subr.bf16.mxu0 0
      %417 = vmatpush1.bf16.xpose.msra.mxu0 0
      %418 = vmatprep.subr.bf16.mxu0 0
      %419 = vmatpush1.bf16.xpose.msra.mxu0 0
      %420 = vmatprep.subr.bf16.mxu0 0
      %421 = vmatpush1.bf16.xpose.msra.mxu0 0
      %422 = vmatprep.subr.bf16.mxu0 0
      %423 = vmatpush1.bf16.xpose.msra.mxu0 0
      %424 = vmatprep.subr.bf16.mxu0 0
      %425 = vmatpush1.bf16.xpose.msra.mxu0 0
      %426 = vmatprep.subr.bf16.mxu0 0
      %427 = vmatpush1.bf16.xpose.msra.mxu0 0
      %428 = vmatprep.subr.bf16.mxu0 0
      %429 = vmatpush1.bf16.xpose.msra.mxu0 0
      %430 = vmatprep.subr.bf16.mxu0 0
      %431 = vmatpush1.bf16.xpose.msra.mxu0 0
      %432 = vmatprep.subr.bf16.mxu0 0
      %433 = vmatpush1.bf16.xpose.msra.mxu0 0
      %434 = vmatprep.subr.bf16.mxu0 0
      %435 = vmatpush1.bf16.xpose.msra.mxu0 0
      %436 = vmatprep.subr.bf16.mxu0 0
      %437 = vmatpush1.bf16.xpose.msra.mxu0 0
      %438 = vmatprep.subr.bf16.mxu0 0
      %439 = vmatpush1.bf16.xpose.msra.mxu0 0
      %440 = vmatprep.mubr.bf16.mxu0 0
      %441 = vmatmul.mubr.bf16.gmra.mrb[0].mxu0 %v403
      %v442 = vpop.f32.mrb[0].mxu0
      %v443 = vadd.f32 0.0, %v442
      %v444 = vpop.f32.mrb[0].mxu0
      %v445 = vpop.f32.mrb[0].mxu0
      %v446 = vpop.f32.mrb[0].mxu0
      %447 = vdwg.mxu0
      %v448 = vmul.f32 %v443, 0.25
      %v449 = vadd.f32 %v448, %v387
      %vm450 = vcmask 64512
      %v451 = vsel %vm450, %v449, -inf
      %452 = vmax.xlane.f32.xlu0 %v451
      %v453 = vpop.xlane.xlu0 %452
      %v454 = vsub.f32 %v449, %v453
      %v455 = vmul.f32 %v454, 1.442695
      %v456 = vpow.pop %v455
      %v457 = vsel %vm450, %v456, 0.0
      %458 = vadd.xlane.f32.xlu0 %v457
      %v459 = vpop.xlane.xlu0 %458
      %v460 = vrcp.pop %v459
      %v461 = vmul.f32 %v456, %v460
      %v462 = vpack.c.bf16 %v461, %v461
      %v464 = vsel %vm450, %v462, 0
      %vm466 = vcmask 1043456
      %v468 = vsel %vm466, %v397, 0
      %470 = vmatprep.subr.bf16.mxu0 0
      %471 = vmatpush1.bf16.msra.mxu0 %v468
      %472 = vmatprep.subr.bf16.mxu0 0
      %473 = vmatpush1.bf16.msra.mxu0 0
      %474 = vmatprep.subr.bf16.mxu0 0
      %475 = vmatpush1.bf16.msra.mxu0 0
      %476 = vmatprep.subr.bf16.mxu0 0
      %477 = vmatpush1.bf16.msra.mxu0 0
      %478 = vmatprep.subr.bf16.mxu0 0
      %479 = vmatpush1.bf16.msra.mxu0 0
      %480 = vmatprep.subr.bf16.mxu0 0
      %481 = vmatpush1.bf16.msra.mxu0 0
      %482 = vmatprep.subr.bf16.mxu0 0
      %483 = vmatpush1.bf16.msra.mxu0 0
      %484 = vmatprep.subr.bf16.mxu0 0
      %485 = vmatpush1.bf16.msra.mxu0 0
      %486 = vmatprep.subr.bf16.mxu0 0
      %487 = vmatpush1.bf16.msra.mxu0 0
      %488 = vmatprep.subr.bf16.mxu0 0
      %489 = vmatpush1.bf16.msra.mxu0 0
      %490 = vmatprep.subr.bf16.mxu0 0
      %491 = vmatpush1.bf16.msra.mxu0 0
      %492 = vmatprep.subr.bf16.mxu0 0
      %493 = vmatpush1.bf16.msra.mxu0 0
      %494 = vmatprep.subr.bf16.mxu0 0
      %495 = vmatpush1.bf16.msra.mxu0 0
      %496 = vmatprep.subr.bf16.mxu0 0
      %497 = vmatpush1.bf16.msra.mxu0 0
      %498 = vmatprep.subr.bf16.mxu0 0
      %499 = vmatpush1.bf16.msra.mxu0 0
      %500 = vmatprep.subr.bf16.mxu0 0
      %501 = vmatpush1.bf16.msra.mxu0 0
      %502 = vmatprep.mubr.bf16.mxu0 0
      %503 = vmatmul.mubr.bf16.gmra.mrb[0].mxu0 %v464
      %v504 = vpop.f32.mrb[0].mxu0
      %v505 = vadd.f32 0.0, %v504
      %v506 = vpop.f32.mrb[0].mxu0
      %v507 = vpop.f32.mrb[0].mxu0
      %v508 = vpop.f32.mrb[0].mxu0
      %509 = vdwg.mxu0
      %v510 = vpack.c.bf16 %v505, %v505
      %511 = vrot.lane.b32.xlu0 %v396, 112
      %v512 = vpop.permute.xlu0 %511
      %513 = vrot.lane.b32.xlu0 %v396, 48
      %v514 = vpop.permute.xlu0 %513
      %v516 = vsel %vm401, %v512, 0
      %v519 = vsel %vm401, %v514, 0
      %521 = vmatprep.subr.bf16.mxu0 0
      %522 = vmatpush1.bf16.xpose.msra.mxu0 %v519
      %523 = vmatprep.subr.bf16.mxu0 0
      %524 = vmatpush1.bf16.xpose.msra.mxu0 0
      %525 = vmatprep.subr.bf16.mxu0 0
      %526 = vmatpush1.bf16.xpose.msra.mxu0 0
      %527 = vmatprep.subr.bf16.mxu0 0
      %528 = vmatpush1.bf16.xpose.msra.mxu0 0
      %529 = vmatprep.subr.bf16.mxu0 0
      %530 = vmatpush1.bf16.xpose.msra.mxu0 0
      %531 = vmatprep.subr.bf16.mxu0 0
      %532 = vmatpush1.bf16.xpose.msra.mxu0 0
      %533 = vmatprep.subr.bf16.mxu0 0
      %534 = vmatpush1.bf16.xpose.msra.mxu0 0
      %535 = vmatprep.subr.bf16.mxu0 0
      %536 = vmatpush1.bf16.xpose.msra.mxu0 0
      %537 = vmatprep.subr.bf16.mxu0 0
      %538 = vmatpush1.bf16.xpose.msra.mxu0 0
      %539 = vmatprep.subr.bf16.mxu0 0
      %540 = vmatpush1.bf16.xpose.msra.mxu0 0
      %541 = vmatprep.subr.bf16.mxu0 0
      %542 = vmatpush1.bf16.xpose.msra.mxu0 0
      %543 = vmatprep.subr.bf16.mxu0 0
      %544 = vmatpush1.bf16.xpose.msra.mxu0 0
      %545 = vmatprep.subr.bf16.mxu0 0
      %546 = vmatpush1.bf16.xpose.msra.mxu0 0
      %547 = vmatprep.subr.bf16.mxu0 0
      %548 = vmatpush1.bf16.xpose.msra.mxu0 0
      %549 = vmatprep.subr.bf16.mxu0 0
      %550 = vmatpush1.bf16.xpose.msra.mxu0 0
      %551 = vmatprep.subr.bf16.mxu0 0
      %552 = vmatpush1.bf16.xpose.msra.mxu0 0
      %553 = vmatprep.mubr.bf16.mxu0 0
      %554 = vmatmul.mubr.bf16.gmra.mrb[0].mxu0 %v516
      %v555 = vpop.f32.mrb[0].mxu0
      %v556 = vadd.f32 0.0, %v555
      %v557 = vpop.f32.mrb[0].mxu0
      %v558 = vpop.f32.mrb[0].mxu0
      %v559 = vpop.f32.mrb[0].mxu0
      %560 = vdwg.mxu0
      %v561 = vmul.f32 %v556, 0.25
      %v562 = vadd.f32 %v561, %v387
      %v563 = vsel %vm450, %v562, -inf
      %564 = vmax.xlane.f32.xlu0 %v563
      %v565 = vpop.xlane.xlu0 %564
      %v566 = vsub.f32 %v562, %v565
      %v567 = vmul.f32 %v566, 1.442695
      %v568 = vpow.pop %v567
      %v569 = vsel %vm450, %v568, 0.0
      %570 = vadd.xlane.f32.xlu0 %v569
      %v571 = vpop.xlane.xlu0 %570
      %v572 = vrcp.pop %v571
      %v573 = vmul.f32 %v568, %v572
      %v574 = vpack.c.bf16 %v573, %v573
      %576 = vrot.lane.b32.xlu0 %v397, 112
      %v577 = vpop.permute.xlu0 %576
      %v579 = vsel %vm450, %v574, 0
      %v582 = vsel %vm466, %v577, 0
      %584 = vmatprep.subr.bf16.mxu0 0
      %585 = vmatpush1.bf16.msra.mxu0 %v582
      %586 = vmatprep.subr.bf16.mxu0 0
      %587 = vmatpush1.bf16.msra.mxu0 0
      %588 = vmatprep.subr.bf16.mxu0 0
      %589 = vmatpush1.bf16.msra.mxu0 0
      %590 = vmatprep.subr.bf16.mxu0 0
      %591 = vmatpush1.bf16.msra.mxu0 0
      %592 = vmatprep.subr.bf16.mxu0 0
      %593 = vmatpush1.bf16.msra.mxu0 0
      %594 = vmatprep.subr.bf16.mxu0 0
      %595 = vmatpush1.bf16.msra.mxu0 0
      %596 = vmatprep.subr.bf16.mxu0 0
      %597 = vmatpush1.bf16.msra.mxu0 0
      %598 = vmatprep.subr.bf16.mxu0 0
      %599 = vmatpush1.bf16.msra.mxu0 0
      %600 = vmatprep.subr.bf16.mxu0 0
      %601 = vmatpush1.bf16.msra.mxu0 0
      %602 = vmatprep.subr.bf16.mxu0 0
      %603 = vmatpush1.bf16.msra.mxu0 0
      %604 = vmatprep.subr.bf16.mxu0 0
      %605 = vmatpush1.bf16.msra.mxu0 0
      %606 = vmatprep.subr.bf16.mxu0 0
      %607 = vmatpush1.bf16.msra.mxu0 0
      %608 = vmatprep.subr.bf16.mxu0 0
      %609 = vmatpush1.bf16.msra.mxu0 0
      %610 = vmatprep.subr.bf16.mxu0 0
      %611 = vmatpush1.bf16.msra.mxu0 0
      %612 = vmatprep.subr.bf16.mxu0 0
      %613 = vmatpush1.bf16.msra.mxu0 0
      %614 = vmatprep.subr.bf16.mxu0 0
      %615 = vmatpush1.bf16.msra.mxu0 0
      %616 = vmatprep.mubr.bf16.mxu0 0
      %617 = vmatmul.mubr.bf16.gmra.mrb[0].mxu0 %v579
      %v618 = vpop.f32.mrb[0].mxu0
      %v619 = vadd.f32 0.0, %v618
      %v620 = vpop.f32.mrb[0].mxu0
      %v621 = vpop.f32.mrb[0].mxu0
      %v622 = vpop.f32.mrb[0].mxu0
      %623 = vdwg.mxu0
      %v624 = vpack.c.bf16 %v619, %v619
      %v627 = vunpack.c.l.b16 %v390
      %v628 = vunpack.c.l.b16 %v391
      %v629 = vpack.c.b16 %v628, %v627
      %v632 = vsel %vm401, %v624, 0
      %634 = vmatprep.subr.bf16.mxu0 0
      %635 = vmatpush1.bf16.msra.mxu0 %v629
      %636 = vmatprep.subr.bf16.mxu0 0
      %637 = vmatpush1.bf16.msra.mxu0 0
      %638 = vmatprep.subr.bf16.mxu0 0
      %639 = vmatpush1.bf16.msra.mxu0 0
      %640 = vmatprep.subr.bf16.mxu0 0
      %641 = vmatpush1.bf16.msra.mxu0 0
      %642 = vmatprep.subr.bf16.mxu0 0
      %643 = vmatpush1.bf16.msra.mxu0 0
      %644 = vmatprep.subr.bf16.mxu0 0
      %645 = vmatpush1.bf16.msra.mxu0 0
      %646 = vmatprep.subr.bf16.mxu0 0
      %647 = vmatpush1.bf16.msra.mxu0 0
      %648 = vmatprep.subr.bf16.mxu0 0
      %649 = vmatpush1.bf16.msra.mxu0 0
      %650 = vmatprep.subr.bf16.mxu0 0
      %651 = vmatpush1.bf16.msra.mxu0 0
      %652 = vmatprep.subr.bf16.mxu0 0
      %653 = vmatpush1.bf16.msra.mxu0 0
      %654 = vmatprep.subr.bf16.mxu0 0
      %655 = vmatpush1.bf16.msra.mxu0 0
      %656 = vmatprep.subr.bf16.mxu0 0
      %657 = vmatpush1.bf16.msra.mxu0 0
      %658 = vmatprep.subr.bf16.mxu0 0
      %659 = vmatpush1.bf16.msra.mxu0 0
      %660 = vmatprep.subr.bf16.mxu0 0
      %661 = vmatpush1.bf16.msra.mxu0 0
      %662 = vmatprep.subr.bf16.mxu0 0
      %663 = vmatpush1.bf16.msra.mxu0 0
      %664 = vmatprep.subr.bf16.mxu0 0
      %665 = vmatpush1.bf16.msra.mxu0 0
      %666 = vmatprep.mubr.bf16.mxu0 0
      %667 = vmatmul.mubr.bf16.gmra.mrb[0].mxu0 %v632
      %v668 = vpop.f32.mrb[0].mxu0
      %v669 = vadd.f32 0.0, %v668
      %v670 = vpop.f32.mrb[0].mxu0
      %v671 = vpop.f32.mrb[0].mxu0
      %v672 = vpop.f32.mrb[0].mxu0
      %673 = vdwg.mxu0
      %v676 = vunpack.c.l.b16 %v388
      %v677 = vunpack.c.l.b16 %v389
      %v678 = vpack.c.b16 %v677, %v676
      %v681 = vsel %vm401, %v510, 0
      %683 = vmatprep.subr.bf16.mxu0 0
      %684 = vmatpush1.bf16.msra.mxu0 %v678
      %685 = vmatprep.subr.bf16.mxu0 0
      %686 = vmatpush1.bf16.msra.mxu0 0
      %687 = vmatprep.subr.bf16.mxu0 0
      %688 = vmatpush1.bf16.msra.mxu0 0
      %689 = vmatprep.subr.bf16.mxu0 0
      %690 = vmatpush1.bf16.msra.mxu0 0
      %691 = vmatprep.subr.bf16.mxu0 0
      %692 = vmatpush1.bf16.msra.mxu0 0
      %693 = vmatprep.subr.bf16.mxu0 0
      %694 = vmatpush1.bf16.msra.mxu0 0
      %695 = vmatprep.subr.bf16.mxu0 0
      %696 = vmatpush1.bf16.msra.mxu0 0
      %697 = vmatprep.subr.bf16.mxu0 0
      %698 = vmatpush1.bf16.msra.mxu0 0
      %699 = vmatprep.subr.bf16.mxu0 0
      %700 = vmatpush1.bf16.msra.mxu0 0
      %701 = vmatprep.subr.bf16.mxu0 0
      %702 = vmatpush1.bf16.msra.mxu0 0
      %703 = vmatprep.subr.bf16.mxu0 0
      %704 = vmatpush1.bf16.msra.mxu0 0
      %705 = vmatprep.subr.bf16.mxu0 0
      %706 = vmatpush1.bf16.msra.mxu0 0
      %707 = vmatprep.subr.bf16.mxu0 0
      %708 = vmatpush1.bf16.msra.mxu0 0
      %709 = vmatprep.subr.bf16.mxu0 0
      %710 = vmatpush1.bf16.msra.mxu0 0
      %711 = vmatprep.subr.bf16.mxu0 0
      %712 = vmatpush1.bf16.msra.mxu0 0
      %713 = vmatprep.subr.bf16.mxu0 0
      %714 = vmatpush1.bf16.msra.mxu0 0
      %715 = vmatprep.mubr.bf16.mxu0 0
      %716 = vmatmul.mubr.bf16.gmra.mrb[0].mxu0 %v681
      %v717 = vpop.f32.mrb[0].mxu0
      %v718 = vadd.f32 %v669, %v717
      %v719 = vpop.f32.mrb[0].mxu0
      %v720 = vpop.f32.mrb[0].mxu0
      %v721 = vpop.f32.mrb[0].mxu0
      %722 = vdwg.mxu0
      %723 = vrot.lane.b32.xlu0 %v396, 96
      %v724 = vpop.permute.xlu0 %723
      %725 = vrot.lane.b32.xlu0 %v396, 32
      %v726 = vpop.permute.xlu0 %725
      %v728 = vsel %vm401, %v724, 0
      %v731 = vsel %vm401, %v726, 0
      %733 = vmatprep.subr.bf16.mxu0 0
      %734 = vmatpush1.bf16.xpose.msra.mxu0 %v731
      %735 = vmatprep.subr.bf16.mxu0 0
      %736 = vmatpush1.bf16.xpose.msra.mxu0 0
      %737 = vmatprep.subr.bf16.mxu0 0
      %738 = vmatpush1.bf16.xpose.msra.mxu0 0
      %739 = vmatprep.subr.bf16.mxu0 0
      %740 = vmatpush1.bf16.xpose.msra.mxu0 0
      %741 = vmatprep.subr.bf16.mxu0 0
      %742 = vmatpush1.bf16.xpose.msra.mxu0 0
      %743 = vmatprep.subr.bf16.mxu0 0
      %744 = vmatpush1.bf16.xpose.msra.mxu0 0
      %745 = vmatprep.subr.bf16.mxu0 0
      %746 = vmatpush1.bf16.xpose.msra.mxu0 0
      %747 = vmatprep.subr.bf16.mxu0 0
      %748 = vmatpush1.bf16.xpose.msra.mxu0 0
      %749 = vmatprep.subr.bf16.mxu0 0
      %750 = vmatpush1.bf16.xpose.msra.mxu0 0
      %751 = vmatprep.subr.bf16.mxu0 0
      %752 = vmatpush1.bf16.xpose.msra.mxu0 0
      %753 = vmatprep.subr.bf16.mxu0 0
      %754 = vmatpush1.bf16.xpose.msra.mxu0 0
      %755 = vmatprep.subr.bf16.mxu0 0
      %756 = vmatpush1.bf16.xpose.msra.mxu0 0
      %757 = vmatprep.subr.bf16.mxu0 0
      %758 = vmatpush1.bf16.xpose.msra.mxu0 0
      %759 = vmatprep.subr.bf16.mxu0 0
      %760 = vmatpush1.bf16.xpose.msra.mxu0 0
      %761 = vmatprep.subr.bf16.mxu0 0
      %762 = vmatpush1.bf16.xpose.msra.mxu0 0
      %763 = vmatprep.subr.bf16.mxu0 0
      %764 = vmatpush1.bf16.xpose.msra.mxu0 0
      %765 = vmatprep.mubr.bf16.mxu0 0
      %766 = vmatmul.mubr.bf16.gmra.mrb[0].mxu0 %v728
      %v767 = vpop.f32.mrb[0].mxu0
      %v768 = vadd.f32 0.0, %v767
      %v769 = vpop.f32.mrb[0].mxu0
      %v770 = vpop.f32.mrb[0].mxu0
      %v771 = vpop.f32.mrb[0].mxu0
      %772 = vdwg.mxu0
      %v773 = vmul.f32 %v768, 0.25
      %v774 = vadd.f32 %v773, %v387
      %v775 = vsel %vm450, %v774, -inf
      %776 = vmax.xlane.f32.xlu0 %v775
      %v777 = vpop.xlane.xlu0 %776
      %v778 = vsub.f32 %v774, %v777
      %v779 = vmul.f32 %v778, 1.442695
      %v780 = vpow.pop %v779
      %v781 = vsel %vm450, %v780, 0.0
      %782 = vadd.xlane.f32.xlu0 %v781
      %v783 = vpop.xlane.xlu0 %782
      %v784 = vrcp.pop %v783
      %v785 = vmul.f32 %v780, %v784
      %v786 = vpack.c.bf16 %v785, %v785
      %787 = vrot.lane.b32.xlu0 %v397, 96
      %v788 = vpop.permute.xlu0 %787
      %v790 = vsel %vm450, %v786, 0
      %v793 = vsel %vm466, %v788, 0
      %795 = vmatprep.subr.bf16.mxu0 0
      %796 = vmatpush1.bf16.msra.mxu0 %v793
      %797 = vmatprep.subr.bf16.mxu0 0
      %798 = vmatpush1.bf16.msra.mxu0 0
      %799 = vmatprep.subr.bf16.mxu0 0
      %800 = vmatpush1.bf16.msra.mxu0 0
      %801 = vmatprep.subr.bf16.mxu0 0
      %802 = vmatpush1.bf16.msra.mxu0 0
      %803 = vmatprep.subr.bf16.mxu0 0
      %804 = vmatpush1.bf16.msra.mxu0 0
      %805 = vmatprep.subr.bf16.mxu0 0
      %806 = vmatpush1.bf16.msra.mxu0 0
      %807 = vmatprep.subr.bf16.mxu0 0
      %808 = vmatpush1.bf16.msra.mxu0 0
      %809 = vmatprep.subr.bf16.mxu0 0
      %810 = vmatpush1.bf16.msra.mxu0 0
      %811 = vmatprep.subr.bf16.mxu0 0
      %812 = vmatpush1.bf16.msra.mxu0 0
      %813 = vmatprep.subr.bf16.mxu0 0
      %814 = vmatpush1.bf16.msra.mxu0 0
      %815 = vmatprep.subr.bf16.mxu0 0
      %816 = vmatpush1.bf16.msra.mxu0 0
      %817 = vmatprep.subr.bf16.mxu0 0
      %818 = vmatpush1.bf16.msra.mxu0 0
      %819 = vmatprep.subr.bf16.mxu0 0
      %820 = vmatpush1.bf16.msra.mxu0 0
      %821 = vmatprep.subr.bf16.mxu0 0
      %822 = vmatpush1.bf16.msra.mxu0 0
      %823 = vmatprep.subr.bf16.mxu0 0
      %824 = vmatpush1.bf16.msra.mxu0 0
      %825 = vmatprep.subr.bf16.mxu0 0
      %826 = vmatpush1.bf16.msra.mxu0 0
      %827 = vmatprep.mubr.bf16.mxu0 0
      %828 = vmatmul.mubr.bf16.gmra.mrb[0].mxu0 %v790
      %v829 = vpop.f32.mrb[0].mxu0
      %v830 = vadd.f32 0.0, %v829
      %v831 = vpop.f32.mrb[0].mxu0
      %v832 = vpop.f32.mrb[0].mxu0
      %v833 = vpop.f32.mrb[0].mxu0
      %834 = vdwg.mxu0
      %v835 = vpack.c.bf16 %v830, %v830
      %v838 = vunpack.c.l.b16 %v392
      %v839 = vunpack.c.l.b16 %v393
      %v840 = vpack.c.b16 %v839, %v838
      %v843 = vsel %vm401, %v835, 0
      %845 = vmatprep.subr.bf16.mxu0 0
      %846 = vmatpush1.bf16.msra.mxu0 %v840
      %847 = vmatprep.subr.bf16.mxu0 0
      %848 = vmatpush1.bf16.msra.mxu0 0
      %849 = vmatprep.subr.bf16.mxu0 0
      %850 = vmatpush1.bf16.msra.mxu0 0
      %851 = vmatprep.subr.bf16.mxu0 0
      %852 = vmatpush1.bf16.msra.mxu0 0
      %853 = vmatprep.subr.bf16.mxu0 0
      %854 = vmatpush1.bf16.msra.mxu0 0
      %855 = vmatprep.subr.bf16.mxu0 0
      %856 = vmatpush1.bf16.msra.mxu0 0
      %857 = vmatprep.subr.bf16.mxu0 0
      %858 = vmatpush1.bf16.msra.mxu0 0
      %859 = vmatprep.subr.bf16.mxu0 0
      %860 = vmatpush1.bf16.msra.mxu0 0
      %861 = vmatprep.subr.bf16.mxu0 0
      %862 = vmatpush1.bf16.msra.mxu0 0
      %863 = vmatprep.subr.bf16.mxu0 0
      %864 = vmatpush1.bf16.msra.mxu0 0
      %865 = vmatprep.subr.bf16.mxu0 0
      %866 = vmatpush1.bf16.msra.mxu0 0
      %867 = vmatprep.subr.bf16.mxu0 0
      %868 = vmatpush1.bf16.msra.mxu0 0
      %869 = vmatprep.subr.bf16.mxu0 0
      %870 = vmatpush1.bf16.msra.mxu0 0
      %871 = vmatprep.subr.bf16.mxu0 0
      %872 = vmatpush1.bf16.msra.mxu0 0
      %873 = vmatprep.subr.bf16.mxu0 0
      %874 = vmatpush1.bf16.msra.mxu0 0
      %875 = vmatprep.subr.bf16.mxu0 0
      %876 = vmatpush1.bf16.msra.mxu0 0
      %877 = vmatprep.mubr.bf16.mxu0 0
      %878 = vmatmul.mubr.bf16.gmra.mrb[0].mxu0 %v843
      %v879 = vpop.f32.mrb[0].mxu0
      %v880 = vadd.f32 0.0, %v879
      %v881 = vpop.f32.mrb[0].mxu0
      %v882 = vpop.f32.mrb[0].mxu0
      %v883 = vpop.f32.mrb[0].mxu0
      %884 = vdwg.mxu0
      %v885 = vadd.f32 %v718, %v880
      %886 = vrot.lane.b32.xlu0 %v396, 80
      %v887 = vpop.permute.xlu0 %886
      %888 = vrot.lane.b32.xlu0 %v396, 16
      %v889 = vpop.permute.xlu0 %888
      %v891 = vsel %vm401, %v887, 0
      %v894 = vsel %vm401, %v889, 0
      %896 = vmatprep.subr.bf16.mxu0 0
      %897 = vmatpush1.bf16.xpose.msra.mxu0 %v894
      %898 = vmatprep.subr.bf16.mxu0 0
      %899 = vmatpush1.bf16.xpose.msra.mxu0 0
      %900 = vmatprep.subr.bf16.mxu0 0
      %901 = vmatpush1.bf16.xpose.msra.mxu0 0
      %902 = vmatprep.subr.bf16.mxu0 0
      %903 = vmatpush1.bf16.xpose.msra.mxu0 0
      %904 = vmatprep.subr.bf16.mxu0 0
      %905 = vmatpush1.bf16.xpose.msra.mxu0 0
      %906 = vmatprep.subr.bf16.mxu0 0
      %907 = vmatpush1.bf16.xpose.msra.mxu0 0
      %908 = vmatprep.subr.bf16.mxu0 0
      %909 = vmatpush1.bf16.xpose.msra.mxu0 0
      %910 = vmatprep.subr.bf16.mxu0 0
      %911 = vmatpush1.bf16.xpose.msra.mxu0 0
      %912 = vmatprep.subr.bf16.mxu0 0
      %913 = vmatpush1.bf16.xpose.msra.mxu0 0
      %914 = vmatprep.subr.bf16.mxu0 0
      %915 = vmatpush1.bf16.xpose.msra.mxu0 0
      %916 = vmatprep.subr.bf16.mxu0 0
      %917 = vmatpush1.bf16.xpose.msra.mxu0 0
      %918 = vmatprep.subr.bf16.mxu0 0
      %919 = vmatpush1.bf16.xpose.msra.mxu0 0
      %920 = vmatprep.subr.bf16.mxu0 0
      %921 = vmatpush1.bf16.xpose.msra.mxu0 0
      %922 = vmatprep.subr.bf16.mxu0 0
      %923 = vmatpush1.bf16.xpose.msra.mxu0 0
      %924 = vmatprep.subr.bf16.mxu0 0
      %925 = vmatpush1.bf16.xpose.msra.mxu0 0
      %926 = vmatprep.subr.bf16.mxu0 0
      %927 = vmatpush1.bf16.xpose.msra.mxu0 0
      %928 = vmatprep.mubr.bf16.mxu0 0
      %929 = vmatmul.mubr.bf16.gmra.mrb[0].mxu0 %v891
      %v930 = vpop.f32.mrb[0].mxu0
      %v931 = vadd.f32 0.0, %v930
      %v932 = vpop.f32.mrb[0].mxu0
      %v933 = vpop.f32.mrb[0].mxu0
      %v934 = vpop.f32.mrb[0].mxu0
      %935 = vdwg.mxu0
      %v936 = vmul.f32 %v931, 0.25
      %v937 = vadd.f32 %v936, %v387
      %v938 = vsel %vm450, %v937, -inf
      %939 = vmax.xlane.f32.xlu0 %v938
      %v940 = vpop.xlane.xlu0 %939
      %v941 = vsub.f32 %v937, %v940
      %v942 = vmul.f32 %v941, 1.442695
      %v943 = vpow.pop %v942
      %v944 = vsel %vm450, %v943, 0.0
      %945 = vadd.xlane.f32.xlu0 %v944
      %v946 = vpop.xlane.xlu0 %945
      %v947 = vrcp.pop %v946
      %v948 = vmul.f32 %v943, %v947
      %v949 = vpack.c.bf16 %v948, %v948
      %950 = vrot.lane.b32.xlu0 %v397, 80
      %v951 = vpop.permute.xlu0 %950
      %v953 = vsel %vm450, %v949, 0
      %v956 = vsel %vm466, %v951, 0
      %958 = vmatprep.subr.bf16.mxu0 0
      %959 = vmatpush1.bf16.msra.mxu0 %v956
      %960 = vmatprep.subr.bf16.mxu0 0
      %961 = vmatpush1.bf16.msra.mxu0 0
      %962 = vmatprep.subr.bf16.mxu0 0
      %963 = vmatpush1.bf16.msra.mxu0 0
      %964 = vmatprep.subr.bf16.mxu0 0
      %965 = vmatpush1.bf16.msra.mxu0 0
      %966 = vmatprep.subr.bf16.mxu0 0
      %967 = vmatpush1.bf16.msra.mxu0 0
      %968 = vmatprep.subr.bf16.mxu0 0
      %969 = vmatpush1.bf16.msra.mxu0 0
      %970 = vmatprep.subr.bf16.mxu0 0
      %971 = vmatpush1.bf16.msra.mxu0 0
      %972 = vmatprep.subr.bf16.mxu0 0
      %973 = vmatpush1.bf16.msra.mxu0 0
      %974 = vmatprep.subr.bf16.mxu0 0
      %975 = vmatpush1.bf16.msra.mxu0 0
      %976 = vmatprep.subr.bf16.mxu0 0
      %977 = vmatpush1.bf16.msra.mxu0 0
      %978 = vmatprep.subr.bf16.mxu0 0
      %979 = vmatpush1.bf16.msra.mxu0 0
      %980 = vmatprep.subr.bf16.mxu0 0
      %981 = vmatpush1.bf16.msra.mxu0 0
      %982 = vmatprep.subr.bf16.mxu0 0
      %983 = vmatpush1.bf16.msra.mxu0 0
      %984 = vmatprep.subr.bf16.mxu0 0
      %985 = vmatpush1.bf16.msra.mxu0 0
      %986 = vmatprep.subr.bf16.mxu0 0
      %987 = vmatpush1.bf16.msra.mxu0 0
      %988 = vmatprep.subr.bf16.mxu0 0
      %989 = vmatpush1.bf16.msra.mxu0 0
      %990 = vmatprep.mubr.bf16.mxu0 0
      %991 = vmatmul.mubr.bf16.gmra.mrb[0].mxu0 %v953
      %v992 = vpop.f32.mrb[0].mxu0
      %v993 = vadd.f32 0.0, %v992
      %v994 = vpop.f32.mrb[0].mxu0
      %v995 = vpop.f32.mrb[0].mxu0
      %v996 = vpop.f32.mrb[0].mxu0
      %997 = vdwg.mxu0
      %v998 = vpack.c.bf16 %v993, %v993
      %v1001 = vunpack.c.l.b16 %v394
      %v1002 = vunpack.c.l.b16 %v395
      %v1003 = vpack.c.b16 %v1002, %v1001
      %v1006 = vsel %vm401, %v998, 0
      %1008 = vmatprep.subr.bf16.mxu0 0
      %1009 = vmatpush1.bf16.msra.mxu0 %v1003
      %1010 = vmatprep.subr.bf16.mxu0 0
      %1011 = vmatpush1.bf16.msra.mxu0 0
      %1012 = vmatprep.subr.bf16.mxu0 0
      %1013 = vmatpush1.bf16.msra.mxu0 0
      %1014 = vmatprep.subr.bf16.mxu0 0
      %1015 = vmatpush1.bf16.msra.mxu0 0
      %1016 = vmatprep.subr.bf16.mxu0 0
      %1017 = vmatpush1.bf16.msra.mxu0 0
      %1018 = vmatprep.subr.bf16.mxu0 0
      %1019 = vmatpush1.bf16.msra.mxu0 0
      %1020 = vmatprep.subr.bf16.mxu0 0
      %1021 = vmatpush1.bf16.msra.mxu0 0
      %1022 = vmatprep.subr.bf16.mxu0 0
      %1023 = vmatpush1.bf16.msra.mxu0 0
      %1024 = vmatprep.subr.bf16.mxu0 0
      %1025 = vmatpush1.bf16.msra.mxu0 0
      %1026 = vmatprep.subr.bf16.mxu0 0
      %1027 = vmatpush1.bf16.msra.mxu0 0
      %1028 = vmatprep.subr.bf16.mxu0 0
      %1029 = vmatpush1.bf16.msra.mxu0 0
      %1030 = vmatprep.subr.bf16.mxu0 0
      %1031 = vmatpush1.bf16.msra.mxu0 0
      %1032 = vmatprep.subr.bf16.mxu0 0
      %1033 = vmatpush1.bf16.msra.mxu0 0
      %1034 = vmatprep.subr.bf16.mxu0 0
      %1035 = vmatpush1.bf16.msra.mxu0 0
      %1036 = vmatprep.subr.bf16.mxu0 0
      %1037 = vmatpush1.bf16.msra.mxu0 0
      %1038 = vmatprep.subr.bf16.mxu0 0
      %1039 = vmatpush1.bf16.msra.mxu0 0
      %1040 = vmatprep.mubr.bf16.mxu0 0
      %1041 = vmatmul.mubr.bf16.gmra.mrb[0].mxu0 %v1006
      %v1042 = vpop.f32.mrb[0].mxu0
      %v1043 = vadd.f32 0.0, %v1042
      %v1044 = vpop.f32.mrb[0].mxu0
      %v1045 = vpop.f32.mrb[0].mxu0
      %v1046 = vpop.f32.mrb[0].mxu0
      %1047 = vdwg.mxu0
      %v1048 = vadd.f32 %v885, %v1043
      %v1049 = vadd.f32 %v276, %v1048
      %v1050 = vld [vmem:[%s4] sm:$0x1]
      %v1052 = vlaneseq
      %v1053 = vshrl.u32 %v1052, 7
      %v1054 = vsub.s32 0, %v1053
      %v1055 = vrot.slane %v1050, %v1054
      %v1057 = vadd.f32 %v1049, %v1055
      %v1058 = vld [vmem:[%s5] sm:$0x1]
      %v1059 = vld [vmem:[%s6] sm:$0x1]
      %v1060 = vsel %vm337, %v1057, 0.0
      %1061 = vadd.xlane.f32.xlu0 %v1060
      %v1062 = vpop.xlane.xlu0 %1061
      %v1063 = vrcp.pop 64.0
      %v1064 = vmul.f32 %v1062, %v1063
      %v1065 = vsub.f32 %v1057, %v1064
      %v1066 = vmul.f32 %v1065, %v1065
      %v1067 = vsel %vm337, %v1066, 0.0
      %1068 = vadd.xlane.f32.xlu0 %v1067
      %v1069 = vpop.xlane.xlu0 %1068
      %v1070 = vmul.f32 %v1069, %v1063
      %v1071 = vadd.f32 %v1070, 1e-06
      %v1072 = vrsqrt.pop %v1071
      %v1073 = vmul.f32 %v1065, %v1072
      %v1075 = vlaneseq
      %v1076 = vshrl.u32 %v1075, 7
      %v1077 = vsub.s32 0, %v1076
      %v1078 = vrot.slane %v1058, %v1077
      %v1080 = vmul.f32 %v1073, %v1078
      %v1082 = vlaneseq
      %v1083 = vshrl.u32 %v1082, 7
      %v1084 = vsub.s32 0, %v1083
      %v1085 = vrot.slane %v1059, %v1084
      %v1087 = vadd.f32 %v1080, %v1085
      %v1088 = vpack.c.bf16 %v1087, %v1087
      %vm1089 = vcmask 519168
      %1090 = vst.msk [vmem:[%s273] sm:$0xf] %vm1089, %v1088
      %p1091 = scmp.lt.s32.totalorder %s18, 1
      %s1092 = scalar_select %p1091, %s18, 1
      %s1093 = smul.addr %s1092, 4
      %s1094 = scalar_lea.vmem %s7, %s1093
      // Predicated region
      $region49: #{_lambda_.18} parent=47 // pred_check
        %p1095 = pneg %p188
      $region50: #{_lambda_.18} parent=47 // pred_check_branch
        %1097 = sbr.rel (%p1095) target = $region52
      $region51: #{_lambda_.18} parent=47 // pred_region
        _
      $region52: #{_lambda_.18} parent=47 // pred_fallthru
        _
    $region48: #{_lambda_.18} parent=5 // pred_fallthru
      _
    %p1098 = scmp.le.s32.totalorder 2, %s13
    // Predicated region
    $region53: #{_lambda_.18} parent=5 // pred_check
      %p1099 = pneg %p1098
    $region54: #{_lambda_.18} parent=5 // pred_check_branch
      %1101 = sbr.rel (%p1099) target = $region56
    $region55: #{_lambda_.18} parent=5 // pred_region
      %s1102 = ssub.s32 %s13, 2
      // Predicated region
      $region57: #{_lambda_.18} parent=55 // pred_check
        %p1103 = pneg %p194
      $region58: #{_lambda_.18} parent=55 // pred_check_branch
        %1105 = sbr.rel (%p1103) target = $region60
      $region59: #{_lambda_.18} parent=55 // pred_region
        %p1106 = scmp.lt.s32.totalorder %s19, 1
        %s1107 = scalar_select %p1106, %s19, 1
        %s1108 = smul.addr %s1107, 4
        %s1109 = scalar_lea.vmem %s7, %s1108
      $region60: #{_lambda_.18} parent=55 // pred_fallthru
        _
    $region56: #{_lambda_.18} parent=5 // pred_fallthru
      _
  $region6: #{_lambda_.18} parent=0 // loop_footer
    %s17 = sadd.s32 1, %s13
  $region7: #{_lambda_.18} parent=0 // loop_footer_branch
    %12 = sbr.rel target = $region3
  $region8: #{_lambda_.18} parent=0 // loop_exit
    _

// kernel: _lambda_.12
$region0: #{_lambda_.12}
  #allocation0 [shape = 'u32[]', space=smem, size = 0x4, offset = 0x4, fixed_abs, tag = 'smem constant byte address 0x4 - core index']
  #allocation1 [shape = 'u32[144,128]{1,0:T(1,128)}', space=vmem, size = 0x12000, scoped, tag = 'internal scratch']
  %s0 = inlined_call_operand.vmem [shape: bf16[16,768], index: 0, kind: input, shape index: {}]
  %s1 = inlined_call_operand.vmem [shape: bf16[768,64], index: 1, kind: input, shape index: {}]
  %s2 = inlined_call_operand.vmem [shape: f32[1,64], index: 2, kind: input, shape index: {}]
  %s3 = inlined_call_operand.vmem [shape: bf16[16,64], index: 3, kind: output, shape index: {}]
  %s4 = sld [smem:[#allocation0]]
  $region22: #{_lambda_.12} parent=0
    _
  %s6 = ssub.s32 1, %s4
  %s7 = scalar_select 0, %s6, %s4
  // Predicated region
  $region2: #{_lambda_.12} parent=0 // pred_check
    _
  $region3: #{_lambda_.12} parent=0 // pred_check_branch
    %9 = sbr.rel (0) target = $region5
  $region4: #{_lambda_.12} parent=0 // pred_region
    _
  $region5: #{_lambda_.12} parent=0 // pred_fallthru
    _
  // Predicated region
  $region6: #{_lambda_.12} parent=0 // pred_check
    _
  $region7: #{_lambda_.12} parent=0 // pred_check_branch
    %11 = sbr.rel (0) target = $region9
  $region8: #{_lambda_.12} parent=0 // pred_region
    _
  $region9: #{_lambda_.12} parent=0 // pred_fallthru
    _
  // Predicated region
  $region10: #{_lambda_.12} parent=0 // pred_check
    _
  $region11: #{_lambda_.12} parent=0 // pred_check_branch
    %13 = sbr.rel (0) target = $region13
  $region12: #{_lambda_.12} parent=0 // pred_region
    _
  $region13: #{_lambda_.12} parent=0 // pred_fallthru
    _
  %v15 = vld [vmem:[%s0] sm:$0xff]
  %v16 = vld [vmem:[%s0 + $0x8] sm:$0xff]
  %v17 = vld [vmem:[%s0 + $0x10] sm:$0xff]
  %v18 = vld [vmem:[%s0 + $0x18] sm:$0xff]
  %v19 = vld [vmem:[%s0 + $0x20] sm:$0xff]
  %v20 = vld [vmem:[%s0 + $0x28] sm:$0xff]
  %v21 = vld [vmem:[%s1] sm:$0xf]
  %v22 = vld [vmem:[%s1 + $0x4] sm:$0xf]
  %v23 = vld [vmem:[%s1 + $0x8] sm:$0xf]
  %v24 = vld [vmem:[%s1 + $0xc] sm:$0xf]
  %v25 = vld [vmem:[%s1 + $0x10] sm:$0xf]
  %v26 = vld [vmem:[%s1 + $0x14] sm:$0xf]
  %v27 = vld [vmem:[%s1 + $0x18] sm:$0xf]
  %v28 = vld [vmem:[%s1 + $0x1c] sm:$0xf]
  %v29 = vld [vmem:[%s1 + $0x20] sm:$0xf]
  %v30 = vld [vmem:[%s1 + $0x24] sm:$0xf]
  %v31 = vld [vmem:[%s1 + $0x28] sm:$0xf]
  %v32 = vld [vmem:[%s1 + $0x2c] sm:$0xf]
  %v33 = vld [vmem:[%s1 + $0x30] sm:$0xf]
  %v34 = vld [vmem:[%s1 + $0x34] sm:$0xf]
  %v35 = vld [vmem:[%s1 + $0x38] sm:$0xf]
  %v36 = vld [vmem:[%s1 + $0x3c] sm:$0xf]
  %v37 = vld [vmem:[%s1 + $0x40] sm:$0xf]
  %v38 = vld [vmem:[%s1 + $0x44] sm:$0xf]
  %v39 = vld [vmem:[%s1 + $0x48] sm:$0xf]
  %v40 = vld [vmem:[%s1 + $0x4c] sm:$0xf]
  %v41 = vld [vmem:[%s1 + $0x50] sm:$0xf]
  %v42 = vld [vmem:[%s1 + $0x54] sm:$0xf]
  %v43 = vld [vmem:[%s1 + $0x58] sm:$0xf]
  %v44 = vld [vmem:[%s1 + $0x5c] sm:$0xf]
  %v45 = vld [vmem:[%s1 + $0x60] sm:$0xf]
  %v46 = vld [vmem:[%s1 + $0x64] sm:$0xf]
  %v47 = vld [vmem:[%s1 + $0x68] sm:$0xf]
  %v48 = vld [vmem:[%s1 + $0x6c] sm:$0xf]
  %v49 = vld [vmem:[%s1 + $0x70] sm:$0xf]
  %v50 = vld [vmem:[%s1 + $0x74] sm:$0xf]
  %v51 = vld [vmem:[%s1 + $0x78] sm:$0xf]
  %v52 = vld [vmem:[%s1 + $0x7c] sm:$0xf]
  %v53 = vld [vmem:[%s1 + $0x80] sm:$0xf]
  %v54 = vld [vmem:[%s1 + $0x84] sm:$0xf]
  %v55 = vld [vmem:[%s1 + $0x88] sm:$0xf]
  %v56 = vld [vmem:[%s1 + $0x8c] sm:$0xf]
  %v57 = vld [vmem:[%s1 + $0x90] sm:$0xf]
  %v58 = vld [vmem:[%s1 + $0x94] sm:$0xf]
  %v59 = vld [vmem:[%s1 + $0x98] sm:$0xf]
  %v60 = vld [vmem:[%s1 + $0x9c] sm:$0xf]
  %v61 = vld [vmem:[%s1 + $0xa0] sm:$0xf]
  %v62 = vld [vmem:[%s1 + $0xa4] sm:$0xf]
  %v63 = vld [vmem:[%s1 + $0xa8] sm:$0xf]
  %v64 = vld [vmem:[%s1 + $0xac] sm:$0xf]
  %v65 = vld [vmem:[%s1 + $0xb0] sm:$0xf]
  %v66 = vld [vmem:[%s1 + $0xb4] sm:$0xf]
  %v67 = vld [vmem:[%s1 + $0xb8] sm:$0xf]
  %v68 = vld [vmem:[%s1 + $0xbc] sm:$0xf]
  %v69 = vld [vmem:[%s1 + $0xc0] sm:$0xf]
  %v70 = vld [vmem:[%s1 + $0xc4] sm:$0xf]
  %v71 = vld [vmem:[%s1 + $0xc8] sm:$0xf]
  %v72 = vld [vmem:[%s1 + $0xcc] sm:$0xf]
  %v73 = vld [vmem:[%s1 + $0xd0] sm:$0xf]
  %v74 = vld [vmem:[%s1 + $0xd4] sm:$0xf]
  %v75 = vld [vmem:[%s1 + $0xd8] sm:$0xf]
  %v76 = vld [vmem:[%s1 + $0xdc] sm:$0xf]
  %v77 = vld [vmem:[%s1 + $0xe0] sm:$0xf]
  %v78 = vld [vmem:[%s1 + $0xe4] sm:$0xf]
  %v79 = vld [vmem:[%s1 + $0xe8] sm:$0xf]
  %v80 = vld [vmem:[%s1 + $0xec] sm:$0xf]
  %v81 = vld [vmem:[%s1 + $0xf0] sm:$0xf]
  %v82 = vld [vmem:[%s1 + $0xf4] sm:$0xf]
  %v83 = vld [vmem:[%s1 + $0xf8] sm:$0xf]
  %v84 = vld [vmem:[%s1 + $0xfc] sm:$0xf]
  %v85 = vld [vmem:[%s1 + $0x100] sm:$0xf]
  %v86 = vld [vmem:[%s1 + $0x104] sm:$0xf]
  %v87 = vld [vmem:[%s1 + $0x108] sm:$0xf]
  %v88 = vld [vmem:[%s1 + $0x10c] sm:$0xf]
  %v89 = vld [vmem:[%s1 + $0x110] sm:$0xf]
  %v90 = vld [vmem:[%s1 + $0x114] sm:$0xf]
  %v91 = vld [vmem:[%s1 + $0x118] sm:$0xf]
  %v92 = vld [vmem:[%s1 + $0x11c] sm:$0xf]
  %v93 = vld [vmem:[%s1 + $0x120] sm:$0xf]
  %v94 = vld [vmem:[%s1 + $0x124] sm:$0xf]
  %v95 = vld [vmem:[%s1 + $0x128] sm:$0xf]
  %v96 = vld [vmem:[%s1 + $0x12c] sm:$0xf]
  %v97 = vld [vmem:[%s1 + $0x130] sm:$0xf]
  %v98 = vld [vmem:[%s1 + $0x134] sm:$0xf]
  %v99 = vld [vmem:[%s1 + $0x138] sm:$0xf]
  %v100 = vld [vmem:[%s1 + $0x13c] sm:$0xf]
  %v101 = vld [vmem:[%s1 + $0x140] sm:$0xf]
  %v102 = vld [vmem:[%s1 + $0x144] sm:$0xf]
  %v103 = vld [vmem:[%s1 + $0x148] sm:$0xf]
  %v104 = vld [vmem:[%s1 + $0x14c] sm:$0xf]
  %v105 = vld [vmem:[%s1 + $0x150] sm:$0xf]
  %v106 = vld [vmem:[%s1 + $0x154] sm:$0xf]
  %v107 = vld [vmem:[%s1 + $0x158] sm:$0xf]
  %v108 = vld [vmem:[%s1 + $0x15c] sm:$0xf]
  %v109 = vld [vmem:[%s1 + $0x160] sm:$0xf]
  %v110 = vld [vmem:[%s1 + $0x164] sm:$0xf]
  %v111 = vld [vmem:[%s1 + $0x168] sm:$0xf]
  %v112 = vld [vmem:[%s1 + $0x16c] sm:$0xf]
  %v113 = vld [vmem:[%s1 + $0x170] sm:$0xf]
  %v114 = vld [vmem:[%s1 + $0x174] sm:$0xf]
  %v115 = vld [vmem:[%s1 + $0x178] sm:$0xf]
  %v116 = vld [vmem:[%s1 + $0x17c] sm:$0xf]
  %v117 = vld [vmem:[%s2] sm:$0x1]
  %v119 = vlaneseq
  %v120 = vshrl.u32 %v119, 7
  %v121 = vsub.s32 0, %v120
  %v122 = vrot.slane %v117, %v121
  %v130 = vunpack.c.l.b16 %v15
  %v131 = vunpack.c.h.b16 %v15
  %v132 = vunpack.c.l.b16 %v16
  %v133 = vunpack.c.h.b16 %v16
  %v134 = vunpack.c.l.b16 %v17
  %v135 = vunpack.c.h.b16 %v17
  %v136 = vunpack.c.l.b16 %v18
  %v137 = vunpack.c.h.b16 %v18
  %v138 = vunpack.c.l.b16 %v19
  %v139 = vunpack.c.h.b16 %v19
  %v140 = vunpack.c.l.b16 %v20
  %v141 = vunpack.c.h.b16 %v20
  %v142 = vpack.c.b16 %v136, %v130
  %v143 = vpack.c.b16 %v137, %v131
  %v144 = vpack.c.b16 %v138, %v132
  %v145 = vpack.c.b16 %v139, %v133
  %v146 = vpack.c.b16 %v140, %v134
  %v147 = vpack.c.b16 %v141, %v135
  %v250 = vunpack.c.l.b16 %v21
  %v251 = vunpack.c.l.b16 %v22
  %v252 = vunpack.c.l.b16 %v23
  %v253 = vunpack.c.l.b16 %v24
  %v254 = vunpack.c.l.b16 %v25
  %v255 = vunpack.c.l.b16 %v26
  %v256 = vunpack.c.l.b16 %v27
  %v257 = vunpack.c.l.b16 %v28
  %v258 = vunpack.c.l.b16 %v29
  %v259 = vunpack.c.l.b16 %v30
  %v260 = vunpack.c.l.b16 %v31
  %v261 = vunpack.c.l.b16 %v32
  %v262 = vunpack.c.l.b16 %v33
  %v263 = vunpack.c.l.b16 %v34
  %v264 = vunpack.c.l.b16 %v35
  %v265 = vunpack.c.l.b16 %v36
  %v266 = vunpack.c.l.b16 %v37
  %v267 = vunpack.c.l.b16 %v38
  %v268 = vunpack.c.l.b16 %v39
  %v269 = vunpack.c.l.b16 %v40
  %v270 = vunpack.c.l.b16 %v41
  %v271 = vunpack.c.l.b16 %v42
  %v272 = vunpack.c.l.b16 %v43
  %v273 = vunpack.c.l.b16 %v44
  %v274 = vunpack.c.l.b16 %v45
  %v275 = vunpack.c.l.b16 %v46
  %v276 = vunpack.c.l.b16 %v47
  %v277 = vunpack.c.l.b16 %v48
  %v278 = vunpack.c.l.b16 %v49
  %v279 = vunpack.c.l.b16 %v50
  %v280 = vunpack.c.l.b16 %v51
  %v281 = vunpack.c.l.b16 %v52
  %v282 = vunpack.c.l.b16 %v53
  %v283 = vunpack.c.l.b16 %v54
  %v284 = vunpack.c.l.b16 %v55
  %v285 = vunpack.c.l.b16 %v56
  %v286 = vunpack.c.l.b16 %v57
  %v287 = vunpack.c.l.b16 %v58
  %v288 = vunpack.c.l.b16 %v59
  %v289 = vunpack.c.l.b16 %v60
  %v290 = vunpack.c.l.b16 %v61
  %v291 = vunpack.c.l.b16 %v62
  %v292 = vunpack.c.l.b16 %v63
  %v293 = vunpack.c.l.b16 %v64
  %v294 = vunpack.c.l.b16 %v65
  %v295 = vunpack.c.l.b16 %v66
  %v296 = vunpack.c.l.b16 %v67
  %v297 = vunpack.c.l.b16 %v68
  %v298 = vunpack.c.l.b16 %v69
  %v299 = vunpack.c.l.b16 %v70
  %v300 = vunpack.c.l.b16 %v71
  %v301 = vunpack.c.l.b16 %v72
  %v302 = vunpack.c.l.b16 %v73
  %v303 = vunpack.c.l.b16 %v74
  %v304 = vunpack.c.l.b16 %v75
  %v305 = vunpack.c.l.b16 %v76
  %v306 = vunpack.c.l.b16 %v77
  %v307 = vunpack.c.l.b16 %v78
  %v308 = vunpack.c.l.b16 %v79
  %v309 = vunpack.c.l.b16 %v80
  %v310 = vunpack.c.l.b16 %v81
  %v311 = vunpack.c.l.b16 %v82
  %v312 = vunpack.c.l.b16 %v83
  %v313 = vunpack.c.l.b16 %v84
  %v314 = vunpack.c.l.b16 %v85
  %v315 = vunpack.c.l.b16 %v86
  %v316 = vunpack.c.l.b16 %v87
  %v317 = vunpack.c.l.b16 %v88
  %v318 = vunpack.c.l.b16 %v89
  %v319 = vunpack.c.l.b16 %v90
  %v320 = vunpack.c.l.b16 %v91
  %v321 = vunpack.c.l.b16 %v92
  %v322 = vunpack.c.l.b16 %v93
  %v323 = vunpack.c.l.b16 %v94
  %v324 = vunpack.c.l.b16 %v95
  %v325 = vunpack.c.l.b16 %v96
  %v326 = vunpack.c.l.b16 %v97
  %v327 = vunpack.c.l.b16 %v98
  %v328 = vunpack.c.l.b16 %v99
  %v329 = vunpack.c.l.b16 %v100
  %v330 = vunpack.c.l.b16 %v101
  %v331 = vunpack.c.l.b16 %v102
  %v332 = vunpack.c.l.b16 %v103
  %v333 = vunpack.c.l.b16 %v104
  %v334 = vunpack.c.l.b16 %v105
  %v335 = vunpack.c.l.b16 %v106
  %v336 = vunpack.c.l.b16 %v107
  %v337 = vunpack.c.l.b16 %v108
  %v338 = vunpack.c.l.b16 %v109
  %v339 = vunpack.c.l.b16 %v110
  %v340 = vunpack.c.l.b16 %v111
  %v341 = vunpack.c.l.b16 %v112
  %v342 = vunpack.c.l.b16 %v113
  %v343 = vunpack.c.l.b16 %v114
  %v344 = vunpack.c.l.b16 %v115
  %v345 = vunpack.c.l.b16 %v116
  %v346 = vpack.c.b16 %v251, %v250
  %v347 = vpack.c.b16 %v253, %v252
  %v348 = vpack.c.b16 %v255, %v254
  %v349 = vpack.c.b16 %v257, %v256
  %v350 = vpack.c.b16 %v259, %v258
  %v351 = vpack.c.b16 %v261, %v260
  %v352 = vpack.c.b16 %v263, %v262
  %v353 = vpack.c.b16 %v265, %v264
  %v354 = vpack.c.b16 %v267, %v266
  %v355 = vpack.c.b16 %v269, %v268
  %v356 = vpack.c.b16 %v271, %v270
  %v357 = vpack.c.b16 %v273, %v272
  %v358 = vpack.c.b16 %v275, %v274
  %v359 = vpack.c.b16 %v277, %v276
  %v360 = vpack.c.b16 %v279, %v278
  %v361 = vpack.c.b16 %v281, %v280
  %v362 = vpack.c.b16 %v283, %v282
  %v363 = vpack.c.b16 %v285, %v284
  %v364 = vpack.c.b16 %v287, %v286
  %v365 = vpack.c.b16 %v289, %v288
  %v366 = vpack.c.b16 %v291, %v290
  %v367 = vpack.c.b16 %v293, %v292
  %v368 = vpack.c.b16 %v295, %v294
  %v369 = vpack.c.b16 %v297, %v296
  %v370 = vpack.c.b16 %v299, %v298
  %v371 = vpack.c.b16 %v301, %v300
  %v372 = vpack.c.b16 %v303, %v302
  %v373 = vpack.c.b16 %v305, %v304
  %v374 = vpack.c.b16 %v307, %v306
  %v375 = vpack.c.b16 %v309, %v308
  %v376 = vpack.c.b16 %v311, %v310
  %v377 = vpack.c.b16 %v313, %v312
  %v378 = vpack.c.b16 %v315, %v314
  %v379 = vpack.c.b16 %v317, %v316
  %v380 = vpack.c.b16 %v319, %v318
  %v381 = vpack.c.b16 %v321, %v320
  %v382 = vpack.c.b16 %v323, %v322
  %v383 = vpack.c.b16 %v325, %v324
  %v384 = vpack.c.b16 %v327, %v326
  %v385 = vpack.c.b16 %v329, %v328
  %v386 = vpack.c.b16 %v331, %v330
  %v387 = vpack.c.b16 %v333, %v332
  %v388 = vpack.c.b16 %v335, %v334
  %v389 = vpack.c.b16 %v337, %v336
  %v390 = vpack.c.b16 %v339, %v338
  %v391 = vpack.c.b16 %v341, %v340
  %v392 = vpack.c.b16 %v343, %v342
  %v393 = vpack.c.b16 %v345, %v344
  %442 = vmatprep.subr.bf16.mxu0 0
  %443 = vmatpush1.bf16.msra.mxu0 %v346
  %444 = vmatprep.subr.bf16.mxu0 0
  %445 = vmatpush1.bf16.msra.mxu0 %v347
  %446 = vmatprep.subr.bf16.mxu0 0
  %447 = vmatpush1.bf16.msra.mxu0 %v348
  %448 = vmatprep.subr.bf16.mxu0 0
  %449 = vmatpush1.bf16.msra.mxu0 %v349
  %450 = vmatprep.subr.bf16.mxu0 0
  %451 = vmatpush1.bf16.msra.mxu0 %v350
  %452 = vmatprep.subr.bf16.mxu0 0
  %453 = vmatpush1.bf16.msra.mxu0 %v351
  %454 = vmatprep.subr.bf16.mxu0 0
  %455 = vmatpush1.bf16.msra.mxu0 %v352
  %456 = vmatprep.subr.bf16.mxu0 0
  %457 = vmatpush1.bf16.msra.mxu0 %v353
  %458 = vmatprep.subr.bf16.mxu0 0
  %459 = vmatpush1.bf16.msra.mxu0 %v354
  %460 = vmatprep.subr.bf16.mxu0 0
  %461 = vmatpush1.bf16.msra.mxu0 %v355
  %462 = vmatprep.subr.bf16.mxu0 0
  %463 = vmatpush1.bf16.msra.mxu0 %v356
  %464 = vmatprep.subr.bf16.mxu0 0
  %465 = vmatpush1.bf16.msra.mxu0 %v357
  %466 = vmatprep.subr.bf16.mxu0 0
  %467 = vmatpush1.bf16.msra.mxu0 %v358
  %468 = vmatprep.subr.bf16.mxu0 0
  %469 = vmatpush1.bf16.msra.mxu0 %v359
  %470 = vmatprep.subr.bf16.mxu0 0
  %471 = vmatpush1.bf16.msra.mxu0 %v360
  %472 = vmatprep.subr.bf16.mxu0 0
  %473 = vmatpush1.bf16.msra.mxu0 %v361
  %474 = vmatprep.mubr.bf16.mxu0 %v143
  %475 = vmatmul.mubr.bf16.gmra.mrb[0].mxu0 %v142
  %v476 = vpop.f32.mrb[0].mxu0
  %v477 = vadd.f32 %v122, %v476
  %v478 = vpop.f32.mrb[0].mxu0
  %v479 = vpop.f32.mrb[0].mxu0
  %v480 = vadd.f32 %v122, %v479
  %v481 = vpop.f32.mrb[0].mxu0
  %482 = vdwg.mxu0
  %483 = vmatprep.subr.bf16.mxu0 0
  %484 = vmatpush1.bf16.msra.mxu0 %v362
  %485 = vmatprep.subr.bf16.mxu0 0
  %486 = vmatpush1.bf16.msra.mxu0 %v363
  %487 = vmatprep.subr.bf16.mxu0 0
  %488 = vmatpush1.bf16.msra.mxu0 %v364
  %489 = vmatprep.subr.bf16.mxu0 0
  %490 = vmatpush1.bf16.msra.mxu0 %v365
  %491 = vmatprep.subr.bf16.mxu0 0
  %492 = vmatpush1.bf16.msra.mxu0 %v366
  %493 = vmatprep.subr.bf16.mxu0 0
  %494 = vmatpush1.bf16.msra.mxu0 %v367
  %495 = vmatprep.subr.bf16.mxu0 0
  %496 = vmatpush1.bf16.msra.mxu0 %v368
  %497 = vmatprep.subr.bf16.mxu0 0
  %498 = vmatpush1.bf16.msra.mxu0 %v369
  %499 = vmatprep.subr.bf16.mxu0 0
  %500 = vmatpush1.bf16.msra.mxu0 %v370
  %501 = vmatprep.subr.bf16.mxu0 0
  %502 = vmatpush1.bf16.msra.mxu0 %v371
  %503 = vmatprep.subr.bf16.mxu0 0
  %504 = vmatpush1.bf16.msra.mxu0 %v372
  %505 = vmatprep.subr.bf16.mxu0 0
  %506 = vmatpush1.bf16.msra.mxu0 %v373
  %507 = vmatprep.subr.bf16.mxu0 0
  %508 = vmatpush1.bf16.msra.mxu0 %v374
  %509 = vmatprep.subr.bf16.mxu0 0
  %510 = vmatpush1.bf16.msra.mxu0 %v375
  %511 = vmatprep.subr.bf16.mxu0 0
  %512 = vmatpush1.bf16.msra.mxu0 %v376
  %513 = vmatprep.subr.bf16.mxu0 0
  %514 = vmatpush1.bf16.msra.mxu0 %v377
  %515 = vmatprep.mubr.bf16.mxu0 %v145
  %516 = vmatmul.mubr.bf16.gmra.mrb[0].mxu0 %v144
  %v517 = vpop.f32.mrb[0].mxu0
  %v518 = vadd.f32 %v477, %v517
  %v519 = vpop.f32.mrb[0].mxu0
  %v520 = vpop.f32.mrb[0].mxu0
  %v521 = vadd.f32 %v480, %v520
  %v522 = vpop.f32.mrb[0].mxu0
  %523 = vdwg.mxu0
  %524 = vmatprep.subr.bf16.mxu0 0
  %525 = vmatpush1.bf16.msra.mxu0 %v378
  %526 = vmatprep.subr.bf16.mxu0 0
  %527 = vmatpush1.bf16.msra.mxu0 %v379
  %528 = vmatprep.subr.bf16.mxu0 0
  %529 = vmatpush1.bf16.msra.mxu0 %v380
  %530 = vmatprep.subr.bf16.mxu0 0
  %531 = vmatpush1.bf16.msra.mxu0 %v381
  %532 = vmatprep.subr.bf16.mxu0 0
  %533 = vmatpush1.bf16.msra.mxu0 %v382
  %534 = vmatprep.subr.bf16.mxu0 0
  %535 = vmatpush1.bf16.msra.mxu0 %v383
  %536 = vmatprep.subr.bf16.mxu0 0
  %537 = vmatpush1.bf16.msra.mxu0 %v384
  %538 = vmatprep.subr.bf16.mxu0 0
  %539 = vmatpush1.bf16.msra.mxu0 %v385
  %540 = vmatprep.subr.bf16.mxu0 0
  %541 = vmatpush1.bf16.msra.mxu0 %v386
  %542 = vmatprep.subr.bf16.mxu0 0
  %543 = vmatpush1.bf16.msra.mxu0 %v387
  %544 = vmatprep.subr.bf16.mxu0 0
  %545 = vmatpush1.bf16.msra.mxu0 %v388
  %546 = vmatprep.subr.bf16.mxu0 0
  %547 = vmatpush1.bf16.msra.mxu0 %v389
  %548 = vmatprep.subr.bf16.mxu0 0
  %549 = vmatpush1.bf16.msra.mxu0 %v390
  %550 = vmatprep.subr.bf16.mxu0 0
  %551 = vmatpush1.bf16.msra.mxu0 %v391
  %552 = vmatprep.subr.bf16.mxu0 0
  %553 = vmatpush1.bf16.msra.mxu0 %v392
  %554 = vmatprep.subr.bf16.mxu0 0
  %555 = vmatpush1.bf16.msra.mxu0 %v393
  %556 = vmatprep.mubr.bf16.mxu0 %v147
  %557 = vmatmul.mubr.bf16.gmra.mrb[0].mxu0 %v146
  %v558 = vpop.f32.mrb[0].mxu0
  %v559 = vadd.f32 %v518, %v558
  %v560 = vpop.f32.mrb[0].mxu0
  %v561 = vpop.f32.mrb[0].mxu0
  %v562 = vadd.f32 %v521, %v561
  %v563 = vpop.f32.mrb[0].mxu0
  %564 = vdwg.mxu0
  %v565 = vpack.c.bf16 %v562, %v559
  %v567 = vunpack.c.l.b16 %v565
  %v568 = vunpack.c.h.b16 %v565
  %v569 = vpack.c.b16 %v567, %v567
  %v570 = vpack.c.b16 %v568, %v568
  %vm573 = vcmask 519168
  %574 = vst.msk [vmem:[%s3] sm:$0xf] %vm573, %v569
  %575 = vst.msk [vmem:[%s3 + $0x4] sm:$0xf] %vm573, %v570
  // Predicated region
  $region14: #{_lambda_.12} parent=0 // pred_check
    _
  $region15: #{_lambda_.12} parent=0 // pred_check_branch
    %577 = sbr.rel (0) target = $region17
  $region16: #{_lambda_.12} parent=0 // pred_region
    _
  $region17: #{_lambda_.12} parent=0 // pred_fallthru
    _
  // Predicated region
  $region18: #{_lambda_.12} parent=0 // pred_check
    _
  $region19: #{_lambda_.12} parent=0 // pred_check_branch
    %579 = sbr.rel (0) target = $region21
  $region20: #{_lambda_.12} parent=0 // pred_region
    _
  $region21: #{_lambda_.12} parent=0 // pred_fallthru
    _

// kernel: _lambda_.14
$region0: #{_lambda_.14}
  #allocation0 [shape = 'u32[]', space=smem, size = 0x4, offset = 0x4, fixed_abs, tag = 'smem constant byte address 0x4 - core index']
  #allocation1 [shape = 'u32[144,128]{1,0:T(1,128)}', space=vmem, size = 0x12000, scoped, tag = 'internal scratch']
  %s0 = inlined_call_operand.vmem [shape: bf16[16,64], index: 0, kind: input, shape index: {}]
  %s1 = inlined_call_operand.vmem [shape: f32[1,64], index: 1, kind: input, shape index: {}]
  %s2 = inlined_call_operand.vmem [shape: f32[1,64], index: 2, kind: input, shape index: {}]
  %s3 = inlined_call_operand.vmem [shape: bf16[64,128], index: 3, kind: input, shape index: {}]
  %s4 = inlined_call_operand.vmem [shape: f32[1,128], index: 4, kind: input, shape index: {}]
  %s5 = inlined_call_operand.vmem [shape: bf16[128,64], index: 5, kind: input, shape index: {}]
  %s6 = inlined_call_operand.vmem [shape: f32[1,64], index: 6, kind: input, shape index: {}]
  %s7 = inlined_call_operand.vmem [shape: bf16[16,64], index: 7, kind: output, shape index: {}]
  %s8 = sld [smem:[#allocation0]]
  $region38: #{_lambda_.14} parent=0
    _
  %s10 = ssub.s32 1, %s8
  %s11 = scalar_select 0, %s10, %s8
  // Predicated region
  $region2: #{_lambda_.14} parent=0 // pred_check
    _
  $region3: #{_lambda_.14} parent=0 // pred_check_branch
    %13 = sbr.rel (0) target = $region5
  $region4: #{_lambda_.14} parent=0 // pred_region
    _
  $region5: #{_lambda_.14} parent=0 // pred_fallthru
    _
  // Predicated region
  $region6: #{_lambda_.14} parent=0 // pred_check
    _
  $region7: #{_lambda_.14} parent=0 // pred_check_branch
    %15 = sbr.rel (0) target = $region9
  $region8: #{_lambda_.14} parent=0 // pred_region
    _
  $region9: #{_lambda_.14} parent=0 // pred_fallthru
    _
  // Predicated region
  $region10: #{_lambda_.14} parent=0 // pred_check
    _
  $region11: #{_lambda_.14} parent=0 // pred_check_branch
    %17 = sbr.rel (0) target = $region13
  $region12: #{_lambda_.14} parent=0 // pred_region
    _
  $region13: #{_lambda_.14} parent=0 // pred_fallthru
    _
  // Predicated region
  $region14: #{_lambda_.14} parent=0 // pred_check
    _
  $region15: #{_lambda_.14} parent=0 // pred_check_branch
    %19 = sbr.rel (0) target = $region17
  $region16: #{_lambda_.14} parent=0 // pred_region
    _
  $region17: #{_lambda_.14} parent=0 // pred_fallthru
    _
  // Predicated region
  $region18: #{_lambda_.14} parent=0 // pred_check
    _
  $region19: #{_lambda_.14} parent=0 // pred_check_branch
    %21 = sbr.rel (0) target = $region21
  $region20: #{_lambda_.14} parent=0 // pred_region
    _
  $region21: #{_lambda_.14} parent=0 // pred_fallthru
    _
  // Predicated region
  $region22: #{_lambda_.14} parent=0 // pred_check
    _
  $region23: #{_lambda_.14} parent=0 // pred_check_branch
    %23 = sbr.rel (0) target = $region25
  $region24: #{_lambda_.14} parent=0 // pred_region
    _
  $region25: #{_lambda_.14} parent=0 // pred_fallthru
    _
  // Predicated region
  $region26: #{_lambda_.14} parent=0 // pred_check
    _
  $region27: #{_lambda_.14} parent=0 // pred_check_branch
    %25 = sbr.rel (0) target = $region29
  $region28: #{_lambda_.14} parent=0 // pred_region
    _
  $region29: #{_lambda_.14} parent=0 // pred_fallthru
    _
  %v27 = vld [vmem:[%s0] sm:$0xf]
  %v28 = vld [vmem:[%s0 + $0x4] sm:$0xf]
  %v29 = vunpack.c.l.bf16 %v27
  %v30 = vunpack.c.l.bf16 %v28
  %v31 = vld [vmem:[%s1] sm:$0x1]
  %v32 = vld [vmem:[%s2] sm:$0x1]
  %vm33 = vcmask 523264
  %v34 = vsel %vm33, %v29, 0.0
  %35 = vadd.xlane.f32.xlu0 %v34
  %v36 = vpop.xlane.xlu0 %35
  %v37 = vsel %vm33, %v30, 0.0
  %38 = vadd.xlane.f32.xlu0 %v37
  %v39 = vpop.xlane.xlu0 %38
  %v40 = vrcp.pop 64.0
  %v41 = vmul.f32 %v36, %v40
  %v42 = vmul.f32 %v39, %v40
  %v43 = vsub.f32 %v29, %v41
  %v44 = vsub.f32 %v30, %v42
  %v45 = vmul.f32 %v43, %v43
  %v46 = vmul.f32 %v44, %v44
  %v47 = vsel %vm33, %v45, 0.0
  %48 = vadd.xlane.f32.xlu0 %v47
  %v49 = vpop.xlane.xlu0 %48
  %v50 = vsel %vm33, %v46, 0.0
  %51 = vadd.xlane.f32.xlu0 %v50
  %v52 = vpop.xlane.xlu0 %51
  %v53 = vmul.f32 %v49, %v40
  %v54 = vmul.f32 %v52, %v40
  %v55 = vadd.f32 %v53, 1e-12
  %v56 = vadd.f32 %v54, 1e-12
  %v57 = vrsqrt.pop %v55
  %v58 = vrsqrt.pop %v56
  %v59 = vmul.f32 %v43, %v57
  %v60 = vmul.f32 %v44, %v58
  %v62 = vlaneseq
  %v63 = vshrl.u32 %v62, 7
  %v64 = vsub.s32 0, %v63
  %v65 = vrot.slane %v31, %v64
  %v67 = vmul.f32 %v59, %v65
  %v68 = vmul.f32 %v60, %v65
  %v70 = vlaneseq
  %v71 = vshrl.u32 %v70, 7
  %v72 = vsub.s32 0, %v71
  %v73 = vrot.slane %v32, %v72
  %v75 = vadd.f32 %v67, %v73
  %v76 = vadd.f32 %v68, %v73
  %v77 = vpack.c.bf16 %v76, %v75
  %v78 = vld [vmem:[%s3] sm:$0xf]
  %v79 = vld [vmem:[%s3 + $0x4] sm:$0xf]
  %v80 = vld [vmem:[%s3 + $0x8] sm:$0xf]
  %v81 = vld [vmem:[%s3 + $0xc] sm:$0xf]
  %v82 = vld [vmem:[%s3 + $0x10] sm:$0xf]
  %v83 = vld [vmem:[%s3 + $0x14] sm:$0xf]
  %v84 = vld [vmem:[%s3 + $0x18] sm:$0xf]
  %v85 = vld [vmem:[%s3 + $0x1c] sm:$0xf]
  %v86 = vld [vmem:[%s4] sm:$0x1]
  %v88 = vlaneseq
  %v89 = vshrl.u32 %v88, 7
  %v90 = vsub.s32 0, %v89
  %v91 = vrot.slane %v86, %v90
  %v101 = vunpack.c.l.b16 %v78
  %v102 = vunpack.c.l.b16 %v79
  %v103 = vunpack.c.l.b16 %v80
  %v104 = vunpack.c.l.b16 %v81
  %v105 = vunpack.c.l.b16 %v82
  %v106 = vunpack.c.l.b16 %v83
  %v107 = vunpack.c.l.b16 %v84
  %v108 = vunpack.c.l.b16 %v85
  %v109 = vpack.c.b16 %v102, %v101
  %v110 = vpack.c.b16 %v104, %v103
  %v111 = vpack.c.b16 %v106, %v105
  %v112 = vpack.c.b16 %v108, %v107
  %v118 = vsel %vm33, %v77, 0
  %120 = vmatprep.subr.bf16.mxu0 0
  %121 = vmatpush1.bf16.msra.mxu0 %v109
  %122 = vmatprep.subr.bf16.mxu0 0
  %123 = vmatpush1.bf16.msra.mxu0 %v110
  %124 = vmatprep.subr.bf16.mxu0 0
  %125 = vmatpush1.bf16.msra.mxu0 %v111
  %126 = vmatprep.subr.bf16.mxu0 0
  %127 = vmatpush1.bf16.msra.mxu0 %v112
  %128 = vmatprep.subr.bf16.mxu0 0
  %129 = vmatpush1.bf16.msra.mxu0 0
  %130 = vmatprep.subr.bf16.mxu0 0
  %131 = vmatpush1.bf16.msra.mxu0 0
  %132 = vmatprep.subr.bf16.mxu0 0
  %133 = vmatpush1.bf16.msra.mxu0 0
  %134 = vmatprep.subr.bf16.mxu0 0
  %135 = vmatpush1.bf16.msra.mxu0 0
  %136 = vmatprep.subr.bf16.mxu0 0
  %137 = vmatpush1.bf16.msra.mxu0 0
  %138 = vmatprep.subr.bf16.mxu0 0
  %139 = vmatpush1.bf16.msra.mxu0 0
  %140 = vmatprep.subr.bf16.mxu0 0
  %141 = vmatpush1.bf16.msra.mxu0 0
  %142 = vmatprep.subr.bf16.mxu0 0
  %143 = vmatpush1.bf16.msra.mxu0 0
  %144 = vmatprep.subr.bf16.mxu0 0
  %145 = vmatpush1.bf16.msra.mxu0 0
  %146 = vmatprep.subr.bf16.mxu0 0
  %147 = vmatpush1.bf16.msra.mxu0 0
  %148 = vmatprep.subr.bf16.mxu0 0
  %149 = vmatpush1.bf16.msra.mxu0 0
  %150 = vmatprep.subr.bf16.mxu0 0
  %151 = vmatpush1.bf16.msra.mxu0 0
  %152 = vmatprep.mubr.bf16.mxu0 0
  %153 = vmatmul.mubr.bf16.gmra.mrb[0].mxu0 %v118
  %v154 = vpop.f32.mrb[0].mxu0
  %v155 = vadd.f32 %v91, %v154
  %v156 = vpop.f32.mrb[0].mxu0
  %v157 = vpop.f32.mrb[0].mxu0
  %v158 = vadd.f32 %v91, %v157
  %v159 = vpop.f32.mrb[0].mxu0
  %160 = vdwg.mxu0
  %v161 = vmul.f32 %v155, %v155
  %v162 = vmul.f32 %v158, %v158
  %v163 = vmul.f32 %v155, %v161
  %v164 = vmul.f32 %v158, %v162
  %v165 = vmul.f32 %v163, 0.044715
  %v166 = vmul.f32 %v164, 0.044715
  %v167 = vadd.f32 %v155, %v165
  %v168 = vadd.f32 %v158, %v166
  %v169 = vmul.f32 %v167, 0.7978846
  %v170 = vmul.f32 %v168, 0.7978846
  %v171 = vtanh.pop %v169
  %v172 = vtanh.pop %v170
  %v173 = vadd.f32 %v171, 1.0
  %v174 = vadd.f32 %v172, 1.0
  %v175 = vmul.f32 %v173, 0.5
  %v176 = vmul.f32 %v174, 0.5
  %v177 = vmul.f32 %v155, %v175
  %v178 = vmul.f32 %v158, %v176
  %v179 = vpack.c.bf16 %v178, %v177
  %v180 = vld [vmem:[%s5] sm:$0xf]
  %v181 = vld [vmem:[%s5 + $0x4] sm:$0xf]
  %v182 = vld [vmem:[%s5 + $0x8] sm:$0xf]
  %v183 = vld [vmem:[%s5 + $0xc] sm:$0xf]
  %v184 = vld [vmem:[%s5 + $0x10] sm:$0xf]
  %v185 = vld [vmem:[%s5 + $0x14] sm:$0xf]
  %v186 = vld [vmem:[%s5 + $0x18] sm:$0xf]
  %v187 = vld [vmem:[%s5 + $0x1c] sm:$0xf]
  %v188 = vld [vmem:[%s5 + $0x20] sm:$0xf]
  %v189 = vld [vmem:[%s5 + $0x24] sm:$0xf]
  %v190 = vld [vmem:[%s5 + $0x28] sm:$0xf]
  %v191 = vld [vmem:[%s5 + $0x2c] sm:$0xf]
  %v192 = vld [vmem:[%s5 + $0x30] sm:$0xf]
  %v193 = vld [vmem:[%s5 + $0x34] sm:$0xf]
  %v194 = vld [vmem:[%s5 + $0x38] sm:$0xf]
  %v195 = vld [vmem:[%s5 + $0x3c] sm:$0xf]
  %v196 = vld [vmem:[%s6] sm:$0x1]
  %v198 = vlaneseq
  %v199 = vshrl.u32 %v198, 7
  %v200 = vsub.s32 0, %v199
  %v201 = vrot.slane %v196, %v200
  %v219 = vunpack.c.l.b16 %v180
  %v220 = vunpack.c.l.b16 %v181
  %v221 = vunpack.c.l.b16 %v182
  %v222 = vunpack.c.l.b16 %v183
  %v223 = vunpack.c.l.b16 %v184
  %v224 = vunpack.c.l.b16 %v185
  %v225 = vunpack.c.l.b16 %v186
  %v226 = vunpack.c.l.b16 %v187
  %v227 = vunpack.c.l.b16 %v188
  %v228 = vunpack.c.l.b16 %v189
  %v229 = vunpack.c.l.b16 %v190
  %v230 = vunpack.c.l.b16 %v191
  %v231 = vunpack.c.l.b16 %v192
  %v232 = vunpack.c.l.b16 %v193
  %v233 = vunpack.c.l.b16 %v194
  %v234 = vunpack.c.l.b16 %v195
  %v235 = vpack.c.b16 %v220, %v219
  %v236 = vpack.c.b16 %v222, %v221
  %v237 = vpack.c.b16 %v224, %v223
  %v238 = vpack.c.b16 %v226, %v225
  %v239 = vpack.c.b16 %v228, %v227
  %v240 = vpack.c.b16 %v230, %v229
  %v241 = vpack.c.b16 %v232, %v231
  %v242 = vpack.c.b16 %v234, %v233
  %251 = vmatprep.subr.bf16.mxu0 0
  %252 = vmatpush1.bf16.msra.mxu0 %v235
  %253 = vmatprep.subr.bf16.mxu0 0
  %254 = vmatpush1.bf16.msra.mxu0 %v236
  %255 = vmatprep.subr.bf16.mxu0 0
  %256 = vmatpush1.bf16.msra.mxu0 %v237
  %257 = vmatprep.subr.bf16.mxu0 0
  %258 = vmatpush1.bf16.msra.mxu0 %v238
  %259 = vmatprep.subr.bf16.mxu0 0
  %260 = vmatpush1.bf16.msra.mxu0 %v239
  %261 = vmatprep.subr.bf16.mxu0 0
  %262 = vmatpush1.bf16.msra.mxu0 %v240
  %263 = vmatprep.subr.bf16.mxu0 0
  %264 = vmatpush1.bf16.msra.mxu0 %v241
  %265 = vmatprep.subr.bf16.mxu0 0
  %266 = vmatpush1.bf16.msra.mxu0 %v242
  %267 = vmatprep.subr.bf16.mxu0 0
  %268 = vmatpush1.bf16.msra.mxu0 0
  %269 = vmatprep.subr.bf16.mxu0 0
  %270 = vmatpush1.bf16.msra.mxu0 0
  %271 = vmatprep.subr.bf16.mxu0 0
  %272 = vmatpush1.bf16.msra.mxu0 0
  %273 = vmatprep.subr.bf16.mxu0 0
  %274 = vmatpush1.bf16.msra.mxu0 0
  %275 = vmatprep.subr.bf16.mxu0 0
  %276 = vmatpush1.bf16.msra.mxu0 0
  %277 = vmatprep.subr.bf16.mxu0 0
  %278 = vmatpush1.bf16.msra.mxu0 0
  %279 = vmatprep.subr.bf16.mxu0 0
  %280 = vmatpush1.bf16.msra.mxu0 0
  %281 = vmatprep.subr.bf16.mxu0 0
  %282 = vmatpush1.bf16.msra.mxu0 0
  %283 = vmatprep.mubr.bf16.mxu0 0
  %284 = vmatmul.mubr.bf16.gmra.mrb[0].mxu0 %v179
  %v285 = vpop.f32.mrb[0].mxu0
  %v286 = vadd.f32 %v201, %v285
  %v287 = vpop.f32.mrb[0].mxu0
  %v288 = vpop.f32.mrb[0].mxu0
  %v289 = vadd.f32 %v201, %v288
  %v290 = vpop.f32.mrb[0].mxu0
  %291 = vdwg.mxu0
  %v292 = vadd.f32 %v29, %v286
  %v293 = vadd.f32 %v30, %v289
  %v294 = vpack.c.bf16 %v293, %v292
  %v296 = vunpack.c.l.b16 %v294
  %v297 = vunpack.c.h.b16 %v294
  %v298 = vpack.c.b16 %v296, %v296
  %v299 = vpack.c.b16 %v297, %v297
  %vm302 = vcmask 519168
  %303 = vst.msk [vmem:[%s7] sm:$0xf] %vm302, %v298
  %304 = vst.msk [vmem:[%s7 + $0x4] sm:$0xf] %vm302, %v299
  // Predicated region
  $region30: #{_lambda_.14} parent=0 // pred_check
    _
  $region31: #{_lambda_.14} parent=0 // pred_check_branch
    %306 = sbr.rel (0) target = $region33
  $region32: #{_lambda_.14} parent=0 // pred_region
    _
  $region33: #{_lambda_.14} parent=0 // pred_fallthru
    _
  // Predicated region
  $region34: #{_lambda_.14} parent=0 // pred_check
    _
  $region35: #{_lambda_.14} parent=0 // pred_check_branch
    %308 = sbr.rel (0) target = $region37
  $region36: #{_lambda_.14} parent=0 // pred_region
    _
  $region37: #{_lambda_.14} parent=0 // pred_fallthru
    _

// kernel: _lambda_.13
$region0: #{_lambda_.13}
  #allocation0 [shape = 'u32[]', space=smem, size = 0x4, offset = 0x4, fixed_abs, tag = 'smem constant byte address 0x4 - core index']
  #allocation1 [shape = 'u32[144,128]{1,0:T(1,128)}', space=vmem, size = 0x12000, scoped, tag = 'internal scratch']
  %s0 = inlined_call_operand.vmem [shape: bf16[2,5,64], index: 0, kind: input, shape index: {}]
  %s1 = inlined_call_operand.vmem [shape: f32[1,64], index: 1, kind: input, shape index: {}]
  %s2 = inlined_call_operand.vmem [shape: f32[1,64], index: 2, kind: input, shape index: {}]
  %s3 = inlined_call_operand.vmem [shape: bf16[64,192], index: 3, kind: input, shape index: {}]
  %s4 = inlined_call_operand.vmem [shape: f32[1,192], index: 4, kind: input, shape index: {}]
  %s5 = inlined_call_operand.vmem [shape: bf16[64,64], index: 5, kind: input, shape index: {}]
  %s6 = inlined_call_operand.vmem [shape: f32[1,64], index: 6, kind: input, shape index: {}]
  %s7 = inlined_call_operand.vmem [shape: bf16[2,5,64], index: 7, kind: output, shape index: {}]
  %s8 = sld [smem:[#allocation0]]
  $region61: #{_lambda_.13} parent=0
    _
  %s10 = ssub.s32 1, %s8
  %s11 = scalar_select 0, %s10, %s8
  loop: start=0, step=1, limit=4
  $region2: #{_lambda_.13} parent=0 // loop_pre_header
    _
  $region3: #{_lambda_.13} parent=0 // loop_header
    %s13 = sphi 0, %s17
    %p14 = scmp.ge.s32.totalorder %s13, 4
    %s23 = sphi 0, %s25
    %s26 = sphi 0, %s23
    %s27 = sphi 0, %s26
    %s43 = sphi 0, %s27
    %s47 = sphi 0, %s47
    %s49 = sphi 0, %s47
    %s50 = sphi 0, %s49
    %s64 = sphi 0, %s50
    %s68 = sphi 0, %s68
    %s70 = sphi 0, %s68
    %s71 = sphi 0, %s70
    %s85 = sphi 0, %s71
    %s89 = sphi 0, %s89
    %s91 = sphi 0, %s89
    %s92 = sphi 0, %s91
    %s106 = sphi 0, %s92
    %s110 = sphi 0, %s110
    %s112 = sphi 0, %s110
    %s113 = sphi 0, %s112
    %s127 = sphi 0, %s113
    %s131 = sphi 0, %s131
    %s133 = sphi 0, %s131
    %s134 = sphi 0, %s133
    %s148 = sphi 0, %s134
    %s152 = sphi 0, %s152
    %s154 = sphi 0, %s152
    %s155 = sphi 0, %s154
    %s169 = sphi 0, %s155
    %s175 = sphi 0, %s177
    %s178 = sphi 0, %s175
    %s179 = sphi 0, %s178
    %s195 = sphi 0, %s179
  $region4: #{_lambda_.13} parent=0 // loop_header_branch
    %16 = sbr.rel (%p14) target = $region8
  $region5: #{_lambda_.13} parent=0 // loop_body
    %s18 = ssub.s32 %s13, 1
    %s19 = ssub.s32 %s13, 2
    %s20 = sadd.s32 %s13, 1
    %s21 = ssub.s32 %s13, %s20
    %p22 = scmp.eq.s32.totalorder %s21, 0
    %s24 = sadd.s32 %s23, 1
    %s25 = scalar_select %p22, %s23, %s24
    %p28 = pneg %p22
    %p29 = scmp.eq.s32.totalorder %s13, 1
    %p30 = por %p28, %p29
    %p31 = scmp.ne.s32.totalorder %s23, %s26
    %p32 = scmp.eq.s32.totalorder %s13, 0
    %p33 = por %p31, %p32
    %p34 = scmp.ne.s32.totalorder %s23, %s26
    %p35 = scmp.eq.s32.totalorder %s18, 1
    %p36 = por %p34, %p35
    %p37 = scmp.ne.s32.totalorder %s26, %s27
    %p38 = scmp.eq.s32.totalorder %s18, 0
    %p39 = por %p37, %p38
    %p40 = scmp.ne.s32.totalorder %s26, %s27
    %p41 = scmp.eq.s32.totalorder %s19, 1
    %p42 = por %p40, %p41
    %p44 = scmp.ne.s32.totalorder %s27, %s43
    %p45 = scmp.eq.s32.totalorder %s19, 0
    %p46 = por %p44, %p45
    %s48 = sadd.s32 %s47, 1
    %p51 = scmp.eq.s32.totalorder %s13, 1
    %p52 = scmp.ne.s32.totalorder %s47, %s49
    %p53 = scmp.eq.s32.totalorder %s13, 0
    %p54 = por %p52, %p53
    %p55 = scmp.ne.s32.totalorder %s47, %s49
    %p56 = scmp.eq.s32.totalorder %s18, 1
    %p57 = por %p55, %p56
    %p58 = scmp.ne.s32.totalorder %s49, %s50
    %p59 = scmp.eq.s32.totalorder %s18, 0
    %p60 = por %p58, %p59
    %p61 = scmp.ne.s32.totalorder %s49, %s50
    %p62 = scmp.eq.s32.totalorder %s19, 1
    %p63 = por %p61, %p62
    %p65 = scmp.ne.s32.totalorder %s50, %s64
    %p66 = scmp.eq.s32.totalorder %s19, 0
    %p67 = por %p65, %p66
    %s69 = sadd.s32 %s68, 1
    %p72 = scmp.eq.s32.totalorder %s13, 1
    %p73 = scmp.ne.s32.totalorder %s68, %s70
    %p74 = scmp.eq.s32.totalorder %s13, 0
    %p75 = por %p73, %p74
    %p76 = scmp.ne.s32.totalorder %s68, %s70
    %p77 = scmp.eq.s32.totalorder %s18, 1
    %p78 = por %p76, %p77
    %p79 = scmp.ne.s32.totalorder %s70, %s71
    %p80 = scmp.eq.s32.totalorder %s18, 0
    %p81 = por %p79, %p80
    %p82 = scmp.ne.s32.totalorder %s70, %s71
    %p83 = scmp.eq.s32.totalorder %s19, 1
    %p84 = por %p82, %p83
    %p86 = scmp.ne.s32.totalorder %s71, %s85
    %p87 = scmp.eq.s32.totalorder %s19, 0
    %p88 = por %p86, %p87
    %s90 = sadd.s32 %s89, 1
    %p93 = scmp.eq.s32.totalorder %s13, 1
    %p94 = scmp.ne.s32.totalorder %s89, %s91
    %p95 = scmp.eq.s32.totalorder %s13, 0
    %p96 = por %p94, %p95
    %p97 = scmp.ne.s32.totalorder %s89, %s91
    %p98 = scmp.eq.s32.totalorder %s18, 1
    %p99 = por %p97, %p98
    %p100 = scmp.ne.s32.totalorder %s91, %s92
    %p101 = scmp.eq.s32.totalorder %s18, 0
    %p102 = por %p100, %p101
    %p103 = scmp.ne.s32.totalorder %s91, %s92
    %p104 = scmp.eq.s32.totalorder %s19, 1
    %p105 = por %p103, %p104
    %p107 = scmp.ne.s32.totalorder %s92, %s106
    %p108 = scmp.eq.s32.totalorder %s19, 0
    %p109 = por %p107, %p108
    %s111 = sadd.s32 %s110, 1
    %p114 = scmp.eq.s32.totalorder %s13, 1
    %p115 = scmp.ne.s32.totalorder %s110, %s112
    %p116 = scmp.eq.s32.totalorder %s13, 0
    %p117 = por %p115, %p116
    %p118 = scmp.ne.s32.totalorder %s110, %s112
    %p119 = scmp.eq.s32.totalorder %s18, 1
    %p120 = por %p118, %p119
    %p121 = scmp.ne.s32.totalorder %s112, %s113
    %p122 = scmp.eq.s32.totalorder %s18, 0
    %p123 = por %p121, %p122
    %p124 = scmp.ne.s32.totalorder %s112, %s113
    %p125 = scmp.eq.s32.totalorder %s19, 1
    %p126 = por %p124, %p125
    %p128 = scmp.ne.s32.totalorder %s113, %s127
    %p129 = scmp.eq.s32.totalorder %s19, 0
    %p130 = por %p128, %p129
    %s132 = sadd.s32 %s131, 1
    %p135 = scmp.eq.s32.totalorder %s13, 1
    %p136 = scmp.ne.s32.totalorder %s131, %s133
    %p137 = scmp.eq.s32.totalorder %s13, 0
    %p138 = por %p136, %p137
    %p139 = scmp.ne.s32.totalorder %s131, %s133
    %p140 = scmp.eq.s32.totalorder %s18, 1
    %p141 = por %p139, %p140
    %p142 = scmp.ne.s32.totalorder %s133, %s134
    %p143 = scmp.eq.s32.totalorder %s18, 0
    %p144 = por %p142, %p143
    %p145 = scmp.ne.s32.totalorder %s133, %s134
    %p146 = scmp.eq.s32.totalorder %s19, 1
    %p147 = por %p145, %p146
    %p149 = scmp.ne.s32.totalorder %s134, %s148
    %p150 = scmp.eq.s32.totalorder %s19, 0
    %p151 = por %p149, %p150
    %s153 = sadd.s32 %s152, 1
    %p156 = scmp.eq.s32.totalorder %s13, 1
    %p157 = scmp.ne.s32.totalorder %s152, %s154
    %p158 = scmp.eq.s32.totalorder %s13, 0
    %p159 = por %p157, %p158
    %p160 = scmp.ne.s32.totalorder %s152, %s154
    %p161 = scmp.eq.s32.totalorder %s18, 1
    %p162 = por %p160, %p161
    %p163 = scmp.ne.s32.totalorder %s154, %s155
    %p164 = scmp.eq.s32.totalorder %s18, 0
    %p165 = por %p163, %p164
    %p166 = scmp.ne.s32.totalorder %s154, %s155
    %p167 = scmp.eq.s32.totalorder %s19, 1
    %p168 = por %p166, %p167
    %p170 = scmp.ne.s32.totalorder %s155, %s169
    %p171 = scmp.eq.s32.totalorder %s19, 0
    %p172 = por %p170, %p171
    %s173 = ssub.s32 %s13, %s20
    %p174 = scmp.eq.s32.totalorder %s173, 0
    %s176 = sadd.s32 %s175, 1
    %s177 = scalar_select %p174, %s175, %s176
    %p180 = pneg %p174
    %p181 = scmp.eq.s32.totalorder %s13, 1
    %p182 = por %p180, %p181
    %p183 = scmp.ne.s32.totalorder %s175, %s178
    %p184 = scmp.eq.s32.totalorder %s13, 0
    %p185 = por %p183, %p184
    %p186 = scmp.ne.s32.totalorder %s175, %s178
    %p187 = scmp.eq.s32.totalorder %s18, 1
    %p188 = por %p186, %p187
    %p189 = scmp.ne.s32.totalorder %s178, %s179
    %p190 = scmp.eq.s32.totalorder %s18, 0
    %p191 = por %p189, %p190
    %p192 = scmp.ne.s32.totalorder %s178, %s179
    %p193 = scmp.eq.s32.totalorder %s19, 1
    %p194 = por %p192, %p193
    %p196 = scmp.ne.s32.totalorder %s179, %s195
    %p197 = scmp.eq.s32.totalorder %s19, 0
    %p198 = por %p196, %p197
    %p199 = scmp.le.s32.totalorder 1, %s13
    %p200 = scmp.lt.s32.totalorder %s13, 3
    %p201 = pnand %p199, %p200
    %p202 = pneg %p201
    // Predicated region
    $region9: #{_lambda_.13} parent=5 // pred_check
      _
    $region10: #{_lambda_.13} parent=5 // pred_check_branch
      %204 = sbr.rel (%p201) target = $region12
    $region11: #{_lambda_.13} parent=5 // pred_region
      %s205 = ssub.s32 %s13, 1
      // Predicated region
      $region13: #{_lambda_.13} parent=11 // pred_check
        %p206 = pneg %p60
      $region14: #{_lambda_.13} parent=11 // pred_check_branch
        %208 = sbr.rel (%p206) target = $region16
      $region15: #{_lambda_.13} parent=11 // pred_region
        _
      $region16: #{_lambda_.13} parent=11 // pred_fallthru
        _
      // Predicated region
      $region17: #{_lambda_.13} parent=11 // pred_check
        %p209 = pneg %p81
      $region18: #{_lambda_.13} parent=11 // pred_check_branch
        %211 = sbr.rel (%p209) target = $region20
      $region19: #{_lambda_.13} parent=11 // pred_region
        _
      $region20: #{_lambda_.13} parent=11 // pred_fallthru
        _
      // Predicated region
      $region21: #{_lambda_.13} parent=11 // pred_check
        %p212 = pneg %p102
      $region22: #{_lambda_.13} parent=11 // pred_check_branch
        %214 = sbr.rel (%p212) target = $region24
      $region23: #{_lambda_.13} parent=11 // pred_region
        _
      $region24: #{_lambda_.13} parent=11 // pred_fallthru
        _
      // Predicated region
      $region25: #{_lambda_.13} parent=11 // pred_check
        %p215 = pneg %p123
      $region26: #{_lambda_.13} parent=11 // pred_check_branch
        %217 = sbr.rel (%p215) target = $region28
      $region27: #{_lambda_.13} parent=11 // pred_region
        _
      $region28: #{_lambda_.13} parent=11 // pred_fallthru
        _
      // Predicated region
      $region29: #{_lambda_.13} parent=11 // pred_check
        %p218 = pneg %p144
      $region30: #{_lambda_.13} parent=11 // pred_check_branch
        %220 = sbr.rel (%p218) target = $region32
      $region31: #{_lambda_.13} parent=11 // pred_region
        _
      $region32: #{_lambda_.13} parent=11 // pred_fallthru
        _
      // Predicated region
      $region33: #{_lambda_.13} parent=11 // pred_check
        %p221 = pneg %p165
      $region34: #{_lambda_.13} parent=11 // pred_check_branch
        %223 = sbr.rel (%p221) target = $region36
      $region35: #{_lambda_.13} parent=11 // pred_region
        _
      $region36: #{_lambda_.13} parent=11 // pred_fallthru
        _
    $region12: #{_lambda_.13} parent=5 // pred_fallthru
      _
    %p224 = scmp.lt.s32.totalorder %s13, 2
    // Predicated region
    $region37: #{_lambda_.13} parent=5 // pred_check
      %p225 = pneg %p224
    $region38: #{_lambda_.13} parent=5 // pred_check_branch
      %227 = sbr.rel (%p225) target = $region40
    $region39: #{_lambda_.13} parent=5 // pred_region
      // Predicated region
      $region41: #{_lambda_.13} parent=39 // pred_check
        %p228 = pneg %p33
      $region42: #{_lambda_.13} parent=39 // pred_check_branch
        %230 = sbr.rel (%p228) target = $region44
      $region43: #{_lambda_.13} parent=39 // pred_region
        %p231 = scmp.lt.s32.totalorder %s13, 1
        %s232 = scalar_select %p231, %s13, 1
        %s233 = smul.addr %s232, 4
        %s234 = scalar_lea.vmem %s0, %s233
      $region44: #{_lambda_.13} parent=39 // pred_fallthru
        _
    $region40: #{_lambda_.13} parent=5 // pred_fallthru
      _
    %p235 = scmp.le.s32.totalorder 1, %s13
    %p236 = scmp.lt.s32.totalorder %s13, 3
    %p237 = pnand %p235, %p236
    %p238 = pneg %p237
    // Predicated region
    $region45: #{_lambda_.13} parent=5 // pred_check
      _
    $region46: #{_lambda_.13} parent=5 // pred_check_branch
      %240 = sbr.rel (%p237) target = $region48
    $region47: #{_lambda_.13} parent=5 // pred_region
      %s241 = ssub.s32 %s13, 1
      %p242 = scmp.lt.s32.totalorder %s18, 1
      %s243 = scalar_select %p242, %s18, 1
      %s244 = smul.addr %s243, 4
      %s245 = scalar_lea.vmem %s0, %s244
      %p246 = pneg %p39
      %p247 = pneg %p36
      %p248 = pneg %p60
      %p249 = pneg %p57
      %p250 = pneg %p81
      %p251 = pneg %p78
      %p252 = pneg %p102
      %p253 = pneg %p99
      %p254 = pneg %p123
      %p255 = pneg %p120
      %p256 = pneg %p144
      %p257 = pneg %p141
      %p258 = pneg %p165
      %p259 = pneg %p162
      %p260 = pneg %p191
      %p261 = pneg %p188
      %p262 = scmp.lt.s32.totalorder %s18, 1
      %s263 = scalar_select %p262, %s18, 1
      %s264 = smul.addr %s263, 4
      %s265 = scalar_lea.vmem %s7, %s264
      %p266 = scmp.lt.s32.totalorder %s18, 1
      %s267 = scalar_select %p266, %s18, 1
      %s268 = smul.addr %s267, 4
      %s269 = scalar_lea.vmem %s0, %s268
      %p270 = scmp.lt.s32.totalorder %s18, 1
      %s271 = scalar_select %p270, %s18, 1
      %s272 = smul.addr %s271, 4
      %s273 = scalar_lea.vmem %s7, %s272
      %v275 = vld [vmem:[%s269] sm:$0x7]
      %v276 = vunpack.c.l.bf16 %v275
      %v277 = vld [vmem:[%s1] sm:$0x1]
      %v278 = vld [vmem:[%s2] sm:$0x1]
      %vm279 = vcmask 520192
      %v280 = vsel %vm279, %v276, 0.0
      %281 = vadd.xlane.f32.xlu0 %v280
      %v282 = vpop.xlane.xlu0 %281
      %v283 = vrcp.pop 64.0
      %v284 = vmul.f32 %v282, %v283
      %v285 = vsub.f32 %v276, %v284
      %v286 = vmul.f32 %v285, %v285
      %v287 = vsel %vm279, %v286, 0.0
      %288 = vadd.xlane.f32.xlu0 %v287
      %v289 = vpop.xlane.xlu0 %288
      %v290 = vmul.f32 %v289, %v283
      %v291 = vadd.f32 %v290, 1e-12
      %v292 = vrsqrt.pop %v291
      %v293 = vmul.f32 %v285, %v292
      %v295 = vlaneseq
      %v296 = vshrl.u32 %v295, 7
      %v297 = vsub.s32 0, %v296
      %v298 = vrot.slane %v277, %v297
      %v300 = vmul.f32 %v293, %v298
      %v302 = vlaneseq
      %v303 = vshrl.u32 %v302, 7
      %v304 = vsub.s32 0, %v303
      %v305 = vrot.slane %v278, %v304
      %v307 = vadd.f32 %v300, %v305
      %v308 = vld [vmem:[%s3] sm:$0xff]
      %v309 = vld [vmem:[%s3 + $0x8] sm:$0xff]
      %v310 = vld [vmem:[%s3 + $0x10] sm:$0xff]
      %v311 = vld [vmem:[%s3 + $0x18] sm:$0xff]
      %v312 = vld [vmem:[%s3 + $0x20] sm:$0xff]
      %v313 = vld [vmem:[%s3 + $0x28] sm:$0xff]
      %v314 = vld [vmem:[%s3 + $0x30] sm:$0xff]
      %v315 = vld [vmem:[%s3 + $0x38] sm:$0xff]
      %v316 = vld [vmem:[%s4] sm:$0x3]
      %v317 = vpack.c.bf16 %v307, %v307
      %v319 = vlaneseq
      %v320 = vshrl.u32 %v319, 7
      %v321 = vsub.s32 0, %v320
      %v322 = vrot.slane %v316, %v321
      %v323 = vlaneseq
      %v324 = vshrl.u32 %v323, 7
      %v325 = vsub.s32 1, %v324
      %v326 = vrot.slane %v316, %v325
      %v337 = vunpack.c.l.b16 %v308
      %v338 = vunpack.c.h.b16 %v308
      %v339 = vunpack.c.l.b16 %v309
      %v340 = vunpack.c.h.b16 %v309
      %v341 = vunpack.c.l.b16 %v310
      %v342 = vunpack.c.h.b16 %v310
      %v343 = vunpack.c.l.b16 %v311
      %v344 = vunpack.c.h.b16 %v311
      %v345 = vunpack.c.l.b16 %v312
      %v346 = vunpack.c.h.b16 %v312
      %v347 = vunpack.c.l.b16 %v313
      %v348 = vunpack.c.h.b16 %v313
      %v349 = vunpack.c.l.b16 %v314
      %v350 = vunpack.c.h.b16 %v314
      %v351 = vunpack.c.l.b16 %v315
      %v352 = vunpack.c.h.b16 %v315
      %v353 = vpack.c.b16 %v339, %v337
      %v354 = vpack.c.b16 %v340, %v338
      %v355 = vpack.c.b16 %v343, %v341
      %v356 = vpack.c.b16 %v344, %v342
      %v357 = vpack.c.b16 %v347, %v345
      %v358 = vpack.c.b16 %v348, %v346
      %v359 = vpack.c.b16 %v351, %v349
      %v360 = vpack.c.b16 %v352, %v350
      %vm369 = vcmask 523264
      %v371 = vsel %vm369, %v317, 0
      %373 = vmatprep.subr.bf16.mxu0 %v354
      %374 = vmatpush1.bf16.msra.mxu0 %v353
      %375 = vmatprep.subr.bf16.mxu0 %v356
      %376 = vmatpush1.bf16.msra.mxu0 %v355
      %377 = vmatprep.subr.bf16.mxu0 %v358
      %378 = vmatpush1.bf16.msra.mxu0 %v357
      %379 = vmatprep.subr.bf16.mxu0 %v360
      %380 = vmatpush1.bf16.msra.mxu0 %v359
      %381 = vmatprep.subr.bf16.mxu0 0
      %382 = vmatpush1.bf16.msra.mxu0 0
      %383 = vmatprep.subr.bf16.mxu0 0
      %384 = vmatpush1.bf16.msra.mxu0 0
      %385 = vmatprep.subr.bf16.mxu0 0
      %386 = vmatpush1.bf16.msra.mxu0 0
      %387 = vmatprep.subr.bf16.mxu0 0
      %388 = vmatpush1.bf16.msra.mxu0 0
      %389 = vmatprep.subr.bf16.mxu0 0
      %390 = vmatpush1.bf16.msra.mxu0 0
      %391 = vmatprep.subr.bf16.mxu0 0
      %392 = vmatpush1.bf16.msra.mxu0 0
      %393 = vmatprep.subr.bf16.mxu0 0
      %394 = vmatpush1.bf16.msra.mxu0 0
      %395 = vmatprep.subr.bf16.mxu0 0
      %396 = vmatpush1.bf16.msra.mxu0 0
      %397 = vmatprep.subr.bf16.mxu0 0
      %398 = vmatpush1.bf16.msra.mxu0 0
      %399 = vmatprep.subr.bf16.mxu0 0
      %400 = vmatpush1.bf16.msra.mxu0 0
      %401 = vmatprep.subr.bf16.mxu0 0
      %402 = vmatpush1.bf16.msra.mxu0 0
      %403 = vmatprep.subr.bf16.mxu0 0
      %404 = vmatpush1.bf16.msra.mxu0 0
      %405 = vmatprep.mubr.bf16.mxu0 0
      %406 = vmatmul.mubr.bf16.gmra.mrb[0].mxu0 %v371
      %v407 = vpop.f32.mrb[0].mxu0
      %v408 = vadd.f32 %v322, %v407
      %v409 = vpop.f32.mrb[0].mxu0
      %v410 = vadd.f32 %v326, %v409
      %v411 = vpop.f32.mrb[0].mxu0
      %v412 = vpop.f32.mrb[0].mxu0
      %413 = vdwg.mxu0
      %v414 = vld [vmem:[%s5] sm:$0xf]
      %v415 = vld [vmem:[%s5 + $0x4] sm:$0xf]
      %v416 = vld [vmem:[%s5 + $0x8] sm:$0xf]
      %v417 = vld [vmem:[%s5 + $0xc] sm:$0xf]
      %v418 = vld [vmem:[%s5 + $0x10] sm:$0xf]
      %v419 = vld [vmem:[%s5 + $0x14] sm:$0xf]
      %v420 = vld [vmem:[%s5 + $0x18] sm:$0xf]
      %v421 = vld [vmem:[%s5 + $0x1c] sm:$0xf]
      %v422 = vpack.c.bf16 %v408, %v408
      %v423 = vpack.c.bf16 %v410, %v410
      %425 = vrot.lane.b32.xlu0 %v422, 64
      %v426 = vpop.permute.xlu0 %425
      %vm427 = vcmask 130048
      %v429 = vsel %vm427, %v422, 0
      %v432 = vsel %vm427, %v426, 0
      %434 = vmatprep.subr.bf16.mxu0 0
      %435 = vmatpush1.bf16.xpose.msra.mxu0 %v432
      %436 = vmatprep.subr.bf16.mxu0 0
      %437 = vmatpush1.bf16.xpose.msra.mxu0 0
      %438 = vmatprep.subr.bf16.mxu0 0
      %439 = vmatpush1.bf16.xpose.msra.mxu0 0
      %440 = vmatprep.subr.bf16.mxu0 0
      %441 = vmatpush1.bf16.xpose.msra.mxu0 0
      %442 = vmatprep.subr.bf16.mxu0 0
      %443 = vmatpush1.bf16.xpose.msra.mxu0 0
      %444 = vmatprep.subr.bf16.mxu0 0
      %445 = vmatpush1.bf16.xpose.msra.mxu0 0
      %446 = vmatprep.subr.bf16.mxu0 0
      %447 = vmatpush1.bf16.xpose.msra.mxu0 0
      %448 = vmatprep.subr.bf16.mxu0 0
      %449 = vmatpush1.bf16.xpose.msra.mxu0 0
      %450 = vmatprep.subr.bf16.mxu0 0
      %451 = vmatpush1.bf16.xpose.msra.mxu0 0
      %452 = vmatprep.subr.bf16.mxu0 0
      %453 = vmatpush1.bf16.xpose.msra.mxu0 0
      %454 = vmatprep.subr.bf16.mxu0 0
      %455 = vmatpush1.bf16.xpose.msra.mxu0 0
      %456 = vmatprep.subr.bf16.mxu0 0
      %457 = vmatpush1.bf16.xpose.msra.mxu0 0
      %458 = vmatprep.subr.bf16.mxu0 0
      %459 = vmatpush1.bf16.xpose.msra.mxu0 0
      %460 = vmatprep.subr.bf16.mxu0 0
      %461 = vmatpush1.bf16.xpose.msra.mxu0 0
      %462 = vmatprep.subr.bf16.mxu0 0
      %463 = vmatpush1.bf16.xpose.msra.mxu0 0
      %464 = vmatprep.subr.bf16.mxu0 0
      %465 = vmatpush1.bf16.xpose.msra.mxu0 0
      %466 = vmatprep.mubr.bf16.mxu0 0
      %467 = vmatmul.mubr.bf16.gmra.mrb[0].mxu0 %v429
      %v468 = vpop.f32.mrb[0].mxu0
      %v469 = vadd.f32 0.0, %v468
      %v470 = vpop.f32.mrb[0].mxu0
      %v471 = vpop.f32.mrb[0].mxu0
      %v472 = vpop.f32.mrb[0].mxu0
      %473 = vdwg.mxu0
      %v474 = vmul.f32 %v469, 0.25
      %vm475 = vcmask 36864
      %v476 = vsel %vm475, %v474, -inf
      %477 = vmax.xlane.f32.xlu0 %v476
      %v478 = vpop.xlane.xlu0 %477
      %v479 = vsub.f32 %v474, %v478
      %v480 = vmul.f32 %v479, 1.442695
      %v481 = vpow.pop %v480
      %v482 = vsel %vm475, %v481, 0.0
      %483 = vadd.xlane.f32.xlu0 %v482
      %v484 = vpop.xlane.xlu0 %483
      %v485 = vrcp.pop %v484
      %v486 = vmul.f32 %v481, %v485
      %v487 = vpack.c.bf16 %v486, %v486
      %vm488 = vcmask 39936
      %v490 = vsel %vm488, %v487, 0
      %vm492 = vcmask 1041408
      %vm493 = vcmask 1042432
      %v494 = vsel %vm492, 4294967295, 65535
      %v495 = vsel %vm493, %v494, 0
      %v497 = vand.u32 %v423, %v495
      %499 = vmatprep.subr.bf16.mxu0 0
      %500 = vmatpush1.bf16.msra.mxu0 %v497
      %501 = vmatprep.subr.bf16.mxu0 0
      %502 = vmatpush1.bf16.msra.mxu0 0
      %503 = vmatprep.subr.bf16.mxu0 0
      %504 = vmatpush1.bf16.msra.mxu0 0
      %505 = vmatprep.subr.bf16.mxu0 0
      %506 = vmatpush1.bf16.msra.mxu0 0
      %507 = vmatprep.subr.bf16.mxu0 0
      %508 = vmatpush1.bf16.msra.mxu0 0
      %509 = vmatprep.subr.bf16.mxu0 0
      %510 = vmatpush1.bf16.msra.mxu0 0
      %511 = vmatprep.subr.bf16.mxu0 0
      %512 = vmatpush1.bf16.msra.mxu0 0
      %513 = vmatprep.subr.bf16.mxu0 0
      %514 = vmatpush1.bf16.msra.mxu0 0
      %515 = vmatprep.subr.bf16.mxu0 0
      %516 = vmatpush1.bf16.msra.mxu0 0
      %517 = vmatprep.subr.bf16.mxu0 0
      %518 = vmatpush1.bf16.msra.mxu0 0
      %519 = vmatprep.subr.bf16.mxu0 0
      %520 = vmatpush1.bf16.msra.mxu0 0
      %521 = vmatprep.subr.bf16.mxu0 0
      %522 = vmatpush1.bf16.msra.mxu0 0
      %523 = vmatprep.subr.bf16.mxu0 0
      %524 = vmatpush1.bf16.msra.mxu0 0
      %525 = vmatprep.subr.bf16.mxu0 0
      %526 = vmatpush1.bf16.msra.mxu0 0
      %527 = vmatprep.subr.bf16.mxu0 0
      %528 = vmatpush1.bf16.msra.mxu0 0
      %529 = vmatprep.subr.bf16.mxu0 0
      %530 = vmatpush1.bf16.msra.mxu0 0
      %531 = vmatprep.mubr.bf16.mxu0 0
      %532 = vmatmul.mubr.bf16.gmra.mrb[0].mxu0 %v490
      %v533 = vpop.f32.mrb[0].mxu0
      %v534 = vadd.f32 0.0, %v533
      %v535 = vpop.f32.mrb[0].mxu0
      %v536 = vpop.f32.mrb[0].mxu0
      %v537 = vpop.f32.mrb[0].mxu0
      %538 = vdwg.mxu0
      %v539 = vpack.c.bf16 %v534, %v534
      %540 = vrot.lane.b32.xlu0 %v422, 112
      %v541 = vpop.permute.xlu0 %540
      %542 = vrot.lane.b32.xlu0 %v422, 48
      %v543 = vpop.permute.xlu0 %542
      %v545 = vsel %vm427, %v541, 0
      %v548 = vsel %vm427, %v543, 0
      %550 = vmatprep.subr.bf16.mxu0 0
      %551 = vmatpush1.bf16.xpose.msra.mxu0 %v548
      %552 = vmatprep.subr.bf16.mxu0 0
      %553 = vmatpush1.bf16.xpose.msra.mxu0 0
      %554 = vmatprep.subr.bf16.mxu0 0
      %555 = vmatpush1.bf16.xpose.msra.mxu0 0
      %556 = vmatprep.subr.bf16.mxu0 0
      %557 = vmatpush1.bf16.xpose.msra.mxu0 0
      %558 = vmatprep.subr.bf16.mxu0 0
      %559 = vmatpush1.bf16.xpose.msra.mxu0 0
      %560 = vmatprep.subr.bf16.mxu0 0
      %561 = vmatpush1.bf16.xpose.msra.mxu0 0
      %562 = vmatprep.subr.bf16.mxu0 0
      %563 = vmatpush1.bf16.xpose.msra.mxu0 0
      %564 = vmatprep.subr.bf16.mxu0 0
      %565 = vmatpush1.bf16.xpose.msra.mxu0 0
      %566 = vmatprep.subr.bf16.mxu0 0
      %567 = vmatpush1.bf16.xpose.msra.mxu0 0
      %568 = vmatprep.subr.bf16.mxu0 0
      %569 = vmatpush1.bf16.xpose.msra.mxu0 0
      %570 = vmatprep.subr.bf16.mxu0 0
      %571 = vmatpush1.bf16.xpose.msra.mxu0 0
      %572 = vmatprep.subr.bf16.mxu0 0
      %573 = vmatpush1.bf16.xpose.msra.mxu0 0
      %574 = vmatprep.subr.bf16.mxu0 0
      %575 = vmatpush1.bf16.xpose.msra.mxu0 0
      %576 = vmatprep.subr.bf16.mxu0 0
      %577 = vmatpush1.bf16.xpose.msra.mxu0 0
      %578 = vmatprep.subr.bf16.mxu0 0
      %579 = vmatpush1.bf16.xpose.msra.mxu0 0
      %580 = vmatprep.subr.bf16.mxu0 0
      %581 = vmatpush1.bf16.xpose.msra.mxu0 0
      %582 = vmatprep.mubr.bf16.mxu0 0
      %583 = vmatmul.mubr.bf16.gmra.mrb[0].mxu0 %v545
      %v584 = vpop.f32.mrb[0].mxu0
      %v585 = vadd.f32 0.0, %v584
      %v586 = vpop.f32.mrb[0].mxu0
      %v587 = vpop.f32.mrb[0].mxu0
      %v588 = vpop.f32.mrb[0].mxu0
      %589 = vdwg.mxu0
      %v590 = vmul.f32 %v585, 0.25
      %v591 = vsel %vm475, %v590, -inf
      %592 = vmax.xlane.f32.xlu0 %v591
      %v593 = vpop.xlane.xlu0 %592
      %v594 = vsub.f32 %v590, %v593
      %v595 = vmul.f32 %v594, 1.442695
      %v596 = vpow.pop %v595
      %v597 = vsel %vm475, %v596, 0.0
      %598 = vadd.xlane.f32.xlu0 %v597
      %v599 = vpop.xlane.xlu0 %598
      %v600 = vrcp.pop %v599
      %v601 = vmul.f32 %v596, %v600
      %v602 = vpack.c.bf16 %v601, %v601
      %604 = vrot.lane.b32.xlu0 %v423, 112
      %v605 = vpop.permute.xlu0 %604
      %v607 = vsel %vm488, %v602, 0
      %v610 = vand.u32 %v605, %v495
      %612 = vmatprep.subr.bf16.mxu0 0
      %613 = vmatpush1.bf16.msra.mxu0 %v610
      %614 = vmatprep.subr.bf16.mxu0 0
      %615 = vmatpush1.bf16.msra.mxu0 0
      %616 = vmatprep.subr.bf16.mxu0 0
      %617 = vmatpush1.bf16.msra.mxu0 0
      %618 = vmatprep.subr.bf16.mxu0 0
      %619 = vmatpush1.bf16.msra.mxu0 0
      %620 = vmatprep.subr.bf16.mxu0 0
      %621 = vmatpush1.bf16.msra.mxu0 0
      %622 = vmatprep.subr.bf16.mxu0 0
      %623 = vmatpush1.bf16.msra.mxu0 0
      %624 = vmatprep.subr.bf16.mxu0 0
      %625 = vmatpush1.bf16.msra.mxu0 0
      %626 = vmatprep.subr.bf16.mxu0 0
      %627 = vmatpush1.bf16.msra.mxu0 0
      %628 = vmatprep.subr.bf16.mxu0 0
      %629 = vmatpush1.bf16.msra.mxu0 0
      %630 = vmatprep.subr.bf16.mxu0 0
      %631 = vmatpush1.bf16.msra.mxu0 0
      %632 = vmatprep.subr.bf16.mxu0 0
      %633 = vmatpush1.bf16.msra.mxu0 0
      %634 = vmatprep.subr.bf16.mxu0 0
      %635 = vmatpush1.bf16.msra.mxu0 0
      %636 = vmatprep.subr.bf16.mxu0 0
      %637 = vmatpush1.bf16.msra.mxu0 0
      %638 = vmatprep.subr.bf16.mxu0 0
      %639 = vmatpush1.bf16.msra.mxu0 0
      %640 = vmatprep.subr.bf16.mxu0 0
      %641 = vmatpush1.bf16.msra.mxu0 0
      %642 = vmatprep.subr.bf16.mxu0 0
      %643 = vmatpush1.bf16.msra.mxu0 0
      %644 = vmatprep.mubr.bf16.mxu0 0
      %645 = vmatmul.mubr.bf16.gmra.mrb[0].mxu0 %v607
      %v646 = vpop.f32.mrb[0].mxu0
      %v647 = vadd.f32 0.0, %v646
      %v648 = vpop.f32.mrb[0].mxu0
      %v649 = vpop.f32.mrb[0].mxu0
      %v650 = vpop.f32.mrb[0].mxu0
      %651 = vdwg.mxu0
      %v652 = vpack.c.bf16 %v647, %v647
      %v655 = vunpack.c.l.b16 %v416
      %v656 = vunpack.c.l.b16 %v417
      %v657 = vpack.c.b16 %v656, %v655
      %v660 = vsel %vm427, %v652, 0
      %662 = vmatprep.subr.bf16.mxu0 0
      %663 = vmatpush1.bf16.msra.mxu0 %v657
      %664 = vmatprep.subr.bf16.mxu0 0
      %665 = vmatpush1.bf16.msra.mxu0 0
      %666 = vmatprep.subr.bf16.mxu0 0
      %667 = vmatpush1.bf16.msra.mxu0 0
      %668 = vmatprep.subr.bf16.mxu0 0
      %669 = vmatpush1.bf16.msra.mxu0 0
      %670 = vmatprep.subr.bf16.mxu0 0
      %671 = vmatpush1.bf16.msra.mxu0 0
      %672 = vmatprep.subr.bf16.mxu0 0
      %673 = vmatpush1.bf16.msra.mxu0 0
      %674 = vmatprep.subr.bf16.mxu0 0
      %675 = vmatpush1.bf16.msra.mxu0 0
      %676 = vmatprep.subr.bf16.mxu0 0
      %677 = vmatpush1.bf16.msra.mxu0 0
      %678 = vmatprep.subr.bf16.mxu0 0
      %679 = vmatpush1.bf16.msra.mxu0 0
      %680 = vmatprep.subr.bf16.mxu0 0
      %681 = vmatpush1.bf16.msra.mxu0 0
      %682 = vmatprep.subr.bf16.mxu0 0
      %683 = vmatpush1.bf16.msra.mxu0 0
      %684 = vmatprep.subr.bf16.mxu0 0
      %685 = vmatpush1.bf16.msra.mxu0 0
      %686 = vmatprep.subr.bf16.mxu0 0
      %687 = vmatpush1.bf16.msra.mxu0 0
      %688 = vmatprep.subr.bf16.mxu0 0
      %689 = vmatpush1.bf16.msra.mxu0 0
      %690 = vmatprep.subr.bf16.mxu0 0
      %691 = vmatpush1.bf16.msra.mxu0 0
      %692 = vmatprep.subr.bf16.mxu0 0
      %693 = vmatpush1.bf16.msra.mxu0 0
      %694 = vmatprep.mubr.bf16.mxu0 0
      %695 = vmatmul.mubr.bf16.gmra.mrb[0].mxu0 %v660
      %v696 = vpop.f32.mrb[0].mxu0
      %v697 = vadd.f32 0.0, %v696
      %v698 = vpop.f32.mrb[0].mxu0
      %v699 = vpop.f32.mrb[0].mxu0
      %v700 = vpop.f32.mrb[0].mxu0
      %701 = vdwg.mxu0
      %v704 = vunpack.c.l.b16 %v414
      %v705 = vunpack.c.l.b16 %v415
      %v706 = vpack.c.b16 %v705, %v704
      %v709 = vsel %vm427, %v539, 0
      %711 = vmatprep.subr.bf16.mxu0 0
      %712 = vmatpush1.bf16.msra.mxu0 %v706
      %713 = vmatprep.subr.bf16.mxu0 0
      %714 = vmatpush1.bf16.msra.mxu0 0
      %715 = vmatprep.subr.bf16.mxu0 0
      %716 = vmatpush1.bf16.msra.mxu0 0
      %717 = vmatprep.subr.bf16.mxu0 0
      %718 = vmatpush1.bf16.msra.mxu0 0
      %719 = vmatprep.subr.bf16.mxu0 0
      %720 = vmatpush1.bf16.msra.mxu0 0
      %721 = vmatprep.subr.bf16.mxu0 0
      %722 = vmatpush1.bf16.msra.mxu0 0
      %723 = vmatprep.subr.bf16.mxu0 0
      %724 = vmatpush1.bf16.msra.mxu0 0
      %725 = vmatprep.subr.bf16.mxu0 0
      %726 = vmatpush1.bf16.msra.mxu0 0
      %727 = vmatprep.subr.bf16.mxu0 0
      %728 = vmatpush1.bf16.msra.mxu0 0
      %729 = vmatprep.subr.bf16.mxu0 0
      %730 = vmatpush1.bf16.msra.mxu0 0
      %731 = vmatprep.subr.bf16.mxu0 0
      %732 = vmatpush1.bf16.msra.mxu0 0
      %733 = vmatprep.subr.bf16.mxu0 0
      %734 = vmatpush1.bf16.msra.mxu0 0
      %735 = vmatprep.subr.bf16.mxu0 0
      %736 = vmatpush1.bf16.msra.mxu0 0
      %737 = vmatprep.subr.bf16.mxu0 0
      %738 = vmatpush1.bf16.msra.mxu0 0
      %739 = vmatprep.subr.bf16.mxu0 0
      %740 = vmatpush1.bf16.msra.mxu0 0
      %741 = vmatprep.subr.bf16.mxu0 0
      %742 = vmatpush1.bf16.msra.mxu0 0
      %743 = vmatprep.mubr.bf16.mxu0 0
      %744 = vmatmul.mubr.bf16.gmra.mrb[0].mxu0 %v709
      %v745 = vpop.f32.mrb[0].mxu0
      %v746 = vadd.f32 %v697, %v745
      %v747 = vpop.f32.mrb[0].mxu0
      %v748 = vpop.f32.mrb[0].mxu0
      %v749 = vpop.f32.mrb[0].mxu0
      %750 = vdwg.mxu0
      %751 = vrot.lane.b32.xlu0 %v422, 96
      %v752 = vpop.permute.xlu0 %751
      %753 = vrot.lane.b32.xlu0 %v422, 32
      %v754 = vpop.permute.xlu0 %753
      %v756 = vsel %vm427, %v752, 0
      %v759 = vsel %vm427, %v754, 0
      %761 = vmatprep.subr.bf16.mxu0 0
      %762 = vmatpush1.bf16.xpose.msra.mxu0 %v759
      %763 = vmatprep.subr.bf16.mxu0 0
      %764 = vmatpush1.bf16.xpose.msra.mxu0 0
      %765 = vmatprep.subr.bf16.mxu0 0
      %766 = vmatpush1.bf16.xpose.msra.mxu0 0
      %767 = vmatprep.subr.bf16.mxu0 0
      %768 = vmatpush1.bf16.xpose.msra.mxu0 0
      %769 = vmatprep.subr.bf16.mxu0 0
      %770 = vmatpush1.bf16.xpose.msra.mxu0 0
      %771 = vmatprep.subr.bf16.mxu0 0
      %772 = vmatpush1.bf16.xpose.msra.mxu0 0
      %773 = vmatprep.subr.bf16.mxu0 0
      %774 = vmatpush1.bf16.xpose.msra.mxu0 0
      %775 = vmatprep.subr.bf16.mxu0 0
      %776 = vmatpush1.bf16.xpose.msra.mxu0 0
      %777 = vmatprep.subr.bf16.mxu0 0
      %778 = vmatpush1.bf16.xpose.msra.mxu0 0
      %779 = vmatprep.subr.bf16.mxu0 0
      %780 = vmatpush1.bf16.xpose.msra.mxu0 0
      %781 = vmatprep.subr.bf16.mxu0 0
      %782 = vmatpush1.bf16.xpose.msra.mxu0 0
      %783 = vmatprep.subr.bf16.mxu0 0
      %784 = vmatpush1.bf16.xpose.msra.mxu0 0
      %785 = vmatprep.subr.bf16.mxu0 0
      %786 = vmatpush1.bf16.xpose.msra.mxu0 0
      %787 = vmatprep.subr.bf16.mxu0 0
      %788 = vmatpush1.bf16.xpose.msra.mxu0 0
      %789 = vmatprep.subr.bf16.mxu0 0
      %790 = vmatpush1.bf16.xpose.msra.mxu0 0
      %791 = vmatprep.subr.bf16.mxu0 0
      %792 = vmatpush1.bf16.xpose.msra.mxu0 0
      %793 = vmatprep.mubr.bf16.mxu0 0
      %794 = vmatmul.mubr.bf16.gmra.mrb[0].mxu0 %v756
      %v795 = vpop.f32.mrb[0].mxu0
      %v796 = vadd.f32 0.0, %v795
      %v797 = vpop.f32.mrb[0].mxu0
      %v798 = vpop.f32.mrb[0].mxu0
      %v799 = vpop.f32.mrb[0].mxu0
      %800 = vdwg.mxu0
      %v801 = vmul.f32 %v796, 0.25
      %v802 = vsel %vm475, %v801, -inf
      %803 = vmax.xlane.f32.xlu0 %v802
      %v804 = vpop.xlane.xlu0 %803
      %v805 = vsub.f32 %v801, %v804
      %v806 = vmul.f32 %v805, 1.442695
      %v807 = vpow.pop %v806
      %v808 = vsel %vm475, %v807, 0.0
      %809 = vadd.xlane.f32.xlu0 %v808
      %v810 = vpop.xlane.xlu0 %809
      %v811 = vrcp.pop %v810
      %v812 = vmul.f32 %v807, %v811
      %v813 = vpack.c.bf16 %v812, %v812
      %814 = vrot.lane.b32.xlu0 %v423, 96
      %v815 = vpop.permute.xlu0 %814
      %v817 = vsel %vm488, %v813, 0
      %v820 = vand.u32 %v815, %v495
      %822 = vmatprep.subr.bf16.mxu0 0
      %823 = vmatpush1.bf16.msra.mxu0 %v820
      %824 = vmatprep.subr.bf16.mxu0 0
      %825 = vmatpush1.bf16.msra.mxu0 0
      %826 = vmatprep.subr.bf16.mxu0 0
      %827 = vmatpush1.bf16.msra.mxu0 0
      %828 = vmatprep.subr.bf16.mxu0 0
      %829 = vmatpush1.bf16.msra.mxu0 0
      %830 = vmatprep.subr.bf16.mxu0 0
      %831 = vmatpush1.bf16.msra.mxu0 0
      %832 = vmatprep.subr.bf16.mxu0 0
      %833 = vmatpush1.bf16.msra.mxu0 0
      %834 = vmatprep.subr.bf16.mxu0 0
      %835 = vmatpush1.bf16.msra.mxu0 0
      %836 = vmatprep.subr.bf16.mxu0 0
      %837 = vmatpush1.bf16.msra.mxu0 0
      %838 = vmatprep.subr.bf16.mxu0 0
      %839 = vmatpush1.bf16.msra.mxu0 0
      %840 = vmatprep.subr.bf16.mxu0 0
      %841 = vmatpush1.bf16.msra.mxu0 0
      %842 = vmatprep.subr.bf16.mxu0 0
      %843 = vmatpush1.bf16.msra.mxu0 0
      %844 = vmatprep.subr.bf16.mxu0 0
      %845 = vmatpush1.bf16.msra.mxu0 0
      %846 = vmatprep.subr.bf16.mxu0 0
      %847 = vmatpush1.bf16.msra.mxu0 0
      %848 = vmatprep.subr.bf16.mxu0 0
      %849 = vmatpush1.bf16.msra.mxu0 0
      %850 = vmatprep.subr.bf16.mxu0 0
      %851 = vmatpush1.bf16.msra.mxu0 0
      %852 = vmatprep.subr.bf16.mxu0 0
      %853 = vmatpush1.bf16.msra.mxu0 0
      %854 = vmatprep.mubr.bf16.mxu0 0
      %855 = vmatmul.mubr.bf16.gmra.mrb[0].mxu0 %v817
      %v856 = vpop.f32.mrb[0].mxu0
      %v857 = vadd.f32 0.0, %v856
      %v858 = vpop.f32.mrb[0].mxu0
      %v859 = vpop.f32.mrb[0].mxu0
      %v860 = vpop.f32.mrb[0].mxu0
      %861 = vdwg.mxu0
      %v862 = vpack.c.bf16 %v857, %v857
      %v865 = vunpack.c.l.b16 %v418
      %v866 = vunpack.c.l.b16 %v419
      %v867 = vpack.c.b16 %v866, %v865
      %v870 = vsel %vm427, %v862, 0
      %872 = vmatprep.subr.bf16.mxu0 0
      %873 = vmatpush1.bf16.msra.mxu0 %v867
      %874 = vmatprep.subr.bf16.mxu0 0
      %875 = vmatpush1.bf16.msra.mxu0 0
      %876 = vmatprep.subr.bf16.mxu0 0
      %877 = vmatpush1.bf16.msra.mxu0 0
      %878 = vmatprep.subr.bf16.mxu0 0
      %879 = vmatpush1.bf16.msra.mxu0 0
      %880 = vmatprep.subr.bf16.mxu0 0
      %881 = vmatpush1.bf16.msra.mxu0 0
      %882 = vmatprep.subr.bf16.mxu0 0
      %883 = vmatpush1.bf16.msra.mxu0 0
      %884 = vmatprep.subr.bf16.mxu0 0
      %885 = vmatpush1.bf16.msra.mxu0 0
      %886 = vmatprep.subr.bf16.mxu0 0
      %887 = vmatpush1.bf16.msra.mxu0 0
      %888 = vmatprep.subr.bf16.mxu0 0
      %889 = vmatpush1.bf16.msra.mxu0 0
      %890 = vmatprep.subr.bf16.mxu0 0
      %891 = vmatpush1.bf16.msra.mxu0 0
      %892 = vmatprep.subr.bf16.mxu0 0
      %893 = vmatpush1.bf16.msra.mxu0 0
      %894 = vmatprep.subr.bf16.mxu0 0
      %895 = vmatpush1.bf16.msra.mxu0 0
      %896 = vmatprep.subr.bf16.mxu0 0
      %897 = vmatpush1.bf16.msra.mxu0 0
      %898 = vmatprep.subr.bf16.mxu0 0
      %899 = vmatpush1.bf16.msra.mxu0 0
      %900 = vmatprep.subr.bf16.mxu0 0
      %901 = vmatpush1.bf16.msra.mxu0 0
      %902 = vmatprep.subr.bf16.mxu0 0
      %903 = vmatpush1.bf16.msra.mxu0 0
      %904 = vmatprep.mubr.bf16.mxu0 0
      %905 = vmatmul.mubr.bf16.gmra.mrb[0].mxu0 %v870
      %v906 = vpop.f32.mrb[0].mxu0
      %v907 = vadd.f32 0.0, %v906
      %v908 = vpop.f32.mrb[0].mxu0
      %v909 = vpop.f32.mrb[0].mxu0
      %v910 = vpop.f32.mrb[0].mxu0
      %911 = vdwg.mxu0
      %v912 = vadd.f32 %v746, %v907
      %913 = vrot.lane.b32.xlu0 %v422, 80
      %v914 = vpop.permute.xlu0 %913
      %915 = vrot.lane.b32.xlu0 %v422, 16
      %v916 = vpop.permute.xlu0 %915
      %v918 = vsel %vm427, %v914, 0
      %v921 = vsel %vm427, %v916, 0
      %923 = vmatprep.subr.bf16.mxu0 0
      %924 = vmatpush1.bf16.xpose.msra.mxu0 %v921
      %925 = vmatprep.subr.bf16.mxu0 0
      %926 = vmatpush1.bf16.xpose.msra.mxu0 0
      %927 = vmatprep.subr.bf16.mxu0 0
      %928 = vmatpush1.bf16.xpose.msra.mxu0 0
      %929 = vmatprep.subr.bf16.mxu0 0
      %930 = vmatpush1.bf16.xpose.msra.mxu0 0
      %931 = vmatprep.subr.bf16.mxu0 0
      %932 = vmatpush1.bf16.xpose.msra.mxu0 0
      %933 = vmatprep.subr.bf16.mxu0 0
      %934 = vmatpush1.bf16.xpose.msra.mxu0 0
      %935 = vmatprep.subr.bf16.mxu0 0
      %936 = vmatpush1.bf16.xpose.msra.mxu0 0
      %937 = vmatprep.subr.bf16.mxu0 0
      %938 = vmatpush1.bf16.xpose.msra.mxu0 0
      %939 = vmatprep.subr.bf16.mxu0 0
      %940 = vmatpush1.bf16.xpose.msra.mxu0 0
      %941 = vmatprep.subr.bf16.mxu0 0
      %942 = vmatpush1.bf16.xpose.msra.mxu0 0
      %943 = vmatprep.subr.bf16.mxu0 0
      %944 = vmatpush1.bf16.xpose.msra.mxu0 0
      %945 = vmatprep.subr.bf16.mxu0 0
      %946 = vmatpush1.bf16.xpose.msra.mxu0 0
      %947 = vmatprep.subr.bf16.mxu0 0
      %948 = vmatpush1.bf16.xpose.msra.mxu0 0
      %949 = vmatprep.subr.bf16.mxu0 0
      %950 = vmatpush1.bf16.xpose.msra.mxu0 0
      %951 = vmatprep.subr.bf16.mxu0 0
      %952 = vmatpush1.bf16.xpose.msra.mxu0 0
      %953 = vmatprep.subr.bf16.mxu0 0
      %954 = vmatpush1.bf16.xpose.msra.mxu0 0
      %955 = vmatprep.mubr.bf16.mxu0 0
      %956 = vmatmul.mubr.bf16.gmra.mrb[0].mxu0 %v918
      %v957 = vpop.f32.mrb[0].mxu0
      %v958 = vadd.f32 0.0, %v957
      %v959 = vpop.f32.mrb[0].mxu0
      %v960 = vpop.f32.mrb[0].mxu0
      %v961 = vpop.f32.mrb[0].mxu0
      %962 = vdwg.mxu0
      %v963 = vmul.f32 %v958, 0.25
      %v964 = vsel %vm475, %v963, -inf
      %965 = vmax.xlane.f32.xlu0 %v964
      %v966 = vpop.xlane.xlu0 %965
      %v967 = vsub.f32 %v963, %v966
      %v968 = vmul.f32 %v967, 1.442695
      %v969 = vpow.pop %v968
      %v970 = vsel %vm475, %v969, 0.0
      %971 = vadd.xlane.f32.xlu0 %v970
      %v972 = vpop.xlane.xlu0 %971
      %v973 = vrcp.pop %v972
      %v974 = vmul.f32 %v969, %v973
      %v975 = vpack.c.bf16 %v974, %v974
      %976 = vrot.lane.b32.xlu0 %v423, 80
      %v977 = vpop.permute.xlu0 %976
      %v979 = vsel %vm488, %v975, 0
      %v982 = vand.u32 %v977, %v495
      %984 = vmatprep.subr.bf16.mxu0 0
      %985 = vmatpush1.bf16.msra.mxu0 %v982
      %986 = vmatprep.subr.bf16.mxu0 0
      %987 = vmatpush1.bf16.msra.mxu0 0
      %988 = vmatprep.subr.bf16.mxu0 0
      %989 = vmatpush1.bf16.msra.mxu0 0
      %990 = vmatprep.subr.bf16.mxu0 0
      %991 = vmatpush1.bf16.msra.mxu0 0
      %992 = vmatprep.subr.bf16.mxu0 0
      %993 = vmatpush1.bf16.msra.mxu0 0
      %994 = vmatprep.subr.bf16.mxu0 0
      %995 = vmatpush1.bf16.msra.mxu0 0
      %996 = vmatprep.subr.bf16.mxu0 0
      %997 = vmatpush1.bf16.msra.mxu0 0
      %998 = vmatprep.subr.bf16.mxu0 0
      %999 = vmatpush1.bf16.msra.mxu0 0
      %1000 = vmatprep.subr.bf16.mxu0 0
      %1001 = vmatpush1.bf16.msra.mxu0 0
      %1002 = vmatprep.subr.bf16.mxu0 0
      %1003 = vmatpush1.bf16.msra.mxu0 0
      %1004 = vmatprep.subr.bf16.mxu0 0
      %1005 = vmatpush1.bf16.msra.mxu0 0
      %1006 = vmatprep.subr.bf16.mxu0 0
      %1007 = vmatpush1.bf16.msra.mxu0 0
      %1008 = vmatprep.subr.bf16.mxu0 0
      %1009 = vmatpush1.bf16.msra.mxu0 0
      %1010 = vmatprep.subr.bf16.mxu0 0
      %1011 = vmatpush1.bf16.msra.mxu0 0
      %1012 = vmatprep.subr.bf16.mxu0 0
      %1013 = vmatpush1.bf16.msra.mxu0 0
      %1014 = vmatprep.subr.bf16.mxu0 0
      %1015 = vmatpush1.bf16.msra.mxu0 0
      %1016 = vmatprep.mubr.bf16.mxu0 0
      %1017 = vmatmul.mubr.bf16.gmra.mrb[0].mxu0 %v979
      %v1018 = vpop.f32.mrb[0].mxu0
      %v1019 = vadd.f32 0.0, %v1018
      %v1020 = vpop.f32.mrb[0].mxu0
      %v1021 = vpop.f32.mrb[0].mxu0
      %v1022 = vpop.f32.mrb[0].mxu0
      %1023 = vdwg.mxu0
      %v1024 = vpack.c.bf16 %v1019, %v1019
      %v1027 = vunpack.c.l.b16 %v420
      %v1028 = vunpack.c.l.b16 %v421
      %v1029 = vpack.c.b16 %v1028, %v1027
      %v1032 = vsel %vm427, %v1024, 0
      %1034 = vmatprep.subr.bf16.mxu0 0
      %1035 = vmatpush1.bf16.msra.mxu0 %v1029
      %1036 = vmatprep.subr.bf16.mxu0 0
      %1037 = vmatpush1.bf16.msra.mxu0 0
      %1038 = vmatprep.subr.bf16.mxu0 0
      %1039 = vmatpush1.bf16.msra.mxu0 0
      %1040 = vmatprep.subr.bf16.mxu0 0
      %1041 = vmatpush1.bf16.msra.mxu0 0
      %1042 = vmatprep.subr.bf16.mxu0 0
      %1043 = vmatpush1.bf16.msra.mxu0 0
      %1044 = vmatprep.subr.bf16.mxu0 0
      %1045 = vmatpush1.bf16.msra.mxu0 0
      %1046 = vmatprep.subr.bf16.mxu0 0
      %1047 = vmatpush1.bf16.msra.mxu0 0
      %1048 = vmatprep.subr.bf16.mxu0 0
      %1049 = vmatpush1.bf16.msra.mxu0 0
      %1050 = vmatprep.subr.bf16.mxu0 0
      %1051 = vmatpush1.bf16.msra.mxu0 0
      %1052 = vmatprep.subr.bf16.mxu0 0
      %1053 = vmatpush1.bf16.msra.mxu0 0
      %1054 = vmatprep.subr.bf16.mxu0 0
      %1055 = vmatpush1.bf16.msra.mxu0 0
      %1056 = vmatprep.subr.bf16.mxu0 0
      %1057 = vmatpush1.bf16.msra.mxu0 0
      %1058 = vmatprep.subr.bf16.mxu0 0
      %1059 = vmatpush1.bf16.msra.mxu0 0
      %1060 = vmatprep.subr.bf16.mxu0 0
      %1061 = vmatpush1.bf16.msra.mxu0 0
      %1062 = vmatprep.subr.bf16.mxu0 0
      %1063 = vmatpush1.bf16.msra.mxu0 0
      %1064 = vmatprep.subr.bf16.mxu0 0
      %1065 = vmatpush1.bf16.msra.mxu0 0
      %1066 = vmatprep.mubr.bf16.mxu0 0
      %1067 = vmatmul.mubr.bf16.gmra.mrb[0].mxu0 %v1032
      %v1068 = vpop.f32.mrb[0].mxu0
      %v1069 = vadd.f32 0.0, %v1068
      %v1070 = vpop.f32.mrb[0].mxu0
      %v1071 = vpop.f32.mrb[0].mxu0
      %v1072 = vpop.f32.mrb[0].mxu0
      %1073 = vdwg.mxu0
      %v1074 = vadd.f32 %v912, %v1069
      %v1075 = vadd.f32 %v276, %v1074
      %v1076 = vld [vmem:[%s6] sm:$0x1]
      %v1078 = vlaneseq
      %v1079 = vshrl.u32 %v1078, 7
      %v1080 = vsub.s32 0, %v1079
      %v1081 = vrot.slane %v1076, %v1080
      %v1083 = vadd.f32 %v1075, %v1081
      %v1084 = vpack.c.bf16 %v1083, %v1083
      %vm1085 = vcmask 518144
      %vm1086 = vsmask.f32 2304
      %vm1087 = vmand %vm1085, %vm1086
      %v1088 = vld [vmem:[%s273] sm:$0x7]
      %v1089 = vsel %vm1087, %v1084, %v1088
      %1090 = vst [vmem:[%s273] sm:$0x7] %v1089
      %p1091 = scmp.lt.s32.totalorder %s18, 1
      %s1092 = scalar_select %p1091, %s18, 1
      %s1093 = smul.addr %s1092, 4
      %s1094 = scalar_lea.vmem %s7, %s1093
      // Predicated region
      $region49: #{_lambda_.13} parent=47 // pred_check
        %p1095 = pneg %p188
      $region50: #{_lambda_.13} parent=47 // pred_check_branch
        %1097 = sbr.rel (%p1095) target = $region52
      $region51: #{_lambda_.13} parent=47 // pred_region
        _
      $region52: #{_lambda_.13} parent=47 // pred_fallthru
        _
    $region48: #{_lambda_.13} parent=5 // pred_fallthru
      _
    %p1098 = scmp.le.s32.totalorder 2, %s13
    // Predicated region
    $region53: #{_lambda_.13} parent=5 // pred_check
      %p1099 = pneg %p1098
    $region54: #{_lambda_.13} parent=5 // pred_check_branch
      %1101 = sbr.rel (%p1099) target = $region56
    $region55: #{_lambda_.13} parent=5 // pred_region
      %s1102 = ssub.s32 %s13, 2
      // Predicated region
      $region57: #{_lambda_.13} parent=55 // pred_check
        %p1103 = pneg %p194
      $region58: #{_lambda_.13} parent=55 // pred_check_branch
        %1105 = sbr.rel (%p1103) target = $region60
      $region59: #{_lambda_.13} parent=55 // pred_region
        %p1106 = scmp.lt.s32.totalorder %s19, 1
        %s1107 = scalar_select %p1106, %s19, 1
        %s1108 = smul.addr %s1107, 4
        %s1109 = scalar_lea.vmem %s7, %s1108
      $region60: #{_lambda_.13} parent=55 // pred_fallthru
        _
    $region56: #{_lambda_.13} parent=5 // pred_fallthru
      _
  $region6: #{_lambda_.13} parent=0 // loop_footer
    %s17 = sadd.s32 1, %s13
  $region7: #{_lambda_.13} parent=0 // loop_footer_branch
    %12 = sbr.rel target = $region3
  $region8: #{_lambda_.13} parent=0 // loop_exit
    _

// kernel: _lambda_.16
$region0: #{_lambda_.16}
  #allocation0 [shape = 'u32[]', space=smem, size = 0x4, offset = 0x4, fixed_abs, tag = 'smem constant byte address 0x4 - core index']
  #allocation1 [shape = 'u32[144,128]{1,0:T(1,128)}', space=vmem, size = 0x12000, scoped, tag = 'internal scratch']
  %s0 = inlined_call_operand.vmem [shape: bf16[16,64], index: 0, kind: input, shape index: {}]
  %s1 = inlined_call_operand.vmem [shape: f32[1,64], index: 1, kind: input, shape index: {}]
  %s2 = inlined_call_operand.vmem [shape: f32[1,64], index: 2, kind: input, shape index: {}]
  %s3 = inlined_call_operand.vmem [shape: bf16[64,128], index: 3, kind: input, shape index: {}]
  %s4 = inlined_call_operand.vmem [shape: f32[1,128], index: 4, kind: input, shape index: {}]
  %s5 = inlined_call_operand.vmem [shape: bf16[128,64], index: 5, kind: input, shape index: {}]
  %s6 = inlined_call_operand.vmem [shape: f32[1,64], index: 6, kind: input, shape index: {}]
  %s7 = inlined_call_operand.vmem [shape: f32[1,64], index: 7, kind: input, shape index: {}]
  %s8 = inlined_call_operand.vmem [shape: f32[1,64], index: 8, kind: input, shape index: {}]
  %s9 = inlined_call_operand.vmem [shape: bf16[16,64], index: 9, kind: output, shape index: {}]
  %s10 = sld [smem:[#allocation0]]
  $region46: #{_lambda_.16} parent=0
    _
  %s12 = ssub.s32 1, %s10
  %s13 = scalar_select 0, %s12, %s10
  // Predicated region
  $region2: #{_lambda_.16} parent=0 // pred_check
    _
  $region3: #{_lambda_.16} parent=0 // pred_check_branch
    %15 = sbr.rel (0) target = $region5
  $region4: #{_lambda_.16} parent=0 // pred_region
    _
  $region5: #{_lambda_.16} parent=0 // pred_fallthru
    _
  // Predicated region
  $region6: #{_lambda_.16} parent=0 // pred_check
    _
  $region7: #{_lambda_.16} parent=0 // pred_check_branch
    %17 = sbr.rel (0) target = $region9
  $region8: #{_lambda_.16} parent=0 // pred_region
    _
  $region9: #{_lambda_.16} parent=0 // pred_fallthru
    _
  // Predicated region
  $region10: #{_lambda_.16} parent=0 // pred_check
    _
  $region11: #{_lambda_.16} parent=0 // pred_check_branch
    %19 = sbr.rel (0) target = $region13
  $region12: #{_lambda_.16} parent=0 // pred_region
    _
  $region13: #{_lambda_.16} parent=0 // pred_fallthru
    _
  // Predicated region
  $region14: #{_lambda_.16} parent=0 // pred_check
    _
  $region15: #{_lambda_.16} parent=0 // pred_check_branch
    %21 = sbr.rel (0) target = $region17
  $region16: #{_lambda_.16} parent=0 // pred_region
    _
  $region17: #{_lambda_.16} parent=0 // pred_fallthru
    _
  // Predicated region
  $region18: #{_lambda_.16} parent=0 // pred_check
    _
  $region19: #{_lambda_.16} parent=0 // pred_check_branch
    %23 = sbr.rel (0) target = $region21
  $region20: #{_lambda_.16} parent=0 // pred_region
    _
  $region21: #{_lambda_.16} parent=0 // pred_fallthru
    _
  // Predicated region
  $region22: #{_lambda_.16} parent=0 // pred_check
    _
  $region23: #{_lambda_.16} parent=0 // pred_check_branch
    %25 = sbr.rel (0) target = $region25
  $region24: #{_lambda_.16} parent=0 // pred_region
    _
  $region25: #{_lambda_.16} parent=0 // pred_fallthru
    _
  // Predicated region
  $region26: #{_lambda_.16} parent=0 // pred_check
    _
  $region27: #{_lambda_.16} parent=0 // pred_check_branch
    %27 = sbr.rel (0) target = $region29
  $region28: #{_lambda_.16} parent=0 // pred_region
    _
  $region29: #{_lambda_.16} parent=0 // pred_fallthru
    _
  // Predicated region
  $region30: #{_lambda_.16} parent=0 // pred_check
    _
  $region31: #{_lambda_.16} parent=0 // pred_check_branch
    %29 = sbr.rel (0) target = $region33
  $region32: #{_lambda_.16} parent=0 // pred_region
    _
  $region33: #{_lambda_.16} parent=0 // pred_fallthru
    _
  // Predicated region
  $region34: #{_lambda_.16} parent=0 // pred_check
    _
  $region35: #{_lambda_.16} parent=0 // pred_check_branch
    %31 = sbr.rel (0) target = $region37
  $region36: #{_lambda_.16} parent=0 // pred_region
    _
  $region37: #{_lambda_.16} parent=0 // pred_fallthru
    _
  %v33 = vld [vmem:[%s0] sm:$0xf]
  %v34 = vld [vmem:[%s0 + $0x4] sm:$0xf]
  %v35 = vunpack.c.l.bf16 %v33
  %v36 = vunpack.c.l.bf16 %v34
  %v37 = vld [vmem:[%s1] sm:$0x1]
  %v38 = vld [vmem:[%s2] sm:$0x1]
  %vm39 = vcmask 523264
  %v40 = vsel %vm39, %v35, 0.0
  %41 = vadd.xlane.f32.xlu0 %v40
  %v42 = vpop.xlane.xlu0 %41
  %v43 = vsel %vm39, %v36, 0.0
  %44 = vadd.xlane.f32.xlu0 %v43
  %v45 = vpop.xlane.xlu0 %44
  %v46 = vrcp.pop 64.0
  %v47 = vmul.f32 %v42, %v46
  %v48 = vmul.f32 %v45, %v46
  %v49 = vsub.f32 %v35, %v47
  %v50 = vsub.f32 %v36, %v48
  %v51 = vmul.f32 %v49, %v49
  %v52 = vmul.f32 %v50, %v50
  %v53 = vsel %vm39, %v51, 0.0
  %54 = vadd.xlane.f32.xlu0 %v53
  %v55 = vpop.xlane.xlu0 %54
  %v56 = vsel %vm39, %v52, 0.0
  %57 = vadd.xlane.f32.xlu0 %v56
  %v58 = vpop.xlane.xlu0 %57
  %v59 = vmul.f32 %v55, %v46
  %v60 = vmul.f32 %v58, %v46
  %v61 = vadd.f32 %v59, 1e-12
  %v62 = vadd.f32 %v60, 1e-12
  %v63 = vrsqrt.pop %v61
  %v64 = vrsqrt.pop %v62
  %v65 = vmul.f32 %v49, %v63
  %v66 = vmul.f32 %v50, %v64
  %v68 = vlaneseq
  %v69 = vshrl.u32 %v68, 7
  %v70 = vsub.s32 0, %v69
  %v71 = vrot.slane %v37, %v70
  %v73 = vmul.f32 %v65, %v71
  %v74 = vmul.f32 %v66, %v71
  %v76 = vlaneseq
  %v77 = vshrl.u32 %v76, 7
  %v78 = vsub.s32 0, %v77
  %v79 = vrot.slane %v38, %v78
  %v81 = vadd.f32 %v73, %v79
  %v82 = vadd.f32 %v74, %v79
  %v83 = vpack.c.bf16 %v82, %v81
  %v84 = vld [vmem:[%s3] sm:$0xf]
  %v85 = vld [vmem:[%s3 + $0x4] sm:$0xf]
  %v86 = vld [vmem:[%s3 + $0x8] sm:$0xf]
  %v87 = vld [vmem:[%s3 + $0xc] sm:$0xf]
  %v88 = vld [vmem:[%s3 + $0x10] sm:$0xf]
  %v89 = vld [vmem:[%s3 + $0x14] sm:$0xf]
  %v90 = vld [vmem:[%s3 + $0x18] sm:$0xf]
  %v91 = vld [vmem:[%s3 + $0x1c] sm:$0xf]
  %v92 = vld [vmem:[%s4] sm:$0x1]
  %v94 = vlaneseq
  %v95 = vshrl.u32 %v94, 7
  %v96 = vsub.s32 0, %v95
  %v97 = vrot.slane %v92, %v96
  %v107 = vunpack.c.l.b16 %v84
  %v108 = vunpack.c.l.b16 %v85
  %v109 = vunpack.c.l.b16 %v86
  %v110 = vunpack.c.l.b16 %v87
  %v111 = vunpack.c.l.b16 %v88
  %v112 = vunpack.c.l.b16 %v89
  %v113 = vunpack.c.l.b16 %v90
  %v114 = vunpack.c.l.b16 %v91
  %v115 = vpack.c.b16 %v108, %v107
  %v116 = vpack.c.b16 %v110, %v109
  %v117 = vpack.c.b16 %v112, %v111
  %v118 = vpack.c.b16 %v114, %v113
  %v124 = vsel %vm39, %v83, 0
  %126 = vmatprep.subr.bf16.mxu0 0
  %127 = vmatpush1.bf16.msra.mxu0 %v115
  %128 = vmatprep.subr.bf16.mxu0 0
  %129 = vmatpush1.bf16.msra.mxu0 %v116
  %130 = vmatprep.subr.bf16.mxu0 0
  %131 = vmatpush1.bf16.msra.mxu0 %v117
  %132 = vmatprep.subr.bf16.mxu0 0
  %133 = vmatpush1.bf16.msra.mxu0 %v118
  %134 = vmatprep.subr.bf16.mxu0 0
  %135 = vmatpush1.bf16.msra.mxu0 0
  %136 = vmatprep.subr.bf16.mxu0 0
  %137 = vmatpush1.bf16.msra.mxu0 0
  %138 = vmatprep.subr.bf16.mxu0 0
  %139 = vmatpush1.bf16.msra.mxu0 0
  %140 = vmatprep.subr.bf16.mxu0 0
  %141 = vmatpush1.bf16.msra.mxu0 0
  %142 = vmatprep.subr.bf16.mxu0 0
  %143 = vmatpush1.bf16.msra.mxu0 0
  %144 = vmatprep.subr.bf16.mxu0 0
  %145 = vmatpush1.bf16.msra.mxu0 0
  %146 = vmatprep.subr.bf16.mxu0 0
  %147 = vmatpush1.bf16.msra.mxu0 0
  %148 = vmatprep.subr.bf16.mxu0 0
  %149 = vmatpush1.bf16.msra.mxu0 0
  %150 = vmatprep.subr.bf16.mxu0 0
  %151 = vmatpush1.bf16.msra.mxu0 0
  %152 = vmatprep.subr.bf16.mxu0 0
  %153 = vmatpush1.bf16.msra.mxu0 0
  %154 = vmatprep.subr.bf16.mxu0 0
  %155 = vmatpush1.bf16.msra.mxu0 0
  %156 = vmatprep.subr.bf16.mxu0 0
  %157 = vmatpush1.bf16.msra.mxu0 0
  %158 = vmatprep.mubr.bf16.mxu0 0
  %159 = vmatmul.mubr.bf16.gmra.mrb[0].mxu0 %v124
  %v160 = vpop.f32.mrb[0].mxu0
  %v161 = vadd.f32 %v97, %v160
  %v162 = vpop.f32.mrb[0].mxu0
  %v163 = vpop.f32.mrb[0].mxu0
  %v164 = vadd.f32 %v97, %v163
  %v165 = vpop.f32.mrb[0].mxu0
  %166 = vdwg.mxu0
  %v167 = vmul.f32 %v161, %v161
  %v168 = vmul.f32 %v164, %v164
  %v169 = vmul.f32 %v161, %v167
  %v170 = vmul.f32 %v164, %v168
  %v171 = vmul.f32 %v169, 0.044715
  %v172 = vmul.f32 %v170, 0.044715
  %v173 = vadd.f32 %v161, %v171
  %v174 = vadd.f32 %v164, %v172
  %v175 = vmul.f32 %v173, 0.7978846
  %v176 = vmul.f32 %v174, 0.7978846
  %v177 = vtanh.pop %v175
  %v178 = vtanh.pop %v176
  %v179 = vadd.f32 %v177, 1.0
  %v180 = vadd.f32 %v178, 1.0
  %v181 = vmul.f32 %v179, 0.5
  %v182 = vmul.f32 %v180, 0.5
  %v183 = vmul.f32 %v161, %v181
  %v184 = vmul.f32 %v164, %v182
  %v185 = vpack.c.bf16 %v184, %v183
  %v186 = vld [vmem:[%s5] sm:$0xf]
  %v187 = vld [vmem:[%s5 + $0x4] sm:$0xf]
  %v188 = vld [vmem:[%s5 + $0x8] sm:$0xf]
  %v189 = vld [vmem:[%s5 + $0xc] sm:$0xf]
  %v190 = vld [vmem:[%s5 + $0x10] sm:$0xf]
  %v191 = vld [vmem:[%s5 + $0x14] sm:$0xf]
  %v192 = vld [vmem:[%s5 + $0x18] sm:$0xf]
  %v193 = vld [vmem:[%s5 + $0x1c] sm:$0xf]
  %v194 = vld [vmem:[%s5 + $0x20] sm:$0xf]
  %v195 = vld [vmem:[%s5 + $0x24] sm:$0xf]
  %v196 = vld [vmem:[%s5 + $0x28] sm:$0xf]
  %v197 = vld [vmem:[%s5 + $0x2c] sm:$0xf]
  %v198 = vld [vmem:[%s5 + $0x30] sm:$0xf]
  %v199 = vld [vmem:[%s5 + $0x34] sm:$0xf]
  %v200 = vld [vmem:[%s5 + $0x38] sm:$0xf]
  %v201 = vld [vmem:[%s5 + $0x3c] sm:$0xf]
  %v202 = vld [vmem:[%s6] sm:$0x1]
  %v204 = vlaneseq
  %v205 = vshrl.u32 %v204, 7
  %v206 = vsub.s32 0, %v205
  %v207 = vrot.slane %v202, %v206
  %v225 = vunpack.c.l.b16 %v186
  %v226 = vunpack.c.l.b16 %v187
  %v227 = vunpack.c.l.b16 %v188
  %v228 = vunpack.c.l.b16 %v189
  %v229 = vunpack.c.l.b16 %v190
  %v230 = vunpack.c.l.b16 %v191
  %v231 = vunpack.c.l.b16 %v192
  %v232 = vunpack.c.l.b16 %v193
  %v233 = vunpack.c.l.b16 %v194
  %v234 = vunpack.c.l.b16 %v195
  %v235 = vunpack.c.l.b16 %v196
  %v236 = vunpack.c.l.b16 %v197
  %v237 = vunpack.c.l.b16 %v198
  %v238 = vunpack.c.l.b16 %v199
  %v239 = vunpack.c.l.b16 %v200
  %v240 = vunpack.c.l.b16 %v201
  %v241 = vpack.c.b16 %v226, %v225
  %v242 = vpack.c.b16 %v228, %v227
  %v243 = vpack.c.b16 %v230, %v229
  %v244 = vpack.c.b16 %v232, %v231
  %v245 = vpack.c.b16 %v234, %v233
  %v246 = vpack.c.b16 %v236, %v235
  %v247 = vpack.c.b16 %v238, %v237
  %v248 = vpack.c.b16 %v240, %v239
  %257 = vmatprep.subr.bf16.mxu0 0
  %258 = vmatpush1.bf16.msra.mxu0 %v241
  %259 = vmatprep.subr.bf16.mxu0 0
  %260 = vmatpush1.bf16.msra.mxu0 %v242
  %261 = vmatprep.subr.bf16.mxu0 0
  %262 = vmatpush1.bf16.msra.mxu0 %v243
  %263 = vmatprep.subr.bf16.mxu0 0
  %264 = vmatpush1.bf16.msra.mxu0 %v244
  %265 = vmatprep.subr.bf16.mxu0 0
  %266 = vmatpush1.bf16.msra.mxu0 %v245
  %267 = vmatprep.subr.bf16.mxu0 0
  %268 = vmatpush1.bf16.msra.mxu0 %v246
  %269 = vmatprep.subr.bf16.mxu0 0
  %270 = vmatpush1.bf16.msra.mxu0 %v247
  %271 = vmatprep.subr.bf16.mxu0 0
  %272 = vmatpush1.bf16.msra.mxu0 %v248
  %273 = vmatprep.subr.bf16.mxu0 0
  %274 = vmatpush1.bf16.msra.mxu0 0
  %275 = vmatprep.subr.bf16.mxu0 0
  %276 = vmatpush1.bf16.msra.mxu0 0
  %277 = vmatprep.subr.bf16.mxu0 0
  %278 = vmatpush1.bf16.msra.mxu0 0
  %279 = vmatprep.subr.bf16.mxu0 0
  %280 = vmatpush1.bf16.msra.mxu0 0
  %281 = vmatprep.subr.bf16.mxu0 0
  %282 = vmatpush1.bf16.msra.mxu0 0
  %283 = vmatprep.subr.bf16.mxu0 0
  %284 = vmatpush1.bf16.msra.mxu0 0
  %285 = vmatprep.subr.bf16.mxu0 0
  %286 = vmatpush1.bf16.msra.mxu0 0
  %287 = vmatprep.subr.bf16.mxu0 0
  %288 = vmatpush1.bf16.msra.mxu0 0
  %289 = vmatprep.mubr.bf16.mxu0 0
  %290 = vmatmul.mubr.bf16.gmra.mrb[0].mxu0 %v185
  %v291 = vpop.f32.mrb[0].mxu0
  %v292 = vadd.f32 %v207, %v291
  %v293 = vpop.f32.mrb[0].mxu0
  %v294 = vpop.f32.mrb[0].mxu0
  %v295 = vadd.f32 %v207, %v294
  %v296 = vpop.f32.mrb[0].mxu0
  %297 = vdwg.mxu0
  %v298 = vadd.f32 %v35, %v292
  %v299 = vadd.f32 %v36, %v295
  %v300 = vld [vmem:[%s7] sm:$0x1]
  %v301 = vld [vmem:[%s8] sm:$0x1]
  %v302 = vsel %vm39, %v298, 0.0
  %303 = vadd.xlane.f32.xlu0 %v302
  %v304 = vpop.xlane.xlu0 %303
  %v305 = vsel %vm39, %v299, 0.0
  %306 = vadd.xlane.f32.xlu0 %v305
  %v307 = vpop.xlane.xlu0 %306
  %v308 = vmul.f32 %v304, %v46
  %v309 = vmul.f32 %v307, %v46
  %v310 = vsub.f32 %v298, %v308
  %v311 = vsub.f32 %v299, %v309
  %v312 = vmul.f32 %v310, %v310
  %v313 = vmul.f32 %v311, %v311
  %v314 = vsel %vm39, %v312, 0.0
  %315 = vadd.xlane.f32.xlu0 %v314
  %v316 = vpop.xlane.xlu0 %315
  %v317 = vsel %vm39, %v313, 0.0
  %318 = vadd.xlane.f32.xlu0 %v317
  %v319 = vpop.xlane.xlu0 %318
  %v320 = vmul.f32 %v316, %v46
  %v321 = vmul.f32 %v319, %v46
  %v322 = vadd.f32 %v320, 1e-12
  %v323 = vadd.f32 %v321, 1e-12
  %v324 = vrsqrt.pop %v322
  %v325 = vrsqrt.pop %v323
  %v326 = vmul.f32 %v310, %v324
  %v327 = vmul.f32 %v311, %v325
  %v329 = vlaneseq
  %v330 = vshrl.u32 %v329, 7
  %v331 = vsub.s32 0, %v330
  %v332 = vrot.slane %v300, %v331
  %v334 = vmul.f32 %v326, %v332
  %v335 = vmul.f32 %v327, %v332
  %v337 = vlaneseq
  %v338 = vshrl.u32 %v337, 7
  %v339 = vsub.s32 0, %v338
  %v340 = vrot.slane %v301, %v339
  %v342 = vadd.f32 %v334, %v340
  %v343 = vadd.f32 %v335, %v340
  %v344 = vpack.c.bf16 %v343, %v342
  %v346 = vunpack.c.l.b16 %v344
  %v347 = vunpack.c.h.b16 %v344
  %v348 = vpack.c.b16 %v346, %v346
  %v349 = vpack.c.b16 %v347, %v347
  %vm352 = vcmask 519168
  %353 = vst.msk [vmem:[%s9] sm:$0xf] %vm352, %v348
  %354 = vst.msk [vmem:[%s9 + $0x4] sm:$0xf] %vm352, %v349
  // Predicated region
  $region38: #{_lambda_.16} parent=0 // pred_check
    _
  $region39: #{_lambda_.16} parent=0 // pred_check_branch
    %356 = sbr.rel (0) target = $region41
  $region40: #{_lambda_.16} parent=0 // pred_region
    _
  $region41: #{_lambda_.16} parent=0 // pred_fallthru
    _
  // Predicated region
  $region42: #{_lambda_.16} parent=0 // pred_check
    _
  $region43: #{_lambda_.16} parent=0 // pred_check_branch
    %358 = sbr.rel (0) target = $region45
  $region44: #{_lambda_.16} parent=0 // pred_region
    _
  $region45: #{_lambda_.16} parent=0 // pred_fallthru
    _

// kernel: _lambda_.20
$region0: #{_lambda_.20}
  #allocation0 [shape = 'u32[]', space=smem, size = 0x4, offset = 0x4, fixed_abs, tag = 'smem constant byte address 0x4 - core index']
  #allocation1 [shape = 'u32[144,128]{1,0:T(1,128)}', space=vmem, size = 0x12000, scoped, tag = 'internal scratch']
  %s0 = inlined_call_operand.vmem [shape: bf16[16,64], index: 0, kind: input, shape index: {}]
  %s1 = inlined_call_operand.vmem [shape: bf16[64,128], index: 1, kind: input, shape index: {}]
  %s2 = inlined_call_operand.vmem [shape: f32[1,128], index: 2, kind: input, shape index: {}]
  %s3 = inlined_call_operand.vmem [shape: bf16[128,64], index: 3, kind: input, shape index: {}]
  %s4 = inlined_call_operand.vmem [shape: f32[1,64], index: 4, kind: input, shape index: {}]
  %s5 = inlined_call_operand.vmem [shape: f32[1,64], index: 5, kind: input, shape index: {}]
  %s6 = inlined_call_operand.vmem [shape: f32[1,64], index: 6, kind: input, shape index: {}]
  %s7 = inlined_call_operand.vmem [shape: bf16[16,64], index: 7, kind: output, shape index: {}]
  %s8 = sld [smem:[#allocation0]]
  $region38: #{_lambda_.20} parent=0
    _
  %s10 = ssub.s32 1, %s8
  %s11 = scalar_select 0, %s10, %s8
  // Predicated region
  $region2: #{_lambda_.20} parent=0 // pred_check
    _
  $region3: #{_lambda_.20} parent=0 // pred_check_branch
    %13 = sbr.rel (0) target = $region5
  $region4: #{_lambda_.20} parent=0 // pred_region
    _
  $region5: #{_lambda_.20} parent=0 // pred_fallthru
    _
  // Predicated region
  $region6: #{_lambda_.20} parent=0 // pred_check
    _
  $region7: #{_lambda_.20} parent=0 // pred_check_branch
    %15 = sbr.rel (0) target = $region9
  $region8: #{_lambda_.20} parent=0 // pred_region
    _
  $region9: #{_lambda_.20} parent=0 // pred_fallthru
    _
  // Predicated region
  $region10: #{_lambda_.20} parent=0 // pred_check
    _
  $region11: #{_lambda_.20} parent=0 // pred_check_branch
    %17 = sbr.rel (0) target = $region13
  $region12: #{_lambda_.20} parent=0 // pred_region
    _
  $region13: #{_lambda_.20} parent=0 // pred_fallthru
    _
  // Predicated region
  $region14: #{_lambda_.20} parent=0 // pred_check
    _
  $region15: #{_lambda_.20} parent=0 // pred_check_branch
    %19 = sbr.rel (0) target = $region17
  $region16: #{_lambda_.20} parent=0 // pred_region
    _
  $region17: #{_lambda_.20} parent=0 // pred_fallthru
    _
  // Predicated region
  $region18: #{_lambda_.20} parent=0 // pred_check
    _
  $region19: #{_lambda_.20} parent=0 // pred_check_branch
    %21 = sbr.rel (0) target = $region21
  $region20: #{_lambda_.20} parent=0 // pred_region
    _
  $region21: #{_lambda_.20} parent=0 // pred_fallthru
    _
  // Predicated region
  $region22: #{_lambda_.20} parent=0 // pred_check
    _
  $region23: #{_lambda_.20} parent=0 // pred_check_branch
    %23 = sbr.rel (0) target = $region25
  $region24: #{_lambda_.20} parent=0 // pred_region
    _
  $region25: #{_lambda_.20} parent=0 // pred_fallthru
    _
  // Predicated region
  $region26: #{_lambda_.20} parent=0 // pred_check
    _
  $region27: #{_lambda_.20} parent=0 // pred_check_branch
    %25 = sbr.rel (0) target = $region29
  $region28: #{_lambda_.20} parent=0 // pred_region
    _
  $region29: #{_lambda_.20} parent=0 // pred_fallthru
    _
  %v27 = vld [vmem:[%s0] sm:$0xf]
  %v28 = vld [vmem:[%s0 + $0x4] sm:$0xf]
  %v29 = vunpack.c.l.bf16 %v27
  %v30 = vunpack.c.l.bf16 %v28
  %v31 = vld [vmem:[%s1] sm:$0xf]
  %v32 = vld [vmem:[%s1 + $0x4] sm:$0xf]
  %v33 = vld [vmem:[%s1 + $0x8] sm:$0xf]
  %v34 = vld [vmem:[%s1 + $0xc] sm:$0xf]
  %v35 = vld [vmem:[%s1 + $0x10] sm:$0xf]
  %v36 = vld [vmem:[%s1 + $0x14] sm:$0xf]
  %v37 = vld [vmem:[%s1 + $0x18] sm:$0xf]
  %v38 = vld [vmem:[%s1 + $0x1c] sm:$0xf]
  %v39 = vld [vmem:[%s2] sm:$0x1]
  %v41 = vlaneseq
  %v42 = vshrl.u32 %v41, 7
  %v43 = vsub.s32 0, %v42
  %v44 = vrot.slane %v39, %v43
  %v48 = vunpack.c.l.b16 %v27
  %v49 = vunpack.c.l.b16 %v28
  %v50 = vpack.c.b16 %v49, %v48
  %v59 = vunpack.c.l.b16 %v31
  %v60 = vunpack.c.l.b16 %v32
  %v61 = vunpack.c.l.b16 %v33
  %v62 = vunpack.c.l.b16 %v34
  %v63 = vunpack.c.l.b16 %v35
  %v64 = vunpack.c.l.b16 %v36
  %v65 = vunpack.c.l.b16 %v37
  %v66 = vunpack.c.l.b16 %v38
  %v67 = vpack.c.b16 %v60, %v59
  %v68 = vpack.c.b16 %v62, %v61
  %v69 = vpack.c.b16 %v64, %v63
  %v70 = vpack.c.b16 %v66, %v65
  %vm75 = vcmask 523264
  %v77 = vsel %vm75, %v50, 0
  %79 = vmatprep.subr.bf16.mxu0 0
  %80 = vmatpush1.bf16.msra.mxu0 %v67
  %81 = vmatprep.subr.bf16.mxu0 0
  %82 = vmatpush1.bf16.msra.mxu0 %v68
  %83 = vmatprep.subr.bf16.mxu0 0
  %84 = vmatpush1.bf16.msra.mxu0 %v69
  %85 = vmatprep.subr.bf16.mxu0 0
  %86 = vmatpush1.bf16.msra.mxu0 %v70
  %87 = vmatprep.subr.bf16.mxu0 0
  %88 = vmatpush1.bf16.msra.mxu0 0
  %89 = vmatprep.subr.bf16.mxu0 0
  %90 = vmatpush1.bf16.msra.mxu0 0
  %91 = vmatprep.subr.bf16.mxu0 0
  %92 = vmatpush1.bf16.msra.mxu0 0
  %93 = vmatprep.subr.bf16.mxu0 0
  %94 = vmatpush1.bf16.msra.mxu0 0
  %95 = vmatprep.subr.bf16.mxu0 0
  %96 = vmatpush1.bf16.msra.mxu0 0
  %97 = vmatprep.subr.bf16.mxu0 0
  %98 = vmatpush1.bf16.msra.mxu0 0
  %99 = vmatprep.subr.bf16.mxu0 0
  %100 = vmatpush1.bf16.msra.mxu0 0
  %101 = vmatprep.subr.bf16.mxu0 0
  %102 = vmatpush1.bf16.msra.mxu0 0
  %103 = vmatprep.subr.bf16.mxu0 0
  %104 = vmatpush1.bf16.msra.mxu0 0
  %105 = vmatprep.subr.bf16.mxu0 0
  %106 = vmatpush1.bf16.msra.mxu0 0
  %107 = vmatprep.subr.bf16.mxu0 0
  %108 = vmatpush1.bf16.msra.mxu0 0
  %109 = vmatprep.subr.bf16.mxu0 0
  %110 = vmatpush1.bf16.msra.mxu0 0
  %111 = vmatprep.mubr.bf16.mxu0 0
  %112 = vmatmul.mubr.bf16.gmra.mrb[0].mxu0 %v77
  %v113 = vpop.f32.mrb[0].mxu0
  %v114 = vadd.f32 %v44, %v113
  %v115 = vpop.f32.mrb[0].mxu0
  %v116 = vpop.f32.mrb[0].mxu0
  %v117 = vadd.f32 %v44, %v116
  %v118 = vpop.f32.mrb[0].mxu0
  %119 = vdwg.mxu0
  %v120 = vmax.f32 %v114, 0.0
  %v121 = vmax.f32 %v117, 0.0
  %v122 = vpack.c.bf16 %v121, %v120
  %v123 = vld [vmem:[%s3] sm:$0xf]
  %v124 = vld [vmem:[%s3 + $0x4] sm:$0xf]
  %v125 = vld [vmem:[%s3 + $0x8] sm:$0xf]
  %v126 = vld [vmem:[%s3 + $0xc] sm:$0xf]
  %v127 = vld [vmem:[%s3 + $0x10] sm:$0xf]
  %v128 = vld [vmem:[%s3 + $0x14] sm:$0xf]
  %v129 = vld [vmem:[%s3 + $0x18] sm:$0xf]
  %v130 = vld [vmem:[%s3 + $0x1c] sm:$0xf]
  %v131 = vld [vmem:[%s3 + $0x20] sm:$0xf]
  %v132 = vld [vmem:[%s3 + $0x24] sm:$0xf]
  %v133 = vld [vmem:[%s3 + $0x28] sm:$0xf]
  %v134 = vld [vmem:[%s3 + $0x2c] sm:$0xf]
  %v135 = vld [vmem:[%s3 + $0x30] sm:$0xf]
  %v136 = vld [vmem:[%s3 + $0x34] sm:$0xf]
  %v137 = vld [vmem:[%s3 + $0x38] sm:$0xf]
  %v138 = vld [vmem:[%s3 + $0x3c] sm:$0xf]
  %v139 = vld [vmem:[%s4] sm:$0x1]
  %v141 = vlaneseq
  %v142 = vshrl.u32 %v141, 7
  %v143 = vsub.s32 0, %v142
  %v144 = vrot.slane %v139, %v143
  %v162 = vunpack.c.l.b16 %v123
  %v163 = vunpack.c.l.b16 %v124
  %v164 = vunpack.c.l.b16 %v125
  %v165 = vunpack.c.l.b16 %v126
  %v166 = vunpack.c.l.b16 %v127
  %v167 = vunpack.c.l.b16 %v128
  %v168 = vunpack.c.l.b16 %v129
  %v169 = vunpack.c.l.b16 %v130
  %v170 = vunpack.c.l.b16 %v131
  %v171 = vunpack.c.l.b16 %v132
  %v172 = vunpack.c.l.b16 %v133
  %v173 = vunpack.c.l.b16 %v134
  %v174 = vunpack.c.l.b16 %v135
  %v175 = vunpack.c.l.b16 %v136
  %v176 = vunpack.c.l.b16 %v137
  %v177 = vunpack.c.l.b16 %v138
  %v178 = vpack.c.b16 %v163, %v162
  %v179 = vpack.c.b16 %v165, %v164
  %v180 = vpack.c.b16 %v167, %v166
  %v181 = vpack.c.b16 %v169, %v168
  %v182 = vpack.c.b16 %v171, %v170
  %v183 = vpack.c.b16 %v173, %v172
  %v184 = vpack.c.b16 %v175, %v174
  %v185 = vpack.c.b16 %v177, %v176
  %194 = vmatprep.subr.bf16.mxu0 0
  %195 = vmatpush1.bf16.msra.mxu0 %v178
  %196 = vmatprep.subr.bf16.mxu0 0
  %197 = vmatpush1.bf16.msra.mxu0 %v179
  %198 = vmatprep.subr.bf16.mxu0 0
  %199 = vmatpush1.bf16.msra.mxu0 %v180
  %200 = vmatprep.subr.bf16.mxu0 0
  %201 = vmatpush1.bf16.msra.mxu0 %v181
  %202 = vmatprep.subr.bf16.mxu0 0
  %203 = vmatpush1.bf16.msra.mxu0 %v182
  %204 = vmatprep.subr.bf16.mxu0 0
  %205 = vmatpush1.bf16.msra.mxu0 %v183
  %206 = vmatprep.subr.bf16.mxu0 0
  %207 = vmatpush1.bf16.msra.mxu0 %v184
  %208 = vmatprep.subr.bf16.mxu0 0
  %209 = vmatpush1.bf16.msra.mxu0 %v185
  %210 = vmatprep.subr.bf16.mxu0 0
  %211 = vmatpush1.bf16.msra.mxu0 0
  %212 = vmatprep.subr.bf16.mxu0 0
  %213 = vmatpush1.bf16.msra.mxu0 0
  %214 = vmatprep.subr.bf16.mxu0 0
  %215 = vmatpush1.bf16.msra.mxu0 0
  %216 = vmatprep.subr.bf16.mxu0 0
  %217 = vmatpush1.bf16.msra.mxu0 0
  %218 = vmatprep.subr.bf16.mxu0 0
  %219 = vmatpush1.bf16.msra.mxu0 0
  %220 = vmatprep.subr.bf16.mxu0 0
  %221 = vmatpush1.bf16.msra.mxu0 0
  %222 = vmatprep.subr.bf16.mxu0 0
  %223 = vmatpush1.bf16.msra.mxu0 0
  %224 = vmatprep.subr.bf16.mxu0 0
  %225 = vmatpush1.bf16.msra.mxu0 0
  %226 = vmatprep.mubr.bf16.mxu0 0
  %227 = vmatmul.mubr.bf16.gmra.mrb[0].mxu0 %v122
  %v228 = vpop.f32.mrb[0].mxu0
  %v229 = vadd.f32 %v144, %v228
  %v230 = vpop.f32.mrb[0].mxu0
  %v231 = vpop.f32.mrb[0].mxu0
  %v232 = vadd.f32 %v144, %v231
  %v233 = vpop.f32.mrb[0].mxu0
  %234 = vdwg.mxu0
  %v235 = vadd.f32 %v29, %v229
  %v236 = vadd.f32 %v30, %v232
  %v237 = vld [vmem:[%s5] sm:$0x1]
  %v238 = vld [vmem:[%s6] sm:$0x1]
  %v239 = vsel %vm75, %v235, 0.0
  %240 = vadd.xlane.f32.xlu0 %v239
  %v241 = vpop.xlane.xlu0 %240
  %v242 = vsel %vm75, %v236, 0.0
  %243 = vadd.xlane.f32.xlu0 %v242
  %v244 = vpop.xlane.xlu0 %243
  %v245 = vrcp.pop 64.0
  %v246 = vmul.f32 %v241, %v245
  %v247 = vmul.f32 %v244, %v245
  %v248 = vsub.f32 %v235, %v246
  %v249 = vsub.f32 %v236, %v247
  %v250 = vmul.f32 %v248, %v248
  %v251 = vmul.f32 %v249, %v249
  %v252 = vsel %vm75, %v250, 0.0
  %253 = vadd.xlane.f32.xlu0 %v252
  %v254 = vpop.xlane.xlu0 %253
  %v255 = vsel %vm75, %v251, 0.0
  %256 = vadd.xlane.f32.xlu0 %v255
  %v257 = vpop.xlane.xlu0 %256
  %v258 = vmul.f32 %v254, %v245
  %v259 = vmul.f32 %v257, %v245
  %v260 = vadd.f32 %v258, 1e-06
  %v261 = vadd.f32 %v259, 1e-06
  %v262 = vrsqrt.pop %v260
  %v263 = vrsqrt.pop %v261
  %v264 = vmul.f32 %v248, %v262
  %v265 = vmul.f32 %v249, %v263
  %v267 = vlaneseq
  %v268 = vshrl.u32 %v267, 7
  %v269 = vsub.s32 0, %v268
  %v270 = vrot.slane %v237, %v269
  %v272 = vmul.f32 %v264, %v270
  %v273 = vmul.f32 %v265, %v270
  %v275 = vlaneseq
  %v276 = vshrl.u32 %v275, 7
  %v277 = vsub.s32 0, %v276
  %v278 = vrot.slane %v238, %v277
  %v280 = vadd.f32 %v272, %v278
  %v281 = vadd.f32 %v273, %v278
  %v282 = vpack.c.bf16 %v281, %v280
  %v284 = vunpack.c.l.b16 %v282
  %v285 = vunpack.c.h.b16 %v282
  %v286 = vpack.c.b16 %v284, %v284
  %v287 = vpack.c.b16 %v285, %v285
  %vm290 = vcmask 519168
  %291 = vst.msk [vmem:[%s7] sm:$0xf] %vm290, %v286
  %292 = vst.msk [vmem:[%s7 + $0x4] sm:$0xf] %vm290, %v287
  // Predicated region
  $region30: #{_lambda_.20} parent=0 // pred_check
    _
  $region31: #{_lambda_.20} parent=0 // pred_check_branch
    %294 = sbr.rel (0) target = $region33
  $region32: #{_lambda_.20} parent=0 // pred_region
    _
  $region33: #{_lambda_.20} parent=0 // pred_fallthru
    _
  // Predicated region
  $region34: #{_lambda_.20} parent=0 // pred_check
    _
  $region35: #{_lambda_.20} parent=0 // pred_check_branch
    %296 = sbr.rel (0) target = $region37
  $region36: #{_lambda_.20} parent=0 // pred_region
    _
  $region37: #{_lambda_.20} parent=0 // pred_fallthru
    _

// kernel: _lambda_.19
$region0: #{_lambda_.19}
  #allocation0 [shape = 'u32[]', space=smem, size = 0x4, offset = 0x4, fixed_abs, tag = 'smem constant byte address 0x4 - core index']
  #allocation1 [shape = 'u32[144,128]{1,0:T(1,128)}', space=vmem, size = 0x12000, scoped, tag = 'internal scratch']
  %s0 = inlined_call_operand.vmem [shape: bf16[2,8,64], index: 0, kind: input, shape index: {}]
  %s1 = inlined_call_operand.vmem [shape: bf16[2,5,64], index: 1, kind: input, shape index: {}]
  %s2 = inlined_call_operand.vmem [shape: bf16[64,192], index: 2, kind: input, shape index: {}]
  %s3 = inlined_call_operand.vmem [shape: f32[1,192], index: 3, kind: input, shape index: {}]
  %s4 = inlined_call_operand.vmem [shape: bf16[64,64], index: 4, kind: input, shape index: {}]
  %s5 = inlined_call_operand.vmem [shape: f32[1,64], index: 5, kind: input, shape index: {}]
  %s6 = inlined_call_operand.vmem [shape: f32[1,64], index: 6, kind: input, shape index: {}]
  %s7 = inlined_call_operand.vmem [shape: f32[1,64], index: 7, kind: input, shape index: {}]
  %s8 = inlined_call_operand.vmem [shape: bf16[2,8,64], index: 8, kind: output, shape index: {}]
  %s9 = sld [smem:[#allocation0]]
  $region65: #{_lambda_.19} parent=0
    _
  %s11 = ssub.s32 1, %s9
  %s12 = scalar_select 0, %s11, %s9
  loop: start=0, step=1, limit=4
  $region2: #{_lambda_.19} parent=0 // loop_pre_header
    _
  $region3: #{_lambda_.19} parent=0 // loop_header
    %s14 = sphi 0, %s18
    %p15 = scmp.ge.s32.totalorder %s14, 4
    %s24 = sphi 0, %s26
    %s27 = sphi 0, %s24
    %s28 = sphi 0, %s27
    %s44 = sphi 0, %s28
    %s50 = sphi 0, %s52
    %s53 = sphi 0, %s50
    %s54 = sphi 0, %s53
    %s70 = sphi 0, %s54
    %s74 = sphi 0, %s74
    %s76 = sphi 0, %s74
    %s77 = sphi 0, %s76
    %s91 = sphi 0, %s77
    %s95 = sphi 0, %s95
    %s97 = sphi 0, %s95
    %s98 = sphi 0, %s97
    %s112 = sphi 0, %s98
    %s116 = sphi 0, %s116
    %s118 = sphi 0, %s116
    %s119 = sphi 0, %s118
    %s133 = sphi 0, %s119
    %s137 = sphi 0, %s137
    %s139 = sphi 0, %s137
    %s140 = sphi 0, %s139
    %s154 = sphi 0, %s140
    %s158 = sphi 0, %s158
    %s160 = sphi 0, %s158
    %s161 = sphi 0, %s160
    %s175 = sphi 0, %s161
    %s179 = sphi 0, %s179
    %s181 = sphi 0, %s179
    %s182 = sphi 0, %s181
    %s196 = sphi 0, %s182
    %s202 = sphi 0, %s204
    %s205 = sphi 0, %s202
    %s206 = sphi 0, %s205
    %s222 = sphi 0, %s206
  $region4: #{_lambda_.19} parent=0 // loop_header_branch
    %17 = sbr.rel (%p15) target = $region8
  $region5: #{_lambda_.19} parent=0 // loop_body
    %s19 = ssub.s32 %s14, 1
    %s20 = ssub.s32 %s14, 2
    %s21 = sadd.s32 %s14, 1
    %s22 = ssub.s32 %s14, %s21
    %p23 = scmp.eq.s32.totalorder %s22, 0
    %s25 = sadd.s32 %s24, 1
    %s26 = scalar_select %p23, %s24, %s25
    %p29 = pneg %p23
    %p30 = scmp.eq.s32.totalorder %s14, 1
    %p31 = por %p29, %p30
    %p32 = scmp.ne.s32.totalorder %s24, %s27
    %p33 = scmp.eq.s32.totalorder %s14, 0
    %p34 = por %p32, %p33
    %p35 = scmp.ne.s32.totalorder %s24, %s27
    %p36 = scmp.eq.s32.totalorder %s19, 1
    %p37 = por %p35, %p36
    %p38 = scmp.ne.s32.totalorder %s27, %s28
    %p39 = scmp.eq.s32.totalorder %s19, 0
    %p40 = por %p38, %p39
    %p41 = scmp.ne.s32.totalorder %s27, %s28
    %p42 = scmp.eq.s32.totalorder %s20, 1
    %p43 = por %p41, %p42
    %p45 = scmp.ne.s32.totalorder %s28, %s44
    %p46 = scmp.eq.s32.totalorder %s20, 0
    %p47 = por %p45, %p46
    %s48 = ssub.s32 %s14, %s21
    %p49 = scmp.eq.s32.totalorder %s48, 0
    %s51 = sadd.s32 %s50, 1
    %s52 = scalar_select %p49, %s50, %s51
    %p55 = pneg %p49
    %p56 = scmp.eq.s32.totalorder %s14, 1
    %p57 = por %p55, %p56
    %p58 = scmp.ne.s32.totalorder %s50, %s53
    %p59 = scmp.eq.s32.totalorder %s14, 0
    %p60 = por %p58, %p59
    %p61 = scmp.ne.s32.totalorder %s50, %s53
    %p62 = scmp.eq.s32.totalorder %s19, 1
    %p63 = por %p61, %p62
    %p64 = scmp.ne.s32.totalorder %s53, %s54
    %p65 = scmp.eq.s32.totalorder %s19, 0
    %p66 = por %p64, %p65
    %p67 = scmp.ne.s32.totalorder %s53, %s54
    %p68 = scmp.eq.s32.totalorder %s20, 1
    %p69 = por %p67, %p68
    %p71 = scmp.ne.s32.totalorder %s54, %s70
    %p72 = scmp.eq.s32.totalorder %s20, 0
    %p73 = por %p71, %p72
    %s75 = sadd.s32 %s74, 1
    %p78 = scmp.eq.s32.totalorder %s14, 1
    %p79 = scmp.ne.s32.totalorder %s74, %s76
    %p80 = scmp.eq.s32.totalorder %s14, 0
    %p81 = por %p79, %p80
    %p82 = scmp.ne.s32.totalorder %s74, %s76
    %p83 = scmp.eq.s32.totalorder %s19, 1
    %p84 = por %p82, %p83
    %p85 = scmp.ne.s32.totalorder %s76, %s77
    %p86 = scmp.eq.s32.totalorder %s19, 0
    %p87 = por %p85, %p86
    %p88 = scmp.ne.s32.totalorder %s76, %s77
    %p89 = scmp.eq.s32.totalorder %s20, 1
    %p90 = por %p88, %p89
    %p92 = scmp.ne.s32.totalorder %s77, %s91
    %p93 = scmp.eq.s32.totalorder %s20, 0
    %p94 = por %p92, %p93
    %s96 = sadd.s32 %s95, 1
    %p99 = scmp.eq.s32.totalorder %s14, 1
    %p100 = scmp.ne.s32.totalorder %s95, %s97
    %p101 = scmp.eq.s32.totalorder %s14, 0
    %p102 = por %p100, %p101
    %p103 = scmp.ne.s32.totalorder %s95, %s97
    %p104 = scmp.eq.s32.totalorder %s19, 1
    %p105 = por %p103, %p104
    %p106 = scmp.ne.s32.totalorder %s97, %s98
    %p107 = scmp.eq.s32.totalorder %s19, 0
    %p108 = por %p106, %p107
    %p109 = scmp.ne.s32.totalorder %s97, %s98
    %p110 = scmp.eq.s32.totalorder %s20, 1
    %p111 = por %p109, %p110
    %p113 = scmp.ne.s32.totalorder %s98, %s112
    %p114 = scmp.eq.s32.totalorder %s20, 0
    %p115 = por %p113, %p114
    %s117 = sadd.s32 %s116, 1
    %p120 = scmp.eq.s32.totalorder %s14, 1
    %p121 = scmp.ne.s32.totalorder %s116, %s118
    %p122 = scmp.eq.s32.totalorder %s14, 0
    %p123 = por %p121, %p122
    %p124 = scmp.ne.s32.totalorder %s116, %s118
    %p125 = scmp.eq.s32.totalorder %s19, 1
    %p126 = por %p124, %p125
    %p127 = scmp.ne.s32.totalorder %s118, %s119
    %p128 = scmp.eq.s32.totalorder %s19, 0
    %p129 = por %p127, %p128
    %p130 = scmp.ne.s32.totalorder %s118, %s119
    %p131 = scmp.eq.s32.totalorder %s20, 1
    %p132 = por %p130, %p131
    %p134 = scmp.ne.s32.totalorder %s119, %s133
    %p135 = scmp.eq.s32.totalorder %s20, 0
    %p136 = por %p134, %p135
    %s138 = sadd.s32 %s137, 1
    %p141 = scmp.eq.s32.totalorder %s14, 1
    %p142 = scmp.ne.s32.totalorder %s137, %s139
    %p143 = scmp.eq.s32.totalorder %s14, 0
    %p144 = por %p142, %p143
    %p145 = scmp.ne.s32.totalorder %s137, %s139
    %p146 = scmp.eq.s32.totalorder %s19, 1
    %p147 = por %p145, %p146
    %p148 = scmp.ne.s32.totalorder %s139, %s140
    %p149 = scmp.eq.s32.totalorder %s19, 0
    %p150 = por %p148, %p149
    %p151 = scmp.ne.s32.totalorder %s139, %s140
    %p152 = scmp.eq.s32.totalorder %s20, 1
    %p153 = por %p151, %p152
    %p155 = scmp.ne.s32.totalorder %s140, %s154
    %p156 = scmp.eq.s32.totalorder %s20, 0
    %p157 = por %p155, %p156
    %s159 = sadd.s32 %s158, 1
    %p162 = scmp.eq.s32.totalorder %s14, 1
    %p163 = scmp.ne.s32.totalorder %s158, %s160
    %p164 = scmp.eq.s32.totalorder %s14, 0
    %p165 = por %p163, %p164
    %p166 = scmp.ne.s32.totalorder %s158, %s160
    %p167 = scmp.eq.s32.totalorder %s19, 1
    %p168 = por %p166, %p167
    %p169 = scmp.ne.s32.totalorder %s160, %s161
    %p170 = scmp.eq.s32.totalorder %s19, 0
    %p171 = por %p169, %p170
    %p172 = scmp.ne.s32.totalorder %s160, %s161
    %p173 = scmp.eq.s32.totalorder %s20, 1
    %p174 = por %p172, %p173
    %p176 = scmp.ne.s32.totalorder %s161, %s175
    %p177 = scmp.eq.s32.totalorder %s20, 0
    %p178 = por %p176, %p177
    %s180 = sadd.s32 %s179, 1
    %p183 = scmp.eq.s32.totalorder %s14, 1
    %p184 = scmp.ne.s32.totalorder %s179, %s181
    %p185 = scmp.eq.s32.totalorder %s14, 0
    %p186 = por %p184, %p185
    %p187 = scmp.ne.s32.totalorder %s179, %s181
    %p188 = scmp.eq.s32.totalorder %s19, 1
    %p189 = por %p187, %p188
    %p190 = scmp.ne.s32.totalorder %s181, %s182
    %p191 = scmp.eq.s32.totalorder %s19, 0
    %p192 = por %p190, %p191
    %p193 = scmp.ne.s32.totalorder %s181, %s182
    %p194 = scmp.eq.s32.totalorder %s20, 1
    %p195 = por %p193, %p194
    %p197 = scmp.ne.s32.totalorder %s182, %s196
    %p198 = scmp.eq.s32.totalorder %s20, 0
    %p199 = por %p197, %p198
    %s200 = ssub.s32 %s14, %s21
    %p201 = scmp.eq.s32.totalorder %s200, 0
    %s203 = sadd.s32 %s202, 1
    %s204 = scalar_select %p201, %s202, %s203
    %p207 = pneg %p201
    %p208 = scmp.eq.s32.totalorder %s14, 1
    %p209 = por %p207, %p208
    %p210 = scmp.ne.s32.totalorder %s202, %s205
    %p211 = scmp.eq.s32.totalorder %s14, 0
    %p212 = por %p210, %p211
    %p213 = scmp.ne.s32.totalorder %s202, %s205
    %p214 = scmp.eq.s32.totalorder %s19, 1
    %p215 = por %p213, %p214
    %p216 = scmp.ne.s32.totalorder %s205, %s206
    %p217 = scmp.eq.s32.totalorder %s19, 0
    %p218 = por %p216, %p217
    %p219 = scmp.ne.s32.totalorder %s205, %s206
    %p220 = scmp.eq.s32.totalorder %s20, 1
    %p221 = por %p219, %p220
    %p223 = scmp.ne.s32.totalorder %s206, %s222
    %p224 = scmp.eq.s32.totalorder %s20, 0
    %p225 = por %p223, %p224
    %p226 = scmp.le.s32.totalorder 1, %s14
    %p227 = scmp.lt.s32.totalorder %s14, 3
    %p228 = pnand %p226, %p227
    %p229 = pneg %p228
    // Predicated region
    $region9: #{_lambda_.19} parent=5 // pred_check
      _
    $region10: #{_lambda_.19} parent=5 // pred_check_branch
      %231 = sbr.rel (%p228) target = $region12
    $region11: #{_lambda_.19} parent=5 // pred_region
      %s232 = ssub.s32 %s14, 1
      // Predicated region
      $region13: #{_lambda_.19} parent=11 // pred_check
        %p233 = pneg %p87
      $region14: #{_lambda_.19} parent=11 // pred_check_branch
        %235 = sbr.rel (%p233) target = $region16
      $region15: #{_lambda_.19} parent=11 // pred_region
        _
      $region16: #{_lambda_.19} parent=11 // pred_fallthru
        _
      // Predicated region
      $region17: #{_lambda_.19} parent=11 // pred_check
        %p236 = pneg %p108
      $region18: #{_lambda_.19} parent=11 // pred_check_branch
        %238 = sbr.rel (%p236) target = $region20
      $region19: #{_lambda_.19} parent=11 // pred_region
        _
      $region20: #{_lambda_.19} parent=11 // pred_fallthru
        _
      // Predicated region
      $region21: #{_lambda_.19} parent=11 // pred_check
        %p239 = pneg %p129
      $region22: #{_lambda_.19} parent=11 // pred_check_branch
        %241 = sbr.rel (%p239) target = $region24
      $region23: #{_lambda_.19} parent=11 // pred_region
        _
      $region24: #{_lambda_.19} parent=11 // pred_fallthru
        _
      // Predicated region
      $region25: #{_lambda_.19} parent=11 // pred_check
        %p242 = pneg %p150
      $region26: #{_lambda_.19} parent=11 // pred_check_branch
        %244 = sbr.rel (%p242) target = $region28
      $region27: #{_lambda_.19} parent=11 // pred_region
        _
      $region28: #{_lambda_.19} parent=11 // pred_fallthru
        _
      // Predicated region
      $region29: #{_lambda_.19} parent=11 // pred_check
        %p245 = pneg %p171
      $region30: #{_lambda_.19} parent=11 // pred_check_branch
        %247 = sbr.rel (%p245) target = $region32
      $region31: #{_lambda_.19} parent=11 // pred_region
        _
      $region32: #{_lambda_.19} parent=11 // pred_fallthru
        _
      // Predicated region
      $region33: #{_lambda_.19} parent=11 // pred_check
        %p248 = pneg %p192
      $region34: #{_lambda_.19} parent=11 // pred_check_branch
        %250 = sbr.rel (%p248) target = $region36
      $region35: #{_lambda_.19} parent=11 // pred_region
        _
      $region36: #{_lambda_.19} parent=11 // pred_fallthru
        _
    $region12: #{_lambda_.19} parent=5 // pred_fallthru
      _
    %p251 = scmp.lt.s32.totalorder %s14, 2
    // Predicated region
    $region37: #{_lambda_.19} parent=5 // pred_check
      %p252 = pneg %p251
    $region38: #{_lambda_.19} parent=5 // pred_check_branch
      %254 = sbr.rel (%p252) target = $region40
    $region39: #{_lambda_.19} parent=5 // pred_region
      // Predicated region
      $region41: #{_lambda_.19} parent=39 // pred_check
        %p255 = pneg %p34
      $region42: #{_lambda_.19} parent=39 // pred_check_branch
        %257 = sbr.rel (%p255) target = $region44
      $region43: #{_lambda_.19} parent=39 // pred_region
        %p258 = scmp.lt.s32.totalorder %s14, 1
        %s259 = scalar_select %p258, %s14, 1
        %s260 = smul.addr %s259, 4
        %s261 = scalar_lea.vmem %s0, %s260
      $region44: #{_lambda_.19} parent=39 // pred_fallthru
        _
      // Predicated region
      $region45: #{_lambda_.19} parent=39 // pred_check
        %p262 = pneg %p60
      $region46: #{_lambda_.19} parent=39 // pred_check_branch
        %264 = sbr.rel (%p262) target = $region48
      $region47: #{_lambda_.19} parent=39 // pred_region
        %p265 = scmp.lt.s32.totalorder %s14, 1
        %s266 = scalar_select %p265, %s14, 1
        %s267 = smul.addr %s266, 4
        %s268 = scalar_lea.vmem %s1, %s267
      $region48: #{_lambda_.19} parent=39 // pred_fallthru
        _
    $region40: #{_lambda_.19} parent=5 // pred_fallthru
      _
    %p269 = scmp.le.s32.totalorder 1, %s14
    %p270 = scmp.lt.s32.totalorder %s14, 3
    %p271 = pnand %p269, %p270
    %p272 = pneg %p271
    // Predicated region
    $region49: #{_lambda_.19} parent=5 // pred_check
      _
    $region50: #{_lambda_.19} parent=5 // pred_check_branch
      %274 = sbr.rel (%p271) target = $region52
    $region51: #{_lambda_.19} parent=5 // pred_region
      %s275 = ssub.s32 %s14, 1
      %p276 = scmp.lt.s32.totalorder %s19, 1
      %s277 = scalar_select %p276, %s19, 1
      %s278 = smul.addr %s277, 4
      %s279 = scalar_lea.vmem %s0, %s278
      %p280 = pneg %p40
      %p281 = pneg %p37
      %p282 = scmp.lt.s32.totalorder %s19, 1
      %s283 = scalar_select %p282, %s19, 1
      %s284 = smul.addr %s283, 4
      %s285 = scalar_lea.vmem %s1, %s284
      %p286 = pneg %p66
      %p287 = pneg %p63
      %p288 = pneg %p87
      %p289 = pneg %p84
      %p290 = pneg %p108
      %p291 = pneg %p105
      %p292 = pneg %p129
      %p293 = pneg %p126
      %p294 = pneg %p150
      %p295 = pneg %p147
      %p296 = pneg %p171
      %p297 = pneg %p168
      %p298 = pneg %p192
      %p299 = pneg %p189
      %p300 = pneg %p218
      %p301 = pneg %p215
      %p302 = scmp.lt.s32.totalorder %s19, 1
      %s303 = scalar_select %p302, %s19, 1
      %s304 = smul.addr %s303, 4
      %s305 = scalar_lea.vmem %s8, %s304
      %p306 = scmp.lt.s32.totalorder %s19, 1
      %s307 = scalar_select %p306, %s19, 1
      %s308 = smul.addr %s307, 4
      %s309 = scalar_lea.vmem %s0, %s308
      %p310 = scmp.lt.s32.totalorder %s19, 1
      %s311 = scalar_select %p310, %s19, 1
      %s312 = smul.addr %s311, 4
      %s313 = scalar_lea.vmem %s1, %s312
      %p314 = scmp.lt.s32.totalorder %s19, 1
      %s315 = scalar_select %p314, %s19, 1
      %s316 = smul.addr %s315, 4
      %s317 = scalar_lea.vmem %s8, %s316
      %v319 = vld [vmem:[%s309] sm:$0xf]
      %v320 = vunpack.c.l.bf16 %v319
      %v321 = vld [vmem:[%s2] sm:$0xff]
      %v322 = vld [vmem:[%s2 + $0x8] sm:$0xff]
      %v323 = vld [vmem:[%s2 + $0x10] sm:$0xff]
      %v324 = vld [vmem:[%s2 + $0x18] sm:$0xff]
      %v325 = vld [vmem:[%s2 + $0x20] sm:$0xff]
      %v326 = vld [vmem:[%s2 + $0x28] sm:$0xff]
      %v327 = vld [vmem:[%s2 + $0x30] sm:$0xff]
      %v328 = vld [vmem:[%s2 + $0x38] sm:$0xff]
      %v329 = vld [vmem:[%s3] sm:$0x3]
      %v330 = vld [vmem:[%s313] sm:$0x7]
      %v332 = vlaneseq
      %v333 = vshrl.u32 %v332, 7
      %v334 = vsub.s32 0, %v333
      %v335 = vrot.slane %v329, %v334
      %v345 = vunpack.c.l.b16 %v321
      %v346 = vunpack.c.l.b16 %v322
      %v347 = vunpack.c.l.b16 %v323
      %v348 = vunpack.c.l.b16 %v324
      %v349 = vunpack.c.l.b16 %v325
      %v350 = vunpack.c.l.b16 %v326
      %v351 = vunpack.c.l.b16 %v327
      %v352 = vunpack.c.l.b16 %v328
      %v353 = vpack.c.b16 %v346, %v345
      %v354 = vpack.c.b16 %v348, %v347
      %v355 = vpack.c.b16 %v350, %v349
      %v356 = vpack.c.b16 %v352, %v351
      %vm361 = vcmask 523264
      %v363 = vsel %vm361, %v319, 0
      %365 = vmatprep.subr.bf16.mxu0 0
      %366 = vmatpush1.bf16.msra.mxu0 %v353
      %367 = vmatprep.subr.bf16.mxu0 0
      %368 = vmatpush1.bf16.msra.mxu0 %v354
      %369 = vmatprep.subr.bf16.mxu0 0
      %370 = vmatpush1.bf16.msra.mxu0 %v355
      %371 = vmatprep.subr.bf16.mxu0 0
      %372 = vmatpush1.bf16.msra.mxu0 %v356
      %373 = vmatprep.subr.bf16.mxu0 0
      %374 = vmatpush1.bf16.msra.mxu0 0
      %375 = vmatprep.subr.bf16.mxu0 0
      %376 = vmatpush1.bf16.msra.mxu0 0
      %377 = vmatprep.subr.bf16.mxu0 0
      %378 = vmatpush1.bf16.msra.mxu0 0
      %379 = vmatprep.subr.bf16.mxu0 0
      %380 = vmatpush1.bf16.msra.mxu0 0
      %381 = vmatprep.subr.bf16.mxu0 0
      %382 = vmatpush1.bf16.msra.mxu0 0
      %383 = vmatprep.subr.bf16.mxu0 0
      %384 = vmatpush1.bf16.msra.mxu0 0
      %385 = vmatprep.subr.bf16.mxu0 0
      %386 = vmatpush1.bf16.msra.mxu0 0
      %387 = vmatprep.subr.bf16.mxu0 0
      %388 = vmatpush1.bf16.msra.mxu0 0
      %389 = vmatprep.subr.bf16.mxu0 0
      %390 = vmatpush1.bf16.msra.mxu0 0
      %391 = vmatprep.subr.bf16.mxu0 0
      %392 = vmatpush1.bf16.msra.mxu0 0
      %393 = vmatprep.subr.bf16.mxu0 0
      %394 = vmatpush1.bf16.msra.mxu0 0
      %395 = vmatprep.subr.bf16.mxu0 0
      %396 = vmatpush1.bf16.msra.mxu0 0
      %397 = vmatprep.mubr.bf16.mxu0 0
      %398 = vmatmul.mubr.bf16.gmra.mrb[0].mxu0 %v363
      %v399 = vpop.f32.mrb[0].mxu0
      %v400 = vadd.f32 %v335, %v399
      %v401 = vpop.f32.mrb[0].mxu0
      %v402 = vpop.f32.mrb[0].mxu0
      %v403 = vpop.f32.mrb[0].mxu0
      %404 = vdwg.mxu0
      %v405 = vlaneseq
      %v406 = vshrl.u32 %v405, 7
      %v407 = vsub.s32 1, %v406
      %v408 = vrot.slane %v329, %v407
      %v409 = vunpack.c.h.b16 %v321
      %v410 = vunpack.c.h.b16 %v322
      %v411 = vunpack.c.h.b16 %v323
      %v412 = vunpack.c.h.b16 %v324
      %v413 = vunpack.c.h.b16 %v325
      %v414 = vunpack.c.h.b16 %v326
      %v415 = vunpack.c.h.b16 %v327
      %v416 = vunpack.c.h.b16 %v328
      %v417 = vpack.c.b16 %v410, %v409
      %v418 = vpack.c.b16 %v412, %v411
      %v419 = vpack.c.b16 %v414, %v413
      %v420 = vpack.c.b16 %v416, %v415
      %421 = vrot.lane.b32.xlu0 %v353, 64
      %v422 = vpop.permute.xlu0 %421
      %423 = vrot.lane.b32.xlu0 %v417, 64
      %v424 = vpop.permute.xlu0 %423
      %425 = vrot.lane.b32.xlu0 %v354, 64
      %v426 = vpop.permute.xlu0 %425
      %427 = vrot.lane.b32.xlu0 %v418, 64
      %v428 = vpop.permute.xlu0 %427
      %429 = vrot.lane.b32.xlu0 %v355, 64
      %v430 = vpop.permute.xlu0 %429
      %431 = vrot.lane.b32.xlu0 %v419, 64
      %v432 = vpop.permute.xlu0 %431
      %433 = vrot.lane.b32.xlu0 %v356, 64
      %v434 = vpop.permute.xlu0 %433
      %435 = vrot.lane.b32.xlu0 %v420, 64
      %v436 = vpop.permute.xlu0 %435
      %vm437 = vcmask 523264
      %v438 = vsel %vm437, %v422, %v424
      %v439 = vsel %vm437, %v426, %v428
      %v440 = vsel %vm437, %v430, %v432
      %v441 = vsel %vm437, %v434, %v436
      %446 = vrot.lane.b32.xlu0 %v335, 64
      %v447 = vpop.permute.xlu0 %446
      %448 = vrot.lane.b32.xlu0 %v408, 64
      %v449 = vpop.permute.xlu0 %448
      %v450 = vsel %vm361, %v447, %v449
      %v453 = vsel %vm361, %v330, 0
      %455 = vmatprep.subr.bf16.mxu0 0
      %456 = vmatpush1.bf16.msra.mxu0 %v438
      %457 = vmatprep.subr.bf16.mxu0 0
      %458 = vmatpush1.bf16.msra.mxu0 %v439
      %459 = vmatprep.subr.bf16.mxu0 0
      %460 = vmatpush1.bf16.msra.mxu0 %v440
      %461 = vmatprep.subr.bf16.mxu0 0
      %462 = vmatpush1.bf16.msra.mxu0 %v441
      %463 = vmatprep.subr.bf16.mxu0 0
      %464 = vmatpush1.bf16.msra.mxu0 0
      %465 = vmatprep.subr.bf16.mxu0 0
      %466 = vmatpush1.bf16.msra.mxu0 0
      %467 = vmatprep.subr.bf16.mxu0 0
      %468 = vmatpush1.bf16.msra.mxu0 0
      %469 = vmatprep.subr.bf16.mxu0 0
      %470 = vmatpush1.bf16.msra.mxu0 0
      %471 = vmatprep.subr.bf16.mxu0 0
      %472 = vmatpush1.bf16.msra.mxu0 0
      %473 = vmatprep.subr.bf16.mxu0 0
      %474 = vmatpush1.bf16.msra.mxu0 0
      %475 = vmatprep.subr.bf16.mxu0 0
      %476 = vmatpush1.bf16.msra.mxu0 0
      %477 = vmatprep.subr.bf16.mxu0 0
      %478 = vmatpush1.bf16.msra.mxu0 0
      %479 = vmatprep.subr.bf16.mxu0 0
      %480 = vmatpush1.bf16.msra.mxu0 0
      %481 = vmatprep.subr.bf16.mxu0 0
      %482 = vmatpush1.bf16.msra.mxu0 0
      %483 = vmatprep.subr.bf16.mxu0 0
      %484 = vmatpush1.bf16.msra.mxu0 0
      %485 = vmatprep.subr.bf16.mxu0 0
      %486 = vmatpush1.bf16.msra.mxu0 0
      %487 = vmatprep.mubr.bf16.mxu0 0
      %488 = vmatmul.mubr.bf16.gmra.mrb[0].mxu0 %v453
      %v489 = vpop.f32.mrb[0].mxu0
      %v490 = vadd.f32 %v450, %v489
      %v491 = vpop.f32.mrb[0].mxu0
      %v492 = vpop.f32.mrb[0].mxu0
      %v493 = vpop.f32.mrb[0].mxu0
      %494 = vdwg.mxu0
      %v495 = vld [vmem:[%s4] sm:$0xf]
      %v496 = vld [vmem:[%s4 + $0x4] sm:$0xf]
      %v497 = vld [vmem:[%s4 + $0x8] sm:$0xf]
      %v498 = vld [vmem:[%s4 + $0xc] sm:$0xf]
      %v499 = vld [vmem:[%s4 + $0x10] sm:$0xf]
      %v500 = vld [vmem:[%s4 + $0x14] sm:$0xf]
      %v501 = vld [vmem:[%s4 + $0x18] sm:$0xf]
      %v502 = vld [vmem:[%s4 + $0x1c] sm:$0xf]
      %v503 = vpack.c.bf16 %v400, %v400
      %v504 = vpack.c.bf16 %v490, %v490
      %vm505 = vcmask 130048
      %v507 = vsel %vm505, %v503, 0
      %v510 = vsel %vm505, %v504, 0
      %512 = vmatprep.subr.bf16.mxu0 0
      %513 = vmatpush1.bf16.xpose.msra.mxu0 %v510
      %514 = vmatprep.subr.bf16.mxu0 0
      %515 = vmatpush1.bf16.xpose.msra.mxu0 0
      %516 = vmatprep.subr.bf16.mxu0 0
      %517 = vmatpush1.bf16.xpose.msra.mxu0 0
      %518 = vmatprep.subr.bf16.mxu0 0
      %519 = vmatpush1.bf16.xpose.msra.mxu0 0
      %520 = vmatprep.subr.bf16.mxu0 0
      %521 = vmatpush1.bf16.xpose.msra.mxu0 0
      %522 = vmatprep.subr.bf16.mxu0 0
      %523 = vmatpush1.bf16.xpose.msra.mxu0 0
      %524 = vmatprep.subr.bf16.mxu0 0
      %525 = vmatpush1.bf16.xpose.msra.mxu0 0
      %526 = vmatprep.subr.bf16.mxu0 0
      %527 = vmatpush1.bf16.xpose.msra.mxu0 0
      %528 = vmatprep.subr.bf16.mxu0 0
      %529 = vmatpush1.bf16.xpose.msra.mxu0 0
      %530 = vmatprep.subr.bf16.mxu0 0
      %531 = vmatpush1.bf16.xpose.msra.mxu0 0
      %532 = vmatprep.subr.bf16.mxu0 0
      %533 = vmatpush1.bf16.xpose.msra.mxu0 0
      %534 = vmatprep.subr.bf16.mxu0 0
      %535 = vmatpush1.bf16.xpose.msra.mxu0 0
      %536 = vmatprep.subr.bf16.mxu0 0
      %537 = vmatpush1.bf16.xpose.msra.mxu0 0
      %538 = vmatprep.subr.bf16.mxu0 0
      %539 = vmatpush1.bf16.xpose.msra.mxu0 0
      %540 = vmatprep.subr.bf16.mxu0 0
      %541 = vmatpush1.bf16.xpose.msra.mxu0 0
      %542 = vmatprep.subr.bf16.mxu0 0
      %543 = vmatpush1.bf16.xpose.msra.mxu0 0
      %544 = vmatprep.mubr.bf16.mxu0 0
      %545 = vmatmul.mubr.bf16.gmra.mrb[0].mxu0 %v507
      %v546 = vpop.f32.mrb[0].mxu0
      %v547 = vadd.f32 0.0, %v546
      %v548 = vpop.f32.mrb[0].mxu0
      %v549 = vpop.f32.mrb[0].mxu0
      %v550 = vpop.f32.mrb[0].mxu0
      %551 = vdwg.mxu0
      %v552 = vmul.f32 %v547, 0.25
      %vm553 = vcmask 39936
      %v554 = vsel %vm553, %v552, -inf
      %555 = vmax.xlane.f32.xlu0 %v554
      %v556 = vpop.xlane.xlu0 %555
      %v557 = vsub.f32 %v552, %v556
      %v558 = vmul.f32 %v557, 1.442695
      %v559 = vpow.pop %v558
      %v560 = vsel %vm553, %v559, 0.0
      %561 = vadd.xlane.f32.xlu0 %v560
      %v562 = vpop.xlane.xlu0 %561
      %v563 = vrcp.pop %v562
      %v564 = vmul.f32 %v559, %v563
      %v565 = vpack.c.bf16 %v564, %v564
      %567 = vrot.lane.b32.xlu0 %v504, 64
      %v568 = vpop.permute.xlu0 %567
      %v570 = vsel %vm553, %v565, 0
      %vm572 = vcmask 1041408
      %vm573 = vcmask 1042432
      %v574 = vsel %vm572, 4294967295, 65535
      %v575 = vsel %vm573, %v574, 0
      %v577 = vand.u32 %v568, %v575
      %579 = vmatprep.subr.bf16.mxu0 0
      %580 = vmatpush1.bf16.msra.mxu0 %v577
      %581 = vmatprep.subr.bf16.mxu0 0
      %582 = vmatpush1.bf16.msra.mxu0 0
      %583 = vmatprep.subr.bf16.mxu0 0
      %584 = vmatpush1.bf16.msra.mxu0 0
      %585 = vmatprep.subr.bf16.mxu0 0
      %586 = vmatpush1.bf16.msra.mxu0 0
      %587 = vmatprep.subr.bf16.mxu0 0
      %588 = vmatpush1.bf16.msra.mxu0 0
      %589 = vmatprep.subr.bf16.mxu0 0
      %590 = vmatpush1.bf16.msra.mxu0 0
      %591 = vmatprep.subr.bf16.mxu0 0
      %592 = vmatpush1.bf16.msra.mxu0 0
      %593 = vmatprep.subr.bf16.mxu0 0
      %594 = vmatpush1.bf16.msra.mxu0 0
      %595 = vmatprep.subr.bf16.mxu0 0
      %596 = vmatpush1.bf16.msra.mxu0 0
      %597 = vmatprep.subr.bf16.mxu0 0
      %598 = vmatpush1.bf16.msra.mxu0 0
      %599 = vmatprep.subr.bf16.mxu0 0
      %600 = vmatpush1.bf16.msra.mxu0 0
      %601 = vmatprep.subr.bf16.mxu0 0
      %602 = vmatpush1.bf16.msra.mxu0 0
      %603 = vmatprep.subr.bf16.mxu0 0
      %604 = vmatpush1.bf16.msra.mxu0 0
      %605 = vmatprep.subr.bf16.mxu0 0
      %606 = vmatpush1.bf16.msra.mxu0 0
      %607 = vmatprep.subr.bf16.mxu0 0
      %608 = vmatpush1.bf16.msra.mxu0 0
      %609 = vmatprep.subr.bf16.mxu0 0
      %610 = vmatpush1.bf16.msra.mxu0 0
      %611 = vmatprep.mubr.bf16.mxu0 0
      %612 = vmatmul.mubr.bf16.gmra.mrb[0].mxu0 %v570
      %v613 = vpop.f32.mrb[0].mxu0
      %v614 = vadd.f32 0.0, %v613
      %v615 = vpop.f32.mrb[0].mxu0
      %v616 = vpop.f32.mrb[0].mxu0
      %v617 = vpop.f32.mrb[0].mxu0
      %618 = vdwg.mxu0
      %v619 = vpack.c.bf16 %v614, %v614
      %621 = vrot.lane.b32.xlu0 %v503, 112
      %v622 = vpop.permute.xlu0 %621
      %623 = vrot.lane.b32.xlu0 %v504, 112
      %v624 = vpop.permute.xlu0 %623
      %v626 = vsel %vm505, %v622, 0
      %v629 = vsel %vm505, %v624, 0
      %631 = vmatprep.subr.bf16.mxu0 0
      %632 = vmatpush1.bf16.xpose.msra.mxu0 %v629
      %633 = vmatprep.subr.bf16.mxu0 0
      %634 = vmatpush1.bf16.xpose.msra.mxu0 0
      %635 = vmatprep.subr.bf16.mxu0 0
      %636 = vmatpush1.bf16.xpose.msra.mxu0 0
      %637 = vmatprep.subr.bf16.mxu0 0
      %638 = vmatpush1.bf16.xpose.msra.mxu0 0
      %639 = vmatprep.subr.bf16.mxu0 0
      %640 = vmatpush1.bf16.xpose.msra.mxu0 0
      %641 = vmatprep.subr.bf16.mxu0 0
      %642 = vmatpush1.bf16.xpose.msra.mxu0 0
      %643 = vmatprep.subr.bf16.mxu0 0
      %644 = vmatpush1.bf16.xpose.msra.mxu0 0
      %645 = vmatprep.subr.bf16.mxu0 0
      %646 = vmatpush1.bf16.xpose.msra.mxu0 0
      %647 = vmatprep.subr.bf16.mxu0 0
      %648 = vmatpush1.bf16.xpose.msra.mxu0 0
      %649 = vmatprep.subr.bf16.mxu0 0
      %650 = vmatpush1.bf16.xpose.msra.mxu0 0
      %651 = vmatprep.subr.bf16.mxu0 0
      %652 = vmatpush1.bf16.xpose.msra.mxu0 0
      %653 = vmatprep.subr.bf16.mxu0 0
      %654 = vmatpush1.bf16.xpose.msra.mxu0 0
      %655 = vmatprep.subr.bf16.mxu0 0
      %656 = vmatpush1.bf16.xpose.msra.mxu0 0
      %657 = vmatprep.subr.bf16.mxu0 0
      %658 = vmatpush1.bf16.xpose.msra.mxu0 0
      %659 = vmatprep.subr.bf16.mxu0 0
      %660 = vmatpush1.bf16.xpose.msra.mxu0 0
      %661 = vmatprep.subr.bf16.mxu0 0
      %662 = vmatpush1.bf16.xpose.msra.mxu0 0
      %663 = vmatprep.mubr.bf16.mxu0 0
      %664 = vmatmul.mubr.bf16.gmra.mrb[0].mxu0 %v626
      %v665 = vpop.f32.mrb[0].mxu0
      %v666 = vadd.f32 0.0, %v665
      %v667 = vpop.f32.mrb[0].mxu0
      %v668 = vpop.f32.mrb[0].mxu0
      %v669 = vpop.f32.mrb[0].mxu0
      %670 = vdwg.mxu0
      %v671 = vmul.f32 %v666, 0.25
      %v672 = vsel %vm553, %v671, -inf
      %673 = vmax.xlane.f32.xlu0 %v672
      %v674 = vpop.xlane.xlu0 %673
      %v675 = vsub.f32 %v671, %v674
      %v676 = vmul.f32 %v675, 1.442695
      %v677 = vpow.pop %v676
      %v678 = vsel %vm553, %v677, 0.0
      %679 = vadd.xlane.f32.xlu0 %v678
      %v680 = vpop.xlane.xlu0 %679
      %v681 = vrcp.pop %v680
      %v682 = vmul.f32 %v677, %v681
      %v683 = vpack.c.bf16 %v682, %v682
      %684 = vrot.lane.b32.xlu0 %v504, 48
      %v685 = vpop.permute.xlu0 %684
      %v687 = vsel %vm553, %v683, 0
      %v690 = vand.u32 %v685, %v575
      %692 = vmatprep.subr.bf16.mxu0 0
      %693 = vmatpush1.bf16.msra.mxu0 %v690
      %694 = vmatprep.subr.bf16.mxu0 0
      %695 = vmatpush1.bf16.msra.mxu0 0
      %696 = vmatprep.subr.bf16.mxu0 0
      %697 = vmatpush1.bf16.msra.mxu0 0
      %698 = vmatprep.subr.bf16.mxu0 0
      %699 = vmatpush1.bf16.msra.mxu0 0
      %700 = vmatprep.subr.bf16.mxu0 0
      %701 = vmatpush1.bf16.msra.mxu0 0
      %702 = vmatprep.subr.bf16.mxu0 0
      %703 = vmatpush1.bf16.msra.mxu0 0
      %704 = vmatprep.subr.bf16.mxu0 0
      %705 = vmatpush1.bf16.msra.mxu0 0
      %706 = vmatprep.subr.bf16.mxu0 0
      %707 = vmatpush1.bf16.msra.mxu0 0
      %708 = vmatprep.subr.bf16.mxu0 0
      %709 = vmatpush1.bf16.msra.mxu0 0
      %710 = vmatprep.subr.bf16.mxu0 0
      %711 = vmatpush1.bf16.msra.mxu0 0
      %712 = vmatprep.subr.bf16.mxu0 0
      %713 = vmatpush1.bf16.msra.mxu0 0
      %714 = vmatprep.subr.bf16.mxu0 0
      %715 = vmatpush1.bf16.msra.mxu0 0
      %716 = vmatprep.subr.bf16.mxu0 0
      %717 = vmatpush1.bf16.msra.mxu0 0
      %718 = vmatprep.subr.bf16.mxu0 0
      %719 = vmatpush1.bf16.msra.mxu0 0
      %720 = vmatprep.subr.bf16.mxu0 0
      %721 = vmatpush1.bf16.msra.mxu0 0
      %722 = vmatprep.subr.bf16.mxu0 0
      %723 = vmatpush1.bf16.msra.mxu0 0
      %724 = vmatprep.mubr.bf16.mxu0 0
      %725 = vmatmul.mubr.bf16.gmra.mrb[0].mxu0 %v687
      %v726 = vpop.f32.mrb[0].mxu0
      %v727 = vadd.f32 0.0, %v726
      %v728 = vpop.f32.mrb[0].mxu0
      %v729 = vpop.f32.mrb[0].mxu0
      %v730 = vpop.f32.mrb[0].mxu0
      %731 = vdwg.mxu0
      %v732 = vpack.c.bf16 %v727, %v727
      %v735 = vunpack.c.l.b16 %v497
      %v736 = vunpack.c.l.b16 %v498
      %v737 = vpack.c.b16 %v736, %v735
      %v740 = vsel %vm505, %v732, 0
      %742 = vmatprep.subr.bf16.mxu0 0
      %743 = vmatpush1.bf16.msra.mxu0 %v737
      %744 = vmatprep.subr.bf16.mxu0 0
      %745 = vmatpush1.bf16.msra.mxu0 0
      %746 = vmatprep.subr.bf16.mxu0 0
      %747 = vmatpush1.bf16.msra.mxu0 0
      %748 = vmatprep.subr.bf16.mxu0 0
      %749 = vmatpush1.bf16.msra.mxu0 0
      %750 = vmatprep.subr.bf16.mxu0 0
      %751 = vmatpush1.bf16.msra.mxu0 0
      %752 = vmatprep.subr.bf16.mxu0 0
      %753 = vmatpush1.bf16.msra.mxu0 0
      %754 = vmatprep.subr.bf16.mxu0 0
      %755 = vmatpush1.bf16.msra.mxu0 0
      %756 = vmatprep.subr.bf16.mxu0 0
      %757 = vmatpush1.bf16.msra.mxu0 0
      %758 = vmatprep.subr.bf16.mxu0 0
      %759 = vmatpush1.bf16.msra.mxu0 0
      %760 = vmatprep.subr.bf16.mxu0 0
      %761 = vmatpush1.bf16.msra.mxu0 0
      %762 = vmatprep.subr.bf16.mxu0 0
      %763 = vmatpush1.bf16.msra.mxu0 0
      %764 = vmatprep.subr.bf16.mxu0 0
      %765 = vmatpush1.bf16.msra.mxu0 0
      %766 = vmatprep.subr.bf16.mxu0 0
      %767 = vmatpush1.bf16.msra.mxu0 0
      %768 = vmatprep.subr.bf16.mxu0 0
      %769 = vmatpush1.bf16.msra.mxu0 0
      %770 = vmatprep.subr.bf16.mxu0 0
      %771 = vmatpush1.bf16.msra.mxu0 0
      %772 = vmatprep.subr.bf16.mxu0 0
      %773 = vmatpush1.bf16.msra.mxu0 0
      %774 = vmatprep.mubr.bf16.mxu0 0
      %775 = vmatmul.mubr.bf16.gmra.mrb[0].mxu0 %v740
      %v776 = vpop.f32.mrb[0].mxu0
      %v777 = vadd.f32 0.0, %v776
      %v778 = vpop.f32.mrb[0].mxu0
      %v779 = vpop.f32.mrb[0].mxu0
      %v780 = vpop.f32.mrb[0].mxu0
      %781 = vdwg.mxu0
      %v784 = vunpack.c.l.b16 %v495
      %v785 = vunpack.c.l.b16 %v496
      %v786 = vpack.c.b16 %v785, %v784
      %v789 = vsel %vm505, %v619, 0
      %791 = vmatprep.subr.bf16.mxu0 0
      %792 = vmatpush1.bf16.msra.mxu0 %v786
      %793 = vmatprep.subr.bf16.mxu0 0
      %794 = vmatpush1.bf16.msra.mxu0 0
      %795 = vmatprep.subr.bf16.mxu0 0
      %796 = vmatpush1.bf16.msra.mxu0 0
      %797 = vmatprep.subr.bf16.mxu0 0
      %798 = vmatpush1.bf16.msra.mxu0 0
      %799 = vmatprep.subr.bf16.mxu0 0
      %800 = vmatpush1.bf16.msra.mxu0 0
      %801 = vmatprep.subr.bf16.mxu0 0
      %802 = vmatpush1.bf16.msra.mxu0 0
      %803 = vmatprep.subr.bf16.mxu0 0
      %804 = vmatpush1.bf16.msra.mxu0 0
      %805 = vmatprep.subr.bf16.mxu0 0
      %806 = vmatpush1.bf16.msra.mxu0 0
      %807 = vmatprep.subr.bf16.mxu0 0
      %808 = vmatpush1.bf16.msra.mxu0 0
      %809 = vmatprep.subr.bf16.mxu0 0
      %810 = vmatpush1.bf16.msra.mxu0 0
      %811 = vmatprep.subr.bf16.mxu0 0
      %812 = vmatpush1.bf16.msra.mxu0 0
      %813 = vmatprep.subr.bf16.mxu0 0
      %814 = vmatpush1.bf16.msra.mxu0 0
      %815 = vmatprep.subr.bf16.mxu0 0
      %816 = vmatpush1.bf16.msra.mxu0 0
      %817 = vmatprep.subr.bf16.mxu0 0
      %818 = vmatpush1.bf16.msra.mxu0 0
      %819 = vmatprep.subr.bf16.mxu0 0
      %820 = vmatpush1.bf16.msra.mxu0 0
      %821 = vmatprep.subr.bf16.mxu0 0
      %822 = vmatpush1.bf16.msra.mxu0 0
      %823 = vmatprep.mubr.bf16.mxu0 0
      %824 = vmatmul.mubr.bf16.gmra.mrb[0].mxu0 %v789
      %v825 = vpop.f32.mrb[0].mxu0
      %v826 = vadd.f32 %v777, %v825
      %v827 = vpop.f32.mrb[0].mxu0
      %v828 = vpop.f32.mrb[0].mxu0
      %v829 = vpop.f32.mrb[0].mxu0
      %830 = vdwg.mxu0
      %831 = vrot.lane.b32.xlu0 %v503, 96
      %v832 = vpop.permute.xlu0 %831
      %833 = vrot.lane.b32.xlu0 %v504, 96
      %v834 = vpop.permute.xlu0 %833
      %v836 = vsel %vm505, %v832, 0
      %v839 = vsel %vm505, %v834, 0
      %841 = vmatprep.subr.bf16.mxu0 0
      %842 = vmatpush1.bf16.xpose.msra.mxu0 %v839
      %843 = vmatprep.subr.bf16.mxu0 0
      %844 = vmatpush1.bf16.xpose.msra.mxu0 0
      %845 = vmatprep.subr.bf16.mxu0 0
      %846 = vmatpush1.bf16.xpose.msra.mxu0 0
      %847 = vmatprep.subr.bf16.mxu0 0
      %848 = vmatpush1.bf16.xpose.msra.mxu0 0
      %849 = vmatprep.subr.bf16.mxu0 0
      %850 = vmatpush1.bf16.xpose.msra.mxu0 0
      %851 = vmatprep.subr.bf16.mxu0 0
      %852 = vmatpush1.bf16.xpose.msra.mxu0 0
      %853 = vmatprep.subr.bf16.mxu0 0
      %854 = vmatpush1.bf16.xpose.msra.mxu0 0
      %855 = vmatprep.subr.bf16.mxu0 0
      %856 = vmatpush1.bf16.xpose.msra.mxu0 0
      %857 = vmatprep.subr.bf16.mxu0 0
      %858 = vmatpush1.bf16.xpose.msra.mxu0 0
      %859 = vmatprep.subr.bf16.mxu0 0
      %860 = vmatpush1.bf16.xpose.msra.mxu0 0
      %861 = vmatprep.subr.bf16.mxu0 0
      %862 = vmatpush1.bf16.xpose.msra.mxu0 0
      %863 = vmatprep.subr.bf16.mxu0 0
      %864 = vmatpush1.bf16.xpose.msra.mxu0 0
      %865 = vmatprep.subr.bf16.mxu0 0
      %866 = vmatpush1.bf16.xpose.msra.mxu0 0
      %867 = vmatprep.subr.bf16.mxu0 0
      %868 = vmatpush1.bf16.xpose.msra.mxu0 0
      %869 = vmatprep.subr.bf16.mxu0 0
      %870 = vmatpush1.bf16.xpose.msra.mxu0 0
      %871 = vmatprep.subr.bf16.mxu0 0
      %872 = vmatpush1.bf16.xpose.msra.mxu0 0
      %873 = vmatprep.mubr.bf16.mxu0 0
      %874 = vmatmul.mubr.bf16.gmra.mrb[0].mxu0 %v836
      %v875 = vpop.f32.mrb[0].mxu0
      %v876 = vadd.f32 0.0, %v875
      %v877 = vpop.f32.mrb[0].mxu0
      %v878 = vpop.f32.mrb[0].mxu0
      %v879 = vpop.f32.mrb[0].mxu0
      %880 = vdwg.mxu0
      %v881 = vmul.f32 %v876, 0.25
      %v882 = vsel %vm553, %v881, -inf
      %883 = vmax.xlane.f32.xlu0 %v882
      %v884 = vpop.xlane.xlu0 %883
      %v885 = vsub.f32 %v881, %v884
      %v886 = vmul.f32 %v885, 1.442695
      %v887 = vpow.pop %v886
      %v888 = vsel %vm553, %v887, 0.0
      %889 = vadd.xlane.f32.xlu0 %v888
      %v890 = vpop.xlane.xlu0 %889
      %v891 = vrcp.pop %v890
      %v892 = vmul.f32 %v887, %v891
      %v893 = vpack.c.bf16 %v892, %v892
      %894 = vrot.lane.b32.xlu0 %v504, 32
      %v895 = vpop.permute.xlu0 %894
      %v897 = vsel %vm553, %v893, 0
      %v900 = vand.u32 %v895, %v575
      %902 = vmatprep.subr.bf16.mxu0 0
      %903 = vmatpush1.bf16.msra.mxu0 %v900
      %904 = vmatprep.subr.bf16.mxu0 0
      %905 = vmatpush1.bf16.msra.mxu0 0
      %906 = vmatprep.subr.bf16.mxu0 0
      %907 = vmatpush1.bf16.msra.mxu0 0
      %908 = vmatprep.subr.bf16.mxu0 0
      %909 = vmatpush1.bf16.msra.mxu0 0
      %910 = vmatprep.subr.bf16.mxu0 0
      %911 = vmatpush1.bf16.msra.mxu0 0
      %912 = vmatprep.subr.bf16.mxu0 0
      %913 = vmatpush1.bf16.msra.mxu0 0
      %914 = vmatprep.subr.bf16.mxu0 0
      %915 = vmatpush1.bf16.msra.mxu0 0
      %916 = vmatprep.subr.bf16.mxu0 0
      %917 = vmatpush1.bf16.msra.mxu0 0
      %918 = vmatprep.subr.bf16.mxu0 0
      %919 = vmatpush1.bf16.msra.mxu0 0
      %920 = vmatprep.subr.bf16.mxu0 0
      %921 = vmatpush1.bf16.msra.mxu0 0
      %922 = vmatprep.subr.bf16.mxu0 0
      %923 = vmatpush1.bf16.msra.mxu0 0
      %924 = vmatprep.subr.bf16.mxu0 0
      %925 = vmatpush1.bf16.msra.mxu0 0
      %926 = vmatprep.subr.bf16.mxu0 0
      %927 = vmatpush1.bf16.msra.mxu0 0
      %928 = vmatprep.subr.bf16.mxu0 0
      %929 = vmatpush1.bf16.msra.mxu0 0
      %930 = vmatprep.subr.bf16.mxu0 0
      %931 = vmatpush1.bf16.msra.mxu0 0
      %932 = vmatprep.subr.bf16.mxu0 0
      %933 = vmatpush1.bf16.msra.mxu0 0
      %934 = vmatprep.mubr.bf16.mxu0 0
      %935 = vmatmul.mubr.bf16.gmra.mrb[0].mxu0 %v897
      %v936 = vpop.f32.mrb[0].mxu0
      %v937 = vadd.f32 0.0, %v936
      %v938 = vpop.f32.mrb[0].mxu0
      %v939 = vpop.f32.mrb[0].mxu0
      %v940 = vpop.f32.mrb[0].mxu0
      %941 = vdwg.mxu0
      %v942 = vpack.c.bf16 %v937, %v937
      %v945 = vunpack.c.l.b16 %v499
      %v946 = vunpack.c.l.b16 %v500
      %v947 = vpack.c.b16 %v946, %v945
      %v950 = vsel %vm505, %v942, 0
      %952 = vmatprep.subr.bf16.mxu0 0
      %953 = vmatpush1.bf16.msra.mxu0 %v947
      %954 = vmatprep.subr.bf16.mxu0 0
      %955 = vmatpush1.bf16.msra.mxu0 0
      %956 = vmatprep.subr.bf16.mxu0 0
      %957 = vmatpush1.bf16.msra.mxu0 0
      %958 = vmatprep.subr.bf16.mxu0 0
      %959 = vmatpush1.bf16.msra.mxu0 0
      %960 = vmatprep.subr.bf16.mxu0 0
      %961 = vmatpush1.bf16.msra.mxu0 0
      %962 = vmatprep.subr.bf16.mxu0 0
      %963 = vmatpush1.bf16.msra.mxu0 0
      %964 = vmatprep.subr.bf16.mxu0 0
      %965 = vmatpush1.bf16.msra.mxu0 0
      %966 = vmatprep.subr.bf16.mxu0 0
      %967 = vmatpush1.bf16.msra.mxu0 0
      %968 = vmatprep.subr.bf16.mxu0 0
      %969 = vmatpush1.bf16.msra.mxu0 0
      %970 = vmatprep.subr.bf16.mxu0 0
      %971 = vmatpush1.bf16.msra.mxu0 0
      %972 = vmatprep.subr.bf16.mxu0 0
      %973 = vmatpush1.bf16.msra.mxu0 0
      %974 = vmatprep.subr.bf16.mxu0 0
      %975 = vmatpush1.bf16.msra.mxu0 0
      %976 = vmatprep.subr.bf16.mxu0 0
      %977 = vmatpush1.bf16.msra.mxu0 0
      %978 = vmatprep.subr.bf16.mxu0 0
      %979 = vmatpush1.bf16.msra.mxu0 0
      %980 = vmatprep.subr.bf16.mxu0 0
      %981 = vmatpush1.bf16.msra.mxu0 0
      %982 = vmatprep.subr.bf16.mxu0 0
      %983 = vmatpush1.bf16.msra.mxu0 0
      %984 = vmatprep.mubr.bf16.mxu0 0
      %985 = vmatmul.mubr.bf16.gmra.mrb[0].mxu0 %v950
      %v986 = vpop.f32.mrb[0].mxu0
      %v987 = vadd.f32 0.0, %v986
      %v988 = vpop.f32.mrb[0].mxu0
      %v989 = vpop.f32.mrb[0].mxu0
      %v990 = vpop.f32.mrb[0].mxu0
      %991 = vdwg.mxu0
      %v992 = vadd.f32 %v826, %v987
      %993 = vrot.lane.b32.xlu0 %v503, 80
      %v994 = vpop.permute.xlu0 %993
      %995 = vrot.lane.b32.xlu0 %v504, 80
      %v996 = vpop.permute.xlu0 %995
      %v998 = vsel %vm505, %v994, 0
      %v1001 = vsel %vm505, %v996, 0
      %1003 = vmatprep.subr.bf16.mxu0 0
      %1004 = vmatpush1.bf16.xpose.msra.mxu0 %v1001
      %1005 = vmatprep.subr.bf16.mxu0 0
      %1006 = vmatpush1.bf16.xpose.msra.mxu0 0
      %1007 = vmatprep.subr.bf16.mxu0 0
      %1008 = vmatpush1.bf16.xpose.msra.mxu0 0
      %1009 = vmatprep.subr.bf16.mxu0 0
      %1010 = vmatpush1.bf16.xpose.msra.mxu0 0
      %1011 = vmatprep.subr.bf16.mxu0 0
      %1012 = vmatpush1.bf16.xpose.msra.mxu0 0
      %1013 = vmatprep.subr.bf16.mxu0 0
      %1014 = vmatpush1.bf16.xpose.msra.mxu0 0
      %1015 = vmatprep.subr.bf16.mxu0 0
      %1016 = vmatpush1.bf16.xpose.msra.mxu0 0
      %1017 = vmatprep.subr.bf16.mxu0 0
      %1018 = vmatpush1.bf16.xpose.msra.mxu0 0
      %1019 = vmatprep.subr.bf16.mxu0 0
      %1020 = vmatpush1.bf16.xpose.msra.mxu0 0
      %1021 = vmatprep.subr.bf16.mxu0 0
      %1022 = vmatpush1.bf16.xpose.msra.mxu0 0
      %1023 = vmatprep.subr.bf16.mxu0 0
      %1024 = vmatpush1.bf16.xpose.msra.mxu0 0
      %1025 = vmatprep.subr.bf16.mxu0 0
      %1026 = vmatpush1.bf16.xpose.msra.mxu0 0
      %1027 = vmatprep.subr.bf16.mxu0 0
      %1028 = vmatpush1.bf16.xpose.msra.mxu0 0
      %1029 = vmatprep.subr.bf16.mxu0 0
      %1030 = vmatpush1.bf16.xpose.msra.mxu0 0
      %1031 = vmatprep.subr.bf16.mxu0 0
      %1032 = vmatpush1.bf16.xpose.msra.mxu0 0
      %1033 = vmatprep.subr.bf16.mxu0 0
      %1034 = vmatpush1.bf16.xpose.msra.mxu0 0
      %1035 = vmatprep.mubr.bf16.mxu0 0
      %1036 = vmatmul.mubr.bf16.gmra.mrb[0].mxu0 %v998
      %v1037 = vpop.f32.mrb[0].mxu0
      %v1038 = vadd.f32 0.0, %v1037
      %v1039 = vpop.f32.mrb[0].mxu0
      %v1040 = vpop.f32.mrb[0].mxu0
      %v1041 = vpop.f32.mrb[0].mxu0
      %1042 = vdwg.mxu0
      %v1043 = vmul.f32 %v1038, 0.25
      %v1044 = vsel %vm553, %v1043, -inf
      %1045 = vmax.xlane.f32.xlu0 %v1044
      %v1046 = vpop.xlane.xlu0 %1045
      %v1047 = vsub.f32 %v1043, %v1046
      %v1048 = vmul.f32 %v1047, 1.442695
      %v1049 = vpow.pop %v1048
      %v1050 = vsel %vm553, %v1049, 0.0
      %1051 = vadd.xlane.f32.xlu0 %v1050
      %v1052 = vpop.xlane.xlu0 %1051
      %v1053 = vrcp.pop %v1052
      %v1054 = vmul.f32 %v1049, %v1053
      %v1055 = vpack.c.bf16 %v1054, %v1054
      %1056 = vrot.lane.b32.xlu0 %v504, 16
      %v1057 = vpop.permute.xlu0 %1056
      %v1059 = vsel %vm553, %v1055, 0
      %v1062 = vand.u32 %v1057, %v575
      %1064 = vmatprep.subr.bf16.mxu0 0
      %1065 = vmatpush1.bf16.msra.mxu0 %v1062
      %1066 = vmatprep.subr.bf16.mxu0 0
      %1067 = vmatpush1.bf16.msra.mxu0 0
      %1068 = vmatprep.subr.bf16.mxu0 0
      %1069 = vmatpush1.bf16.msra.mxu0 0
      %1070 = vmatprep.subr.bf16.mxu0 0
      %1071 = vmatpush1.bf16.msra.mxu0 0
      %1072 = vmatprep.subr.bf16.mxu0 0
      %1073 = vmatpush1.bf16.msra.mxu0 0
      %1074 = vmatprep.subr.bf16.mxu0 0
      %1075 = vmatpush1.bf16.msra.mxu0 0
      %1076 = vmatprep.subr.bf16.mxu0 0
      %1077 = vmatpush1.bf16.msra.mxu0 0
      %1078 = vmatprep.subr.bf16.mxu0 0
      %1079 = vmatpush1.bf16.msra.mxu0 0
      %1080 = vmatprep.subr.bf16.mxu0 0
      %1081 = vmatpush1.bf16.msra.mxu0 0
      %1082 = vmatprep.subr.bf16.mxu0 0
      %1083 = vmatpush1.bf16.msra.mxu0 0
      %1084 = vmatprep.subr.bf16.mxu0 0
      %1085 = vmatpush1.bf16.msra.mxu0 0
      %1086 = vmatprep.subr.bf16.mxu0 0
      %1087 = vmatpush1.bf16.msra.mxu0 0
      %1088 = vmatprep.subr.bf16.mxu0 0
      %1089 = vmatpush1.bf16.msra.mxu0 0
      %1090 = vmatprep.subr.bf16.mxu0 0
      %1091 = vmatpush1.bf16.msra.mxu0 0
      %1092 = vmatprep.subr.bf16.mxu0 0
      %1093 = vmatpush1.bf16.msra.mxu0 0
      %1094 = vmatprep.subr.bf16.mxu0 0
      %1095 = vmatpush1.bf16.msra.mxu0 0
      %1096 = vmatprep.mubr.bf16.mxu0 0
      %1097 = vmatmul.mubr.bf16.gmra.mrb[0].mxu0 %v1059
      %v1098 = vpop.f32.mrb[0].mxu0
      %v1099 = vadd.f32 0.0, %v1098
      %v1100 = vpop.f32.mrb[0].mxu0
      %v1101 = vpop.f32.mrb[0].mxu0
      %v1102 = vpop.f32.mrb[0].mxu0
      %1103 = vdwg.mxu0
      %v1104 = vpack.c.bf16 %v1099, %v1099
      %v1107 = vunpack.c.l.b16 %v501
      %v1108 = vunpack.c.l.b16 %v502
      %v1109 = vpack.c.b16 %v1108, %v1107
      %v1112 = vsel %vm505, %v1104, 0
      %1114 = vmatprep.subr.bf16.mxu0 0
      %1115 = vmatpush1.bf16.msra.mxu0 %v1109
      %1116 = vmatprep.subr.bf16.mxu0 0
      %1117 = vmatpush1.bf16.msra.mxu0 0
      %1118 = vmatprep.subr.bf16.mxu0 0
      %1119 = vmatpush1.bf16.msra.mxu0 0
      %1120 = vmatprep.subr.bf16.mxu0 0
      %1121 = vmatpush1.bf16.msra.mxu0 0
      %1122 = vmatprep.subr.bf16.mxu0 0
      %1123 = vmatpush1.bf16.msra.mxu0 0
      %1124 = vmatprep.subr.bf16.mxu0 0
      %1125 = vmatpush1.bf16.msra.mxu0 0
      %1126 = vmatprep.subr.bf16.mxu0 0
      %1127 = vmatpush1.bf16.msra.mxu0 0
      %1128 = vmatprep.subr.bf16.mxu0 0
      %1129 = vmatpush1.bf16.msra.mxu0 0
      %1130 = vmatprep.subr.bf16.mxu0 0
      %1131 = vmatpush1.bf16.msra.mxu0 0
      %1132 = vmatprep.subr.bf16.mxu0 0
      %1133 = vmatpush1.bf16.msra.mxu0 0
      %1134 = vmatprep.subr.bf16.mxu0 0
      %1135 = vmatpush1.bf16.msra.mxu0 0
      %1136 = vmatprep.subr.bf16.mxu0 0
      %1137 = vmatpush1.bf16.msra.mxu0 0
      %1138 = vmatprep.subr.bf16.mxu0 0
      %1139 = vmatpush1.bf16.msra.mxu0 0
      %1140 = vmatprep.subr.bf16.mxu0 0
      %1141 = vmatpush1.bf16.msra.mxu0 0
      %1142 = vmatprep.subr.bf16.mxu0 0
      %1143 = vmatpush1.bf16.msra.mxu0 0
      %1144 = vmatprep.subr.bf16.mxu0 0
      %1145 = vmatpush1.bf16.msra.mxu0 0
      %1146 = vmatprep.mubr.bf16.mxu0 0
      %1147 = vmatmul.mubr.bf16.gmra.mrb[0].mxu0 %v1112
      %v1148 = vpop.f32.mrb[0].mxu0
      %v1149 = vadd.f32 0.0, %v1148
      %v1150 = vpop.f32.mrb[0].mxu0
      %v1151 = vpop.f32.mrb[0].mxu0
      %v1152 = vpop.f32.mrb[0].mxu0
      %1153 = vdwg.mxu0
      %v1154 = vadd.f32 %v992, %v1149
      %v1155 = vadd.f32 %v320, %v1154
      %v1156 = vld [vmem:[%s5] sm:$0x1]
      %v1158 = vlaneseq
      %v1159 = vshrl.u32 %v1158, 7
      %v1160 = vsub.s32 0, %v1159
      %v1161 = vrot.slane %v1156, %v1160
      %v1163 = vadd.f32 %v1155, %v1161
      %v1164 = vld [vmem:[%s6] sm:$0x1]
      %v1165 = vld [vmem:[%s7] sm:$0x1]
      %v1166 = vsel %vm361, %v1163, 0.0
      %1167 = vadd.xlane.f32.xlu0 %v1166
      %v1168 = vpop.xlane.xlu0 %1167
      %v1169 = vrcp.pop 64.0
      %v1170 = vmul.f32 %v1168, %v1169
      %v1171 = vsub.f32 %v1163, %v1170
      %v1172 = vmul.f32 %v1171, %v1171
      %v1173 = vsel %vm361, %v1172, 0.0
      %1174 = vadd.xlane.f32.xlu0 %v1173
      %v1175 = vpop.xlane.xlu0 %1174
      %v1176 = vmul.f32 %v1175, %v1169
      %v1177 = vadd.f32 %v1176, 1e-06
      %v1178 = vrsqrt.pop %v1177
      %v1179 = vmul.f32 %v1171, %v1178
      %v1181 = vlaneseq
      %v1182 = vshrl.u32 %v1181, 7
      %v1183 = vsub.s32 0, %v1182
      %v1184 = vrot.slane %v1164, %v1183
      %v1186 = vmul.f32 %v1179, %v1184
      %v1188 = vlaneseq
      %v1189 = vshrl.u32 %v1188, 7
      %v1190 = vsub.s32 0, %v1189
      %v1191 = vrot.slane %v1165, %v1190
      %v1193 = vadd.f32 %v1186, %v1191
      %v1194 = vpack.c.bf16 %v1193, %v1193
      %vm1195 = vcmask 519168
      %1196 = vst.msk [vmem:[%s317] sm:$0xf] %vm1195, %v1194
      %p1197 = scmp.lt.s32.totalorder %s19, 1
      %s1198 = scalar_select %p1197, %s19, 1
      %s1199 = smul.addr %s1198, 4
      %s1200 = scalar_lea.vmem %s8, %s1199
      // Predicated region
      $region53: #{_lambda_.19} parent=51 // pred_check
        %p1201 = pneg %p215
      $region54: #{_lambda_.19} parent=51 // pred_check_branch
        %1203 = sbr.rel (%p1201) target = $region56
      $region55: #{_lambda_.19} parent=51 // pred_region
        _
      $region56: #{_lambda_.19} parent=51 // pred_fallthru
        _
    $region52: #{_lambda_.19} parent=5 // pred_fallthru
      _
    %p1204 = scmp.le.s32.totalorder 2, %s14
    // Predicated region
    $region57: #{_lambda_.19} parent=5 // pred_check
      %p1205 = pneg %p1204
    $region58: #{_lambda_.19} parent=5 // pred_check_branch
      %1207 = sbr.rel (%p1205) target = $region60
    $region59: #{_lambda_.19} parent=5 // pred_region
      %s1208 = ssub.s32 %s14, 2
      // Predicated region
      $region61: #{_lambda_.19} parent=59 // pred_check
        %p1209 = pneg %p221
      $region62: #{_lambda_.19} parent=59 // pred_check_branch
        %1211 = sbr.rel (%p1209) target = $region64
      $region63: #{_lambda_.19} parent=59 // pred_region
        %p1212 = scmp.lt.s32.totalorder %s20, 1
        %s1213 = scalar_select %p1212, %s20, 1
        %s1214 = smul.addr %s1213, 4
        %s1215 = scalar_lea.vmem %s8, %s1214
      $region64: #{_lambda_.19} parent=59 // pred_fallthru
        _
    $region60: #{_lambda_.19} parent=5 // pred_fallthru
      _
  $region6: #{_lambda_.19} parent=0 // loop_footer
    %s18 = sadd.s32 1, %s14
  $region7: #{_lambda_.19} parent=0 // loop_footer_branch
    %13 = sbr.rel target = $region3
  $region8: #{_lambda_.19} parent=0 // loop_exit
    _

</llo_original>
